<compile_context>
chip_gen: v7x
topology: tpu7x:2x2x1
jax: 0.10.0
libtpu: 0.0.40
codegen_flags: <defaults>
</compile_context>

<pallas_src>
import numpy as np
import jax
import jax.numpy as jnp
from jax import lax
from jax.experimental import pallas as pl
from jax.experimental.pallas import tpu as pltpu


IMG = 16  # input spatial size (square)

# (kind, Cin, Cout, K, stride, pad, Hin, Hout, act)
LAYERS = (
    ("conv",    3,  8, 3, 2, 1, 16,  8, "leaky_relu"),
    ("conv",    8, 16, 3, 2, 1,  8,  4, "leaky_relu"),
    ("deconv", 16,  8, 4, 2, 1,  4,  8, "relu"),
    ("deconv",  8,  3, 4, 2, 1,  8, 16, "tanh"),
)
_PARAM_NAMES = (("enc1_w", "enc1_b"), ("enc2_w", "enc2_b"),
                ("dec1_w", "dec1_b"), ("dec2_w", "dec2_b"))


# ------------------------- constant selection matrices -----------------------
def _selection_matrices(kind, K, stride, pad, Hin, Hout):
    """0/1 matrices S[t] of shape [Hin*Hin, Hout*Hout], one per tap t=(kh,kw).

    conv   : out[y,x] += w[kh,kw] * in[ s*y - p + kh , s*x - p + kw ]
    deconv : out[ s*i - p + kh , s*j - p + kw ] += w[kh,kw] * in[i,j]
    (PyTorch Conv2d / ConvTranspose2d semantics; zero-padding handled by simply
     dropping out-of-range taps -> no zero-inserted upsampling for the deconv.)
    """
    S = np.zeros((K * K, Hin * Hin, Hout * Hout), np.float32)
    for kh in range(K):
        for kw in range(K):
            t = kh * K + kw
            for oy in range(Hout):
                for ox in range(Hout):
                    if kind == "conv":
                        iy = stride * oy - pad + kh
                        ix = stride * ox - pad + kw
                    else:  # deconv: oy = stride*iy - pad + kh
                        ny, nx = oy + pad - kh, ox + pad - kw
                        if ny % stride or nx % stride:
                            continue
                        iy, ix = ny // stride, nx // stride
                    if 0 <= iy < Hin and 0 <= ix < Hin:
                        S[t, iy * Hin + ix, oy * Hout + ox] = 1.0
    return S


def _pack_taps(kind, w):
    """Per-tap weight matrices [KH*KW, Cout, Cin] from PyTorch-layout weights."""
    if kind == "conv":            # Conv2d weight: [Cout, Cin, KH, KW]
        cout, cin, kh, kw = w.shape
        taps = jnp.transpose(w, (2, 3, 0, 1))
    else:                         # ConvTranspose2d weight: [Cin, Cout, KH, KW]
        cin, cout, kh, kw = w.shape
        taps = jnp.transpose(w, (2, 3, 1, 0))
    return taps.reshape(kh * kw, cout, cin)


# ------------------------------- Pallas kernel -------------------------------
def _layer(a, w_ref, s_ref, b_ref, act):
    """act( bias + sum_t W[t] @ (a @ S[t]) );  a: [Cin, Min] bf16 -> [Cout, Mout] f32."""
    T, Cout, _ = w_ref.shape
    M = s_ref.shape[-1]
    acc = jnp.zeros((Cout, M), jnp.float32)
    for t in range(T):  # unrolled: T in {9, 16}
        # in-kernel "im2col": pure copy/scatter of a's columns (bf16 MXU feed)
        tap = jnp.dot(a, s_ref[t], preferred_element_type=jnp.float32)   # [Cin, M]
        acc = acc + jnp.dot(w_ref[t], tap,
                            preferred_element_type=jnp.float32)          # [Cout, M]
    acc = acc + b_ref[...]                                               # [Cout, 1] bcast
    if act == "leaky_relu":
        acc = jnp.where(acc > 0, acc, 0.2 * acc)
    elif act == "relu":
        acc = jnp.maximum(acc, 0.0)
    elif act == "tanh":
        acc = jnp.tanh(acc)
    return acc


def _gan_kernel(x_ref,
                w1, s1, b1, w2, s2, b2, w3, s3, b3, w4, s4, b4,
                o_ref):
    a = x_ref[0].astype(jnp.bfloat16)                                # [3, 256]
    a = _layer(a, w1, s1, b1, "leaky_relu").astype(jnp.bfloat16)     # [8, 64]
    a = _layer(a, w2, s2, b2, "leaky_relu").astype(jnp.bfloat16)     # [16, 16]
    a = _layer(a, w3, s3, b3, "relu").astype(jnp.bfloat16)           # [8, 64]
    o_ref[0] = _layer(a, w4, s4, b4, "tanh").astype(o_ref.dtype)     # [3, 256]  lane-dense


# --------------------------------- wrapper -----------------------------------
def gan_forward(x_nchw, params):
    """Equivalent of GAN.forward(x) = decoder(encoder(x)). Input/output NCHW."""
    N, Cin, H, W = x_nchw.shape
    assert (Cin, H, W) == (LAYERS[0][1], IMG, IMG)

    ops = []
    for (kind, cin, cout, K, s, p, hin, hout, _), (wn, bn) in zip(LAYERS, _PARAM_NAMES):
        w_taps = _pack_taps(kind, params[wn]).astype(jnp.float32)         # [T, Cout, Cin]
        sel = jnp.asarray(_selection_matrices(kind, K, s, p, hin, hout),
                          jnp.bfloat16)                                   # [T, Hin^2, Hout^2]
        bias = params[bn].reshape(cout, 1).astype(jnp.float32)            # [Cout, 1]
        ops += [w_taps, sel, bias]

    c_out = LAYERS[-1][2]
    m_out = LAYERS[-1][7] ** 2
    x2d = x_nchw.astype(jnp.float32).reshape(N, Cin, H * W)               # free reshape

    def const_spec(a):
        zero = (0,) * a.ndim
        return pl.BlockSpec(a.shape, lambda b: zero)                      # VMEM-resident

    out = pl.pallas_call(
        _gan_kernel,
        out_shape=jax.ShapeDtypeStruct((N, c_out, m_out), jnp.float32),
        grid_spec=pltpu.PrefetchScalarGridSpec(
            num_scalar_prefetch=0,
            grid=(N,),                                                    # one image / step
            in_specs=[pl.BlockSpec((1, Cin, H * W), lambda b: (b, 0, 0))]
                     + [const_spec(a) for a in ops],
            out_specs=pl.BlockSpec((1, c_out, m_out), lambda b: (b, 0, 0)),
        ),
        compiler_params=pltpu.CompilerParams(
            dimension_semantics=("parallel",)),                           # v7x: 2 TCs
    )(x2d, *ops)
    return out.reshape(N, c_out, IMG, IMG)                                # already NCHW


# ------------------------------ params / reference ---------------------------
def init_params(key):
    ks = jax.random.split(key, 8)

    def wrand(k, shape, fan_in):
        return jax.random.normal(k, shape, jnp.float32) / jnp.sqrt(float(fan_in))

    def brand(k, n):
        return 0.1 * jax.random.normal(k, (n,), jnp.float32)

    return {
        # encoder: PyTorch Conv2d weight layout [Cout, Cin, KH, KW]
        "enc1_w": wrand(ks[0], (8, 3, 3, 3), 3 * 3 * 3),
        "enc1_b": brand(ks[1], 8),
        "enc2_w": wrand(ks[2], (16, 8, 3, 3), 8 * 3 * 3),
        "enc2_b": brand(ks[3], 16),
        # decoder: PyTorch ConvTranspose2d weight layout [Cin, Cout, KH, KW]
        "dec1_w": wrand(ks[4], (16, 8, 4, 4), 16 * 4 * 4),
        "dec1_b": brand(ks[5], 8),
        "dec2_w": wrand(ks[6], (8, 3, 4, 4), 8 * 4 * 4),
        "dec2_b": brand(ks[7], 3),
    }


def gan_forward_reference(x, params):
    """Pure-JAX f32 reference with PyTorch Conv2d / ConvTranspose2d semantics."""
    def conv(x, w, b, s, p):
        y = lax.conv_general_dilated(x, w, (s, s), ((p, p), (p, p)),
                                     dimension_numbers=("NCHW", "OIHW", "NCHW"))
        return y + b[None, :, None, None]

    def deconv(x, w, b, s, p):
        K = w.shape[2]
        w_oihw = jnp.transpose(jnp.flip(w, (2, 3)), (1, 0, 2, 3))
        y = lax.conv_general_dilated(x, w_oihw, (1, 1),
                                     ((K - 1 - p, K - 1 - p), (K - 1 - p, K - 1 - p)),
                                     lhs_dilation=(s, s),
                                     dimension_numbers=("NCHW", "OIHW", "NCHW"))
        return y + b[None, :, None, None]

    h = conv(x, params["enc1_w"], params["enc1_b"], 2, 1)
    h = jnp.where(h > 0, h, 0.2 * h)
    h = conv(h, params["enc2_w"], params["enc2_b"], 2, 1)
    h = jnp.where(h > 0, h, 0.2 * h)
    h = deconv(h, params["dec1_w"], params["dec1_b"], 2, 1)
    h = jnp.maximum(h, 0.0)
    h = deconv(h, params["dec2_w"], params["dec2_b"], 2, 1)
    return jnp.tanh(h)


if __name__ == "__main__":
    key = jax.random.PRNGKey(0)
    k_param, k_x = jax.random.split(key)
    params = init_params(k_param)
    x = jax.random.normal(k_x, (2, 3, IMG, IMG), jnp.float32)   # NCHW like PyTorch

    out = jax.jit(gan_forward)(x, params)
    out = jax.block_until_ready(out)

    assert out.shape == (2, 3, IMG, IMG), out.shape
    assert out.dtype == jnp.float32
    assert bool(jnp.all(jnp.isfinite(out)))

    ref = gan_forward_reference(x, params)
    err = float(jnp.max(jnp.abs(out - ref)))
    assert err < 5e-2, f"max |pallas - reference| = {err}"
    print("KERNEL_OK")
</pallas_src>

<mosaic_0001>
module attributes {stable_mosaic.version = 11 : i64} {
  func.func @_gan_kernel(%arg0: i32, %arg1: memref<1x3x256xf32, #tpu.memory_space<vmem>>, %arg2: memref<9x8x3xf32, #tpu.memory_space<vmem>>, %arg3: memref<9x256x64xbf16, #tpu.memory_space<vmem>>, %arg4: memref<8x1xf32, #tpu.memory_space<vmem>>, %arg5: memref<9x16x8xf32, #tpu.memory_space<vmem>>, %arg6: memref<9x64x16xbf16, #tpu.memory_space<vmem>>, %arg7: memref<16x1xf32, #tpu.memory_space<vmem>>, %arg8: memref<16x8x16xf32, #tpu.memory_space<vmem>>, %arg9: memref<16x16x64xbf16, #tpu.memory_space<vmem>>, %arg10: memref<8x1xf32, #tpu.memory_space<vmem>>, %arg11: memref<16x3x8xf32, #tpu.memory_space<vmem>>, %arg12: memref<16x64x256xbf16, #tpu.memory_space<vmem>>, %arg13: memref<3x1xf32, #tpu.memory_space<vmem>>, %arg14: memref<1x3x256xf32, #tpu.memory_space<vmem>>) attributes {dimension_semantics = [#tpu.dimension_semantics<parallel>], iteration_bounds = array<i64: 2>, scalar_prefetch = 0 : i64, scratch_operands = 0 : i64, tpu.core_type = #tpu.core_type<tc>, window_params = [{transform_indices = @transform_0, window_bounds = array<i64: 1, 3, 256>}, {pipeline_mode = #tpu.pipeline_mode<synchronous>, transform_indices = @transform_1, window_bounds = array<i64: 9, 8, 3>}, {pipeline_mode = #tpu.pipeline_mode<synchronous>, transform_indices = @transform_2, window_bounds = array<i64: 9, 256, 64>}, {pipeline_mode = #tpu.pipeline_mode<synchronous>, transform_indices = @transform_3, window_bounds = array<i64: 8, 1>}, {pipeline_mode = #tpu.pipeline_mode<synchronous>, transform_indices = @transform_4, window_bounds = array<i64: 9, 16, 8>}, {pipeline_mode = #tpu.pipeline_mode<synchronous>, transform_indices = @transform_5, window_bounds = array<i64: 9, 64, 16>}, {pipeline_mode = #tpu.pipeline_mode<synchronous>, transform_indices = @transform_6, window_bounds = array<i64: 16, 1>}, {pipeline_mode = #tpu.pipeline_mode<synchronous>, transform_indices = @transform_7, window_bounds = array<i64: 16, 8, 16>}, {pipeline_mode = #tpu.pipeline_mode<synchronous>, transform_indices = @transform_8, window_bounds = array<i64: 16, 16, 64>}, {pipeline_mode = #tpu.pipeline_mode<synchronous>, transform_indices = @transform_9, window_bounds = array<i64: 8, 1>}, {pipeline_mode = #tpu.pipeline_mode<synchronous>, transform_indices = @transform_10, window_bounds = array<i64: 16, 3, 8>}, {pipeline_mode = #tpu.pipeline_mode<synchronous>, transform_indices = @transform_11, window_bounds = array<i64: 16, 64, 256>}, {pipeline_mode = #tpu.pipeline_mode<synchronous>, transform_indices = @transform_12, window_bounds = array<i64: 3, 1>}, {transform_indices = @transform_13, window_bounds = array<i64: 1, 3, 256>}]} {
    %c0 = arith.constant 0 : index
    %c0_0 = arith.constant 0 : index
    %c0_1 = arith.constant 0 : index
    %0 = vector.load %arg1[%c0, %c0_0, %c0_1] : memref<1x3x256xf32, #tpu.memory_space<vmem>>, vector<1x3x256xf32>
    %1 = vector.shape_cast %0 : vector<1x3x256xf32> to vector<3x256xf32>
    %2 = arith.truncf %1 : vector<3x256xf32> to vector<3x256xbf16>
    %cst = arith.constant 0.000000e+00 : f32
    %3 = vector.broadcast %cst : f32 to vector<8x64xf32>
    %c0_2 = arith.constant 0 : index
    %c0_3 = arith.constant 0 : index
    %c0_4 = arith.constant 0 : index
    %4 = vector.load %arg3[%c0_2, %c0_3, %c0_4] : memref<9x256x64xbf16, #tpu.memory_space<vmem>>, vector<1x256x64xbf16>
    %5 = vector.shape_cast %4 : vector<1x256x64xbf16> to vector<256x64xbf16>
    %cst_5 = arith.constant dense<0.000000e+00> : vector<3x64xf32>
    %6 = tpu.matmul %2, %5, %cst_5 {dimension_numbers = #tpu.dot_dimension_numbers<[1], [0], [0], [1], [0, 0, 1, 1], [], []>} : vector<3x256xbf16>, vector<256x64xbf16>, vector<3x64xf32> -> vector<3x64xf32>
    %c0_6 = arith.constant 0 : index
    %c0_7 = arith.constant 0 : index
    %c0_8 = arith.constant 0 : index
    %7 = vector.load %arg2[%c0_6, %c0_7, %c0_8] : memref<9x8x3xf32, #tpu.memory_space<vmem>>, vector<1x8x3xf32>
    %8 = vector.shape_cast %7 : vector<1x8x3xf32> to vector<8x3xf32>
    %cst_9 = arith.constant dense<0.000000e+00> : vector<8x64xf32>
    %9 = tpu.matmul %8, %6, %cst_9 {dimension_numbers = #tpu.dot_dimension_numbers<[1], [0], [0], [1], [0, 0, 1, 1], [], []>} : vector<8x3xf32>, vector<3x64xf32>, vector<8x64xf32> -> vector<8x64xf32>
    %10 = arith.addf %3, %9 : vector<8x64xf32>
    %c1 = arith.constant 1 : index
    %c0_10 = arith.constant 0 : index
    %c0_11 = arith.constant 0 : index
    %11 = vector.load %arg3[%c1, %c0_10, %c0_11] : memref<9x256x64xbf16, #tpu.memory_space<vmem>>, vector<1x256x64xbf16>
    %12 = vector.shape_cast %11 : vector<1x256x64xbf16> to vector<256x64xbf16>
    %cst_12 = arith.constant dense<0.000000e+00> : vector<3x64xf32>
    %13 = tpu.matmul %2, %12, %cst_12 {dimension_numbers = #tpu.dot_dimension_numbers<[1], [0], [0], [1], [0, 0, 1, 1], [], []>} : vector<3x256xbf16>, vector<256x64xbf16>, vector<3x64xf32> -> vector<3x64xf32>
    %c1_13 = arith.constant 1 : index
    %c0_14 = arith.constant 0 : index
    %c0_15 = arith.constant 0 : index
    %14 = vector.load %arg2[%c1_13, %c0_14, %c0_15] : memref<9x8x3xf32, #tpu.memory_space<vmem>>, vector<1x8x3xf32>
    %15 = vector.shape_cast %14 : vector<1x8x3xf32> to vector<8x3xf32>
    %cst_16 = arith.constant dense<0.000000e+00> : vector<8x64xf32>
    %16 = tpu.matmul %15, %13, %cst_16 {dimension_numbers = #tpu.dot_dimension_numbers<[1], [0], [0], [1], [0, 0, 1, 1], [], []>} : vector<8x3xf32>, vector<3x64xf32>, vector<8x64xf32> -> vector<8x64xf32>
    %17 = arith.addf %10, %16 : vector<8x64xf32>
    %c2 = arith.constant 2 : index
    %c0_17 = arith.constant 0 : index
    %c0_18 = arith.constant 0 : index
    %18 = vector.load %arg3[%c2, %c0_17, %c0_18] : memref<9x256x64xbf16, #tpu.memory_space<vmem>>, vector<1x256x64xbf16>
    %19 = vector.shape_cast %18 : vector<1x256x64xbf16> to vector<256x64xbf16>
    %cst_19 = arith.constant dense<0.000000e+00> : vector<3x64xf32>
    %20 = tpu.matmul %2, %19, %cst_19 {dimension_numbers = #tpu.dot_dimension_numbers<[1], [0], [0], [1], [0, 0, 1, 1], [], []>} : vector<3x256xbf16>, vector<256x64xbf16>, vector<3x64xf32> -> vector<3x64xf32>
    %c2_20 = arith.constant 2 : index
    %c0_21 = arith.constant 0 : index
    %c0_22 = arith.constant 0 : index
    %21 = vector.load %arg2[%c2_20, %c0_21, %c0_22] : memref<9x8x3xf32, #tpu.memory_space<vmem>>, vector<1x8x3xf32>
    %22 = vector.shape_cast %21 : vector<1x8x3xf32> to vector<8x3xf32>
    %cst_23 = arith.constant dense<0.000000e+00> : vector<8x64xf32>
    %23 = tpu.matmul %22, %20, %cst_23 {dimension_numbers = #tpu.dot_dimension_numbers<[1], [0], [0], [1], [0, 0, 1, 1], [], []>} : vector<8x3xf32>, vector<3x64xf32>, vector<8x64xf32> -> vector<8x64xf32>
    %24 = arith.addf %17, %23 : vector<8x64xf32>
    %c3 = arith.constant 3 : index
    %c0_24 = arith.constant 0 : index
    %c0_25 = arith.constant 0 : index
    %25 = vector.load %arg3[%c3, %c0_24, %c0_25] : memref<9x256x64xbf16, #tpu.memory_space<vmem>>, vector<1x256x64xbf16>
    %26 = vector.shape_cast %25 : vector<1x256x64xbf16> to vector<256x64xbf16>
    %cst_26 = arith.constant dense<0.000000e+00> : vector<3x64xf32>
    %27 = tpu.matmul %2, %26, %cst_26 {dimension_numbers = #tpu.dot_dimension_numbers<[1], [0], [0], [1], [0, 0, 1, 1], [], []>} : vector<3x256xbf16>, vector<256x64xbf16>, vector<3x64xf32> -> vector<3x64xf32>
    %c3_27 = arith.constant 3 : index
    %c0_28 = arith.constant 0 : index
    %c0_29 = arith.constant 0 : index
    %28 = vector.load %arg2[%c3_27, %c0_28, %c0_29] : memref<9x8x3xf32, #tpu.memory_space<vmem>>, vector<1x8x3xf32>
    %29 = vector.shape_cast %28 : vector<1x8x3xf32> to vector<8x3xf32>
    %cst_30 = arith.constant dense<0.000000e+00> : vector<8x64xf32>
    %30 = tpu.matmul %29, %27, %cst_30 {dimension_numbers = #tpu.dot_dimension_numbers<[1], [0], [0], [1], [0, 0, 1, 1], [], []>} : vector<8x3xf32>, vector<3x64xf32>, vector<8x64xf32> -> vector<8x64xf32>
    %31 = arith.addf %24, %30 : vector<8x64xf32>
    %c4 = arith.constant 4 : index
    %c0_31 = arith.constant 0 : index
    %c0_32 = arith.constant 0 : index
    %32 = vector.load %arg3[%c4, %c0_31, %c0_32] : memref<9x256x64xbf16, #tpu.memory_space<vmem>>, vector<1x256x64xbf16>
    %33 = vector.shape_cast %32 : vector<1x256x64xbf16> to vector<256x64xbf16>
    %cst_33 = arith.constant dense<0.000000e+00> : vector<3x64xf32>
    %34 = tpu.matmul %2, %33, %cst_33 {dimension_numbers = #tpu.dot_dimension_numbers<[1], [0], [0], [1], [0, 0, 1, 1], [], []>} : vector<3x256xbf16>, vector<256x64xbf16>, vector<3x64xf32> -> vector<3x64xf32>
    %c4_34 = arith.constant 4 : index
    %c0_35 = arith.constant 0 : index
    %c0_36 = arith.constant 0 : index
    %35 = vector.load %arg2[%c4_34, %c0_35, %c0_36] : memref<9x8x3xf32, #tpu.memory_space<vmem>>, vector<1x8x3xf32>
    %36 = vector.shape_cast %35 : vector<1x8x3xf32> to vector<8x3xf32>
    %cst_37 = arith.constant dense<0.000000e+00> : vector<8x64xf32>
    %37 = tpu.matmul %36, %34, %cst_37 {dimension_numbers = #tpu.dot_dimension_numbers<[1], [0], [0], [1], [0, 0, 1, 1], [], []>} : vector<8x3xf32>, vector<3x64xf32>, vector<8x64xf32> -> vector<8x64xf32>
    %38 = arith.addf %31, %37 : vector<8x64xf32>
    %c5 = arith.constant 5 : index
    %c0_38 = arith.constant 0 : index
    %c0_39 = arith.constant 0 : index
    %39 = vector.load %arg3[%c5, %c0_38, %c0_39] : memref<9x256x64xbf16, #tpu.memory_space<vmem>>, vector<1x256x64xbf16>
    %40 = vector.shape_cast %39 : vector<1x256x64xbf16> to vector<256x64xbf16>
    %cst_40 = arith.constant dense<0.000000e+00> : vector<3x64xf32>
    %41 = tpu.matmul %2, %40, %cst_40 {dimension_numbers = #tpu.dot_dimension_numbers<[1], [0], [0], [1], [0, 0, 1, 1], [], []>} : vector<3x256xbf16>, vector<256x64xbf16>, vector<3x64xf32> -> vector<3x64xf32>
    %c5_41 = arith.constant 5 : index
    %c0_42 = arith.constant 0 : index
    %c0_43 = arith.constant 0 : index
    %42 = vector.load %arg2[%c5_41, %c0_42, %c0_43] : memref<9x8x3xf32, #tpu.memory_space<vmem>>, vector<1x8x3xf32>
    %43 = vector.shape_cast %42 : vector<1x8x3xf32> to vector<8x3xf32>
    %cst_44 = arith.constant dense<0.000000e+00> : vector<8x64xf32>
    %44 = tpu.matmul %43, %41, %cst_44 {dimension_numbers = #tpu.dot_dimension_numbers<[1], [0], [0], [1], [0, 0, 1, 1], [], []>} : vector<8x3xf32>, vector<3x64xf32>, vector<8x64xf32> -> vector<8x64xf32>
    %45 = arith.addf %38, %44 : vector<8x64xf32>
    %c6 = arith.constant 6 : index
    %c0_45 = arith.constant 0 : index
    %c0_46 = arith.constant 0 : index
    %46 = vector.load %arg3[%c6, %c0_45, %c0_46] : memref<9x256x64xbf16, #tpu.memory_space<vmem>>, vector<1x256x64xbf16>
    %47 = vector.shape_cast %46 : vector<1x256x64xbf16> to vector<256x64xbf16>
    %cst_47 = arith.constant dense<0.000000e+00> : vector<3x64xf32>
    %48 = tpu.matmul %2, %47, %cst_47 {dimension_numbers = #tpu.dot_dimension_numbers<[1], [0], [0], [1], [0, 0, 1, 1], [], []>} : vector<3x256xbf16>, vector<256x64xbf16>, vector<3x64xf32> -> vector<3x64xf32>
    %c6_48 = arith.constant 6 : index
    %c0_49 = arith.constant 0 : index
    %c0_50 = arith.constant 0 : index
    %49 = vector.load %arg2[%c6_48, %c0_49, %c0_50] : memref<9x8x3xf32, #tpu.memory_space<vmem>>, vector<1x8x3xf32>
    %50 = vector.shape_cast %49 : vector<1x8x3xf32> to vector<8x3xf32>
    %cst_51 = arith.constant dense<0.000000e+00> : vector<8x64xf32>
    %51 = tpu.matmul %50, %48, %cst_51 {dimension_numbers = #tpu.dot_dimension_numbers<[1], [0], [0], [1], [0, 0, 1, 1], [], []>} : vector<8x3xf32>, vector<3x64xf32>, vector<8x64xf32> -> vector<8x64xf32>
    %52 = arith.addf %45, %51 : vector<8x64xf32>
    %c7 = arith.constant 7 : index
    %c0_52 = arith.constant 0 : index
    %c0_53 = arith.constant 0 : index
    %53 = vector.load %arg3[%c7, %c0_52, %c0_53] : memref<9x256x64xbf16, #tpu.memory_space<vmem>>, vector<1x256x64xbf16>
    %54 = vector.shape_cast %53 : vector<1x256x64xbf16> to vector<256x64xbf16>
    %cst_54 = arith.constant dense<0.000000e+00> : vector<3x64xf32>
    %55 = tpu.matmul %2, %54, %cst_54 {dimension_numbers = #tpu.dot_dimension_numbers<[1], [0], [0], [1], [0, 0, 1, 1], [], []>} : vector<3x256xbf16>, vector<256x64xbf16>, vector<3x64xf32> -> vector<3x64xf32>
    %c7_55 = arith.constant 7 : index
    %c0_56 = arith.constant 0 : index
    %c0_57 = arith.constant 0 : index
    %56 = vector.load %arg2[%c7_55, %c0_56, %c0_57] : memref<9x8x3xf32, #tpu.memory_space<vmem>>, vector<1x8x3xf32>
    %57 = vector.shape_cast %56 : vector<1x8x3xf32> to vector<8x3xf32>
    %cst_58 = arith.constant dense<0.000000e+00> : vector<8x64xf32>
    %58 = tpu.matmul %57, %55, %cst_58 {dimension_numbers = #tpu.dot_dimension_numbers<[1], [0], [0], [1], [0, 0, 1, 1], [], []>} : vector<8x3xf32>, vector<3x64xf32>, vector<8x64xf32> -> vector<8x64xf32>
    %59 = arith.addf %52, %58 : vector<8x64xf32>
    %c8 = arith.constant 8 : index
    %c0_59 = arith.constant 0 : index
    %c0_60 = arith.constant 0 : index
    %60 = vector.load %arg3[%c8, %c0_59, %c0_60] : memref<9x256x64xbf16, #tpu.memory_space<vmem>>, vector<1x256x64xbf16>
    %61 = vector.shape_cast %60 : vector<1x256x64xbf16> to vector<256x64xbf16>
    %cst_61 = arith.constant dense<0.000000e+00> : vector<3x64xf32>
    %62 = tpu.matmul %2, %61, %cst_61 {dimension_numbers = #tpu.dot_dimension_numbers<[1], [0], [0], [1], [0, 0, 1, 1], [], []>} : vector<3x256xbf16>, vector<256x64xbf16>, vector<3x64xf32> -> vector<3x64xf32>
    %c8_62 = arith.constant 8 : index
    %c0_63 = arith.constant 0 : index
    %c0_64 = arith.constant 0 : index
    %63 = vector.load %arg2[%c8_62, %c0_63, %c0_64] : memref<9x8x3xf32, #tpu.memory_space<vmem>>, vector<1x8x3xf32>
    %64 = vector.shape_cast %63 : vector<1x8x3xf32> to vector<8x3xf32>
    %cst_65 = arith.constant dense<0.000000e+00> : vector<8x64xf32>
    %65 = tpu.matmul %64, %62, %cst_65 {dimension_numbers = #tpu.dot_dimension_numbers<[1], [0], [0], [1], [0, 0, 1, 1], [], []>} : vector<8x3xf32>, vector<3x64xf32>, vector<8x64xf32> -> vector<8x64xf32>
    %66 = arith.addf %59, %65 : vector<8x64xf32>
    %c0_66 = arith.constant 0 : index
    %c0_67 = arith.constant 0 : index
    %67 = vector.load %arg4[%c0_66, %c0_67] : memref<8x1xf32, #tpu.memory_space<vmem>>, vector<8x1xf32>
    %68 = vector.broadcast %67 : vector<8x1xf32> to vector<8x64xf32>
    %69 = arith.addf %66, %68 : vector<8x64xf32>
    %cst_68 = arith.constant 0.000000e+00 : f32
    %70 = vector.broadcast %cst_68 : f32 to vector<8x64xf32>
    %71 = arith.cmpf ogt, %69, %70 : vector<8x64xf32>
    %cst_69 = arith.constant 2.000000e-01 : f32
    %72 = vector.broadcast %cst_69 : f32 to vector<8x64xf32>
    %73 = arith.mulf %72, %69 : vector<8x64xf32>
    %74 = arith.select %71, %69, %73 : vector<8x64xi1>, vector<8x64xf32>
    %75 = arith.truncf %74 : vector<8x64xf32> to vector<8x64xbf16>
    %cst_70 = arith.constant 0.000000e+00 : f32
    %76 = vector.broadcast %cst_70 : f32 to vector<16x16xf32>
    %c0_71 = arith.constant 0 : index
    %c0_72 = arith.constant 0 : index
    %c0_73 = arith.constant 0 : index
    %77 = vector.load %arg6[%c0_71, %c0_72, %c0_73] : memref<9x64x16xbf16, #tpu.memory_space<vmem>>, vector<1x64x16xbf16>
    %78 = vector.shape_cast %77 : vector<1x64x16xbf16> to vector<64x16xbf16>
    %cst_74 = arith.constant dense<0.000000e+00> : vector<8x16xf32>
    %79 = tpu.matmul %75, %78, %cst_74 {dimension_numbers = #tpu.dot_dimension_numbers<[1], [0], [0], [1], [0, 0, 1, 1], [], []>} : vector<8x64xbf16>, vector<64x16xbf16>, vector<8x16xf32> -> vector<8x16xf32>
    %c0_75 = arith.constant 0 : index
    %c0_76 = arith.constant 0 : index
    %c0_77 = arith.constant 0 : index
    %80 = vector.load %arg5[%c0_75, %c0_76, %c0_77] : memref<9x16x8xf32, #tpu.memory_space<vmem>>, vector<1x16x8xf32>
    %81 = vector.shape_cast %80 : vector<1x16x8xf32> to vector<16x8xf32>
    %cst_78 = arith.constant dense<0.000000e+00> : vector<16x16xf32>
    %82 = tpu.matmul %81, %79, %cst_78 {dimension_numbers = #tpu.dot_dimension_numbers<[1], [0], [0], [1], [0, 0, 1, 1], [], []>} : vector<16x8xf32>, vector<8x16xf32>, vector<16x16xf32> -> vector<16x16xf32>
    %83 = arith.addf %76, %82 : vector<16x16xf32>
    %c1_79 = arith.constant 1 : index
    %c0_80 = arith.constant 0 : index
    %c0_81 = arith.constant 0 : index
    %84 = vector.load %arg6[%c1_79, %c0_80, %c0_81] : memref<9x64x16xbf16, #tpu.memory_space<vmem>>, vector<1x64x16xbf16>
    %85 = vector.shape_cast %84 : vector<1x64x16xbf16> to vector<64x16xbf16>
    %cst_82 = arith.constant dense<0.000000e+00> : vector<8x16xf32>
    %86 = tpu.matmul %75, %85, %cst_82 {dimension_numbers = #tpu.dot_dimension_numbers<[1], [0], [0], [1], [0, 0, 1, 1], [], []>} : vector<8x64xbf16>, vector<64x16xbf16>, vector<8x16xf32> -> vector<8x16xf32>
    %c1_83 = arith.constant 1 : index
    %c0_84 = arith.constant 0 : index
    %c0_85 = arith.constant 0 : index
    %87 = vector.load %arg5[%c1_83, %c0_84, %c0_85] : memref<9x16x8xf32, #tpu.memory_space<vmem>>, vector<1x16x8xf32>
    %88 = vector.shape_cast %87 : vector<1x16x8xf32> to vector<16x8xf32>
    %cst_86 = arith.constant dense<0.000000e+00> : vector<16x16xf32>
    %89 = tpu.matmul %88, %86, %cst_86 {dimension_numbers = #tpu.dot_dimension_numbers<[1], [0], [0], [1], [0, 0, 1, 1], [], []>} : vector<16x8xf32>, vector<8x16xf32>, vector<16x16xf32> -> vector<16x16xf32>
    %90 = arith.addf %83, %89 : vector<16x16xf32>
    %c2_87 = arith.constant 2 : index
    %c0_88 = arith.constant 0 : index
    %c0_89 = arith.constant 0 : index
    %91 = vector.load %arg6[%c2_87, %c0_88, %c0_89] : memref<9x64x16xbf16, #tpu.memory_space<vmem>>, vector<1x64x16xbf16>
    %92 = vector.shape_cast %91 : vector<1x64x16xbf16> to vector<64x16xbf16>
    %cst_90 = arith.constant dense<0.000000e+00> : vector<8x16xf32>
    %93 = tpu.matmul %75, %92, %cst_90 {dimension_numbers = #tpu.dot_dimension_numbers<[1], [0], [0], [1], [0, 0, 1, 1], [], []>} : vector<8x64xbf16>, vector<64x16xbf16>, vector<8x16xf32> -> vector<8x16xf32>
    %c2_91 = arith.constant 2 : index
    %c0_92 = arith.constant 0 : index
    %c0_93 = arith.constant 0 : index
    %94 = vector.load %arg5[%c2_91, %c0_92, %c0_93] : memref<9x16x8xf32, #tpu.memory_space<vmem>>, vector<1x16x8xf32>
    %95 = vector.shape_cast %94 : vector<1x16x8xf32> to vector<16x8xf32>
    %cst_94 = arith.constant dense<0.000000e+00> : vector<16x16xf32>
    %96 = tpu.matmul %95, %93, %cst_94 {dimension_numbers = #tpu.dot_dimension_numbers<[1], [0], [0], [1], [0, 0, 1, 1], [], []>} : vector<16x8xf32>, vector<8x16xf32>, vector<16x16xf32> -> vector<16x16xf32>
    %97 = arith.addf %90, %96 : vector<16x16xf32>
    %c3_95 = arith.constant 3 : index
    %c0_96 = arith.constant 0 : index
    %c0_97 = arith.constant 0 : index
    %98 = vector.load %arg6[%c3_95, %c0_96, %c0_97] : memref<9x64x16xbf16, #tpu.memory_space<vmem>>, vector<1x64x16xbf16>
    %99 = vector.shape_cast %98 : vector<1x64x16xbf16> to vector<64x16xbf16>
    %cst_98 = arith.constant dense<0.000000e+00> : vector<8x16xf32>
    %100 = tpu.matmul %75, %99, %cst_98 {dimension_numbers = #tpu.dot_dimension_numbers<[1], [0], [0], [1], [0, 0, 1, 1], [], []>} : vector<8x64xbf16>, vector<64x16xbf16>, vector<8x16xf32> -> vector<8x16xf32>
    %c3_99 = arith.constant 3 : index
    %c0_100 = arith.constant 0 : index
    %c0_101 = arith.constant 0 : index
    %101 = vector.load %arg5[%c3_99, %c0_100, %c0_101] : memref<9x16x8xf32, #tpu.memory_space<vmem>>, vector<1x16x8xf32>
    %102 = vector.shape_cast %101 : vector<1x16x8xf32> to vector<16x8xf32>
    %cst_102 = arith.constant dense<0.000000e+00> : vector<16x16xf32>
    %103 = tpu.matmul %102, %100, %cst_102 {dimension_numbers = #tpu.dot_dimension_numbers<[1], [0], [0], [1], [0, 0, 1, 1], [], []>} : vector<16x8xf32>, vector<8x16xf32>, vector<16x16xf32> -> vector<16x16xf32>
    %104 = arith.addf %97, %103 : vector<16x16xf32>
    %c4_103 = arith.constant 4 : index
    %c0_104 = arith.constant 0 : index
    %c0_105 = arith.constant 0 : index
    %105 = vector.load %arg6[%c4_103, %c0_104, %c0_105] : memref<9x64x16xbf16, #tpu.memory_space<vmem>>, vector<1x64x16xbf16>
    %106 = vector.shape_cast %105 : vector<1x64x16xbf16> to vector<64x16xbf16>
    %cst_106 = arith.constant dense<0.000000e+00> : vector<8x16xf32>
    %107 = tpu.matmul %75, %106, %cst_106 {dimension_numbers = #tpu.dot_dimension_numbers<[1], [0], [0], [1], [0, 0, 1, 1], [], []>} : vector<8x64xbf16>, vector<64x16xbf16>, vector<8x16xf32> -> vector<8x16xf32>
    %c4_107 = arith.constant 4 : index
    %c0_108 = arith.constant 0 : index
    %c0_109 = arith.constant 0 : index
    %108 = vector.load %arg5[%c4_107, %c0_108, %c0_109] : memref<9x16x8xf32, #tpu.memory_space<vmem>>, vector<1x16x8xf32>
    %109 = vector.shape_cast %108 : vector<1x16x8xf32> to vector<16x8xf32>
    %cst_110 = arith.constant dense<0.000000e+00> : vector<16x16xf32>
    %110 = tpu.matmul %109, %107, %cst_110 {dimension_numbers = #tpu.dot_dimension_numbers<[1], [0], [0], [1], [0, 0, 1, 1], [], []>} : vector<16x8xf32>, vector<8x16xf32>, vector<16x16xf32> -> vector<16x16xf32>
    %111 = arith.addf %104, %110 : vector<16x16xf32>
    %c5_111 = arith.constant 5 : index
    %c0_112 = arith.constant 0 : index
    %c0_113 = arith.constant 0 : index
    %112 = vector.load %arg6[%c5_111, %c0_112, %c0_113] : memref<9x64x16xbf16, #tpu.memory_space<vmem>>, vector<1x64x16xbf16>
    %113 = vector.shape_cast %112 : vector<1x64x16xbf16> to vector<64x16xbf16>
    %cst_114 = arith.constant dense<0.000000e+00> : vector<8x16xf32>
    %114 = tpu.matmul %75, %113, %cst_114 {dimension_numbers = #tpu.dot_dimension_numbers<[1], [0], [0], [1], [0, 0, 1, 1], [], []>} : vector<8x64xbf16>, vector<64x16xbf16>, vector<8x16xf32> -> vector<8x16xf32>
    %c5_115 = arith.constant 5 : index
    %c0_116 = arith.constant 0 : index
    %c0_117 = arith.constant 0 : index
    %115 = vector.load %arg5[%c5_115, %c0_116, %c0_117] : memref<9x16x8xf32, #tpu.memory_space<vmem>>, vector<1x16x8xf32>
    %116 = vector.shape_cast %115 : vector<1x16x8xf32> to vector<16x8xf32>
    %cst_118 = arith.constant dense<0.000000e+00> : vector<16x16xf32>
    %117 = tpu.matmul %116, %114, %cst_118 {dimension_numbers = #tpu.dot_dimension_numbers<[1], [0], [0], [1], [0, 0, 1, 1], [], []>} : vector<16x8xf32>, vector<8x16xf32>, vector<16x16xf32> -> vector<16x16xf32>
    %118 = arith.addf %111, %117 : vector<16x16xf32>
    %c6_119 = arith.constant 6 : index
    %c0_120 = arith.constant 0 : index
    %c0_121 = arith.constant 0 : index
    %119 = vector.load %arg6[%c6_119, %c0_120, %c0_121] : memref<9x64x16xbf16, #tpu.memory_space<vmem>>, vector<1x64x16xbf16>
    %120 = vector.shape_cast %119 : vector<1x64x16xbf16> to vector<64x16xbf16>
    %cst_122 = arith.constant dense<0.000000e+00> : vector<8x16xf32>
    %121 = tpu.matmul %75, %120, %cst_122 {dimension_numbers = #tpu.dot_dimension_numbers<[1], [0], [0], [1], [0, 0, 1, 1], [], []>} : vector<8x64xbf16>, vector<64x16xbf16>, vector<8x16xf32> -> vector<8x16xf32>
    %c6_123 = arith.constant 6 : index
    %c0_124 = arith.constant 0 : index
    %c0_125 = arith.constant 0 : index
    %122 = vector.load %arg5[%c6_123, %c0_124, %c0_125] : memref<9x16x8xf32, #tpu.memory_space<vmem>>, vector<1x16x8xf32>
    %123 = vector.shape_cast %122 : vector<1x16x8xf32> to vector<16x8xf32>
    %cst_126 = arith.constant dense<0.000000e+00> : vector<16x16xf32>
    %124 = tpu.matmul %123, %121, %cst_126 {dimension_numbers = #tpu.dot_dimension_numbers<[1], [0], [0], [1], [0, 0, 1, 1], [], []>} : vector<16x8xf32>, vector<8x16xf32>, vector<16x16xf32> -> vector<16x16xf32>
    %125 = arith.addf %118, %124 : vector<16x16xf32>
    %c7_127 = arith.constant 7 : index
    %c0_128 = arith.constant 0 : index
    %c0_129 = arith.constant 0 : index
    %126 = vector.load %arg6[%c7_127, %c0_128, %c0_129] : memref<9x64x16xbf16, #tpu.memory_space<vmem>>, vector<1x64x16xbf16>
    %127 = vector.shape_cast %126 : vector<1x64x16xbf16> to vector<64x16xbf16>
    %cst_130 = arith.constant dense<0.000000e+00> : vector<8x16xf32>
    %128 = tpu.matmul %75, %127, %cst_130 {dimension_numbers = #tpu.dot_dimension_numbers<[1], [0], [0], [1], [0, 0, 1, 1], [], []>} : vector<8x64xbf16>, vector<64x16xbf16>, vector<8x16xf32> -> vector<8x16xf32>
    %c7_131 = arith.constant 7 : index
    %c0_132 = arith.constant 0 : index
    %c0_133 = arith.constant 0 : index
    %129 = vector.load %arg5[%c7_131, %c0_132, %c0_133] : memref<9x16x8xf32, #tpu.memory_space<vmem>>, vector<1x16x8xf32>
    %130 = vector.shape_cast %129 : vector<1x16x8xf32> to vector<16x8xf32>
    %cst_134 = arith.constant dense<0.000000e+00> : vector<16x16xf32>
    %131 = tpu.matmul %130, %128, %cst_134 {dimension_numbers = #tpu.dot_dimension_numbers<[1], [0], [0], [1], [0, 0, 1, 1], [], []>} : vector<16x8xf32>, vector<8x16xf32>, vector<16x16xf32> -> vector<16x16xf32>
    %132 = arith.addf %125, %131 : vector<16x16xf32>
    %c8_135 = arith.constant 8 : index
    %c0_136 = arith.constant 0 : index
    %c0_137 = arith.constant 0 : index
    %133 = vector.load %arg6[%c8_135, %c0_136, %c0_137] : memref<9x64x16xbf16, #tpu.memory_space<vmem>>, vector<1x64x16xbf16>
    %134 = vector.shape_cast %133 : vector<1x64x16xbf16> to vector<64x16xbf16>
    %cst_138 = arith.constant dense<0.000000e+00> : vector<8x16xf32>
    %135 = tpu.matmul %75, %134, %cst_138 {dimension_numbers = #tpu.dot_dimension_numbers<[1], [0], [0], [1], [0, 0, 1, 1], [], []>} : vector<8x64xbf16>, vector<64x16xbf16>, vector<8x16xf32> -> vector<8x16xf32>
    %c8_139 = arith.constant 8 : index
    %c0_140 = arith.constant 0 : index
    %c0_141 = arith.constant 0 : index
    %136 = vector.load %arg5[%c8_139, %c0_140, %c0_141] : memref<9x16x8xf32, #tpu.memory_space<vmem>>, vector<1x16x8xf32>
    %137 = vector.shape_cast %136 : vector<1x16x8xf32> to vector<16x8xf32>
    %cst_142 = arith.constant dense<0.000000e+00> : vector<16x16xf32>
    %138 = tpu.matmul %137, %135, %cst_142 {dimension_numbers = #tpu.dot_dimension_numbers<[1], [0], [0], [1], [0, 0, 1, 1], [], []>} : vector<16x8xf32>, vector<8x16xf32>, vector<16x16xf32> -> vector<16x16xf32>
    %139 = arith.addf %132, %138 : vector<16x16xf32>
    %c0_143 = arith.constant 0 : index
    %c0_144 = arith.constant 0 : index
    %140 = vector.load %arg7[%c0_143, %c0_144] : memref<16x1xf32, #tpu.memory_space<vmem>>, vector<16x1xf32>
    %141 = vector.broadcast %140 : vector<16x1xf32> to vector<16x16xf32>
    %142 = arith.addf %139, %141 : vector<16x16xf32>
    %cst_145 = arith.constant 0.000000e+00 : f32
    %143 = vector.broadcast %cst_145 : f32 to vector<16x16xf32>
    %144 = arith.cmpf ogt, %142, %143 : vector<16x16xf32>
    %cst_146 = arith.constant 2.000000e-01 : f32
    %145 = vector.broadcast %cst_146 : f32 to vector<16x16xf32>
    %146 = arith.mulf %145, %142 : vector<16x16xf32>
    %147 = arith.select %144, %142, %146 : vector<16x16xi1>, vector<16x16xf32>
    %148 = arith.truncf %147 : vector<16x16xf32> to vector<16x16xbf16>
    %cst_147 = arith.constant 0.000000e+00 : f32
    %149 = vector.broadcast %cst_147 : f32 to vector<8x64xf32>
    %c0_148 = arith.constant 0 : index
    %c0_149 = arith.constant 0 : index
    %c0_150 = arith.constant 0 : index
    %150 = vector.load %arg9[%c0_148, %c0_149, %c0_150] : memref<16x16x64xbf16, #tpu.memory_space<vmem>>, vector<1x16x64xbf16>
    %151 = vector.shape_cast %150 : vector<1x16x64xbf16> to vector<16x64xbf16>
    %cst_151 = arith.constant dense<0.000000e+00> : vector<16x64xf32>
    %152 = tpu.matmul %148, %151, %cst_151 {dimension_numbers = #tpu.dot_dimension_numbers<[1], [0], [0], [1], [0, 0, 1, 1], [], []>} : vector<16x16xbf16>, vector<16x64xbf16>, vector<16x64xf32> -> vector<16x64xf32>
    %c0_152 = arith.constant 0 : index
    %c0_153 = arith.constant 0 : index
    %c0_154 = arith.constant 0 : index
    %153 = vector.load %arg8[%c0_152, %c0_153, %c0_154] : memref<16x8x16xf32, #tpu.memory_space<vmem>>, vector<1x8x16xf32>
    %154 = vector.shape_cast %153 : vector<1x8x16xf32> to vector<8x16xf32>
    %cst_155 = arith.constant dense<0.000000e+00> : vector<8x64xf32>
    %155 = tpu.matmul %154, %152, %cst_155 {dimension_numbers = #tpu.dot_dimension_numbers<[1], [0], [0], [1], [0, 0, 1, 1], [], []>} : vector<8x16xf32>, vector<16x64xf32>, vector<8x64xf32> -> vector<8x64xf32>
    %156 = arith.addf %149, %155 : vector<8x64xf32>
    %c1_156 = arith.constant 1 : index
    %c0_157 = arith.constant 0 : index
    %c0_158 = arith.constant 0 : index
    %157 = vector.load %arg9[%c1_156, %c0_157, %c0_158] : memref<16x16x64xbf16, #tpu.memory_space<vmem>>, vector<1x16x64xbf16>
    %158 = vector.shape_cast %157 : vector<1x16x64xbf16> to vector<16x64xbf16>
    %cst_159 = arith.constant dense<0.000000e+00> : vector<16x64xf32>
    %159 = tpu.matmul %148, %158, %cst_159 {dimension_numbers = #tpu.dot_dimension_numbers<[1], [0], [0], [1], [0, 0, 1, 1], [], []>} : vector<16x16xbf16>, vector<16x64xbf16>, vector<16x64xf32> -> vector<16x64xf32>
    %c1_160 = arith.constant 1 : index
    %c0_161 = arith.constant 0 : index
    %c0_162 = arith.constant 0 : index
    %160 = vector.load %arg8[%c1_160, %c0_161, %c0_162] : memref<16x8x16xf32, #tpu.memory_space<vmem>>, vector<1x8x16xf32>
    %161 = vector.shape_cast %160 : vector<1x8x16xf32> to vector<8x16xf32>
    %cst_163 = arith.constant dense<0.000000e+00> : vector<8x64xf32>
    %162 = tpu.matmul %161, %159, %cst_163 {dimension_numbers = #tpu.dot_dimension_numbers<[1], [0], [0], [1], [0, 0, 1, 1], [], []>} : vector<8x16xf32>, vector<16x64xf32>, vector<8x64xf32> -> vector<8x64xf32>
    %163 = arith.addf %156, %162 : vector<8x64xf32>
    %c2_164 = arith.constant 2 : index
    %c0_165 = arith.constant 0 : index
    %c0_166 = arith.constant 0 : index
    %164 = vector.load %arg9[%c2_164, %c0_165, %c0_166] : memref<16x16x64xbf16, #tpu.memory_space<vmem>>, vector<1x16x64xbf16>
    %165 = vector.shape_cast %164 : vector<1x16x64xbf16> to vector<16x64xbf16>
    %cst_167 = arith.constant dense<0.000000e+00> : vector<16x64xf32>
    %166 = tpu.matmul %148, %165, %cst_167 {dimension_numbers = #tpu.dot_dimension_numbers<[1], [0], [0], [1], [0, 0, 1, 1], [], []>} : vector<16x16xbf16>, vector<16x64xbf16>, vector<16x64xf32> -> vector<16x64xf32>
    %c2_168 = arith.constant 2 : index
    %c0_169 = arith.constant 0 : index
    %c0_170 = arith.constant 0 : index
    %167 = vector.load %arg8[%c2_168, %c0_169, %c0_170] : memref<16x8x16xf32, #tpu.memory_space<vmem>>, vector<1x8x16xf32>
    %168 = vector.shape_cast %167 : vector<1x8x16xf32> to vector<8x16xf32>
    %cst_171 = arith.constant dense<0.000000e+00> : vector<8x64xf32>
    %169 = tpu.matmul %168, %166, %cst_171 {dimension_numbers = #tpu.dot_dimension_numbers<[1], [0], [0], [1], [0, 0, 1, 1], [], []>} : vector<8x16xf32>, vector<16x64xf32>, vector<8x64xf32> -> vector<8x64xf32>
    %170 = arith.addf %163, %169 : vector<8x64xf32>
    %c3_172 = arith.constant 3 : index
    %c0_173 = arith.constant 0 : index
    %c0_174 = arith.constant 0 : index
    %171 = vector.load %arg9[%c3_172, %c0_173, %c0_174] : memref<16x16x64xbf16, #tpu.memory_space<vmem>>, vector<1x16x64xbf16>
    %172 = vector.shape_cast %171 : vector<1x16x64xbf16> to vector<16x64xbf16>
    %cst_175 = arith.constant dense<0.000000e+00> : vector<16x64xf32>
    %173 = tpu.matmul %148, %172, %cst_175 {dimension_numbers = #tpu.dot_dimension_numbers<[1], [0], [0], [1], [0, 0, 1, 1], [], []>} : vector<16x16xbf16>, vector<16x64xbf16>, vector<16x64xf32> -> vector<16x64xf32>
    %c3_176 = arith.constant 3 : index
    %c0_177 = arith.constant 0 : index
    %c0_178 = arith.constant 0 : index
    %174 = vector.load %arg8[%c3_176, %c0_177, %c0_178] : memref<16x8x16xf32, #tpu.memory_space<vmem>>, vector<1x8x16xf32>
    %175 = vector.shape_cast %174 : vector<1x8x16xf32> to vector<8x16xf32>
    %cst_179 = arith.constant dense<0.000000e+00> : vector<8x64xf32>
    %176 = tpu.matmul %175, %173, %cst_179 {dimension_numbers = #tpu.dot_dimension_numbers<[1], [0], [0], [1], [0, 0, 1, 1], [], []>} : vector<8x16xf32>, vector<16x64xf32>, vector<8x64xf32> -> vector<8x64xf32>
    %177 = arith.addf %170, %176 : vector<8x64xf32>
    %c4_180 = arith.constant 4 : index
    %c0_181 = arith.constant 0 : index
    %c0_182 = arith.constant 0 : index
    %178 = vector.load %arg9[%c4_180, %c0_181, %c0_182] : memref<16x16x64xbf16, #tpu.memory_space<vmem>>, vector<1x16x64xbf16>
    %179 = vector.shape_cast %178 : vector<1x16x64xbf16> to vector<16x64xbf16>
    %cst_183 = arith.constant dense<0.000000e+00> : vector<16x64xf32>
    %180 = tpu.matmul %148, %179, %cst_183 {dimension_numbers = #tpu.dot_dimension_numbers<[1], [0], [0], [1], [0, 0, 1, 1], [], []>} : vector<16x16xbf16>, vector<16x64xbf16>, vector<16x64xf32> -> vector<16x64xf32>
    %c4_184 = arith.constant 4 : index
    %c0_185 = arith.constant 0 : index
    %c0_186 = arith.constant 0 : index
    %181 = vector.load %arg8[%c4_184, %c0_185, %c0_186] : memref<16x8x16xf32, #tpu.memory_space<vmem>>, vector<1x8x16xf32>
    %182 = vector.shape_cast %181 : vector<1x8x16xf32> to vector<8x16xf32>
    %cst_187 = arith.constant dense<0.000000e+00> : vector<8x64xf32>
    %183 = tpu.matmul %182, %180, %cst_187 {dimension_numbers = #tpu.dot_dimension_numbers<[1], [0], [0], [1], [0, 0, 1, 1], [], []>} : vector<8x16xf32>, vector<16x64xf32>, vector<8x64xf32> -> vector<8x64xf32>
    %184 = arith.addf %177, %183 : vector<8x64xf32>
    %c5_188 = arith.constant 5 : index
    %c0_189 = arith.constant 0 : index
    %c0_190 = arith.constant 0 : index
    %185 = vector.load %arg9[%c5_188, %c0_189, %c0_190] : memref<16x16x64xbf16, #tpu.memory_space<vmem>>, vector<1x16x64xbf16>
    %186 = vector.shape_cast %185 : vector<1x16x64xbf16> to vector<16x64xbf16>
    %cst_191 = arith.constant dense<0.000000e+00> : vector<16x64xf32>
    %187 = tpu.matmul %148, %186, %cst_191 {dimension_numbers = #tpu.dot_dimension_numbers<[1], [0], [0], [1], [0, 0, 1, 1], [], []>} : vector<16x16xbf16>, vector<16x64xbf16>, vector<16x64xf32> -> vector<16x64xf32>
    %c5_192 = arith.constant 5 : index
    %c0_193 = arith.constant 0 : index
    %c0_194 = arith.constant 0 : index
    %188 = vector.load %arg8[%c5_192, %c0_193, %c0_194] : memref<16x8x16xf32, #tpu.memory_space<vmem>>, vector<1x8x16xf32>
    %189 = vector.shape_cast %188 : vector<1x8x16xf32> to vector<8x16xf32>
    %cst_195 = arith.constant dense<0.000000e+00> : vector<8x64xf32>
    %190 = tpu.matmul %189, %187, %cst_195 {dimension_numbers = #tpu.dot_dimension_numbers<[1], [0], [0], [1], [0, 0, 1, 1], [], []>} : vector<8x16xf32>, vector<16x64xf32>, vector<8x64xf32> -> vector<8x64xf32>
    %191 = arith.addf %184, %190 : vector<8x64xf32>
    %c6_196 = arith.constant 6 : index
    %c0_197 = arith.constant 0 : index
    %c0_198 = arith.constant 0 : index
    %192 = vector.load %arg9[%c6_196, %c0_197, %c0_198] : memref<16x16x64xbf16, #tpu.memory_space<vmem>>, vector<1x16x64xbf16>
    %193 = vector.shape_cast %192 : vector<1x16x64xbf16> to vector<16x64xbf16>
    %cst_199 = arith.constant dense<0.000000e+00> : vector<16x64xf32>
    %194 = tpu.matmul %148, %193, %cst_199 {dimension_numbers = #tpu.dot_dimension_numbers<[1], [0], [0], [1], [0, 0, 1, 1], [], []>} : vector<16x16xbf16>, vector<16x64xbf16>, vector<16x64xf32> -> vector<16x64xf32>
    %c6_200 = arith.constant 6 : index
    %c0_201 = arith.constant 0 : index
    %c0_202 = arith.constant 0 : index
    %195 = vector.load %arg8[%c6_200, %c0_201, %c0_202] : memref<16x8x16xf32, #tpu.memory_space<vmem>>, vector<1x8x16xf32>
    %196 = vector.shape_cast %195 : vector<1x8x16xf32> to vector<8x16xf32>
    %cst_203 = arith.constant dense<0.000000e+00> : vector<8x64xf32>
    %197 = tpu.matmul %196, %194, %cst_203 {dimension_numbers = #tpu.dot_dimension_numbers<[1], [0], [0], [1], [0, 0, 1, 1], [], []>} : vector<8x16xf32>, vector<16x64xf32>, vector<8x64xf32> -> vector<8x64xf32>
    %198 = arith.addf %191, %197 : vector<8x64xf32>
    %c7_204 = arith.constant 7 : index
    %c0_205 = arith.constant 0 : index
    %c0_206 = arith.constant 0 : index
    %199 = vector.load %arg9[%c7_204, %c0_205, %c0_206] : memref<16x16x64xbf16, #tpu.memory_space<vmem>>, vector<1x16x64xbf16>
    %200 = vector.shape_cast %199 : vector<1x16x64xbf16> to vector<16x64xbf16>
    %cst_207 = arith.constant dense<0.000000e+00> : vector<16x64xf32>
    %201 = tpu.matmul %148, %200, %cst_207 {dimension_numbers = #tpu.dot_dimension_numbers<[1], [0], [0], [1], [0, 0, 1, 1], [], []>} : vector<16x16xbf16>, vector<16x64xbf16>, vector<16x64xf32> -> vector<16x64xf32>
    %c7_208 = arith.constant 7 : index
    %c0_209 = arith.constant 0 : index
    %c0_210 = arith.constant 0 : index
    %202 = vector.load %arg8[%c7_208, %c0_209, %c0_210] : memref<16x8x16xf32, #tpu.memory_space<vmem>>, vector<1x8x16xf32>
    %203 = vector.shape_cast %202 : vector<1x8x16xf32> to vector<8x16xf32>
    %cst_211 = arith.constant dense<0.000000e+00> : vector<8x64xf32>
    %204 = tpu.matmul %203, %201, %cst_211 {dimension_numbers = #tpu.dot_dimension_numbers<[1], [0], [0], [1], [0, 0, 1, 1], [], []>} : vector<8x16xf32>, vector<16x64xf32>, vector<8x64xf32> -> vector<8x64xf32>
    %205 = arith.addf %198, %204 : vector<8x64xf32>
    %c8_212 = arith.constant 8 : index
    %c0_213 = arith.constant 0 : index
    %c0_214 = arith.constant 0 : index
    %206 = vector.load %arg9[%c8_212, %c0_213, %c0_214] : memref<16x16x64xbf16, #tpu.memory_space<vmem>>, vector<1x16x64xbf16>
    %207 = vector.shape_cast %206 : vector<1x16x64xbf16> to vector<16x64xbf16>
    %cst_215 = arith.constant dense<0.000000e+00> : vector<16x64xf32>
    %208 = tpu.matmul %148, %207, %cst_215 {dimension_numbers = #tpu.dot_dimension_numbers<[1], [0], [0], [1], [0, 0, 1, 1], [], []>} : vector<16x16xbf16>, vector<16x64xbf16>, vector<16x64xf32> -> vector<16x64xf32>
    %c8_216 = arith.constant 8 : index
    %c0_217 = arith.constant 0 : index
    %c0_218 = arith.constant 0 : index
    %209 = vector.load %arg8[%c8_216, %c0_217, %c0_218] : memref<16x8x16xf32, #tpu.memory_space<vmem>>, vector<1x8x16xf32>
    %210 = vector.shape_cast %209 : vector<1x8x16xf32> to vector<8x16xf32>
    %cst_219 = arith.constant dense<0.000000e+00> : vector<8x64xf32>
    %211 = tpu.matmul %210, %208, %cst_219 {dimension_numbers = #tpu.dot_dimension_numbers<[1], [0], [0], [1], [0, 0, 1, 1], [], []>} : vector<8x16xf32>, vector<16x64xf32>, vector<8x64xf32> -> vector<8x64xf32>
    %212 = arith.addf %205, %211 : vector<8x64xf32>
    %c9 = arith.constant 9 : index
    %c0_220 = arith.constant 0 : index
    %c0_221 = arith.constant 0 : index
    %213 = vector.load %arg9[%c9, %c0_220, %c0_221] : memref<16x16x64xbf16, #tpu.memory_space<vmem>>, vector<1x16x64xbf16>
    %214 = vector.shape_cast %213 : vector<1x16x64xbf16> to vector<16x64xbf16>
    %cst_222 = arith.constant dense<0.000000e+00> : vector<16x64xf32>
    %215 = tpu.matmul %148, %214, %cst_222 {dimension_numbers = #tpu.dot_dimension_numbers<[1], [0], [0], [1], [0, 0, 1, 1], [], []>} : vector<16x16xbf16>, vector<16x64xbf16>, vector<16x64xf32> -> vector<16x64xf32>
    %c9_223 = arith.constant 9 : index
    %c0_224 = arith.constant 0 : index
    %c0_225 = arith.constant 0 : index
    %216 = vector.load %arg8[%c9_223, %c0_224, %c0_225] : memref<16x8x16xf32, #tpu.memory_space<vmem>>, vector<1x8x16xf32>
    %217 = vector.shape_cast %216 : vector<1x8x16xf32> to vector<8x16xf32>
    %cst_226 = arith.constant dense<0.000000e+00> : vector<8x64xf32>
    %218 = tpu.matmul %217, %215, %cst_226 {dimension_numbers = #tpu.dot_dimension_numbers<[1], [0], [0], [1], [0, 0, 1, 1], [], []>} : vector<8x16xf32>, vector<16x64xf32>, vector<8x64xf32> -> vector<8x64xf32>
    %219 = arith.addf %212, %218 : vector<8x64xf32>
    %c10 = arith.constant 10 : index
    %c0_227 = arith.constant 0 : index
    %c0_228 = arith.constant 0 : index
    %220 = vector.load %arg9[%c10, %c0_227, %c0_228] : memref<16x16x64xbf16, #tpu.memory_space<vmem>>, vector<1x16x64xbf16>
    %221 = vector.shape_cast %220 : vector<1x16x64xbf16> to vector<16x64xbf16>
    %cst_229 = arith.constant dense<0.000000e+00> : vector<16x64xf32>
    %222 = tpu.matmul %148, %221, %cst_229 {dimension_numbers = #tpu.dot_dimension_numbers<[1], [0], [0], [1], [0, 0, 1, 1], [], []>} : vector<16x16xbf16>, vector<16x64xbf16>, vector<16x64xf32> -> vector<16x64xf32>
    %c10_230 = arith.constant 10 : index
    %c0_231 = arith.constant 0 : index
    %c0_232 = arith.constant 0 : index
    %223 = vector.load %arg8[%c10_230, %c0_231, %c0_232] : memref<16x8x16xf32, #tpu.memory_space<vmem>>, vector<1x8x16xf32>
    %224 = vector.shape_cast %223 : vector<1x8x16xf32> to vector<8x16xf32>
    %cst_233 = arith.constant dense<0.000000e+00> : vector<8x64xf32>
    %225 = tpu.matmul %224, %222, %cst_233 {dimension_numbers = #tpu.dot_dimension_numbers<[1], [0], [0], [1], [0, 0, 1, 1], [], []>} : vector<8x16xf32>, vector<16x64xf32>, vector<8x64xf32> -> vector<8x64xf32>
    %226 = arith.addf %219, %225 : vector<8x64xf32>
    %c11 = arith.constant 11 : index
    %c0_234 = arith.constant 0 : index
    %c0_235 = arith.constant 0 : index
    %227 = vector.load %arg9[%c11, %c0_234, %c0_235] : memref<16x16x64xbf16, #tpu.memory_space<vmem>>, vector<1x16x64xbf16>
    %228 = vector.shape_cast %227 : vector<1x16x64xbf16> to vector<16x64xbf16>
    %cst_236 = arith.constant dense<0.000000e+00> : vector<16x64xf32>
    %229 = tpu.matmul %148, %228, %cst_236 {dimension_numbers = #tpu.dot_dimension_numbers<[1], [0], [0], [1], [0, 0, 1, 1], [], []>} : vector<16x16xbf16>, vector<16x64xbf16>, vector<16x64xf32> -> vector<16x64xf32>
    %c11_237 = arith.constant 11 : index
    %c0_238 = arith.constant 0 : index
    %c0_239 = arith.constant 0 : index
    %230 = vector.load %arg8[%c11_237, %c0_238, %c0_239] : memref<16x8x16xf32, #tpu.memory_space<vmem>>, vector<1x8x16xf32>
    %231 = vector.shape_cast %230 : vector<1x8x16xf32> to vector<8x16xf32>
    %cst_240 = arith.constant dense<0.000000e+00> : vector<8x64xf32>
    %232 = tpu.matmul %231, %229, %cst_240 {dimension_numbers = #tpu.dot_dimension_numbers<[1], [0], [0], [1], [0, 0, 1, 1], [], []>} : vector<8x16xf32>, vector<16x64xf32>, vector<8x64xf32> -> vector<8x64xf32>
    %233 = arith.addf %226, %232 : vector<8x64xf32>
    %c12 = arith.constant 12 : index
    %c0_241 = arith.constant 0 : index
    %c0_242 = arith.constant 0 : index
    %234 = vector.load %arg9[%c12, %c0_241, %c0_242] : memref<16x16x64xbf16, #tpu.memory_space<vmem>>, vector<1x16x64xbf16>
    %235 = vector.shape_cast %234 : vector<1x16x64xbf16> to vector<16x64xbf16>
    %cst_243 = arith.constant dense<0.000000e+00> : vector<16x64xf32>
    %236 = tpu.matmul %148, %235, %cst_243 {dimension_numbers = #tpu.dot_dimension_numbers<[1], [0], [0], [1], [0, 0, 1, 1], [], []>} : vector<16x16xbf16>, vector<16x64xbf16>, vector<16x64xf32> -> vector<16x64xf32>
    %c12_244 = arith.constant 12 : index
    %c0_245 = arith.constant 0 : index
    %c0_246 = arith.constant 0 : index
    %237 = vector.load %arg8[%c12_244, %c0_245, %c0_246] : memref<16x8x16xf32, #tpu.memory_space<vmem>>, vector<1x8x16xf32>
    %238 = vector.shape_cast %237 : vector<1x8x16xf32> to vector<8x16xf32>
    %cst_247 = arith.constant dense<0.000000e+00> : vector<8x64xf32>
    %239 = tpu.matmul %238, %236, %cst_247 {dimension_numbers = #tpu.dot_dimension_numbers<[1], [0], [0], [1], [0, 0, 1, 1], [], []>} : vector<8x16xf32>, vector<16x64xf32>, vector<8x64xf32> -> vector<8x64xf32>
    %240 = arith.addf %233, %239 : vector<8x64xf32>
    %c13 = arith.constant 13 : index
    %c0_248 = arith.constant 0 : index
    %c0_249 = arith.constant 0 : index
    %241 = vector.load %arg9[%c13, %c0_248, %c0_249] : memref<16x16x64xbf16, #tpu.memory_space<vmem>>, vector<1x16x64xbf16>
    %242 = vector.shape_cast %241 : vector<1x16x64xbf16> to vector<16x64xbf16>
    %cst_250 = arith.constant dense<0.000000e+00> : vector<16x64xf32>
    %243 = tpu.matmul %148, %242, %cst_250 {dimension_numbers = #tpu.dot_dimension_numbers<[1], [0], [0], [1], [0, 0, 1, 1], [], []>} : vector<16x16xbf16>, vector<16x64xbf16>, vector<16x64xf32> -> vector<16x64xf32>
    %c13_251 = arith.constant 13 : index
    %c0_252 = arith.constant 0 : index
    %c0_253 = arith.constant 0 : index
    %244 = vector.load %arg8[%c13_251, %c0_252, %c0_253] : memref<16x8x16xf32, #tpu.memory_space<vmem>>, vector<1x8x16xf32>
    %245 = vector.shape_cast %244 : vector<1x8x16xf32> to vector<8x16xf32>
    %cst_254 = arith.constant dense<0.000000e+00> : vector<8x64xf32>
    %246 = tpu.matmul %245, %243, %cst_254 {dimension_numbers = #tpu.dot_dimension_numbers<[1], [0], [0], [1], [0, 0, 1, 1], [], []>} : vector<8x16xf32>, vector<16x64xf32>, vector<8x64xf32> -> vector<8x64xf32>
    %247 = arith.addf %240, %246 : vector<8x64xf32>
    %c14 = arith.constant 14 : index
    %c0_255 = arith.constant 0 : index
    %c0_256 = arith.constant 0 : index
    %248 = vector.load %arg9[%c14, %c0_255, %c0_256] : memref<16x16x64xbf16, #tpu.memory_space<vmem>>, vector<1x16x64xbf16>
    %249 = vector.shape_cast %248 : vector<1x16x64xbf16> to vector<16x64xbf16>
    %cst_257 = arith.constant dense<0.000000e+00> : vector<16x64xf32>
    %250 = tpu.matmul %148, %249, %cst_257 {dimension_numbers = #tpu.dot_dimension_numbers<[1], [0], [0], [1], [0, 0, 1, 1], [], []>} : vector<16x16xbf16>, vector<16x64xbf16>, vector<16x64xf32> -> vector<16x64xf32>
    %c14_258 = arith.constant 14 : index
    %c0_259 = arith.constant 0 : index
    %c0_260 = arith.constant 0 : index
    %251 = vector.load %arg8[%c14_258, %c0_259, %c0_260] : memref<16x8x16xf32, #tpu.memory_space<vmem>>, vector<1x8x16xf32>
    %252 = vector.shape_cast %251 : vector<1x8x16xf32> to vector<8x16xf32>
    %cst_261 = arith.constant dense<0.000000e+00> : vector<8x64xf32>
    %253 = tpu.matmul %252, %250, %cst_261 {dimension_numbers = #tpu.dot_dimension_numbers<[1], [0], [0], [1], [0, 0, 1, 1], [], []>} : vector<8x16xf32>, vector<16x64xf32>, vector<8x64xf32> -> vector<8x64xf32>
    %254 = arith.addf %247, %253 : vector<8x64xf32>
    %c15 = arith.constant 15 : index
    %c0_262 = arith.constant 0 : index
    %c0_263 = arith.constant 0 : index
    %255 = vector.load %arg9[%c15, %c0_262, %c0_263] : memref<16x16x64xbf16, #tpu.memory_space<vmem>>, vector<1x16x64xbf16>
    %256 = vector.shape_cast %255 : vector<1x16x64xbf16> to vector<16x64xbf16>
    %cst_264 = arith.constant dense<0.000000e+00> : vector<16x64xf32>
    %257 = tpu.matmul %148, %256, %cst_264 {dimension_numbers = #tpu.dot_dimension_numbers<[1], [0], [0], [1], [0, 0, 1, 1], [], []>} : vector<16x16xbf16>, vector<16x64xbf16>, vector<16x64xf32> -> vector<16x64xf32>
    %c15_265 = arith.constant 15 : index
    %c0_266 = arith.constant 0 : index
    %c0_267 = arith.constant 0 : index
    %258 = vector.load %arg8[%c15_265, %c0_266, %c0_267] : memref<16x8x16xf32, #tpu.memory_space<vmem>>, vector<1x8x16xf32>
    %259 = vector.shape_cast %258 : vector<1x8x16xf32> to vector<8x16xf32>
    %cst_268 = arith.constant dense<0.000000e+00> : vector<8x64xf32>
    %260 = tpu.matmul %259, %257, %cst_268 {dimension_numbers = #tpu.dot_dimension_numbers<[1], [0], [0], [1], [0, 0, 1, 1], [], []>} : vector<8x16xf32>, vector<16x64xf32>, vector<8x64xf32> -> vector<8x64xf32>
    %261 = arith.addf %254, %260 : vector<8x64xf32>
    %c0_269 = arith.constant 0 : index
    %c0_270 = arith.constant 0 : index
    %262 = vector.load %arg10[%c0_269, %c0_270] : memref<8x1xf32, #tpu.memory_space<vmem>>, vector<8x1xf32>
    %263 = vector.broadcast %262 : vector<8x1xf32> to vector<8x64xf32>
    %264 = arith.addf %261, %263 : vector<8x64xf32>
    %cst_271 = arith.constant 0.000000e+00 : f32
    %265 = vector.broadcast %cst_271 : f32 to vector<8x64xf32>
    %266 = arith.maximumf %264, %265 : vector<8x64xf32>
    %267 = arith.truncf %266 : vector<8x64xf32> to vector<8x64xbf16>
    %cst_272 = arith.constant 0.000000e+00 : f32
    %268 = vector.broadcast %cst_272 : f32 to vector<3x256xf32>
    %c0_273 = arith.constant 0 : index
    %c0_274 = arith.constant 0 : index
    %c0_275 = arith.constant 0 : index
    %269 = vector.load %arg12[%c0_273, %c0_274, %c0_275] : memref<16x64x256xbf16, #tpu.memory_space<vmem>>, vector<1x64x256xbf16>
    %270 = vector.shape_cast %269 : vector<1x64x256xbf16> to vector<64x256xbf16>
    %cst_276 = arith.constant dense<0.000000e+00> : vector<8x256xf32>
    %271 = tpu.matmul %267, %270, %cst_276 {dimension_numbers = #tpu.dot_dimension_numbers<[1], [0], [0], [1], [0, 0, 1, 1], [], []>} : vector<8x64xbf16>, vector<64x256xbf16>, vector<8x256xf32> -> vector<8x256xf32>
    %c0_277 = arith.constant 0 : index
    %c0_278 = arith.constant 0 : index
    %c0_279 = arith.constant 0 : index
    %272 = vector.load %arg11[%c0_277, %c0_278, %c0_279] : memref<16x3x8xf32, #tpu.memory_space<vmem>>, vector<1x3x8xf32>
    %273 = vector.shape_cast %272 : vector<1x3x8xf32> to vector<3x8xf32>
    %cst_280 = arith.constant dense<0.000000e+00> : vector<3x256xf32>
    %274 = tpu.matmul %273, %271, %cst_280 {dimension_numbers = #tpu.dot_dimension_numbers<[1], [0], [0], [1], [0, 0, 1, 1], [], []>} : vector<3x8xf32>, vector<8x256xf32>, vector<3x256xf32> -> vector<3x256xf32>
    %275 = arith.addf %268, %274 : vector<3x256xf32>
    %c1_281 = arith.constant 1 : index
    %c0_282 = arith.constant 0 : index
    %c0_283 = arith.constant 0 : index
    %276 = vector.load %arg12[%c1_281, %c0_282, %c0_283] : memref<16x64x256xbf16, #tpu.memory_space<vmem>>, vector<1x64x256xbf16>
    %277 = vector.shape_cast %276 : vector<1x64x256xbf16> to vector<64x256xbf16>
    %cst_284 = arith.constant dense<0.000000e+00> : vector<8x256xf32>
    %278 = tpu.matmul %267, %277, %cst_284 {dimension_numbers = #tpu.dot_dimension_numbers<[1], [0], [0], [1], [0, 0, 1, 1], [], []>} : vector<8x64xbf16>, vector<64x256xbf16>, vector<8x256xf32> -> vector<8x256xf32>
    %c1_285 = arith.constant 1 : index
    %c0_286 = arith.constant 0 : index
    %c0_287 = arith.constant 0 : index
    %279 = vector.load %arg11[%c1_285, %c0_286, %c0_287] : memref<16x3x8xf32, #tpu.memory_space<vmem>>, vector<1x3x8xf32>
    %280 = vector.shape_cast %279 : vector<1x3x8xf32> to vector<3x8xf32>
    %cst_288 = arith.constant dense<0.000000e+00> : vector<3x256xf32>
    %281 = tpu.matmul %280, %278, %cst_288 {dimension_numbers = #tpu.dot_dimension_numbers<[1], [0], [0], [1], [0, 0, 1, 1], [], []>} : vector<3x8xf32>, vector<8x256xf32>, vector<3x256xf32> -> vector<3x256xf32>
    %282 = arith.addf %275, %281 : vector<3x256xf32>
    %c2_289 = arith.constant 2 : index
    %c0_290 = arith.constant 0 : index
    %c0_291 = arith.constant 0 : index
    %283 = vector.load %arg12[%c2_289, %c0_290, %c0_291] : memref<16x64x256xbf16, #tpu.memory_space<vmem>>, vector<1x64x256xbf16>
    %284 = vector.shape_cast %283 : vector<1x64x256xbf16> to vector<64x256xbf16>
    %cst_292 = arith.constant dense<0.000000e+00> : vector<8x256xf32>
    %285 = tpu.matmul %267, %284, %cst_292 {dimension_numbers = #tpu.dot_dimension_numbers<[1], [0], [0], [1], [0, 0, 1, 1], [], []>} : vector<8x64xbf16>, vector<64x256xbf16>, vector<8x256xf32> -> vector<8x256xf32>
    %c2_293 = arith.constant 2 : index
    %c0_294 = arith.constant 0 : index
    %c0_295 = arith.constant 0 : index
    %286 = vector.load %arg11[%c2_293, %c0_294, %c0_295] : memref<16x3x8xf32, #tpu.memory_space<vmem>>, vector<1x3x8xf32>
    %287 = vector.shape_cast %286 : vector<1x3x8xf32> to vector<3x8xf32>
    %cst_296 = arith.constant dense<0.000000e+00> : vector<3x256xf32>
    %288 = tpu.matmul %287, %285, %cst_296 {dimension_numbers = #tpu.dot_dimension_numbers<[1], [0], [0], [1], [0, 0, 1, 1], [], []>} : vector<3x8xf32>, vector<8x256xf32>, vector<3x256xf32> -> vector<3x256xf32>
    %289 = arith.addf %282, %288 : vector<3x256xf32>
    %c3_297 = arith.constant 3 : index
    %c0_298 = arith.constant 0 : index
    %c0_299 = arith.constant 0 : index
    %290 = vector.load %arg12[%c3_297, %c0_298, %c0_299] : memref<16x64x256xbf16, #tpu.memory_space<vmem>>, vector<1x64x256xbf16>
    %291 = vector.shape_cast %290 : vector<1x64x256xbf16> to vector<64x256xbf16>
    %cst_300 = arith.constant dense<0.000000e+00> : vector<8x256xf32>
    %292 = tpu.matmul %267, %291, %cst_300 {dimension_numbers = #tpu.dot_dimension_numbers<[1], [0], [0], [1], [0, 0, 1, 1], [], []>} : vector<8x64xbf16>, vector<64x256xbf16>, vector<8x256xf32> -> vector<8x256xf32>
    %c3_301 = arith.constant 3 : index
    %c0_302 = arith.constant 0 : index
    %c0_303 = arith.constant 0 : index
    %293 = vector.load %arg11[%c3_301, %c0_302, %c0_303] : memref<16x3x8xf32, #tpu.memory_space<vmem>>, vector<1x3x8xf32>
    %294 = vector.shape_cast %293 : vector<1x3x8xf32> to vector<3x8xf32>
    %cst_304 = arith.constant dense<0.000000e+00> : vector<3x256xf32>
    %295 = tpu.matmul %294, %292, %cst_304 {dimension_numbers = #tpu.dot_dimension_numbers<[1], [0], [0], [1], [0, 0, 1, 1], [], []>} : vector<3x8xf32>, vector<8x256xf32>, vector<3x256xf32> -> vector<3x256xf32>
    %296 = arith.addf %289, %295 : vector<3x256xf32>
    %c4_305 = arith.constant 4 : index
    %c0_306 = arith.constant 0 : index
    %c0_307 = arith.constant 0 : index
    %297 = vector.load %arg12[%c4_305, %c0_306, %c0_307] : memref<16x64x256xbf16, #tpu.memory_space<vmem>>, vector<1x64x256xbf16>
    %298 = vector.shape_cast %297 : vector<1x64x256xbf16> to vector<64x256xbf16>
    %cst_308 = arith.constant dense<0.000000e+00> : vector<8x256xf32>
    %299 = tpu.matmul %267, %298, %cst_308 {dimension_numbers = #tpu.dot_dimension_numbers<[1], [0], [0], [1], [0, 0, 1, 1], [], []>} : vector<8x64xbf16>, vector<64x256xbf16>, vector<8x256xf32> -> vector<8x256xf32>
    %c4_309 = arith.constant 4 : index
    %c0_310 = arith.constant 0 : index
    %c0_311 = arith.constant 0 : index
    %300 = vector.load %arg11[%c4_309, %c0_310, %c0_311] : memref<16x3x8xf32, #tpu.memory_space<vmem>>, vector<1x3x8xf32>
    %301 = vector.shape_cast %300 : vector<1x3x8xf32> to vector<3x8xf32>
    %cst_312 = arith.constant dense<0.000000e+00> : vector<3x256xf32>
    %302 = tpu.matmul %301, %299, %cst_312 {dimension_numbers = #tpu.dot_dimension_numbers<[1], [0], [0], [1], [0, 0, 1, 1], [], []>} : vector<3x8xf32>, vector<8x256xf32>, vector<3x256xf32> -> vector<3x256xf32>
    %303 = arith.addf %296, %302 : vector<3x256xf32>
    %c5_313 = arith.constant 5 : index
    %c0_314 = arith.constant 0 : index
    %c0_315 = arith.constant 0 : index
    %304 = vector.load %arg12[%c5_313, %c0_314, %c0_315] : memref<16x64x256xbf16, #tpu.memory_space<vmem>>, vector<1x64x256xbf16>
    %305 = vector.shape_cast %304 : vector<1x64x256xbf16> to vector<64x256xbf16>
    %cst_316 = arith.constant dense<0.000000e+00> : vector<8x256xf32>
    %306 = tpu.matmul %267, %305, %cst_316 {dimension_numbers = #tpu.dot_dimension_numbers<[1], [0], [0], [1], [0, 0, 1, 1], [], []>} : vector<8x64xbf16>, vector<64x256xbf16>, vector<8x256xf32> -> vector<8x256xf32>
    %c5_317 = arith.constant 5 : index
    %c0_318 = arith.constant 0 : index
    %c0_319 = arith.constant 0 : index
    %307 = vector.load %arg11[%c5_317, %c0_318, %c0_319] : memref<16x3x8xf32, #tpu.memory_space<vmem>>, vector<1x3x8xf32>
    %308 = vector.shape_cast %307 : vector<1x3x8xf32> to vector<3x8xf32>
    %cst_320 = arith.constant dense<0.000000e+00> : vector<3x256xf32>
    %309 = tpu.matmul %308, %306, %cst_320 {dimension_numbers = #tpu.dot_dimension_numbers<[1], [0], [0], [1], [0, 0, 1, 1], [], []>} : vector<3x8xf32>, vector<8x256xf32>, vector<3x256xf32> -> vector<3x256xf32>
    %310 = arith.addf %303, %309 : vector<3x256xf32>
    %c6_321 = arith.constant 6 : index
    %c0_322 = arith.constant 0 : index
    %c0_323 = arith.constant 0 : index
    %311 = vector.load %arg12[%c6_321, %c0_322, %c0_323] : memref<16x64x256xbf16, #tpu.memory_space<vmem>>, vector<1x64x256xbf16>
    %312 = vector.shape_cast %311 : vector<1x64x256xbf16> to vector<64x256xbf16>
    %cst_324 = arith.constant dense<0.000000e+00> : vector<8x256xf32>
    %313 = tpu.matmul %267, %312, %cst_324 {dimension_numbers = #tpu.dot_dimension_numbers<[1], [0], [0], [1], [0, 0, 1, 1], [], []>} : vector<8x64xbf16>, vector<64x256xbf16>, vector<8x256xf32> -> vector<8x256xf32>
    %c6_325 = arith.constant 6 : index
    %c0_326 = arith.constant 0 : index
    %c0_327 = arith.constant 0 : index
    %314 = vector.load %arg11[%c6_325, %c0_326, %c0_327] : memref<16x3x8xf32, #tpu.memory_space<vmem>>, vector<1x3x8xf32>
    %315 = vector.shape_cast %314 : vector<1x3x8xf32> to vector<3x8xf32>
    %cst_328 = arith.constant dense<0.000000e+00> : vector<3x256xf32>
    %316 = tpu.matmul %315, %313, %cst_328 {dimension_numbers = #tpu.dot_dimension_numbers<[1], [0], [0], [1], [0, 0, 1, 1], [], []>} : vector<3x8xf32>, vector<8x256xf32>, vector<3x256xf32> -> vector<3x256xf32>
    %317 = arith.addf %310, %316 : vector<3x256xf32>
    %c7_329 = arith.constant 7 : index
    %c0_330 = arith.constant 0 : index
    %c0_331 = arith.constant 0 : index
    %318 = vector.load %arg12[%c7_329, %c0_330, %c0_331] : memref<16x64x256xbf16, #tpu.memory_space<vmem>>, vector<1x64x256xbf16>
    %319 = vector.shape_cast %318 : vector<1x64x256xbf16> to vector<64x256xbf16>
    %cst_332 = arith.constant dense<0.000000e+00> : vector<8x256xf32>
    %320 = tpu.matmul %267, %319, %cst_332 {dimension_numbers = #tpu.dot_dimension_numbers<[1], [0], [0], [1], [0, 0, 1, 1], [], []>} : vector<8x64xbf16>, vector<64x256xbf16>, vector<8x256xf32> -> vector<8x256xf32>
    %c7_333 = arith.constant 7 : index
    %c0_334 = arith.constant 0 : index
    %c0_335 = arith.constant 0 : index
    %321 = vector.load %arg11[%c7_333, %c0_334, %c0_335] : memref<16x3x8xf32, #tpu.memory_space<vmem>>, vector<1x3x8xf32>
    %322 = vector.shape_cast %321 : vector<1x3x8xf32> to vector<3x8xf32>
    %cst_336 = arith.constant dense<0.000000e+00> : vector<3x256xf32>
    %323 = tpu.matmul %322, %320, %cst_336 {dimension_numbers = #tpu.dot_dimension_numbers<[1], [0], [0], [1], [0, 0, 1, 1], [], []>} : vector<3x8xf32>, vector<8x256xf32>, vector<3x256xf32> -> vector<3x256xf32>
    %324 = arith.addf %317, %323 : vector<3x256xf32>
    %c8_337 = arith.constant 8 : index
    %c0_338 = arith.constant 0 : index
    %c0_339 = arith.constant 0 : index
    %325 = vector.load %arg12[%c8_337, %c0_338, %c0_339] : memref<16x64x256xbf16, #tpu.memory_space<vmem>>, vector<1x64x256xbf16>
    %326 = vector.shape_cast %325 : vector<1x64x256xbf16> to vector<64x256xbf16>
    %cst_340 = arith.constant dense<0.000000e+00> : vector<8x256xf32>
    %327 = tpu.matmul %267, %326, %cst_340 {dimension_numbers = #tpu.dot_dimension_numbers<[1], [0], [0], [1], [0, 0, 1, 1], [], []>} : vector<8x64xbf16>, vector<64x256xbf16>, vector<8x256xf32> -> vector<8x256xf32>
    %c8_341 = arith.constant 8 : index
    %c0_342 = arith.constant 0 : index
    %c0_343 = arith.constant 0 : index
    %328 = vector.load %arg11[%c8_341, %c0_342, %c0_343] : memref<16x3x8xf32, #tpu.memory_space<vmem>>, vector<1x3x8xf32>
    %329 = vector.shape_cast %328 : vector<1x3x8xf32> to vector<3x8xf32>
    %cst_344 = arith.constant dense<0.000000e+00> : vector<3x256xf32>
    %330 = tpu.matmul %329, %327, %cst_344 {dimension_numbers = #tpu.dot_dimension_numbers<[1], [0], [0], [1], [0, 0, 1, 1], [], []>} : vector<3x8xf32>, vector<8x256xf32>, vector<3x256xf32> -> vector<3x256xf32>
    %331 = arith.addf %324, %330 : vector<3x256xf32>
    %c9_345 = arith.constant 9 : index
    %c0_346 = arith.constant 0 : index
    %c0_347 = arith.constant 0 : index
    %332 = vector.load %arg12[%c9_345, %c0_346, %c0_347] : memref<16x64x256xbf16, #tpu.memory_space<vmem>>, vector<1x64x256xbf16>
    %333 = vector.shape_cast %332 : vector<1x64x256xbf16> to vector<64x256xbf16>
    %cst_348 = arith.constant dense<0.000000e+00> : vector<8x256xf32>
    %334 = tpu.matmul %267, %333, %cst_348 {dimension_numbers = #tpu.dot_dimension_numbers<[1], [0], [0], [1], [0, 0, 1, 1], [], []>} : vector<8x64xbf16>, vector<64x256xbf16>, vector<8x256xf32> -> vector<8x256xf32>
    %c9_349 = arith.constant 9 : index
    %c0_350 = arith.constant 0 : index
    %c0_351 = arith.constant 0 : index
    %335 = vector.load %arg11[%c9_349, %c0_350, %c0_351] : memref<16x3x8xf32, #tpu.memory_space<vmem>>, vector<1x3x8xf32>
    %336 = vector.shape_cast %335 : vector<1x3x8xf32> to vector<3x8xf32>
    %cst_352 = arith.constant dense<0.000000e+00> : vector<3x256xf32>
    %337 = tpu.matmul %336, %334, %cst_352 {dimension_numbers = #tpu.dot_dimension_numbers<[1], [0], [0], [1], [0, 0, 1, 1], [], []>} : vector<3x8xf32>, vector<8x256xf32>, vector<3x256xf32> -> vector<3x256xf32>
    %338 = arith.addf %331, %337 : vector<3x256xf32>
    %c10_353 = arith.constant 10 : index
    %c0_354 = arith.constant 0 : index
    %c0_355 = arith.constant 0 : index
    %339 = vector.load %arg12[%c10_353, %c0_354, %c0_355] : memref<16x64x256xbf16, #tpu.memory_space<vmem>>, vector<1x64x256xbf16>
    %340 = vector.shape_cast %339 : vector<1x64x256xbf16> to vector<64x256xbf16>
    %cst_356 = arith.constant dense<0.000000e+00> : vector<8x256xf32>
    %341 = tpu.matmul %267, %340, %cst_356 {dimension_numbers = #tpu.dot_dimension_numbers<[1], [0], [0], [1], [0, 0, 1, 1], [], []>} : vector<8x64xbf16>, vector<64x256xbf16>, vector<8x256xf32> -> vector<8x256xf32>
    %c10_357 = arith.constant 10 : index
    %c0_358 = arith.constant 0 : index
    %c0_359 = arith.constant 0 : index
    %342 = vector.load %arg11[%c10_357, %c0_358, %c0_359] : memref<16x3x8xf32, #tpu.memory_space<vmem>>, vector<1x3x8xf32>
    %343 = vector.shape_cast %342 : vector<1x3x8xf32> to vector<3x8xf32>
    %cst_360 = arith.constant dense<0.000000e+00> : vector<3x256xf32>
    %344 = tpu.matmul %343, %341, %cst_360 {dimension_numbers = #tpu.dot_dimension_numbers<[1], [0], [0], [1], [0, 0, 1, 1], [], []>} : vector<3x8xf32>, vector<8x256xf32>, vector<3x256xf32> -> vector<3x256xf32>
    %345 = arith.addf %338, %344 : vector<3x256xf32>
    %c11_361 = arith.constant 11 : index
    %c0_362 = arith.constant 0 : index
    %c0_363 = arith.constant 0 : index
    %346 = vector.load %arg12[%c11_361, %c0_362, %c0_363] : memref<16x64x256xbf16, #tpu.memory_space<vmem>>, vector<1x64x256xbf16>
    %347 = vector.shape_cast %346 : vector<1x64x256xbf16> to vector<64x256xbf16>
    %cst_364 = arith.constant dense<0.000000e+00> : vector<8x256xf32>
    %348 = tpu.matmul %267, %347, %cst_364 {dimension_numbers = #tpu.dot_dimension_numbers<[1], [0], [0], [1], [0, 0, 1, 1], [], []>} : vector<8x64xbf16>, vector<64x256xbf16>, vector<8x256xf32> -> vector<8x256xf32>
    %c11_365 = arith.constant 11 : index
    %c0_366 = arith.constant 0 : index
    %c0_367 = arith.constant 0 : index
    %349 = vector.load %arg11[%c11_365, %c0_366, %c0_367] : memref<16x3x8xf32, #tpu.memory_space<vmem>>, vector<1x3x8xf32>
    %350 = vector.shape_cast %349 : vector<1x3x8xf32> to vector<3x8xf32>
    %cst_368 = arith.constant dense<0.000000e+00> : vector<3x256xf32>
    %351 = tpu.matmul %350, %348, %cst_368 {dimension_numbers = #tpu.dot_dimension_numbers<[1], [0], [0], [1], [0, 0, 1, 1], [], []>} : vector<3x8xf32>, vector<8x256xf32>, vector<3x256xf32> -> vector<3x256xf32>
    %352 = arith.addf %345, %351 : vector<3x256xf32>
    %c12_369 = arith.constant 12 : index
    %c0_370 = arith.constant 0 : index
    %c0_371 = arith.constant 0 : index
    %353 = vector.load %arg12[%c12_369, %c0_370, %c0_371] : memref<16x64x256xbf16, #tpu.memory_space<vmem>>, vector<1x64x256xbf16>
    %354 = vector.shape_cast %353 : vector<1x64x256xbf16> to vector<64x256xbf16>
    %cst_372 = arith.constant dense<0.000000e+00> : vector<8x256xf32>
    %355 = tpu.matmul %267, %354, %cst_372 {dimension_numbers = #tpu.dot_dimension_numbers<[1], [0], [0], [1], [0, 0, 1, 1], [], []>} : vector<8x64xbf16>, vector<64x256xbf16>, vector<8x256xf32> -> vector<8x256xf32>
    %c12_373 = arith.constant 12 : index
    %c0_374 = arith.constant 0 : index
    %c0_375 = arith.constant 0 : index
    %356 = vector.load %arg11[%c12_373, %c0_374, %c0_375] : memref<16x3x8xf32, #tpu.memory_space<vmem>>, vector<1x3x8xf32>
    %357 = vector.shape_cast %356 : vector<1x3x8xf32> to vector<3x8xf32>
    %cst_376 = arith.constant dense<0.000000e+00> : vector<3x256xf32>
    %358 = tpu.matmul %357, %355, %cst_376 {dimension_numbers = #tpu.dot_dimension_numbers<[1], [0], [0], [1], [0, 0, 1, 1], [], []>} : vector<3x8xf32>, vector<8x256xf32>, vector<3x256xf32> -> vector<3x256xf32>
    %359 = arith.addf %352, %358 : vector<3x256xf32>
    %c13_377 = arith.constant 13 : index
    %c0_378 = arith.constant 0 : index
    %c0_379 = arith.constant 0 : index
    %360 = vector.load %arg12[%c13_377, %c0_378, %c0_379] : memref<16x64x256xbf16, #tpu.memory_space<vmem>>, vector<1x64x256xbf16>
    %361 = vector.shape_cast %360 : vector<1x64x256xbf16> to vector<64x256xbf16>
    %cst_380 = arith.constant dense<0.000000e+00> : vector<8x256xf32>
    %362 = tpu.matmul %267, %361, %cst_380 {dimension_numbers = #tpu.dot_dimension_numbers<[1], [0], [0], [1], [0, 0, 1, 1], [], []>} : vector<8x64xbf16>, vector<64x256xbf16>, vector<8x256xf32> -> vector<8x256xf32>
    %c13_381 = arith.constant 13 : index
    %c0_382 = arith.constant 0 : index
    %c0_383 = arith.constant 0 : index
    %363 = vector.load %arg11[%c13_381, %c0_382, %c0_383] : memref<16x3x8xf32, #tpu.memory_space<vmem>>, vector<1x3x8xf32>
    %364 = vector.shape_cast %363 : vector<1x3x8xf32> to vector<3x8xf32>
    %cst_384 = arith.constant dense<0.000000e+00> : vector<3x256xf32>
    %365 = tpu.matmul %364, %362, %cst_384 {dimension_numbers = #tpu.dot_dimension_numbers<[1], [0], [0], [1], [0, 0, 1, 1], [], []>} : vector<3x8xf32>, vector<8x256xf32>, vector<3x256xf32> -> vector<3x256xf32>
    %366 = arith.addf %359, %365 : vector<3x256xf32>
    %c14_385 = arith.constant 14 : index
    %c0_386 = arith.constant 0 : index
    %c0_387 = arith.constant 0 : index
    %367 = vector.load %arg12[%c14_385, %c0_386, %c0_387] : memref<16x64x256xbf16, #tpu.memory_space<vmem>>, vector<1x64x256xbf16>
    %368 = vector.shape_cast %367 : vector<1x64x256xbf16> to vector<64x256xbf16>
    %cst_388 = arith.constant dense<0.000000e+00> : vector<8x256xf32>
    %369 = tpu.matmul %267, %368, %cst_388 {dimension_numbers = #tpu.dot_dimension_numbers<[1], [0], [0], [1], [0, 0, 1, 1], [], []>} : vector<8x64xbf16>, vector<64x256xbf16>, vector<8x256xf32> -> vector<8x256xf32>
    %c14_389 = arith.constant 14 : index
    %c0_390 = arith.constant 0 : index
    %c0_391 = arith.constant 0 : index
    %370 = vector.load %arg11[%c14_389, %c0_390, %c0_391] : memref<16x3x8xf32, #tpu.memory_space<vmem>>, vector<1x3x8xf32>
    %371 = vector.shape_cast %370 : vector<1x3x8xf32> to vector<3x8xf32>
    %cst_392 = arith.constant dense<0.000000e+00> : vector<3x256xf32>
    %372 = tpu.matmul %371, %369, %cst_392 {dimension_numbers = #tpu.dot_dimension_numbers<[1], [0], [0], [1], [0, 0, 1, 1], [], []>} : vector<3x8xf32>, vector<8x256xf32>, vector<3x256xf32> -> vector<3x256xf32>
    %373 = arith.addf %366, %372 : vector<3x256xf32>
    %c15_393 = arith.constant 15 : index
    %c0_394 = arith.constant 0 : index
    %c0_395 = arith.constant 0 : index
    %374 = vector.load %arg12[%c15_393, %c0_394, %c0_395] : memref<16x64x256xbf16, #tpu.memory_space<vmem>>, vector<1x64x256xbf16>
    %375 = vector.shape_cast %374 : vector<1x64x256xbf16> to vector<64x256xbf16>
    %cst_396 = arith.constant dense<0.000000e+00> : vector<8x256xf32>
    %376 = tpu.matmul %267, %375, %cst_396 {dimension_numbers = #tpu.dot_dimension_numbers<[1], [0], [0], [1], [0, 0, 1, 1], [], []>} : vector<8x64xbf16>, vector<64x256xbf16>, vector<8x256xf32> -> vector<8x256xf32>
    %c15_397 = arith.constant 15 : index
    %c0_398 = arith.constant 0 : index
    %c0_399 = arith.constant 0 : index
    %377 = vector.load %arg11[%c15_397, %c0_398, %c0_399] : memref<16x3x8xf32, #tpu.memory_space<vmem>>, vector<1x3x8xf32>
    %378 = vector.shape_cast %377 : vector<1x3x8xf32> to vector<3x8xf32>
    %cst_400 = arith.constant dense<0.000000e+00> : vector<3x256xf32>
    %379 = tpu.matmul %378, %376, %cst_400 {dimension_numbers = #tpu.dot_dimension_numbers<[1], [0], [0], [1], [0, 0, 1, 1], [], []>} : vector<3x8xf32>, vector<8x256xf32>, vector<3x256xf32> -> vector<3x256xf32>
    %380 = arith.addf %373, %379 : vector<3x256xf32>
    %c0_401 = arith.constant 0 : index
    %c0_402 = arith.constant 0 : index
    %381 = vector.load %arg13[%c0_401, %c0_402] : memref<3x1xf32, #tpu.memory_space<vmem>>, vector<3x1xf32>
    %382 = vector.broadcast %381 : vector<3x1xf32> to vector<3x256xf32>
    %383 = arith.addf %380, %382 : vector<3x256xf32>
    %384 = math.tanh %383 : vector<3x256xf32>
    %c0_403 = arith.constant 0 : index
    %c0_404 = arith.constant 0 : index
    %c0_405 = arith.constant 0 : index
    %385 = vector.load %arg14[%c0_403, %c0_404, %c0_405] : memref<1x3x256xf32, #tpu.memory_space<vmem>>, vector<1x3x256xf32>
    %386 = vector.shape_cast %385 : vector<1x3x256xf32> to vector<3x256xf32>
    %387 = vector.shape_cast %384 : vector<3x256xf32> to vector<1x3x256xf32>
    tpu.vector_store %arg14[%c0_403, %c0_404, %c0_405], %387 {strides = array<i32>} : memref<1x3x256xf32, #tpu.memory_space<vmem>>, vector<1x3x256xf32>,
    return
  }
  func.func @transform_0(%arg0: i32) -> (i32, i32, i32) {
    %c0_i32 = arith.constant 0 : i32
    %c0_i32_0 = arith.constant 0 : i32
    %c0_i32_1 = arith.constant 0 : i32
    return %arg0, %c0_i32, %c0_i32_0 : i32, i32, i32
  }
  func.func @transform_1(%arg0: i32) -> (i32, i32, i32) {
    %c0_i32 = arith.constant 0 : i32
    %c0_i32_0 = arith.constant 0 : i32
    %c0_i32_1 = arith.constant 0 : i32
    %c0_i32_2 = arith.constant 0 : i32
    return %c0_i32, %c0_i32_0, %c0_i32_1 : i32, i32, i32
  }
  func.func @transform_2(%arg0: i32) -> (i32, i32, i32) {
    %c0_i32 = arith.constant 0 : i32
    %c0_i32_0 = arith.constant 0 : i32
    %c0_i32_1 = arith.constant 0 : i32
    %c0_i32_2 = arith.constant 0 : i32
    return %c0_i32, %c0_i32_0, %c0_i32_1 : i32, i32, i32
  }
  func.func @transform_3(%arg0: i32) -> (i32, i32) {
    %c0_i32 = arith.constant 0 : i32
    %c0_i32_0 = arith.constant 0 : i32
    %c0_i32_1 = arith.constant 0 : i32
    return %c0_i32, %c0_i32_0 : i32, i32
  }
  func.func @transform_4(%arg0: i32) -> (i32, i32, i32) {
    %c0_i32 = arith.constant 0 : i32
    %c0_i32_0 = arith.constant 0 : i32
    %c0_i32_1 = arith.constant 0 : i32
    %c0_i32_2 = arith.constant 0 : i32
    return %c0_i32, %c0_i32_0, %c0_i32_1 : i32, i32, i32
  }
  func.func @transform_5(%arg0: i32) -> (i32, i32, i32) {
    %c0_i32 = arith.constant 0 : i32
    %c0_i32_0 = arith.constant 0 : i32
    %c0_i32_1 = arith.constant 0 : i32
    %c0_i32_2 = arith.constant 0 : i32
    return %c0_i32, %c0_i32_0, %c0_i32_1 : i32, i32, i32
  }
  func.func @transform_6(%arg0: i32) -> (i32, i32) {
    %c0_i32 = arith.constant 0 : i32
    %c0_i32_0 = arith.constant 0 : i32
    %c0_i32_1 = arith.constant 0 : i32
    return %c0_i32, %c0_i32_0 : i32, i32
  }
  func.func @transform_7(%arg0: i32) -> (i32, i32, i32) {
    %c0_i32 = arith.constant 0 : i32
    %c0_i32_0 = arith.constant 0 : i32
    %c0_i32_1 = arith.constant 0 : i32
    %c0_i32_2 = arith.constant 0 : i32
    return %c0_i32, %c0_i32_0, %c0_i32_1 : i32, i32, i32
  }
  func.func @transform_8(%arg0: i32) -> (i32, i32, i32) {
    %c0_i32 = arith.constant 0 : i32
    %c0_i32_0 = arith.constant 0 : i32
    %c0_i32_1 = arith.constant 0 : i32
    %c0_i32_2 = arith.constant 0 : i32
    return %c0_i32, %c0_i32_0, %c0_i32_1 : i32, i32, i32
  }
  func.func @transform_9(%arg0: i32) -> (i32, i32) {
    %c0_i32 = arith.constant 0 : i32
    %c0_i32_0 = arith.constant 0 : i32
    %c0_i32_1 = arith.constant 0 : i32
    return %c0_i32, %c0_i32_0 : i32, i32
  }
  func.func @transform_10(%arg0: i32) -> (i32, i32, i32) {
    %c0_i32 = arith.constant 0 : i32
    %c0_i32_0 = arith.constant 0 : i32
    %c0_i32_1 = arith.constant 0 : i32
    %c0_i32_2 = arith.constant 0 : i32
    return %c0_i32, %c0_i32_0, %c0_i32_1 : i32, i32, i32
  }
  func.func @transform_11(%arg0: i32) -> (i32, i32, i32) {
    %c0_i32 = arith.constant 0 : i32
    %c0_i32_0 = arith.constant 0 : i32
    %c0_i32_1 = arith.constant 0 : i32
    %c0_i32_2 = arith.constant 0 : i32
    return %c0_i32, %c0_i32_0, %c0_i32_1 : i32, i32, i32
  }
  func.func @transform_12(%arg0: i32) -> (i32, i32) {
    %c0_i32 = arith.constant 0 : i32
    %c0_i32_0 = arith.constant 0 : i32
    %c0_i32_1 = arith.constant 0 : i32
    return %c0_i32, %c0_i32_0 : i32, i32
  }
  func.func @transform_13(%arg0: i32) -> (i32, i32, i32) {
    %c0_i32 = arith.constant 0 : i32
    %c0_i32_0 = arith.constant 0 : i32
    %c0_i32_1 = arith.constant 0 : i32
    return %arg0, %c0_i32, %c0_i32_0 : i32, i32, i32
  }
}

</mosaic_0001>

<llo_original>
// kernel: gan_forward.1
$region0: #{gan_forward.1}
  #allocation0 [shape = 'u32[]', space=smem, size = 0x4, offset = 0x4, fixed_abs, tag = 'smem constant byte address 0x4 - core index']
  #allocation1 [shape = 'u32[144,128]{1,0:T(1,128)}', space=vmem, size = 0x12000, scoped, tag = 'internal scratch']
  %s0 = inlined_call_operand.vmem [shape: f32[2,3,256], index: 0, kind: input, shape index: {}]
  %s1 = inlined_call_operand.vmem [shape: f32[9,8,3], index: 1, kind: input, shape index: {}]
  %s2 = inlined_call_operand.vmem [shape: bf16[9,256,64], index: 2, kind: input, shape index: {}]
  %s3 = inlined_call_operand.vmem [shape: f32[8,1], index: 3, kind: input, shape index: {}]
  %s4 = inlined_call_operand.vmem [shape: f32[9,16,8], index: 4, kind: input, shape index: {}]
  %s5 = inlined_call_operand.vmem [shape: bf16[9,64,16], index: 5, kind: input, shape index: {}]
  %s6 = inlined_call_operand.vmem [shape: f32[16,1], index: 6, kind: input, shape index: {}]
  %s7 = inlined_call_operand.vmem [shape: f32[16,8,16], index: 7, kind: input, shape index: {}]
  %s8 = inlined_call_operand.vmem [shape: bf16[16,16,64], index: 8, kind: input, shape index: {}]
  %s9 = inlined_call_operand.vmem [shape: f32[8,1], index: 9, kind: input, shape index: {}]
  %s10 = inlined_call_operand.vmem [shape: f32[16,3,8], index: 10, kind: input, shape index: {}]
  %s11 = inlined_call_operand.vmem [shape: bf16[16,64,256], index: 11, kind: input, shape index: {}]
  %s12 = inlined_call_operand.vmem [shape: f32[3,1], index: 12, kind: input, shape index: {}]
  %s13 = inlined_call_operand.vmem [shape: f32[2,3,256], index: 13, kind: output, shape index: {}]
  %s14 = sld [smem:[#allocation0]]
  $region85: #{gan_forward.1} parent=0
    _
  %s16 = ssub.s32 1, %s14
  %s17 = scalar_select 0, %s16, %s14
  loop: start=0, step=1, limit=4
  $region2: #{gan_forward.1} parent=0 // loop_pre_header
    _
  $region3: #{gan_forward.1} parent=0 // loop_header
    %s19 = sphi 0, %s23
    %p20 = scmp.ge.s32.totalorder %s19, 4
    %s29 = sphi 0, %s31
    %s32 = sphi 0, %s29
    %s33 = sphi 0, %s32
    %s49 = sphi 0, %s33
    %s53 = sphi 0, %s53
    %s55 = sphi 0, %s53
    %s56 = sphi 0, %s55
    %s70 = sphi 0, %s56
    %s74 = sphi 0, %s74
    %s76 = sphi 0, %s74
    %s77 = sphi 0, %s76
    %s91 = sphi 0, %s77
    %s95 = sphi 0, %s95
    %s97 = sphi 0, %s95
    %s98 = sphi 0, %s97
    %s112 = sphi 0, %s98
    %s116 = sphi 0, %s116
    %s118 = sphi 0, %s116
    %s119 = sphi 0, %s118
    %s133 = sphi 0, %s119
    %s137 = sphi 0, %s137
    %s139 = sphi 0, %s137
    %s140 = sphi 0, %s139
    %s154 = sphi 0, %s140
    %s158 = sphi 0, %s158
    %s160 = sphi 0, %s158
    %s161 = sphi 0, %s160
    %s175 = sphi 0, %s161
    %s179 = sphi 0, %s179
    %s181 = sphi 0, %s179
    %s182 = sphi 0, %s181
    %s196 = sphi 0, %s182
    %s200 = sphi 0, %s200
    %s202 = sphi 0, %s200
    %s203 = sphi 0, %s202
    %s217 = sphi 0, %s203
    %s221 = sphi 0, %s221
    %s223 = sphi 0, %s221
    %s224 = sphi 0, %s223
    %s238 = sphi 0, %s224
    %s242 = sphi 0, %s242
    %s244 = sphi 0, %s242
    %s245 = sphi 0, %s244
    %s259 = sphi 0, %s245
    %s263 = sphi 0, %s263
    %s265 = sphi 0, %s263
    %s266 = sphi 0, %s265
    %s280 = sphi 0, %s266
    %s284 = sphi 0, %s284
    %s286 = sphi 0, %s284
    %s287 = sphi 0, %s286
    %s301 = sphi 0, %s287
    %s307 = sphi 0, %s309
    %s310 = sphi 0, %s307
    %s311 = sphi 0, %s310
    %s327 = sphi 0, %s311
  $region4: #{gan_forward.1} parent=0 // loop_header_branch
    %22 = sbr.rel (%p20) target = $region8
  $region5: #{gan_forward.1} parent=0 // loop_body
    %s24 = ssub.s32 %s19, 1
    %s25 = ssub.s32 %s19, 2
    %s26 = sadd.s32 %s19, 1
    %s27 = ssub.s32 %s19, %s26
    %p28 = scmp.eq.s32.totalorder %s27, 0
    %s30 = sadd.s32 %s29, 1
    %s31 = scalar_select %p28, %s29, %s30
    %p34 = pneg %p28
    %p35 = scmp.eq.s32.totalorder %s19, 1
    %p36 = por %p34, %p35
    %p37 = scmp.ne.s32.totalorder %s29, %s32
    %p38 = scmp.eq.s32.totalorder %s19, 0
    %p39 = por %p37, %p38
    %p40 = scmp.ne.s32.totalorder %s29, %s32
    %p41 = scmp.eq.s32.totalorder %s24, 1
    %p42 = por %p40, %p41
    %p43 = scmp.ne.s32.totalorder %s32, %s33
    %p44 = scmp.eq.s32.totalorder %s24, 0
    %p45 = por %p43, %p44
    %p46 = scmp.ne.s32.totalorder %s32, %s33
    %p47 = scmp.eq.s32.totalorder %s25, 1
    %p48 = por %p46, %p47
    %p50 = scmp.ne.s32.totalorder %s33, %s49
    %p51 = scmp.eq.s32.totalorder %s25, 0
    %p52 = por %p50, %p51
    %s54 = sadd.s32 %s53, 1
    %p57 = scmp.eq.s32.totalorder %s19, 1
    %p58 = scmp.ne.s32.totalorder %s53, %s55
    %p59 = scmp.eq.s32.totalorder %s19, 0
    %p60 = por %p58, %p59
    %p61 = scmp.ne.s32.totalorder %s53, %s55
    %p62 = scmp.eq.s32.totalorder %s24, 1
    %p63 = por %p61, %p62
    %p64 = scmp.ne.s32.totalorder %s55, %s56
    %p65 = scmp.eq.s32.totalorder %s24, 0
    %p66 = por %p64, %p65
    %p67 = scmp.ne.s32.totalorder %s55, %s56
    %p68 = scmp.eq.s32.totalorder %s25, 1
    %p69 = por %p67, %p68
    %p71 = scmp.ne.s32.totalorder %s56, %s70
    %p72 = scmp.eq.s32.totalorder %s25, 0
    %p73 = por %p71, %p72
    %s75 = sadd.s32 %s74, 1
    %p78 = scmp.eq.s32.totalorder %s19, 1
    %p79 = scmp.ne.s32.totalorder %s74, %s76
    %p80 = scmp.eq.s32.totalorder %s19, 0
    %p81 = por %p79, %p80
    %p82 = scmp.ne.s32.totalorder %s74, %s76
    %p83 = scmp.eq.s32.totalorder %s24, 1
    %p84 = por %p82, %p83
    %p85 = scmp.ne.s32.totalorder %s76, %s77
    %p86 = scmp.eq.s32.totalorder %s24, 0
    %p87 = por %p85, %p86
    %p88 = scmp.ne.s32.totalorder %s76, %s77
    %p89 = scmp.eq.s32.totalorder %s25, 1
    %p90 = por %p88, %p89
    %p92 = scmp.ne.s32.totalorder %s77, %s91
    %p93 = scmp.eq.s32.totalorder %s25, 0
    %p94 = por %p92, %p93
    %s96 = sadd.s32 %s95, 1
    %p99 = scmp.eq.s32.totalorder %s19, 1
    %p100 = scmp.ne.s32.totalorder %s95, %s97
    %p101 = scmp.eq.s32.totalorder %s19, 0
    %p102 = por %p100, %p101
    %p103 = scmp.ne.s32.totalorder %s95, %s97
    %p104 = scmp.eq.s32.totalorder %s24, 1
    %p105 = por %p103, %p104
    %p106 = scmp.ne.s32.totalorder %s97, %s98
    %p107 = scmp.eq.s32.totalorder %s24, 0
    %p108 = por %p106, %p107
    %p109 = scmp.ne.s32.totalorder %s97, %s98
    %p110 = scmp.eq.s32.totalorder %s25, 1
    %p111 = por %p109, %p110
    %p113 = scmp.ne.s32.totalorder %s98, %s112
    %p114 = scmp.eq.s32.totalorder %s25, 0
    %p115 = por %p113, %p114
    %s117 = sadd.s32 %s116, 1
    %p120 = scmp.eq.s32.totalorder %s19, 1
    %p121 = scmp.ne.s32.totalorder %s116, %s118
    %p122 = scmp.eq.s32.totalorder %s19, 0
    %p123 = por %p121, %p122
    %p124 = scmp.ne.s32.totalorder %s116, %s118
    %p125 = scmp.eq.s32.totalorder %s24, 1
    %p126 = por %p124, %p125
    %p127 = scmp.ne.s32.totalorder %s118, %s119
    %p128 = scmp.eq.s32.totalorder %s24, 0
    %p129 = por %p127, %p128
    %p130 = scmp.ne.s32.totalorder %s118, %s119
    %p131 = scmp.eq.s32.totalorder %s25, 1
    %p132 = por %p130, %p131
    %p134 = scmp.ne.s32.totalorder %s119, %s133
    %p135 = scmp.eq.s32.totalorder %s25, 0
    %p136 = por %p134, %p135
    %s138 = sadd.s32 %s137, 1
    %p141 = scmp.eq.s32.totalorder %s19, 1
    %p142 = scmp.ne.s32.totalorder %s137, %s139
    %p143 = scmp.eq.s32.totalorder %s19, 0
    %p144 = por %p142, %p143
    %p145 = scmp.ne.s32.totalorder %s137, %s139
    %p146 = scmp.eq.s32.totalorder %s24, 1
    %p147 = por %p145, %p146
    %p148 = scmp.ne.s32.totalorder %s139, %s140
    %p149 = scmp.eq.s32.totalorder %s24, 0
    %p150 = por %p148, %p149
    %p151 = scmp.ne.s32.totalorder %s139, %s140
    %p152 = scmp.eq.s32.totalorder %s25, 1
    %p153 = por %p151, %p152
    %p155 = scmp.ne.s32.totalorder %s140, %s154
    %p156 = scmp.eq.s32.totalorder %s25, 0
    %p157 = por %p155, %p156
    %s159 = sadd.s32 %s158, 1
    %p162 = scmp.eq.s32.totalorder %s19, 1
    %p163 = scmp.ne.s32.totalorder %s158, %s160
    %p164 = scmp.eq.s32.totalorder %s19, 0
    %p165 = por %p163, %p164
    %p166 = scmp.ne.s32.totalorder %s158, %s160
    %p167 = scmp.eq.s32.totalorder %s24, 1
    %p168 = por %p166, %p167
    %p169 = scmp.ne.s32.totalorder %s160, %s161
    %p170 = scmp.eq.s32.totalorder %s24, 0
    %p171 = por %p169, %p170
    %p172 = scmp.ne.s32.totalorder %s160, %s161
    %p173 = scmp.eq.s32.totalorder %s25, 1
    %p174 = por %p172, %p173
    %p176 = scmp.ne.s32.totalorder %s161, %s175
    %p177 = scmp.eq.s32.totalorder %s25, 0
    %p178 = por %p176, %p177
    %s180 = sadd.s32 %s179, 1
    %p183 = scmp.eq.s32.totalorder %s19, 1
    %p184 = scmp.ne.s32.totalorder %s179, %s181
    %p185 = scmp.eq.s32.totalorder %s19, 0
    %p186 = por %p184, %p185
    %p187 = scmp.ne.s32.totalorder %s179, %s181
    %p188 = scmp.eq.s32.totalorder %s24, 1
    %p189 = por %p187, %p188
    %p190 = scmp.ne.s32.totalorder %s181, %s182
    %p191 = scmp.eq.s32.totalorder %s24, 0
    %p192 = por %p190, %p191
    %p193 = scmp.ne.s32.totalorder %s181, %s182
    %p194 = scmp.eq.s32.totalorder %s25, 1
    %p195 = por %p193, %p194
    %p197 = scmp.ne.s32.totalorder %s182, %s196
    %p198 = scmp.eq.s32.totalorder %s25, 0
    %p199 = por %p197, %p198
    %s201 = sadd.s32 %s200, 1
    %p204 = scmp.eq.s32.totalorder %s19, 1
    %p205 = scmp.ne.s32.totalorder %s200, %s202
    %p206 = scmp.eq.s32.totalorder %s19, 0
    %p207 = por %p205, %p206
    %p208 = scmp.ne.s32.totalorder %s200, %s202
    %p209 = scmp.eq.s32.totalorder %s24, 1
    %p210 = por %p208, %p209
    %p211 = scmp.ne.s32.totalorder %s202, %s203
    %p212 = scmp.eq.s32.totalorder %s24, 0
    %p213 = por %p211, %p212
    %p214 = scmp.ne.s32.totalorder %s202, %s203
    %p215 = scmp.eq.s32.totalorder %s25, 1
    %p216 = por %p214, %p215
    %p218 = scmp.ne.s32.totalorder %s203, %s217
    %p219 = scmp.eq.s32.totalorder %s25, 0
    %p220 = por %p218, %p219
    %s222 = sadd.s32 %s221, 1
    %p225 = scmp.eq.s32.totalorder %s19, 1
    %p226 = scmp.ne.s32.totalorder %s221, %s223
    %p227 = scmp.eq.s32.totalorder %s19, 0
    %p228 = por %p226, %p227
    %p229 = scmp.ne.s32.totalorder %s221, %s223
    %p230 = scmp.eq.s32.totalorder %s24, 1
    %p231 = por %p229, %p230
    %p232 = scmp.ne.s32.totalorder %s223, %s224
    %p233 = scmp.eq.s32.totalorder %s24, 0
    %p234 = por %p232, %p233
    %p235 = scmp.ne.s32.totalorder %s223, %s224
    %p236 = scmp.eq.s32.totalorder %s25, 1
    %p237 = por %p235, %p236
    %p239 = scmp.ne.s32.totalorder %s224, %s238
    %p240 = scmp.eq.s32.totalorder %s25, 0
    %p241 = por %p239, %p240
    %s243 = sadd.s32 %s242, 1
    %p246 = scmp.eq.s32.totalorder %s19, 1
    %p247 = scmp.ne.s32.totalorder %s242, %s244
    %p248 = scmp.eq.s32.totalorder %s19, 0
    %p249 = por %p247, %p248
    %p250 = scmp.ne.s32.totalorder %s242, %s244
    %p251 = scmp.eq.s32.totalorder %s24, 1
    %p252 = por %p250, %p251
    %p253 = scmp.ne.s32.totalorder %s244, %s245
    %p254 = scmp.eq.s32.totalorder %s24, 0
    %p255 = por %p253, %p254
    %p256 = scmp.ne.s32.totalorder %s244, %s245
    %p257 = scmp.eq.s32.totalorder %s25, 1
    %p258 = por %p256, %p257
    %p260 = scmp.ne.s32.totalorder %s245, %s259
    %p261 = scmp.eq.s32.totalorder %s25, 0
    %p262 = por %p260, %p261
    %s264 = sadd.s32 %s263, 1
    %p267 = scmp.eq.s32.totalorder %s19, 1
    %p268 = scmp.ne.s32.totalorder %s263, %s265
    %p269 = scmp.eq.s32.totalorder %s19, 0
    %p270 = por %p268, %p269
    %p271 = scmp.ne.s32.totalorder %s263, %s265
    %p272 = scmp.eq.s32.totalorder %s24, 1
    %p273 = por %p271, %p272
    %p274 = scmp.ne.s32.totalorder %s265, %s266
    %p275 = scmp.eq.s32.totalorder %s24, 0
    %p276 = por %p274, %p275
    %p277 = scmp.ne.s32.totalorder %s265, %s266
    %p278 = scmp.eq.s32.totalorder %s25, 1
    %p279 = por %p277, %p278
    %p281 = scmp.ne.s32.totalorder %s266, %s280
    %p282 = scmp.eq.s32.totalorder %s25, 0
    %p283 = por %p281, %p282
    %s285 = sadd.s32 %s284, 1
    %p288 = scmp.eq.s32.totalorder %s19, 1
    %p289 = scmp.ne.s32.totalorder %s284, %s286
    %p290 = scmp.eq.s32.totalorder %s19, 0
    %p291 = por %p289, %p290
    %p292 = scmp.ne.s32.totalorder %s284, %s286
    %p293 = scmp.eq.s32.totalorder %s24, 1
    %p294 = por %p292, %p293
    %p295 = scmp.ne.s32.totalorder %s286, %s287
    %p296 = scmp.eq.s32.totalorder %s24, 0
    %p297 = por %p295, %p296
    %p298 = scmp.ne.s32.totalorder %s286, %s287
    %p299 = scmp.eq.s32.totalorder %s25, 1
    %p300 = por %p298, %p299
    %p302 = scmp.ne.s32.totalorder %s287, %s301
    %p303 = scmp.eq.s32.totalorder %s25, 0
    %p304 = por %p302, %p303
    %s305 = ssub.s32 %s19, %s26
    %p306 = scmp.eq.s32.totalorder %s305, 0
    %s308 = sadd.s32 %s307, 1
    %s309 = scalar_select %p306, %s307, %s308
    %p312 = pneg %p306
    %p313 = scmp.eq.s32.totalorder %s19, 1
    %p314 = por %p312, %p313
    %p315 = scmp.ne.s32.totalorder %s307, %s310
    %p316 = scmp.eq.s32.totalorder %s19, 0
    %p317 = por %p315, %p316
    %p318 = scmp.ne.s32.totalorder %s307, %s310
    %p319 = scmp.eq.s32.totalorder %s24, 1
    %p320 = por %p318, %p319
    %p321 = scmp.ne.s32.totalorder %s310, %s311
    %p322 = scmp.eq.s32.totalorder %s24, 0
    %p323 = por %p321, %p322
    %p324 = scmp.ne.s32.totalorder %s310, %s311
    %p325 = scmp.eq.s32.totalorder %s25, 1
    %p326 = por %p324, %p325
    %p328 = scmp.ne.s32.totalorder %s311, %s327
    %p329 = scmp.eq.s32.totalorder %s25, 0
    %p330 = por %p328, %p329
    %p331 = scmp.le.s32.totalorder 1, %s19
    %p332 = scmp.lt.s32.totalorder %s19, 3
    %p333 = pnand %p331, %p332
    %p334 = pneg %p333
    // Predicated region
    $region9: #{gan_forward.1} parent=5 // pred_check
      _
    $region10: #{gan_forward.1} parent=5 // pred_check_branch
      %336 = sbr.rel (%p333) target = $region12
    $region11: #{gan_forward.1} parent=5 // pred_region
      %s337 = ssub.s32 %s19, 1
      // Predicated region
      $region13: #{gan_forward.1} parent=11 // pred_check
        %p338 = pneg %p66
      $region14: #{gan_forward.1} parent=11 // pred_check_branch
        %340 = sbr.rel (%p338) target = $region16
      $region15: #{gan_forward.1} parent=11 // pred_region
        _
      $region16: #{gan_forward.1} parent=11 // pred_fallthru
        _
      // Predicated region
      $region17: #{gan_forward.1} parent=11 // pred_check
        %p341 = pneg %p87
      $region18: #{gan_forward.1} parent=11 // pred_check_branch
        %343 = sbr.rel (%p341) target = $region20
      $region19: #{gan_forward.1} parent=11 // pred_region
        _
      $region20: #{gan_forward.1} parent=11 // pred_fallthru
        _
      // Predicated region
      $region21: #{gan_forward.1} parent=11 // pred_check
        %p344 = pneg %p108
      $region22: #{gan_forward.1} parent=11 // pred_check_branch
        %346 = sbr.rel (%p344) target = $region24
      $region23: #{gan_forward.1} parent=11 // pred_region
        _
      $region24: #{gan_forward.1} parent=11 // pred_fallthru
        _
      // Predicated region
      $region25: #{gan_forward.1} parent=11 // pred_check
        %p347 = pneg %p129
      $region26: #{gan_forward.1} parent=11 // pred_check_branch
        %349 = sbr.rel (%p347) target = $region28
      $region27: #{gan_forward.1} parent=11 // pred_region
        _
      $region28: #{gan_forward.1} parent=11 // pred_fallthru
        _
      // Predicated region
      $region29: #{gan_forward.1} parent=11 // pred_check
        %p350 = pneg %p150
      $region30: #{gan_forward.1} parent=11 // pred_check_branch
        %352 = sbr.rel (%p350) target = $region32
      $region31: #{gan_forward.1} parent=11 // pred_region
        _
      $region32: #{gan_forward.1} parent=11 // pred_fallthru
        _
      // Predicated region
      $region33: #{gan_forward.1} parent=11 // pred_check
        %p353 = pneg %p171
      $region34: #{gan_forward.1} parent=11 // pred_check_branch
        %355 = sbr.rel (%p353) target = $region36
      $region35: #{gan_forward.1} parent=11 // pred_region
        _
      $region36: #{gan_forward.1} parent=11 // pred_fallthru
        _
      // Predicated region
      $region37: #{gan_forward.1} parent=11 // pred_check
        %p356 = pneg %p192
      $region38: #{gan_forward.1} parent=11 // pred_check_branch
        %358 = sbr.rel (%p356) target = $region40
      $region39: #{gan_forward.1} parent=11 // pred_region
        _
      $region40: #{gan_forward.1} parent=11 // pred_fallthru
        _
      // Predicated region
      $region41: #{gan_forward.1} parent=11 // pred_check
        %p359 = pneg %p213
      $region42: #{gan_forward.1} parent=11 // pred_check_branch
        %361 = sbr.rel (%p359) target = $region44
      $region43: #{gan_forward.1} parent=11 // pred_region
        _
      $region44: #{gan_forward.1} parent=11 // pred_fallthru
        _
      // Predicated region
      $region45: #{gan_forward.1} parent=11 // pred_check
        %p362 = pneg %p234
      $region46: #{gan_forward.1} parent=11 // pred_check_branch
        %364 = sbr.rel (%p362) target = $region48
      $region47: #{gan_forward.1} parent=11 // pred_region
        _
      $region48: #{gan_forward.1} parent=11 // pred_fallthru
        _
      // Predicated region
      $region49: #{gan_forward.1} parent=11 // pred_check
        %p365 = pneg %p255
      $region50: #{gan_forward.1} parent=11 // pred_check_branch
        %367 = sbr.rel (%p365) target = $region52
      $region51: #{gan_forward.1} parent=11 // pred_region
        _
      $region52: #{gan_forward.1} parent=11 // pred_fallthru
        _
      // Predicated region
      $region53: #{gan_forward.1} parent=11 // pred_check
        %p368 = pneg %p276
      $region54: #{gan_forward.1} parent=11 // pred_check_branch
        %370 = sbr.rel (%p368) target = $region56
      $region55: #{gan_forward.1} parent=11 // pred_region
        _
      $region56: #{gan_forward.1} parent=11 // pred_fallthru
        _
      // Predicated region
      $region57: #{gan_forward.1} parent=11 // pred_check
        %p371 = pneg %p297
      $region58: #{gan_forward.1} parent=11 // pred_check_branch
        %373 = sbr.rel (%p371) target = $region60
      $region59: #{gan_forward.1} parent=11 // pred_region
        _
      $region60: #{gan_forward.1} parent=11 // pred_fallthru
        _
    $region12: #{gan_forward.1} parent=5 // pred_fallthru
      _
    %p374 = scmp.lt.s32.totalorder %s19, 2
    // Predicated region
    $region61: #{gan_forward.1} parent=5 // pred_check
      %p375 = pneg %p374
    $region62: #{gan_forward.1} parent=5 // pred_check_branch
      %377 = sbr.rel (%p375) target = $region64
    $region63: #{gan_forward.1} parent=5 // pred_region
      // Predicated region
      $region65: #{gan_forward.1} parent=63 // pred_check
        %p378 = pneg %p39
      $region66: #{gan_forward.1} parent=63 // pred_check_branch
        %380 = sbr.rel (%p378) target = $region68
      $region67: #{gan_forward.1} parent=63 // pred_region
        %p381 = scmp.lt.s32.totalorder %s19, 1
        %s382 = scalar_select %p381, %s19, 1
        %s383 = smul.addr %s382, 2
        %s384 = smul.addr %s383, 4
        %s385 = scalar_lea.vmem %s0, %s384
      $region68: #{gan_forward.1} parent=63 // pred_fallthru
        _
    $region64: #{gan_forward.1} parent=5 // pred_fallthru
      _
    %p386 = scmp.le.s32.totalorder 1, %s19
    %p387 = scmp.lt.s32.totalorder %s19, 3
    %p388 = pnand %p386, %p387
    %p389 = pneg %p388
    // Predicated region
    $region69: #{gan_forward.1} parent=5 // pred_check
      _
    $region70: #{gan_forward.1} parent=5 // pred_check_branch
      %391 = sbr.rel (%p388) target = $region72
    $region71: #{gan_forward.1} parent=5 // pred_region
      %s392 = ssub.s32 %s19, 1
      %p393 = scmp.lt.s32.totalorder %s24, 1
      %s394 = scalar_select %p393, %s24, 1
      %s395 = smul.addr %s394, 2
      %s396 = smul.addr %s395, 4
      %s397 = scalar_lea.vmem %s0, %s396
      %p398 = pneg %p45
      %p399 = pneg %p42
      %p400 = pneg %p66
      %p401 = pneg %p63
      %p402 = pneg %p87
      %p403 = pneg %p84
      %p404 = pneg %p108
      %p405 = pneg %p105
      %p406 = pneg %p129
      %p407 = pneg %p126
      %p408 = pneg %p150
      %p409 = pneg %p147
      %p410 = pneg %p171
      %p411 = pneg %p168
      %p412 = pneg %p192
      %p413 = pneg %p189
      %p414 = pneg %p213
      %p415 = pneg %p210
      %p416 = pneg %p234
      %p417 = pneg %p231
      %p418 = pneg %p255
      %p419 = pneg %p252
      %p420 = pneg %p276
      %p421 = pneg %p273
      %p422 = pneg %p297
      %p423 = pneg %p294
      %p424 = pneg %p323
      %p425 = pneg %p320
      %p426 = scmp.lt.s32.totalorder %s24, 1
      %s427 = scalar_select %p426, %s24, 1
      %s428 = smul.addr %s427, 2
      %s429 = smul.addr %s428, 4
      %s430 = scalar_lea.vmem %s13, %s429
      %p431 = scmp.lt.s32.totalorder %s24, 1
      %s432 = scalar_select %p431, %s24, 1
      %s433 = smul.addr %s432, 2
      %s434 = smul.addr %s433, 4
      %s435 = scalar_lea.vmem %s0, %s434
      %p436 = scmp.lt.s32.totalorder %s24, 1
      %s437 = scalar_select %p436, %s24, 1
      %s438 = smul.addr %s437, 2
      %s439 = smul.addr %s438, 4
      %s440 = scalar_lea.vmem %s13, %s439
      %v442 = vld [vmem:[%s435] sm:$0x77]
      %v444 = vcombine.high %v442, %v442
      %v446 = vpack.c.bf16 %v442, %v442
      %v447 = vpack.c.bf16 %v444, %v444
      %v448 = vld [vmem:[%s2] sm:$0xf]
      %v449 = vld [vmem:[%s2 + $0x4] sm:$0xf]
      %v450 = vld [vmem:[%s2 + $0x8] sm:$0xf]
      %v451 = vld [vmem:[%s2 + $0xc] sm:$0xf]
      %v452 = vld [vmem:[%s2 + $0x10] sm:$0xf]
      %v453 = vld [vmem:[%s2 + $0x14] sm:$0xf]
      %v454 = vld [vmem:[%s2 + $0x18] sm:$0xf]
      %v455 = vld [vmem:[%s2 + $0x1c] sm:$0xf]
      %v456 = vld [vmem:[%s2 + $0x20] sm:$0xf]
      %v457 = vld [vmem:[%s2 + $0x24] sm:$0xf]
      %v458 = vld [vmem:[%s2 + $0x28] sm:$0xf]
      %v459 = vld [vmem:[%s2 + $0x2c] sm:$0xf]
      %v460 = vld [vmem:[%s2 + $0x30] sm:$0xf]
      %v461 = vld [vmem:[%s2 + $0x34] sm:$0xf]
      %v462 = vld [vmem:[%s2 + $0x38] sm:$0xf]
      %v463 = vld [vmem:[%s2 + $0x3c] sm:$0xf]
      %v464 = vld [vmem:[%s2 + $0x40] sm:$0xf]
      %v465 = vld [vmem:[%s2 + $0x44] sm:$0xf]
      %v466 = vld [vmem:[%s2 + $0x48] sm:$0xf]
      %v467 = vld [vmem:[%s2 + $0x4c] sm:$0xf]
      %v468 = vld [vmem:[%s2 + $0x50] sm:$0xf]
      %v469 = vld [vmem:[%s2 + $0x54] sm:$0xf]
      %v470 = vld [vmem:[%s2 + $0x58] sm:$0xf]
      %v471 = vld [vmem:[%s2 + $0x5c] sm:$0xf]
      %v472 = vld [vmem:[%s2 + $0x60] sm:$0xf]
      %v473 = vld [vmem:[%s2 + $0x64] sm:$0xf]
      %v474 = vld [vmem:[%s2 + $0x68] sm:$0xf]
      %v475 = vld [vmem:[%s2 + $0x6c] sm:$0xf]
      %v476 = vld [vmem:[%s2 + $0x70] sm:$0xf]
      %v477 = vld [vmem:[%s2 + $0x74] sm:$0xf]
      %v478 = vld [vmem:[%s2 + $0x78] sm:$0xf]
      %v479 = vld [vmem:[%s2 + $0x7c] sm:$0xf]
      %v512 = vunpack.c.l.b16 %v448
      %v513 = vunpack.c.l.b16 %v449
      %v514 = vunpack.c.l.b16 %v450
      %v515 = vunpack.c.l.b16 %v451
      %v516 = vunpack.c.l.b16 %v452
      %v517 = vunpack.c.l.b16 %v453
      %v518 = vunpack.c.l.b16 %v454
      %v519 = vunpack.c.l.b16 %v455
      %v520 = vunpack.c.l.b16 %v456
      %v521 = vunpack.c.l.b16 %v457
      %v522 = vunpack.c.l.b16 %v458
      %v523 = vunpack.c.l.b16 %v459
      %v524 = vunpack.c.l.b16 %v460
      %v525 = vunpack.c.l.b16 %v461
      %v526 = vunpack.c.l.b16 %v462
      %v527 = vunpack.c.l.b16 %v463
      %v528 = vunpack.c.l.b16 %v464
      %v529 = vunpack.c.l.b16 %v465
      %v530 = vunpack.c.l.b16 %v466
      %v531 = vunpack.c.l.b16 %v467
      %v532 = vunpack.c.l.b16 %v468
      %v533 = vunpack.c.l.b16 %v469
      %v534 = vunpack.c.l.b16 %v470
      %v535 = vunpack.c.l.b16 %v471
      %v536 = vunpack.c.l.b16 %v472
      %v537 = vunpack.c.l.b16 %v473
      %v538 = vunpack.c.l.b16 %v474
      %v539 = vunpack.c.l.b16 %v475
      %v540 = vunpack.c.l.b16 %v476
      %v541 = vunpack.c.l.b16 %v477
      %v542 = vunpack.c.l.b16 %v478
      %v543 = vunpack.c.l.b16 %v479
      %v544 = vpack.c.b16 %v513, %v512
      %v545 = vpack.c.b16 %v515, %v514
      %v546 = vpack.c.b16 %v517, %v516
      %v547 = vpack.c.b16 %v519, %v518
      %v548 = vpack.c.b16 %v521, %v520
      %v549 = vpack.c.b16 %v523, %v522
      %v550 = vpack.c.b16 %v525, %v524
      %v551 = vpack.c.b16 %v527, %v526
      %v552 = vpack.c.b16 %v529, %v528
      %v553 = vpack.c.b16 %v531, %v530
      %v554 = vpack.c.b16 %v533, %v532
      %v555 = vpack.c.b16 %v535, %v534
      %v556 = vpack.c.b16 %v537, %v536
      %v557 = vpack.c.b16 %v539, %v538
      %v558 = vpack.c.b16 %v541, %v540
      %v559 = vpack.c.b16 %v543, %v542
      %576 = vmatprep.subr.bf16.mxu0 0
      %577 = vmatpush1.bf16.msra.mxu0 %v544
      %578 = vmatprep.subr.bf16.mxu0 0
      %579 = vmatpush1.bf16.msra.mxu0 %v545
      %580 = vmatprep.subr.bf16.mxu0 0
      %581 = vmatpush1.bf16.msra.mxu0 %v546
      %582 = vmatprep.subr.bf16.mxu0 0
      %583 = vmatpush1.bf16.msra.mxu0 %v547
      %584 = vmatprep.subr.bf16.mxu0 0
      %585 = vmatpush1.bf16.msra.mxu0 %v548
      %586 = vmatprep.subr.bf16.mxu0 0
      %587 = vmatpush1.bf16.msra.mxu0 %v549
      %588 = vmatprep.subr.bf16.mxu0 0
      %589 = vmatpush1.bf16.msra.mxu0 %v550
      %590 = vmatprep.subr.bf16.mxu0 0
      %591 = vmatpush1.bf16.msra.mxu0 %v551
      %592 = vmatprep.subr.bf16.mxu0 0
      %593 = vmatpush1.bf16.msra.mxu0 %v552
      %594 = vmatprep.subr.bf16.mxu0 0
      %595 = vmatpush1.bf16.msra.mxu0 %v553
      %596 = vmatprep.subr.bf16.mxu0 0
      %597 = vmatpush1.bf16.msra.mxu0 %v554
      %598 = vmatprep.subr.bf16.mxu0 0
      %599 = vmatpush1.bf16.msra.mxu0 %v555
      %600 = vmatprep.subr.bf16.mxu0 0
      %601 = vmatpush1.bf16.msra.mxu0 %v556
      %602 = vmatprep.subr.bf16.mxu0 0
      %603 = vmatpush1.bf16.msra.mxu0 %v557
      %604 = vmatprep.subr.bf16.mxu0 0
      %605 = vmatpush1.bf16.msra.mxu0 %v558
      %606 = vmatprep.subr.bf16.mxu0 0
      %607 = vmatpush1.bf16.msra.mxu0 %v559
      %608 = vmatprep.mubr.bf16.mxu0 %v447
      %609 = vmatmul.mubr.bf16.gmra.mrb[0].mxu0 %v446
      %v610 = vpop.f32.mrb[0].mxu0
      %v611 = vadd.f32 0.0, %v610
      %v612 = vpop.f32.mrb[0].mxu0
      %v613 = vpop.f32.mrb[0].mxu0
      %v614 = vpop.f32.mrb[0].mxu0
      %615 = vdwg.mxu0
      %v616 = vld [vmem:[%s1] sm:$0xff]
      %s617 = scalar_lea.vmem %s2, 128
      %v618 = vld [vmem:[%s617] sm:$0xf]
      %v619 = vld [vmem:[%s617 + $0x4] sm:$0xf]
      %v620 = vld [vmem:[%s617 + $0x8] sm:$0xf]
      %v621 = vld [vmem:[%s617 + $0xc] sm:$0xf]
      %v622 = vld [vmem:[%s617 + $0x10] sm:$0xf]
      %v623 = vld [vmem:[%s617 + $0x14] sm:$0xf]
      %v624 = vld [vmem:[%s617 + $0x18] sm:$0xf]
      %v625 = vld [vmem:[%s617 + $0x1c] sm:$0xf]
      %v626 = vld [vmem:[%s617 + $0x20] sm:$0xf]
      %v627 = vld [vmem:[%s617 + $0x24] sm:$0xf]
      %v628 = vld [vmem:[%s617 + $0x28] sm:$0xf]
      %v629 = vld [vmem:[%s617 + $0x2c] sm:$0xf]
      %v630 = vld [vmem:[%s617 + $0x30] sm:$0xf]
      %v631 = vld [vmem:[%s617 + $0x34] sm:$0xf]
      %v632 = vld [vmem:[%s617 + $0x38] sm:$0xf]
      %v633 = vld [vmem:[%s617 + $0x3c] sm:$0xf]
      %v634 = vld [vmem:[%s617 + $0x40] sm:$0xf]
      %v635 = vld [vmem:[%s617 + $0x44] sm:$0xf]
      %v636 = vld [vmem:[%s617 + $0x48] sm:$0xf]
      %v637 = vld [vmem:[%s617 + $0x4c] sm:$0xf]
      %v638 = vld [vmem:[%s617 + $0x50] sm:$0xf]
      %v639 = vld [vmem:[%s617 + $0x54] sm:$0xf]
      %v640 = vld [vmem:[%s617 + $0x58] sm:$0xf]
      %v641 = vld [vmem:[%s617 + $0x5c] sm:$0xf]
      %v642 = vld [vmem:[%s617 + $0x60] sm:$0xf]
      %v643 = vld [vmem:[%s617 + $0x64] sm:$0xf]
      %v644 = vld [vmem:[%s617 + $0x68] sm:$0xf]
      %v645 = vld [vmem:[%s617 + $0x6c] sm:$0xf]
      %v646 = vld [vmem:[%s617 + $0x70] sm:$0xf]
      %v647 = vld [vmem:[%s617 + $0x74] sm:$0xf]
      %v648 = vld [vmem:[%s617 + $0x78] sm:$0xf]
      %v649 = vld [vmem:[%s617 + $0x7c] sm:$0xf]
      %v682 = vunpack.c.l.b16 %v618
      %v683 = vunpack.c.l.b16 %v619
      %v684 = vunpack.c.l.b16 %v620
      %v685 = vunpack.c.l.b16 %v621
      %v686 = vunpack.c.l.b16 %v622
      %v687 = vunpack.c.l.b16 %v623
      %v688 = vunpack.c.l.b16 %v624
      %v689 = vunpack.c.l.b16 %v625
      %v690 = vunpack.c.l.b16 %v626
      %v691 = vunpack.c.l.b16 %v627
      %v692 = vunpack.c.l.b16 %v628
      %v693 = vunpack.c.l.b16 %v629
      %v694 = vunpack.c.l.b16 %v630
      %v695 = vunpack.c.l.b16 %v631
      %v696 = vunpack.c.l.b16 %v632
      %v697 = vunpack.c.l.b16 %v633
      %v698 = vunpack.c.l.b16 %v634
      %v699 = vunpack.c.l.b16 %v635
      %v700 = vunpack.c.l.b16 %v636
      %v701 = vunpack.c.l.b16 %v637
      %v702 = vunpack.c.l.b16 %v638
      %v703 = vunpack.c.l.b16 %v639
      %v704 = vunpack.c.l.b16 %v640
      %v705 = vunpack.c.l.b16 %v641
      %v706 = vunpack.c.l.b16 %v642
      %v707 = vunpack.c.l.b16 %v643
      %v708 = vunpack.c.l.b16 %v644
      %v709 = vunpack.c.l.b16 %v645
      %v710 = vunpack.c.l.b16 %v646
      %v711 = vunpack.c.l.b16 %v647
      %v712 = vunpack.c.l.b16 %v648
      %v713 = vunpack.c.l.b16 %v649
      %v714 = vpack.c.b16 %v683, %v682
      %v715 = vpack.c.b16 %v685, %v684
      %v716 = vpack.c.b16 %v687, %v686
      %v717 = vpack.c.b16 %v689, %v688
      %v718 = vpack.c.b16 %v691, %v690
      %v719 = vpack.c.b16 %v693, %v692
      %v720 = vpack.c.b16 %v695, %v694
      %v721 = vpack.c.b16 %v697, %v696
      %v722 = vpack.c.b16 %v699, %v698
      %v723 = vpack.c.b16 %v701, %v700
      %v724 = vpack.c.b16 %v703, %v702
      %v725 = vpack.c.b16 %v705, %v704
      %v726 = vpack.c.b16 %v707, %v706
      %v727 = vpack.c.b16 %v709, %v708
      %v728 = vpack.c.b16 %v711, %v710
      %v729 = vpack.c.b16 %v713, %v712
      %746 = vmatprep.subr.bf16.mxu0 0
      %747 = vmatpush1.bf16.msra.mxu0 %v714
      %748 = vmatprep.subr.bf16.mxu0 0
      %749 = vmatpush1.bf16.msra.mxu0 %v715
      %750 = vmatprep.subr.bf16.mxu0 0
      %751 = vmatpush1.bf16.msra.mxu0 %v716
      %752 = vmatprep.subr.bf16.mxu0 0
      %753 = vmatpush1.bf16.msra.mxu0 %v717
      %754 = vmatprep.subr.bf16.mxu0 0
      %755 = vmatpush1.bf16.msra.mxu0 %v718
      %756 = vmatprep.subr.bf16.mxu0 0
      %757 = vmatpush1.bf16.msra.mxu0 %v719
      %758 = vmatprep.subr.bf16.mxu0 0
      %759 = vmatpush1.bf16.msra.mxu0 %v720
      %760 = vmatprep.subr.bf16.mxu0 0
      %761 = vmatpush1.bf16.msra.mxu0 %v721
      %762 = vmatprep.subr.bf16.mxu0 0
      %763 = vmatpush1.bf16.msra.mxu0 %v722
      %764 = vmatprep.subr.bf16.mxu0 0
      %765 = vmatpush1.bf16.msra.mxu0 %v723
      %766 = vmatprep.subr.bf16.mxu0 0
      %767 = vmatpush1.bf16.msra.mxu0 %v724
      %768 = vmatprep.subr.bf16.mxu0 0
      %769 = vmatpush1.bf16.msra.mxu0 %v725
      %770 = vmatprep.subr.bf16.mxu0 0
      %771 = vmatpush1.bf16.msra.mxu0 %v726
      %772 = vmatprep.subr.bf16.mxu0 0
      %773 = vmatpush1.bf16.msra.mxu0 %v727
      %774 = vmatprep.subr.bf16.mxu0 0
      %775 = vmatpush1.bf16.msra.mxu0 %v728
      %776 = vmatprep.subr.bf16.mxu0 0
      %777 = vmatpush1.bf16.msra.mxu0 %v729
      %778 = vmatprep.mubr.bf16.mxu0 %v447
      %779 = vmatmul.mubr.bf16.gmra.mrb[0].mxu0 %v446
      %v780 = vpop.f32.mrb[0].mxu0
      %v781 = vadd.f32 0.0, %v780
      %v782 = vpop.f32.mrb[0].mxu0
      %v783 = vpop.f32.mrb[0].mxu0
      %v784 = vpop.f32.mrb[0].mxu0
      %785 = vdwg.mxu0
      %s786 = scalar_lea.vmem %s1, 8
      %v787 = vld [vmem:[%s786] sm:$0xff]
      %vm788 = vcmask 23552
      %v790 = vsel %vm788, %v787, 0
      %vm792 = vcmask 1042432
      %v794 = vsel %vm792, %v781, 0
      %796 = vmatprep.subr.mxu0 0.0
      %797 = vmatpush1.msra.mxu0 %v794
      %798 = vmatprep.subr.mxu0 0.0
      %799 = vmatpush1.msra.mxu0 0.0
      %800 = vmatprep.subr.mxu0 0.0
      %801 = vmatpush1.msra.mxu0 0.0
      %802 = vmatprep.subr.mxu0 0.0
      %803 = vmatpush1.msra.mxu0 0.0
      %804 = vmatprep.subr.mxu0 0.0
      %805 = vmatpush1.msra.mxu0 0.0
      %806 = vmatprep.subr.mxu0 0.0
      %807 = vmatpush1.msra.mxu0 0.0
      %808 = vmatprep.subr.mxu0 0.0
      %809 = vmatpush1.msra.mxu0 0.0
      %810 = vmatprep.subr.mxu0 0.0
      %811 = vmatpush1.msra.mxu0 0.0
      %812 = vmatprep.subr.mxu0 0.0
      %813 = vmatpush1.msra.mxu0 0.0
      %814 = vmatprep.subr.mxu0 0.0
      %815 = vmatpush1.msra.mxu0 0.0
      %816 = vmatprep.subr.mxu0 0.0
      %817 = vmatpush1.msra.mxu0 0.0
      %818 = vmatprep.subr.mxu0 0.0
      %819 = vmatpush1.msra.mxu0 0.0
      %820 = vmatprep.subr.mxu0 0.0
      %821 = vmatpush1.msra.mxu0 0.0
      %822 = vmatprep.subr.mxu0 0.0
      %823 = vmatpush1.msra.mxu0 0.0
      %824 = vmatprep.subr.mxu0 0.0
      %825 = vmatpush1.msra.mxu0 0.0
      %826 = vmatprep.subr.mxu0 0.0
      %827 = vmatpush1.msra.mxu0 0.0
      %828 = vmatprep.subr.mxu0 0.0
      %829 = vmatpush1.msra.mxu0 0.0
      %830 = vmatprep.subr.mxu0 0.0
      %831 = vmatpush1.msra.mxu0 0.0
      %832 = vmatprep.subr.mxu0 0.0
      %833 = vmatpush1.msra.mxu0 0.0
      %834 = vmatprep.subr.mxu0 0.0
      %835 = vmatpush1.msra.mxu0 0.0
      %836 = vmatprep.subr.mxu0 0.0
      %837 = vmatpush1.msra.mxu0 0.0
      %838 = vmatprep.subr.mxu0 0.0
      %839 = vmatpush1.msra.mxu0 0.0
      %840 = vmatprep.subr.mxu0 0.0
      %841 = vmatpush1.msra.mxu0 0.0
      %842 = vmatprep.subr.mxu0 0.0
      %843 = vmatpush1.msra.mxu0 0.0
      %844 = vmatprep.subr.mxu0 0.0
      %845 = vmatpush1.msra.mxu0 0.0
      %846 = vmatprep.subr.mxu0 0.0
      %847 = vmatpush1.msra.mxu0 0.0
      %848 = vmatprep.subr.mxu0 0.0
      %849 = vmatpush1.msra.mxu0 0.0
      %850 = vmatprep.subr.mxu0 0.0
      %851 = vmatpush1.msra.mxu0 0.0
      %852 = vmatprep.subr.mxu0 0.0
      %853 = vmatpush1.msra.mxu0 0.0
      %854 = vmatprep.subr.mxu0 0.0
      %855 = vmatpush1.msra.mxu0 0.0
      %856 = vmatprep.subr.mxu0 0.0
      %857 = vmatpush1.msra.mxu0 0.0
      %858 = vmatprep.subr.mxu0 0.0
      %859 = vmatpush1.msra.mxu0 0.0
      %860 = vmatprep.mubr.f32.mxu0 0.0
      %861 = vmatmul.mubr.f32.gmra.mrb[0].mxu0 %v790
      %v862 = vpop.f32.mrb[0].mxu0
      %v863 = vadd.f32 0.0, %v862
      %v864 = vpop.f32.mrb[0].mxu0
      %865 = vdwg.mxu0
      %v867 = vsel %vm788, %v616, 0
      %v870 = vsel %vm792, %v611, 0
      %872 = vmatprep.subr.mxu0 0.0
      %873 = vmatpush1.msra.mxu0 %v870
      %874 = vmatprep.subr.mxu0 0.0
      %875 = vmatpush1.msra.mxu0 0.0
      %876 = vmatprep.subr.mxu0 0.0
      %877 = vmatpush1.msra.mxu0 0.0
      %878 = vmatprep.subr.mxu0 0.0
      %879 = vmatpush1.msra.mxu0 0.0
      %880 = vmatprep.subr.mxu0 0.0
      %881 = vmatpush1.msra.mxu0 0.0
      %882 = vmatprep.subr.mxu0 0.0
      %883 = vmatpush1.msra.mxu0 0.0
      %884 = vmatprep.subr.mxu0 0.0
      %885 = vmatpush1.msra.mxu0 0.0
      %886 = vmatprep.subr.mxu0 0.0
      %887 = vmatpush1.msra.mxu0 0.0
      %888 = vmatprep.subr.mxu0 0.0
      %889 = vmatpush1.msra.mxu0 0.0
      %890 = vmatprep.subr.mxu0 0.0
      %891 = vmatpush1.msra.mxu0 0.0
      %892 = vmatprep.subr.mxu0 0.0
      %893 = vmatpush1.msra.mxu0 0.0
      %894 = vmatprep.subr.mxu0 0.0
      %895 = vmatpush1.msra.mxu0 0.0
      %896 = vmatprep.subr.mxu0 0.0
      %897 = vmatpush1.msra.mxu0 0.0
      %898 = vmatprep.subr.mxu0 0.0
      %899 = vmatpush1.msra.mxu0 0.0
      %900 = vmatprep.subr.mxu0 0.0
      %901 = vmatpush1.msra.mxu0 0.0
      %902 = vmatprep.subr.mxu0 0.0
      %903 = vmatpush1.msra.mxu0 0.0
      %904 = vmatprep.subr.mxu0 0.0
      %905 = vmatpush1.msra.mxu0 0.0
      %906 = vmatprep.subr.mxu0 0.0
      %907 = vmatpush1.msra.mxu0 0.0
      %908 = vmatprep.subr.mxu0 0.0
      %909 = vmatpush1.msra.mxu0 0.0
      %910 = vmatprep.subr.mxu0 0.0
      %911 = vmatpush1.msra.mxu0 0.0
      %912 = vmatprep.subr.mxu0 0.0
      %913 = vmatpush1.msra.mxu0 0.0
      %914 = vmatprep.subr.mxu0 0.0
      %915 = vmatpush1.msra.mxu0 0.0
      %916 = vmatprep.subr.mxu0 0.0
      %917 = vmatpush1.msra.mxu0 0.0
      %918 = vmatprep.subr.mxu0 0.0
      %919 = vmatpush1.msra.mxu0 0.0
      %920 = vmatprep.subr.mxu0 0.0
      %921 = vmatpush1.msra.mxu0 0.0
      %922 = vmatprep.subr.mxu0 0.0
      %923 = vmatpush1.msra.mxu0 0.0
      %924 = vmatprep.subr.mxu0 0.0
      %925 = vmatpush1.msra.mxu0 0.0
      %926 = vmatprep.subr.mxu0 0.0
      %927 = vmatpush1.msra.mxu0 0.0
      %928 = vmatprep.subr.mxu0 0.0
      %929 = vmatpush1.msra.mxu0 0.0
      %930 = vmatprep.subr.mxu0 0.0
      %931 = vmatpush1.msra.mxu0 0.0
      %932 = vmatprep.subr.mxu0 0.0
      %933 = vmatpush1.msra.mxu0 0.0
      %934 = vmatprep.subr.mxu0 0.0
      %935 = vmatpush1.msra.mxu0 0.0
      %936 = vmatprep.mubr.f32.mxu0 0.0
      %937 = vmatmul.mubr.f32.gmra.mrb[0].mxu0 %v867
      %v938 = vpop.f32.mrb[0].mxu0
      %v939 = vadd.f32 %v863, %v938
      %v940 = vpop.f32.mrb[0].mxu0
      %941 = vdwg.mxu0
      %s942 = scalar_lea.vmem %s2, 256
      %v943 = vld [vmem:[%s942] sm:$0xf]
      %v944 = vld [vmem:[%s942 + $0x4] sm:$0xf]
      %v945 = vld [vmem:[%s942 + $0x8] sm:$0xf]
      %v946 = vld [vmem:[%s942 + $0xc] sm:$0xf]
      %v947 = vld [vmem:[%s942 + $0x10] sm:$0xf]
      %v948 = vld [vmem:[%s942 + $0x14] sm:$0xf]
      %v949 = vld [vmem:[%s942 + $0x18] sm:$0xf]
      %v950 = vld [vmem:[%s942 + $0x1c] sm:$0xf]
      %v951 = vld [vmem:[%s942 + $0x20] sm:$0xf]
      %v952 = vld [vmem:[%s942 + $0x24] sm:$0xf]
      %v953 = vld [vmem:[%s942 + $0x28] sm:$0xf]
      %v954 = vld [vmem:[%s942 + $0x2c] sm:$0xf]
      %v955 = vld [vmem:[%s942 + $0x30] sm:$0xf]
      %v956 = vld [vmem:[%s942 + $0x34] sm:$0xf]
      %v957 = vld [vmem:[%s942 + $0x38] sm:$0xf]
      %v958 = vld [vmem:[%s942 + $0x3c] sm:$0xf]
      %v959 = vld [vmem:[%s942 + $0x40] sm:$0xf]
      %v960 = vld [vmem:[%s942 + $0x44] sm:$0xf]
      %v961 = vld [vmem:[%s942 + $0x48] sm:$0xf]
      %v962 = vld [vmem:[%s942 + $0x4c] sm:$0xf]
      %v963 = vld [vmem:[%s942 + $0x50] sm:$0xf]
      %v964 = vld [vmem:[%s942 + $0x54] sm:$0xf]
      %v965 = vld [vmem:[%s942 + $0x58] sm:$0xf]
      %v966 = vld [vmem:[%s942 + $0x5c] sm:$0xf]
      %v967 = vld [vmem:[%s942 + $0x60] sm:$0xf]
      %v968 = vld [vmem:[%s942 + $0x64] sm:$0xf]
      %v969 = vld [vmem:[%s942 + $0x68] sm:$0xf]
      %v970 = vld [vmem:[%s942 + $0x6c] sm:$0xf]
      %v971 = vld [vmem:[%s942 + $0x70] sm:$0xf]
      %v972 = vld [vmem:[%s942 + $0x74] sm:$0xf]
      %v973 = vld [vmem:[%s942 + $0x78] sm:$0xf]
      %v974 = vld [vmem:[%s942 + $0x7c] sm:$0xf]
      %v1007 = vunpack.c.l.b16 %v943
      %v1008 = vunpack.c.l.b16 %v944
      %v1009 = vunpack.c.l.b16 %v945
      %v1010 = vunpack.c.l.b16 %v946
      %v1011 = vunpack.c.l.b16 %v947
      %v1012 = vunpack.c.l.b16 %v948
      %v1013 = vunpack.c.l.b16 %v949
      %v1014 = vunpack.c.l.b16 %v950
      %v1015 = vunpack.c.l.b16 %v951
      %v1016 = vunpack.c.l.b16 %v952
      %v1017 = vunpack.c.l.b16 %v953
      %v1018 = vunpack.c.l.b16 %v954
      %v1019 = vunpack.c.l.b16 %v955
      %v1020 = vunpack.c.l.b16 %v956
      %v1021 = vunpack.c.l.b16 %v957
      %v1022 = vunpack.c.l.b16 %v958
      %v1023 = vunpack.c.l.b16 %v959
      %v1024 = vunpack.c.l.b16 %v960
      %v1025 = vunpack.c.l.b16 %v961
      %v1026 = vunpack.c.l.b16 %v962
      %v1027 = vunpack.c.l.b16 %v963
      %v1028 = vunpack.c.l.b16 %v964
      %v1029 = vunpack.c.l.b16 %v965
      %v1030 = vunpack.c.l.b16 %v966
      %v1031 = vunpack.c.l.b16 %v967
      %v1032 = vunpack.c.l.b16 %v968
      %v1033 = vunpack.c.l.b16 %v969
      %v1034 = vunpack.c.l.b16 %v970
      %v1035 = vunpack.c.l.b16 %v971
      %v1036 = vunpack.c.l.b16 %v972
      %v1037 = vunpack.c.l.b16 %v973
      %v1038 = vunpack.c.l.b16 %v974
      %v1039 = vpack.c.b16 %v1008, %v1007
      %v1040 = vpack.c.b16 %v1010, %v1009
      %v1041 = vpack.c.b16 %v1012, %v1011
      %v1042 = vpack.c.b16 %v1014, %v1013
      %v1043 = vpack.c.b16 %v1016, %v1015
      %v1044 = vpack.c.b16 %v1018, %v1017
      %v1045 = vpack.c.b16 %v1020, %v1019
      %v1046 = vpack.c.b16 %v1022, %v1021
      %v1047 = vpack.c.b16 %v1024, %v1023
      %v1048 = vpack.c.b16 %v1026, %v1025
      %v1049 = vpack.c.b16 %v1028, %v1027
      %v1050 = vpack.c.b16 %v1030, %v1029
      %v1051 = vpack.c.b16 %v1032, %v1031
      %v1052 = vpack.c.b16 %v1034, %v1033
      %v1053 = vpack.c.b16 %v1036, %v1035
      %v1054 = vpack.c.b16 %v1038, %v1037
      %1071 = vmatprep.subr.bf16.mxu0 0
      %1072 = vmatpush1.bf16.msra.mxu0 %v1039
      %1073 = vmatprep.subr.bf16.mxu0 0
      %1074 = vmatpush1.bf16.msra.mxu0 %v1040
      %1075 = vmatprep.subr.bf16.mxu0 0
      %1076 = vmatpush1.bf16.msra.mxu0 %v1041
      %1077 = vmatprep.subr.bf16.mxu0 0
      %1078 = vmatpush1.bf16.msra.mxu0 %v1042
      %1079 = vmatprep.subr.bf16.mxu0 0
      %1080 = vmatpush1.bf16.msra.mxu0 %v1043
      %1081 = vmatprep.subr.bf16.mxu0 0
      %1082 = vmatpush1.bf16.msra.mxu0 %v1044
      %1083 = vmatprep.subr.bf16.mxu0 0
      %1084 = vmatpush1.bf16.msra.mxu0 %v1045
      %1085 = vmatprep.subr.bf16.mxu0 0
      %1086 = vmatpush1.bf16.msra.mxu0 %v1046
      %1087 = vmatprep.subr.bf16.mxu0 0
      %1088 = vmatpush1.bf16.msra.mxu0 %v1047
      %1089 = vmatprep.subr.bf16.mxu0 0
      %1090 = vmatpush1.bf16.msra.mxu0 %v1048
      %1091 = vmatprep.subr.bf16.mxu0 0
      %1092 = vmatpush1.bf16.msra.mxu0 %v1049
      %1093 = vmatprep.subr.bf16.mxu0 0
      %1094 = vmatpush1.bf16.msra.mxu0 %v1050
      %1095 = vmatprep.subr.bf16.mxu0 0
      %1096 = vmatpush1.bf16.msra.mxu0 %v1051
      %1097 = vmatprep.subr.bf16.mxu0 0
      %1098 = vmatpush1.bf16.msra.mxu0 %v1052
      %1099 = vmatprep.subr.bf16.mxu0 0
      %1100 = vmatpush1.bf16.msra.mxu0 %v1053
      %1101 = vmatprep.subr.bf16.mxu0 0
      %1102 = vmatpush1.bf16.msra.mxu0 %v1054
      %1103 = vmatprep.mubr.bf16.mxu0 %v447
      %1104 = vmatmul.mubr.bf16.gmra.mrb[0].mxu0 %v446
      %v1105 = vpop.f32.mrb[0].mxu0
      %v1106 = vadd.f32 0.0, %v1105
      %v1107 = vpop.f32.mrb[0].mxu0
      %v1108 = vpop.f32.mrb[0].mxu0
      %v1109 = vpop.f32.mrb[0].mxu0
      %1110 = vdwg.mxu0
      %s1111 = scalar_lea.vmem %s1, 16
      %v1112 = vld [vmem:[%s1111] sm:$0xff]
      %v1114 = vsel %vm788, %v1112, 0
      %v1117 = vsel %vm792, %v1106, 0
      %1119 = vmatprep.subr.mxu0 0.0
      %1120 = vmatpush1.msra.mxu0 %v1117
      %1121 = vmatprep.subr.mxu0 0.0
      %1122 = vmatpush1.msra.mxu0 0.0
      %1123 = vmatprep.subr.mxu0 0.0
      %1124 = vmatpush1.msra.mxu0 0.0
      %1125 = vmatprep.subr.mxu0 0.0
      %1126 = vmatpush1.msra.mxu0 0.0
      %1127 = vmatprep.subr.mxu0 0.0
      %1128 = vmatpush1.msra.mxu0 0.0
      %1129 = vmatprep.subr.mxu0 0.0
      %1130 = vmatpush1.msra.mxu0 0.0
      %1131 = vmatprep.subr.mxu0 0.0
      %1132 = vmatpush1.msra.mxu0 0.0
      %1133 = vmatprep.subr.mxu0 0.0
      %1134 = vmatpush1.msra.mxu0 0.0
      %1135 = vmatprep.subr.mxu0 0.0
      %1136 = vmatpush1.msra.mxu0 0.0
      %1137 = vmatprep.subr.mxu0 0.0
      %1138 = vmatpush1.msra.mxu0 0.0
      %1139 = vmatprep.subr.mxu0 0.0
      %1140 = vmatpush1.msra.mxu0 0.0
      %1141 = vmatprep.subr.mxu0 0.0
      %1142 = vmatpush1.msra.mxu0 0.0
      %1143 = vmatprep.subr.mxu0 0.0
      %1144 = vmatpush1.msra.mxu0 0.0
      %1145 = vmatprep.subr.mxu0 0.0
      %1146 = vmatpush1.msra.mxu0 0.0
      %1147 = vmatprep.subr.mxu0 0.0
      %1148 = vmatpush1.msra.mxu0 0.0
      %1149 = vmatprep.subr.mxu0 0.0
      %1150 = vmatpush1.msra.mxu0 0.0
      %1151 = vmatprep.subr.mxu0 0.0
      %1152 = vmatpush1.msra.mxu0 0.0
      %1153 = vmatprep.subr.mxu0 0.0
      %1154 = vmatpush1.msra.mxu0 0.0
      %1155 = vmatprep.subr.mxu0 0.0
      %1156 = vmatpush1.msra.mxu0 0.0
      %1157 = vmatprep.subr.mxu0 0.0
      %1158 = vmatpush1.msra.mxu0 0.0
      %1159 = vmatprep.subr.mxu0 0.0
      %1160 = vmatpush1.msra.mxu0 0.0
      %1161 = vmatprep.subr.mxu0 0.0
      %1162 = vmatpush1.msra.mxu0 0.0
      %1163 = vmatprep.subr.mxu0 0.0
      %1164 = vmatpush1.msra.mxu0 0.0
      %1165 = vmatprep.subr.mxu0 0.0
      %1166 = vmatpush1.msra.mxu0 0.0
      %1167 = vmatprep.subr.mxu0 0.0
      %1168 = vmatpush1.msra.mxu0 0.0
      %1169 = vmatprep.subr.mxu0 0.0
      %1170 = vmatpush1.msra.mxu0 0.0
      %1171 = vmatprep.subr.mxu0 0.0
      %1172 = vmatpush1.msra.mxu0 0.0
      %1173 = vmatprep.subr.mxu0 0.0
      %1174 = vmatpush1.msra.mxu0 0.0
      %1175 = vmatprep.subr.mxu0 0.0
      %1176 = vmatpush1.msra.mxu0 0.0
      %1177 = vmatprep.subr.mxu0 0.0
      %1178 = vmatpush1.msra.mxu0 0.0
      %1179 = vmatprep.subr.mxu0 0.0
      %1180 = vmatpush1.msra.mxu0 0.0
      %1181 = vmatprep.subr.mxu0 0.0
      %1182 = vmatpush1.msra.mxu0 0.0
      %1183 = vmatprep.mubr.f32.mxu0 0.0
      %1184 = vmatmul.mubr.f32.gmra.mrb[0].mxu0 %v1114
      %v1185 = vpop.f32.mrb[0].mxu0
      %v1186 = vadd.f32 0.0, %v1185
      %v1187 = vpop.f32.mrb[0].mxu0
      %1188 = vdwg.mxu0
      %v1189 = vadd.f32 %v939, %v1186
      %s1190 = scalar_lea.vmem %s2, 384
      %v1191 = vld [vmem:[%s1190] sm:$0xf]
      %v1192 = vld [vmem:[%s1190 + $0x4] sm:$0xf]
      %v1193 = vld [vmem:[%s1190 + $0x8] sm:$0xf]
      %v1194 = vld [vmem:[%s1190 + $0xc] sm:$0xf]
      %v1195 = vld [vmem:[%s1190 + $0x10] sm:$0xf]
      %v1196 = vld [vmem:[%s1190 + $0x14] sm:$0xf]
      %v1197 = vld [vmem:[%s1190 + $0x18] sm:$0xf]
      %v1198 = vld [vmem:[%s1190 + $0x1c] sm:$0xf]
      %v1199 = vld [vmem:[%s1190 + $0x20] sm:$0xf]
      %v1200 = vld [vmem:[%s1190 + $0x24] sm:$0xf]
      %v1201 = vld [vmem:[%s1190 + $0x28] sm:$0xf]
      %v1202 = vld [vmem:[%s1190 + $0x2c] sm:$0xf]
      %v1203 = vld [vmem:[%s1190 + $0x30] sm:$0xf]
      %v1204 = vld [vmem:[%s1190 + $0x34] sm:$0xf]
      %v1205 = vld [vmem:[%s1190 + $0x38] sm:$0xf]
      %v1206 = vld [vmem:[%s1190 + $0x3c] sm:$0xf]
      %v1207 = vld [vmem:[%s1190 + $0x40] sm:$0xf]
      %v1208 = vld [vmem:[%s1190 + $0x44] sm:$0xf]
      %v1209 = vld [vmem:[%s1190 + $0x48] sm:$0xf]
      %v1210 = vld [vmem:[%s1190 + $0x4c] sm:$0xf]
      %v1211 = vld [vmem:[%s1190 + $0x50] sm:$0xf]
      %v1212 = vld [vmem:[%s1190 + $0x54] sm:$0xf]
      %v1213 = vld [vmem:[%s1190 + $0x58] sm:$0xf]
      %v1214 = vld [vmem:[%s1190 + $0x5c] sm:$0xf]
      %v1215 = vld [vmem:[%s1190 + $0x60] sm:$0xf]
      %v1216 = vld [vmem:[%s1190 + $0x64] sm:$0xf]
      %v1217 = vld [vmem:[%s1190 + $0x68] sm:$0xf]
      %v1218 = vld [vmem:[%s1190 + $0x6c] sm:$0xf]
      %v1219 = vld [vmem:[%s1190 + $0x70] sm:$0xf]
      %v1220 = vld [vmem:[%s1190 + $0x74] sm:$0xf]
      %v1221 = vld [vmem:[%s1190 + $0x78] sm:$0xf]
      %v1222 = vld [vmem:[%s1190 + $0x7c] sm:$0xf]
      %v1255 = vunpack.c.l.b16 %v1191
      %v1256 = vunpack.c.l.b16 %v1192
      %v1257 = vunpack.c.l.b16 %v1193
      %v1258 = vunpack.c.l.b16 %v1194
      %v1259 = vunpack.c.l.b16 %v1195
      %v1260 = vunpack.c.l.b16 %v1196
      %v1261 = vunpack.c.l.b16 %v1197
      %v1262 = vunpack.c.l.b16 %v1198
      %v1263 = vunpack.c.l.b16 %v1199
      %v1264 = vunpack.c.l.b16 %v1200
      %v1265 = vunpack.c.l.b16 %v1201
      %v1266 = vunpack.c.l.b16 %v1202
      %v1267 = vunpack.c.l.b16 %v1203
      %v1268 = vunpack.c.l.b16 %v1204
      %v1269 = vunpack.c.l.b16 %v1205
      %v1270 = vunpack.c.l.b16 %v1206
      %v1271 = vunpack.c.l.b16 %v1207
      %v1272 = vunpack.c.l.b16 %v1208
      %v1273 = vunpack.c.l.b16 %v1209
      %v1274 = vunpack.c.l.b16 %v1210
      %v1275 = vunpack.c.l.b16 %v1211
      %v1276 = vunpack.c.l.b16 %v1212
      %v1277 = vunpack.c.l.b16 %v1213
      %v1278 = vunpack.c.l.b16 %v1214
      %v1279 = vunpack.c.l.b16 %v1215
      %v1280 = vunpack.c.l.b16 %v1216
      %v1281 = vunpack.c.l.b16 %v1217
      %v1282 = vunpack.c.l.b16 %v1218
      %v1283 = vunpack.c.l.b16 %v1219
      %v1284 = vunpack.c.l.b16 %v1220
      %v1285 = vunpack.c.l.b16 %v1221
      %v1286 = vunpack.c.l.b16 %v1222
      %v1287 = vpack.c.b16 %v1256, %v1255
      %v1288 = vpack.c.b16 %v1258, %v1257
      %v1289 = vpack.c.b16 %v1260, %v1259
      %v1290 = vpack.c.b16 %v1262, %v1261
      %v1291 = vpack.c.b16 %v1264, %v1263
      %v1292 = vpack.c.b16 %v1266, %v1265
      %v1293 = vpack.c.b16 %v1268, %v1267
      %v1294 = vpack.c.b16 %v1270, %v1269
      %v1295 = vpack.c.b16 %v1272, %v1271
      %v1296 = vpack.c.b16 %v1274, %v1273
      %v1297 = vpack.c.b16 %v1276, %v1275
      %v1298 = vpack.c.b16 %v1278, %v1277
      %v1299 = vpack.c.b16 %v1280, %v1279
      %v1300 = vpack.c.b16 %v1282, %v1281
      %v1301 = vpack.c.b16 %v1284, %v1283
      %v1302 = vpack.c.b16 %v1286, %v1285
      %1319 = vmatprep.subr.bf16.mxu0 0
      %1320 = vmatpush1.bf16.msra.mxu0 %v1287
      %1321 = vmatprep.subr.bf16.mxu0 0
      %1322 = vmatpush1.bf16.msra.mxu0 %v1288
      %1323 = vmatprep.subr.bf16.mxu0 0
      %1324 = vmatpush1.bf16.msra.mxu0 %v1289
      %1325 = vmatprep.subr.bf16.mxu0 0
      %1326 = vmatpush1.bf16.msra.mxu0 %v1290
      %1327 = vmatprep.subr.bf16.mxu0 0
      %1328 = vmatpush1.bf16.msra.mxu0 %v1291
      %1329 = vmatprep.subr.bf16.mxu0 0
      %1330 = vmatpush1.bf16.msra.mxu0 %v1292
      %1331 = vmatprep.subr.bf16.mxu0 0
      %1332 = vmatpush1.bf16.msra.mxu0 %v1293
      %1333 = vmatprep.subr.bf16.mxu0 0
      %1334 = vmatpush1.bf16.msra.mxu0 %v1294
      %1335 = vmatprep.subr.bf16.mxu0 0
      %1336 = vmatpush1.bf16.msra.mxu0 %v1295
      %1337 = vmatprep.subr.bf16.mxu0 0
      %1338 = vmatpush1.bf16.msra.mxu0 %v1296
      %1339 = vmatprep.subr.bf16.mxu0 0
      %1340 = vmatpush1.bf16.msra.mxu0 %v1297
      %1341 = vmatprep.subr.bf16.mxu0 0
      %1342 = vmatpush1.bf16.msra.mxu0 %v1298
      %1343 = vmatprep.subr.bf16.mxu0 0
      %1344 = vmatpush1.bf16.msra.mxu0 %v1299
      %1345 = vmatprep.subr.bf16.mxu0 0
      %1346 = vmatpush1.bf16.msra.mxu0 %v1300
      %1347 = vmatprep.subr.bf16.mxu0 0
      %1348 = vmatpush1.bf16.msra.mxu0 %v1301
      %1349 = vmatprep.subr.bf16.mxu0 0
      %1350 = vmatpush1.bf16.msra.mxu0 %v1302
      %1351 = vmatprep.mubr.bf16.mxu0 %v447
      %1352 = vmatmul.mubr.bf16.gmra.mrb[0].mxu0 %v446
      %v1353 = vpop.f32.mrb[0].mxu0
      %v1354 = vadd.f32 0.0, %v1353
      %v1355 = vpop.f32.mrb[0].mxu0
      %v1356 = vpop.f32.mrb[0].mxu0
      %v1357 = vpop.f32.mrb[0].mxu0
      %1358 = vdwg.mxu0
      %s1359 = scalar_lea.vmem %s1, 24
      %v1360 = vld [vmem:[%s1359] sm:$0xff]
      %v1362 = vsel %vm788, %v1360, 0
      %v1365 = vsel %vm792, %v1354, 0
      %1367 = vmatprep.subr.mxu0 0.0
      %1368 = vmatpush1.msra.mxu0 %v1365
      %1369 = vmatprep.subr.mxu0 0.0
      %1370 = vmatpush1.msra.mxu0 0.0
      %1371 = vmatprep.subr.mxu0 0.0
      %1372 = vmatpush1.msra.mxu0 0.0
      %1373 = vmatprep.subr.mxu0 0.0
      %1374 = vmatpush1.msra.mxu0 0.0
      %1375 = vmatprep.subr.mxu0 0.0
      %1376 = vmatpush1.msra.mxu0 0.0
      %1377 = vmatprep.subr.mxu0 0.0
      %1378 = vmatpush1.msra.mxu0 0.0
      %1379 = vmatprep.subr.mxu0 0.0
      %1380 = vmatpush1.msra.mxu0 0.0
      %1381 = vmatprep.subr.mxu0 0.0
      %1382 = vmatpush1.msra.mxu0 0.0
      %1383 = vmatprep.subr.mxu0 0.0
      %1384 = vmatpush1.msra.mxu0 0.0
      %1385 = vmatprep.subr.mxu0 0.0
      %1386 = vmatpush1.msra.mxu0 0.0
      %1387 = vmatprep.subr.mxu0 0.0
      %1388 = vmatpush1.msra.mxu0 0.0
      %1389 = vmatprep.subr.mxu0 0.0
      %1390 = vmatpush1.msra.mxu0 0.0
      %1391 = vmatprep.subr.mxu0 0.0
      %1392 = vmatpush1.msra.mxu0 0.0
      %1393 = vmatprep.subr.mxu0 0.0
      %1394 = vmatpush1.msra.mxu0 0.0
      %1395 = vmatprep.subr.mxu0 0.0
      %1396 = vmatpush1.msra.mxu0 0.0
      %1397 = vmatprep.subr.mxu0 0.0
      %1398 = vmatpush1.msra.mxu0 0.0
      %1399 = vmatprep.subr.mxu0 0.0
      %1400 = vmatpush1.msra.mxu0 0.0
      %1401 = vmatprep.subr.mxu0 0.0
      %1402 = vmatpush1.msra.mxu0 0.0
      %1403 = vmatprep.subr.mxu0 0.0
      %1404 = vmatpush1.msra.mxu0 0.0
      %1405 = vmatprep.subr.mxu0 0.0
      %1406 = vmatpush1.msra.mxu0 0.0
      %1407 = vmatprep.subr.mxu0 0.0
      %1408 = vmatpush1.msra.mxu0 0.0
      %1409 = vmatprep.subr.mxu0 0.0
      %1410 = vmatpush1.msra.mxu0 0.0
      %1411 = vmatprep.subr.mxu0 0.0
      %1412 = vmatpush1.msra.mxu0 0.0
      %1413 = vmatprep.subr.mxu0 0.0
      %1414 = vmatpush1.msra.mxu0 0.0
      %1415 = vmatprep.subr.mxu0 0.0
      %1416 = vmatpush1.msra.mxu0 0.0
      %1417 = vmatprep.subr.mxu0 0.0
      %1418 = vmatpush1.msra.mxu0 0.0
      %1419 = vmatprep.subr.mxu0 0.0
      %1420 = vmatpush1.msra.mxu0 0.0
      %1421 = vmatprep.subr.mxu0 0.0
      %1422 = vmatpush1.msra.mxu0 0.0
      %1423 = vmatprep.subr.mxu0 0.0
      %1424 = vmatpush1.msra.mxu0 0.0
      %1425 = vmatprep.subr.mxu0 0.0
      %1426 = vmatpush1.msra.mxu0 0.0
      %1427 = vmatprep.subr.mxu0 0.0
      %1428 = vmatpush1.msra.mxu0 0.0
      %1429 = vmatprep.subr.mxu0 0.0
      %1430 = vmatpush1.msra.mxu0 0.0
      %1431 = vmatprep.mubr.f32.mxu0 0.0
      %1432 = vmatmul.mubr.f32.gmra.mrb[0].mxu0 %v1362
      %v1433 = vpop.f32.mrb[0].mxu0
      %v1434 = vadd.f32 0.0, %v1433
      %v1435 = vpop.f32.mrb[0].mxu0
      %1436 = vdwg.mxu0
      %v1437 = vadd.f32 %v1189, %v1434
      %s1438 = scalar_lea.vmem %s2, 512
      %v1439 = vld [vmem:[%s1438] sm:$0xf]
      %v1440 = vld [vmem:[%s1438 + $0x4] sm:$0xf]
      %v1441 = vld [vmem:[%s1438 + $0x8] sm:$0xf]
      %v1442 = vld [vmem:[%s1438 + $0xc] sm:$0xf]
      %v1443 = vld [vmem:[%s1438 + $0x10] sm:$0xf]
      %v1444 = vld [vmem:[%s1438 + $0x14] sm:$0xf]
      %v1445 = vld [vmem:[%s1438 + $0x18] sm:$0xf]
      %v1446 = vld [vmem:[%s1438 + $0x1c] sm:$0xf]
      %v1447 = vld [vmem:[%s1438 + $0x20] sm:$0xf]
      %v1448 = vld [vmem:[%s1438 + $0x24] sm:$0xf]
      %v1449 = vld [vmem:[%s1438 + $0x28] sm:$0xf]
      %v1450 = vld [vmem:[%s1438 + $0x2c] sm:$0xf]
      %v1451 = vld [vmem:[%s1438 + $0x30] sm:$0xf]
      %v1452 = vld [vmem:[%s1438 + $0x34] sm:$0xf]
      %v1453 = vld [vmem:[%s1438 + $0x38] sm:$0xf]
      %v1454 = vld [vmem:[%s1438 + $0x3c] sm:$0xf]
      %v1455 = vld [vmem:[%s1438 + $0x40] sm:$0xf]
      %v1456 = vld [vmem:[%s1438 + $0x44] sm:$0xf]
      %v1457 = vld [vmem:[%s1438 + $0x48] sm:$0xf]
      %v1458 = vld [vmem:[%s1438 + $0x4c] sm:$0xf]
      %v1459 = vld [vmem:[%s1438 + $0x50] sm:$0xf]
      %v1460 = vld [vmem:[%s1438 + $0x54] sm:$0xf]
      %v1461 = vld [vmem:[%s1438 + $0x58] sm:$0xf]
      %v1462 = vld [vmem:[%s1438 + $0x5c] sm:$0xf]
      %v1463 = vld [vmem:[%s1438 + $0x60] sm:$0xf]
      %v1464 = vld [vmem:[%s1438 + $0x64] sm:$0xf]
      %v1465 = vld [vmem:[%s1438 + $0x68] sm:$0xf]
      %v1466 = vld [vmem:[%s1438 + $0x6c] sm:$0xf]
      %v1467 = vld [vmem:[%s1438 + $0x70] sm:$0xf]
      %v1468 = vld [vmem:[%s1438 + $0x74] sm:$0xf]
      %v1469 = vld [vmem:[%s1438 + $0x78] sm:$0xf]
      %v1470 = vld [vmem:[%s1438 + $0x7c] sm:$0xf]
      %v1503 = vunpack.c.l.b16 %v1439
      %v1504 = vunpack.c.l.b16 %v1440
      %v1505 = vunpack.c.l.b16 %v1441
      %v1506 = vunpack.c.l.b16 %v1442
      %v1507 = vunpack.c.l.b16 %v1443
      %v1508 = vunpack.c.l.b16 %v1444
      %v1509 = vunpack.c.l.b16 %v1445
      %v1510 = vunpack.c.l.b16 %v1446
      %v1511 = vunpack.c.l.b16 %v1447
      %v1512 = vunpack.c.l.b16 %v1448
      %v1513 = vunpack.c.l.b16 %v1449
      %v1514 = vunpack.c.l.b16 %v1450
      %v1515 = vunpack.c.l.b16 %v1451
      %v1516 = vunpack.c.l.b16 %v1452
      %v1517 = vunpack.c.l.b16 %v1453
      %v1518 = vunpack.c.l.b16 %v1454
      %v1519 = vunpack.c.l.b16 %v1455
      %v1520 = vunpack.c.l.b16 %v1456
      %v1521 = vunpack.c.l.b16 %v1457
      %v1522 = vunpack.c.l.b16 %v1458
      %v1523 = vunpack.c.l.b16 %v1459
      %v1524 = vunpack.c.l.b16 %v1460
      %v1525 = vunpack.c.l.b16 %v1461
      %v1526 = vunpack.c.l.b16 %v1462
      %v1527 = vunpack.c.l.b16 %v1463
      %v1528 = vunpack.c.l.b16 %v1464
      %v1529 = vunpack.c.l.b16 %v1465
      %v1530 = vunpack.c.l.b16 %v1466
      %v1531 = vunpack.c.l.b16 %v1467
      %v1532 = vunpack.c.l.b16 %v1468
      %v1533 = vunpack.c.l.b16 %v1469
      %v1534 = vunpack.c.l.b16 %v1470
      %v1535 = vpack.c.b16 %v1504, %v1503
      %v1536 = vpack.c.b16 %v1506, %v1505
      %v1537 = vpack.c.b16 %v1508, %v1507
      %v1538 = vpack.c.b16 %v1510, %v1509
      %v1539 = vpack.c.b16 %v1512, %v1511
      %v1540 = vpack.c.b16 %v1514, %v1513
      %v1541 = vpack.c.b16 %v1516, %v1515
      %v1542 = vpack.c.b16 %v1518, %v1517
      %v1543 = vpack.c.b16 %v1520, %v1519
      %v1544 = vpack.c.b16 %v1522, %v1521
      %v1545 = vpack.c.b16 %v1524, %v1523
      %v1546 = vpack.c.b16 %v1526, %v1525
      %v1547 = vpack.c.b16 %v1528, %v1527
      %v1548 = vpack.c.b16 %v1530, %v1529
      %v1549 = vpack.c.b16 %v1532, %v1531
      %v1550 = vpack.c.b16 %v1534, %v1533
      %1567 = vmatprep.subr.bf16.mxu0 0
      %1568 = vmatpush1.bf16.msra.mxu0 %v1535
      %1569 = vmatprep.subr.bf16.mxu0 0
      %1570 = vmatpush1.bf16.msra.mxu0 %v1536
      %1571 = vmatprep.subr.bf16.mxu0 0
      %1572 = vmatpush1.bf16.msra.mxu0 %v1537
      %1573 = vmatprep.subr.bf16.mxu0 0
      %1574 = vmatpush1.bf16.msra.mxu0 %v1538
      %1575 = vmatprep.subr.bf16.mxu0 0
      %1576 = vmatpush1.bf16.msra.mxu0 %v1539
      %1577 = vmatprep.subr.bf16.mxu0 0
      %1578 = vmatpush1.bf16.msra.mxu0 %v1540
      %1579 = vmatprep.subr.bf16.mxu0 0
      %1580 = vmatpush1.bf16.msra.mxu0 %v1541
      %1581 = vmatprep.subr.bf16.mxu0 0
      %1582 = vmatpush1.bf16.msra.mxu0 %v1542
      %1583 = vmatprep.subr.bf16.mxu0 0
      %1584 = vmatpush1.bf16.msra.mxu0 %v1543
      %1585 = vmatprep.subr.bf16.mxu0 0
      %1586 = vmatpush1.bf16.msra.mxu0 %v1544
      %1587 = vmatprep.subr.bf16.mxu0 0
      %1588 = vmatpush1.bf16.msra.mxu0 %v1545
      %1589 = vmatprep.subr.bf16.mxu0 0
      %1590 = vmatpush1.bf16.msra.mxu0 %v1546
      %1591 = vmatprep.subr.bf16.mxu0 0
      %1592 = vmatpush1.bf16.msra.mxu0 %v1547
      %1593 = vmatprep.subr.bf16.mxu0 0
      %1594 = vmatpush1.bf16.msra.mxu0 %v1548
      %1595 = vmatprep.subr.bf16.mxu0 0
      %1596 = vmatpush1.bf16.msra.mxu0 %v1549
      %1597 = vmatprep.subr.bf16.mxu0 0
      %1598 = vmatpush1.bf16.msra.mxu0 %v1550
      %1599 = vmatprep.mubr.bf16.mxu0 %v447
      %1600 = vmatmul.mubr.bf16.gmra.mrb[0].mxu0 %v446
      %v1601 = vpop.f32.mrb[0].mxu0
      %v1602 = vadd.f32 0.0, %v1601
      %v1603 = vpop.f32.mrb[0].mxu0
      %v1604 = vpop.f32.mrb[0].mxu0
      %v1605 = vpop.f32.mrb[0].mxu0
      %1606 = vdwg.mxu0
      %s1607 = scalar_lea.vmem %s1, 32
      %v1608 = vld [vmem:[%s1607] sm:$0xff]
      %v1610 = vsel %vm788, %v1608, 0
      %v1613 = vsel %vm792, %v1602, 0
      %1615 = vmatprep.subr.mxu0 0.0
      %1616 = vmatpush1.msra.mxu0 %v1613
      %1617 = vmatprep.subr.mxu0 0.0
      %1618 = vmatpush1.msra.mxu0 0.0
      %1619 = vmatprep.subr.mxu0 0.0
      %1620 = vmatpush1.msra.mxu0 0.0
      %1621 = vmatprep.subr.mxu0 0.0
      %1622 = vmatpush1.msra.mxu0 0.0
      %1623 = vmatprep.subr.mxu0 0.0
      %1624 = vmatpush1.msra.mxu0 0.0
      %1625 = vmatprep.subr.mxu0 0.0
      %1626 = vmatpush1.msra.mxu0 0.0
      %1627 = vmatprep.subr.mxu0 0.0
      %1628 = vmatpush1.msra.mxu0 0.0
      %1629 = vmatprep.subr.mxu0 0.0
      %1630 = vmatpush1.msra.mxu0 0.0
      %1631 = vmatprep.subr.mxu0 0.0
      %1632 = vmatpush1.msra.mxu0 0.0
      %1633 = vmatprep.subr.mxu0 0.0
      %1634 = vmatpush1.msra.mxu0 0.0
      %1635 = vmatprep.subr.mxu0 0.0
      %1636 = vmatpush1.msra.mxu0 0.0
      %1637 = vmatprep.subr.mxu0 0.0
      %1638 = vmatpush1.msra.mxu0 0.0
      %1639 = vmatprep.subr.mxu0 0.0
      %1640 = vmatpush1.msra.mxu0 0.0
      %1641 = vmatprep.subr.mxu0 0.0
      %1642 = vmatpush1.msra.mxu0 0.0
      %1643 = vmatprep.subr.mxu0 0.0
      %1644 = vmatpush1.msra.mxu0 0.0
      %1645 = vmatprep.subr.mxu0 0.0
      %1646 = vmatpush1.msra.mxu0 0.0
      %1647 = vmatprep.subr.mxu0 0.0
      %1648 = vmatpush1.msra.mxu0 0.0
      %1649 = vmatprep.subr.mxu0 0.0
      %1650 = vmatpush1.msra.mxu0 0.0
      %1651 = vmatprep.subr.mxu0 0.0
      %1652 = vmatpush1.msra.mxu0 0.0
      %1653 = vmatprep.subr.mxu0 0.0
      %1654 = vmatpush1.msra.mxu0 0.0
      %1655 = vmatprep.subr.mxu0 0.0
      %1656 = vmatpush1.msra.mxu0 0.0
      %1657 = vmatprep.subr.mxu0 0.0
      %1658 = vmatpush1.msra.mxu0 0.0
      %1659 = vmatprep.subr.mxu0 0.0
      %1660 = vmatpush1.msra.mxu0 0.0
      %1661 = vmatprep.subr.mxu0 0.0
      %1662 = vmatpush1.msra.mxu0 0.0
      %1663 = vmatprep.subr.mxu0 0.0
      %1664 = vmatpush1.msra.mxu0 0.0
      %1665 = vmatprep.subr.mxu0 0.0
      %1666 = vmatpush1.msra.mxu0 0.0
      %1667 = vmatprep.subr.mxu0 0.0
      %1668 = vmatpush1.msra.mxu0 0.0
      %1669 = vmatprep.subr.mxu0 0.0
      %1670 = vmatpush1.msra.mxu0 0.0
      %1671 = vmatprep.subr.mxu0 0.0
      %1672 = vmatpush1.msra.mxu0 0.0
      %1673 = vmatprep.subr.mxu0 0.0
      %1674 = vmatpush1.msra.mxu0 0.0
      %1675 = vmatprep.subr.mxu0 0.0
      %1676 = vmatpush1.msra.mxu0 0.0
      %1677 = vmatprep.subr.mxu0 0.0
      %1678 = vmatpush1.msra.mxu0 0.0
      %1679 = vmatprep.mubr.f32.mxu0 0.0
      %1680 = vmatmul.mubr.f32.gmra.mrb[0].mxu0 %v1610
      %v1681 = vpop.f32.mrb[0].mxu0
      %v1682 = vadd.f32 0.0, %v1681
      %v1683 = vpop.f32.mrb[0].mxu0
      %1684 = vdwg.mxu0
      %v1685 = vadd.f32 %v1437, %v1682
      %s1686 = scalar_lea.vmem %s2, 640
      %v1687 = vld [vmem:[%s1686] sm:$0xf]
      %v1688 = vld [vmem:[%s1686 + $0x4] sm:$0xf]
      %v1689 = vld [vmem:[%s1686 + $0x8] sm:$0xf]
      %v1690 = vld [vmem:[%s1686 + $0xc] sm:$0xf]
      %v1691 = vld [vmem:[%s1686 + $0x10] sm:$0xf]
      %v1692 = vld [vmem:[%s1686 + $0x14] sm:$0xf]
      %v1693 = vld [vmem:[%s1686 + $0x18] sm:$0xf]
      %v1694 = vld [vmem:[%s1686 + $0x1c] sm:$0xf]
      %v1695 = vld [vmem:[%s1686 + $0x20] sm:$0xf]
      %v1696 = vld [vmem:[%s1686 + $0x24] sm:$0xf]
      %v1697 = vld [vmem:[%s1686 + $0x28] sm:$0xf]
      %v1698 = vld [vmem:[%s1686 + $0x2c] sm:$0xf]
      %v1699 = vld [vmem:[%s1686 + $0x30] sm:$0xf]
      %v1700 = vld [vmem:[%s1686 + $0x34] sm:$0xf]
      %v1701 = vld [vmem:[%s1686 + $0x38] sm:$0xf]
      %v1702 = vld [vmem:[%s1686 + $0x3c] sm:$0xf]
      %v1703 = vld [vmem:[%s1686 + $0x40] sm:$0xf]
      %v1704 = vld [vmem:[%s1686 + $0x44] sm:$0xf]
      %v1705 = vld [vmem:[%s1686 + $0x48] sm:$0xf]
      %v1706 = vld [vmem:[%s1686 + $0x4c] sm:$0xf]
      %v1707 = vld [vmem:[%s1686 + $0x50] sm:$0xf]
      %v1708 = vld [vmem:[%s1686 + $0x54] sm:$0xf]
      %v1709 = vld [vmem:[%s1686 + $0x58] sm:$0xf]
      %v1710 = vld [vmem:[%s1686 + $0x5c] sm:$0xf]
      %v1711 = vld [vmem:[%s1686 + $0x60] sm:$0xf]
      %v1712 = vld [vmem:[%s1686 + $0x64] sm:$0xf]
      %v1713 = vld [vmem:[%s1686 + $0x68] sm:$0xf]
      %v1714 = vld [vmem:[%s1686 + $0x6c] sm:$0xf]
      %v1715 = vld [vmem:[%s1686 + $0x70] sm:$0xf]
      %v1716 = vld [vmem:[%s1686 + $0x74] sm:$0xf]
      %v1717 = vld [vmem:[%s1686 + $0x78] sm:$0xf]
      %v1718 = vld [vmem:[%s1686 + $0x7c] sm:$0xf]
      %v1751 = vunpack.c.l.b16 %v1687
      %v1752 = vunpack.c.l.b16 %v1688
      %v1753 = vunpack.c.l.b16 %v1689
      %v1754 = vunpack.c.l.b16 %v1690
      %v1755 = vunpack.c.l.b16 %v1691
      %v1756 = vunpack.c.l.b16 %v1692
      %v1757 = vunpack.c.l.b16 %v1693
      %v1758 = vunpack.c.l.b16 %v1694
      %v1759 = vunpack.c.l.b16 %v1695
      %v1760 = vunpack.c.l.b16 %v1696
      %v1761 = vunpack.c.l.b16 %v1697
      %v1762 = vunpack.c.l.b16 %v1698
      %v1763 = vunpack.c.l.b16 %v1699
      %v1764 = vunpack.c.l.b16 %v1700
      %v1765 = vunpack.c.l.b16 %v1701
      %v1766 = vunpack.c.l.b16 %v1702
      %v1767 = vunpack.c.l.b16 %v1703
      %v1768 = vunpack.c.l.b16 %v1704
      %v1769 = vunpack.c.l.b16 %v1705
      %v1770 = vunpack.c.l.b16 %v1706
      %v1771 = vunpack.c.l.b16 %v1707
      %v1772 = vunpack.c.l.b16 %v1708
      %v1773 = vunpack.c.l.b16 %v1709
      %v1774 = vunpack.c.l.b16 %v1710
      %v1775 = vunpack.c.l.b16 %v1711
      %v1776 = vunpack.c.l.b16 %v1712
      %v1777 = vunpack.c.l.b16 %v1713
      %v1778 = vunpack.c.l.b16 %v1714
      %v1779 = vunpack.c.l.b16 %v1715
      %v1780 = vunpack.c.l.b16 %v1716
      %v1781 = vunpack.c.l.b16 %v1717
      %v1782 = vunpack.c.l.b16 %v1718
      %v1783 = vpack.c.b16 %v1752, %v1751
      %v1784 = vpack.c.b16 %v1754, %v1753
      %v1785 = vpack.c.b16 %v1756, %v1755
      %v1786 = vpack.c.b16 %v1758, %v1757
      %v1787 = vpack.c.b16 %v1760, %v1759
      %v1788 = vpack.c.b16 %v1762, %v1761
      %v1789 = vpack.c.b16 %v1764, %v1763
      %v1790 = vpack.c.b16 %v1766, %v1765
      %v1791 = vpack.c.b16 %v1768, %v1767
      %v1792 = vpack.c.b16 %v1770, %v1769
      %v1793 = vpack.c.b16 %v1772, %v1771
      %v1794 = vpack.c.b16 %v1774, %v1773
      %v1795 = vpack.c.b16 %v1776, %v1775
      %v1796 = vpack.c.b16 %v1778, %v1777
      %v1797 = vpack.c.b16 %v1780, %v1779
      %v1798 = vpack.c.b16 %v1782, %v1781
      %1815 = vmatprep.subr.bf16.mxu0 0
      %1816 = vmatpush1.bf16.msra.mxu0 %v1783
      %1817 = vmatprep.subr.bf16.mxu0 0
      %1818 = vmatpush1.bf16.msra.mxu0 %v1784
      %1819 = vmatprep.subr.bf16.mxu0 0
      %1820 = vmatpush1.bf16.msra.mxu0 %v1785
      %1821 = vmatprep.subr.bf16.mxu0 0
      %1822 = vmatpush1.bf16.msra.mxu0 %v1786
      %1823 = vmatprep.subr.bf16.mxu0 0
      %1824 = vmatpush1.bf16.msra.mxu0 %v1787
      %1825 = vmatprep.subr.bf16.mxu0 0
      %1826 = vmatpush1.bf16.msra.mxu0 %v1788
      %1827 = vmatprep.subr.bf16.mxu0 0
      %1828 = vmatpush1.bf16.msra.mxu0 %v1789
      %1829 = vmatprep.subr.bf16.mxu0 0
      %1830 = vmatpush1.bf16.msra.mxu0 %v1790
      %1831 = vmatprep.subr.bf16.mxu0 0
      %1832 = vmatpush1.bf16.msra.mxu0 %v1791
      %1833 = vmatprep.subr.bf16.mxu0 0
      %1834 = vmatpush1.bf16.msra.mxu0 %v1792
      %1835 = vmatprep.subr.bf16.mxu0 0
      %1836 = vmatpush1.bf16.msra.mxu0 %v1793
      %1837 = vmatprep.subr.bf16.mxu0 0
      %1838 = vmatpush1.bf16.msra.mxu0 %v1794
      %1839 = vmatprep.subr.bf16.mxu0 0
      %1840 = vmatpush1.bf16.msra.mxu0 %v1795
      %1841 = vmatprep.subr.bf16.mxu0 0
      %1842 = vmatpush1.bf16.msra.mxu0 %v1796
      %1843 = vmatprep.subr.bf16.mxu0 0
      %1844 = vmatpush1.bf16.msra.mxu0 %v1797
      %1845 = vmatprep.subr.bf16.mxu0 0
      %1846 = vmatpush1.bf16.msra.mxu0 %v1798
      %1847 = vmatprep.mubr.bf16.mxu0 %v447
      %1848 = vmatmul.mubr.bf16.gmra.mrb[0].mxu0 %v446
      %v1849 = vpop.f32.mrb[0].mxu0
      %v1850 = vadd.f32 0.0, %v1849
      %v1851 = vpop.f32.mrb[0].mxu0
      %v1852 = vpop.f32.mrb[0].mxu0
      %v1853 = vpop.f32.mrb[0].mxu0
      %1854 = vdwg.mxu0
      %s1855 = scalar_lea.vmem %s1, 40
      %v1856 = vld [vmem:[%s1855] sm:$0xff]
      %v1858 = vsel %vm788, %v1856, 0
      %v1861 = vsel %vm792, %v1850, 0
      %1863 = vmatprep.subr.mxu0 0.0
      %1864 = vmatpush1.msra.mxu0 %v1861
      %1865 = vmatprep.subr.mxu0 0.0
      %1866 = vmatpush1.msra.mxu0 0.0
      %1867 = vmatprep.subr.mxu0 0.0
      %1868 = vmatpush1.msra.mxu0 0.0
      %1869 = vmatprep.subr.mxu0 0.0
      %1870 = vmatpush1.msra.mxu0 0.0
      %1871 = vmatprep.subr.mxu0 0.0
      %1872 = vmatpush1.msra.mxu0 0.0
      %1873 = vmatprep.subr.mxu0 0.0
      %1874 = vmatpush1.msra.mxu0 0.0
      %1875 = vmatprep.subr.mxu0 0.0
      %1876 = vmatpush1.msra.mxu0 0.0
      %1877 = vmatprep.subr.mxu0 0.0
      %1878 = vmatpush1.msra.mxu0 0.0
      %1879 = vmatprep.subr.mxu0 0.0
      %1880 = vmatpush1.msra.mxu0 0.0
      %1881 = vmatprep.subr.mxu0 0.0
      %1882 = vmatpush1.msra.mxu0 0.0
      %1883 = vmatprep.subr.mxu0 0.0
      %1884 = vmatpush1.msra.mxu0 0.0
      %1885 = vmatprep.subr.mxu0 0.0
      %1886 = vmatpush1.msra.mxu0 0.0
      %1887 = vmatprep.subr.mxu0 0.0
      %1888 = vmatpush1.msra.mxu0 0.0
      %1889 = vmatprep.subr.mxu0 0.0
      %1890 = vmatpush1.msra.mxu0 0.0
      %1891 = vmatprep.subr.mxu0 0.0
      %1892 = vmatpush1.msra.mxu0 0.0
      %1893 = vmatprep.subr.mxu0 0.0
      %1894 = vmatpush1.msra.mxu0 0.0
      %1895 = vmatprep.subr.mxu0 0.0
      %1896 = vmatpush1.msra.mxu0 0.0
      %1897 = vmatprep.subr.mxu0 0.0
      %1898 = vmatpush1.msra.mxu0 0.0
      %1899 = vmatprep.subr.mxu0 0.0
      %1900 = vmatpush1.msra.mxu0 0.0
      %1901 = vmatprep.subr.mxu0 0.0
      %1902 = vmatpush1.msra.mxu0 0.0
      %1903 = vmatprep.subr.mxu0 0.0
      %1904 = vmatpush1.msra.mxu0 0.0
      %1905 = vmatprep.subr.mxu0 0.0
      %1906 = vmatpush1.msra.mxu0 0.0
      %1907 = vmatprep.subr.mxu0 0.0
      %1908 = vmatpush1.msra.mxu0 0.0
      %1909 = vmatprep.subr.mxu0 0.0
      %1910 = vmatpush1.msra.mxu0 0.0
      %1911 = vmatprep.subr.mxu0 0.0
      %1912 = vmatpush1.msra.mxu0 0.0
      %1913 = vmatprep.subr.mxu0 0.0
      %1914 = vmatpush1.msra.mxu0 0.0
      %1915 = vmatprep.subr.mxu0 0.0
      %1916 = vmatpush1.msra.mxu0 0.0
      %1917 = vmatprep.subr.mxu0 0.0
      %1918 = vmatpush1.msra.mxu0 0.0
      %1919 = vmatprep.subr.mxu0 0.0
      %1920 = vmatpush1.msra.mxu0 0.0
      %1921 = vmatprep.subr.mxu0 0.0
      %1922 = vmatpush1.msra.mxu0 0.0
      %1923 = vmatprep.subr.mxu0 0.0
      %1924 = vmatpush1.msra.mxu0 0.0
      %1925 = vmatprep.subr.mxu0 0.0
      %1926 = vmatpush1.msra.mxu0 0.0
      %1927 = vmatprep.mubr.f32.mxu0 0.0
      %1928 = vmatmul.mubr.f32.gmra.mrb[0].mxu0 %v1858
      %v1929 = vpop.f32.mrb[0].mxu0
      %v1930 = vadd.f32 0.0, %v1929
      %v1931 = vpop.f32.mrb[0].mxu0
      %1932 = vdwg.mxu0
      %v1933 = vadd.f32 %v1685, %v1930
      %s1934 = scalar_lea.vmem %s2, 768
      %v1935 = vld [vmem:[%s1934] sm:$0xf]
      %v1936 = vld [vmem:[%s1934 + $0x4] sm:$0xf]
      %v1937 = vld [vmem:[%s1934 + $0x8] sm:$0xf]
      %v1938 = vld [vmem:[%s1934 + $0xc] sm:$0xf]
      %v1939 = vld [vmem:[%s1934 + $0x10] sm:$0xf]
      %v1940 = vld [vmem:[%s1934 + $0x14] sm:$0xf]
      %v1941 = vld [vmem:[%s1934 + $0x18] sm:$0xf]
      %v1942 = vld [vmem:[%s1934 + $0x1c] sm:$0xf]
      %v1943 = vld [vmem:[%s1934 + $0x20] sm:$0xf]
      %v1944 = vld [vmem:[%s1934 + $0x24] sm:$0xf]
      %v1945 = vld [vmem:[%s1934 + $0x28] sm:$0xf]
      %v1946 = vld [vmem:[%s1934 + $0x2c] sm:$0xf]
      %v1947 = vld [vmem:[%s1934 + $0x30] sm:$0xf]
      %v1948 = vld [vmem:[%s1934 + $0x34] sm:$0xf]
      %v1949 = vld [vmem:[%s1934 + $0x38] sm:$0xf]
      %v1950 = vld [vmem:[%s1934 + $0x3c] sm:$0xf]
      %v1951 = vld [vmem:[%s1934 + $0x40] sm:$0xf]
      %v1952 = vld [vmem:[%s1934 + $0x44] sm:$0xf]
      %v1953 = vld [vmem:[%s1934 + $0x48] sm:$0xf]
      %v1954 = vld [vmem:[%s1934 + $0x4c] sm:$0xf]
      %v1955 = vld [vmem:[%s1934 + $0x50] sm:$0xf]
      %v1956 = vld [vmem:[%s1934 + $0x54] sm:$0xf]
      %v1957 = vld [vmem:[%s1934 + $0x58] sm:$0xf]
      %v1958 = vld [vmem:[%s1934 + $0x5c] sm:$0xf]
      %v1959 = vld [vmem:[%s1934 + $0x60] sm:$0xf]
      %v1960 = vld [vmem:[%s1934 + $0x64] sm:$0xf]
      %v1961 = vld [vmem:[%s1934 + $0x68] sm:$0xf]
      %v1962 = vld [vmem:[%s1934 + $0x6c] sm:$0xf]
      %v1963 = vld [vmem:[%s1934 + $0x70] sm:$0xf]
      %v1964 = vld [vmem:[%s1934 + $0x74] sm:$0xf]
      %v1965 = vld [vmem:[%s1934 + $0x78] sm:$0xf]
      %v1966 = vld [vmem:[%s1934 + $0x7c] sm:$0xf]
      %v1999 = vunpack.c.l.b16 %v1935
      %v2000 = vunpack.c.l.b16 %v1936
      %v2001 = vunpack.c.l.b16 %v1937
      %v2002 = vunpack.c.l.b16 %v1938
      %v2003 = vunpack.c.l.b16 %v1939
      %v2004 = vunpack.c.l.b16 %v1940
      %v2005 = vunpack.c.l.b16 %v1941
      %v2006 = vunpack.c.l.b16 %v1942
      %v2007 = vunpack.c.l.b16 %v1943
      %v2008 = vunpack.c.l.b16 %v1944
      %v2009 = vunpack.c.l.b16 %v1945
      %v2010 = vunpack.c.l.b16 %v1946
      %v2011 = vunpack.c.l.b16 %v1947
      %v2012 = vunpack.c.l.b16 %v1948
      %v2013 = vunpack.c.l.b16 %v1949
      %v2014 = vunpack.c.l.b16 %v1950
      %v2015 = vunpack.c.l.b16 %v1951
      %v2016 = vunpack.c.l.b16 %v1952
      %v2017 = vunpack.c.l.b16 %v1953
      %v2018 = vunpack.c.l.b16 %v1954
      %v2019 = vunpack.c.l.b16 %v1955
      %v2020 = vunpack.c.l.b16 %v1956
      %v2021 = vunpack.c.l.b16 %v1957
      %v2022 = vunpack.c.l.b16 %v1958
      %v2023 = vunpack.c.l.b16 %v1959
      %v2024 = vunpack.c.l.b16 %v1960
      %v2025 = vunpack.c.l.b16 %v1961
      %v2026 = vunpack.c.l.b16 %v1962
      %v2027 = vunpack.c.l.b16 %v1963
      %v2028 = vunpack.c.l.b16 %v1964
      %v2029 = vunpack.c.l.b16 %v1965
      %v2030 = vunpack.c.l.b16 %v1966
      %v2031 = vpack.c.b16 %v2000, %v1999
      %v2032 = vpack.c.b16 %v2002, %v2001
      %v2033 = vpack.c.b16 %v2004, %v2003
      %v2034 = vpack.c.b16 %v2006, %v2005
      %v2035 = vpack.c.b16 %v2008, %v2007
      %v2036 = vpack.c.b16 %v2010, %v2009
      %v2037 = vpack.c.b16 %v2012, %v2011
      %v2038 = vpack.c.b16 %v2014, %v2013
      %v2039 = vpack.c.b16 %v2016, %v2015
      %v2040 = vpack.c.b16 %v2018, %v2017
      %v2041 = vpack.c.b16 %v2020, %v2019
      %v2042 = vpack.c.b16 %v2022, %v2021
      %v2043 = vpack.c.b16 %v2024, %v2023
      %v2044 = vpack.c.b16 %v2026, %v2025
      %v2045 = vpack.c.b16 %v2028, %v2027
      %v2046 = vpack.c.b16 %v2030, %v2029
      %2063 = vmatprep.subr.bf16.mxu0 0
      %2064 = vmatpush1.bf16.msra.mxu0 %v2031
      %2065 = vmatprep.subr.bf16.mxu0 0
      %2066 = vmatpush1.bf16.msra.mxu0 %v2032
      %2067 = vmatprep.subr.bf16.mxu0 0
      %2068 = vmatpush1.bf16.msra.mxu0 %v2033
      %2069 = vmatprep.subr.bf16.mxu0 0
      %2070 = vmatpush1.bf16.msra.mxu0 %v2034
      %2071 = vmatprep.subr.bf16.mxu0 0
      %2072 = vmatpush1.bf16.msra.mxu0 %v2035
      %2073 = vmatprep.subr.bf16.mxu0 0
      %2074 = vmatpush1.bf16.msra.mxu0 %v2036
      %2075 = vmatprep.subr.bf16.mxu0 0
      %2076 = vmatpush1.bf16.msra.mxu0 %v2037
      %2077 = vmatprep.subr.bf16.mxu0 0
      %2078 = vmatpush1.bf16.msra.mxu0 %v2038
      %2079 = vmatprep.subr.bf16.mxu0 0
      %2080 = vmatpush1.bf16.msra.mxu0 %v2039
      %2081 = vmatprep.subr.bf16.mxu0 0
      %2082 = vmatpush1.bf16.msra.mxu0 %v2040
      %2083 = vmatprep.subr.bf16.mxu0 0
      %2084 = vmatpush1.bf16.msra.mxu0 %v2041
      %2085 = vmatprep.subr.bf16.mxu0 0
      %2086 = vmatpush1.bf16.msra.mxu0 %v2042
      %2087 = vmatprep.subr.bf16.mxu0 0
      %2088 = vmatpush1.bf16.msra.mxu0 %v2043
      %2089 = vmatprep.subr.bf16.mxu0 0
      %2090 = vmatpush1.bf16.msra.mxu0 %v2044
      %2091 = vmatprep.subr.bf16.mxu0 0
      %2092 = vmatpush1.bf16.msra.mxu0 %v2045
      %2093 = vmatprep.subr.bf16.mxu0 0
      %2094 = vmatpush1.bf16.msra.mxu0 %v2046
      %2095 = vmatprep.mubr.bf16.mxu0 %v447
      %2096 = vmatmul.mubr.bf16.gmra.mrb[0].mxu0 %v446
      %v2097 = vpop.f32.mrb[0].mxu0
      %v2098 = vadd.f32 0.0, %v2097
      %v2099 = vpop.f32.mrb[0].mxu0
      %v2100 = vpop.f32.mrb[0].mxu0
      %v2101 = vpop.f32.mrb[0].mxu0
      %2102 = vdwg.mxu0
      %s2103 = scalar_lea.vmem %s1, 48
      %v2104 = vld [vmem:[%s2103] sm:$0xff]
      %v2106 = vsel %vm788, %v2104, 0
      %v2109 = vsel %vm792, %v2098, 0
      %2111 = vmatprep.subr.mxu0 0.0
      %2112 = vmatpush1.msra.mxu0 %v2109
      %2113 = vmatprep.subr.mxu0 0.0
      %2114 = vmatpush1.msra.mxu0 0.0
      %2115 = vmatprep.subr.mxu0 0.0
      %2116 = vmatpush1.msra.mxu0 0.0
      %2117 = vmatprep.subr.mxu0 0.0
      %2118 = vmatpush1.msra.mxu0 0.0
      %2119 = vmatprep.subr.mxu0 0.0
      %2120 = vmatpush1.msra.mxu0 0.0
      %2121 = vmatprep.subr.mxu0 0.0
      %2122 = vmatpush1.msra.mxu0 0.0
      %2123 = vmatprep.subr.mxu0 0.0
      %2124 = vmatpush1.msra.mxu0 0.0
      %2125 = vmatprep.subr.mxu0 0.0
      %2126 = vmatpush1.msra.mxu0 0.0
      %2127 = vmatprep.subr.mxu0 0.0
      %2128 = vmatpush1.msra.mxu0 0.0
      %2129 = vmatprep.subr.mxu0 0.0
      %2130 = vmatpush1.msra.mxu0 0.0
      %2131 = vmatprep.subr.mxu0 0.0
      %2132 = vmatpush1.msra.mxu0 0.0
      %2133 = vmatprep.subr.mxu0 0.0
      %2134 = vmatpush1.msra.mxu0 0.0
      %2135 = vmatprep.subr.mxu0 0.0
      %2136 = vmatpush1.msra.mxu0 0.0
      %2137 = vmatprep.subr.mxu0 0.0
      %2138 = vmatpush1.msra.mxu0 0.0
      %2139 = vmatprep.subr.mxu0 0.0
      %2140 = vmatpush1.msra.mxu0 0.0
      %2141 = vmatprep.subr.mxu0 0.0
      %2142 = vmatpush1.msra.mxu0 0.0
      %2143 = vmatprep.subr.mxu0 0.0
      %2144 = vmatpush1.msra.mxu0 0.0
      %2145 = vmatprep.subr.mxu0 0.0
      %2146 = vmatpush1.msra.mxu0 0.0
      %2147 = vmatprep.subr.mxu0 0.0
      %2148 = vmatpush1.msra.mxu0 0.0
      %2149 = vmatprep.subr.mxu0 0.0
      %2150 = vmatpush1.msra.mxu0 0.0
      %2151 = vmatprep.subr.mxu0 0.0
      %2152 = vmatpush1.msra.mxu0 0.0
      %2153 = vmatprep.subr.mxu0 0.0
      %2154 = vmatpush1.msra.mxu0 0.0
      %2155 = vmatprep.subr.mxu0 0.0
      %2156 = vmatpush1.msra.mxu0 0.0
      %2157 = vmatprep.subr.mxu0 0.0
      %2158 = vmatpush1.msra.mxu0 0.0
      %2159 = vmatprep.subr.mxu0 0.0
      %2160 = vmatpush1.msra.mxu0 0.0
      %2161 = vmatprep.subr.mxu0 0.0
      %2162 = vmatpush1.msra.mxu0 0.0
      %2163 = vmatprep.subr.mxu0 0.0
      %2164 = vmatpush1.msra.mxu0 0.0
      %2165 = vmatprep.subr.mxu0 0.0
      %2166 = vmatpush1.msra.mxu0 0.0
      %2167 = vmatprep.subr.mxu0 0.0
      %2168 = vmatpush1.msra.mxu0 0.0
      %2169 = vmatprep.subr.mxu0 0.0
      %2170 = vmatpush1.msra.mxu0 0.0
      %2171 = vmatprep.subr.mxu0 0.0
      %2172 = vmatpush1.msra.mxu0 0.0
      %2173 = vmatprep.subr.mxu0 0.0
      %2174 = vmatpush1.msra.mxu0 0.0
      %2175 = vmatprep.mubr.f32.mxu0 0.0
      %2176 = vmatmul.mubr.f32.gmra.mrb[0].mxu0 %v2106
      %v2177 = vpop.f32.mrb[0].mxu0
      %v2178 = vadd.f32 0.0, %v2177
      %v2179 = vpop.f32.mrb[0].mxu0
      %2180 = vdwg.mxu0
      %v2181 = vadd.f32 %v1933, %v2178
      %s2182 = scalar_lea.vmem %s2, 896
      %v2183 = vld [vmem:[%s2182] sm:$0xf]
      %v2184 = vld [vmem:[%s2182 + $0x4] sm:$0xf]
      %v2185 = vld [vmem:[%s2182 + $0x8] sm:$0xf]
      %v2186 = vld [vmem:[%s2182 + $0xc] sm:$0xf]
      %v2187 = vld [vmem:[%s2182 + $0x10] sm:$0xf]
      %v2188 = vld [vmem:[%s2182 + $0x14] sm:$0xf]
      %v2189 = vld [vmem:[%s2182 + $0x18] sm:$0xf]
      %v2190 = vld [vmem:[%s2182 + $0x1c] sm:$0xf]
      %v2191 = vld [vmem:[%s2182 + $0x20] sm:$0xf]
      %v2192 = vld [vmem:[%s2182 + $0x24] sm:$0xf]
      %v2193 = vld [vmem:[%s2182 + $0x28] sm:$0xf]
      %v2194 = vld [vmem:[%s2182 + $0x2c] sm:$0xf]
      %v2195 = vld [vmem:[%s2182 + $0x30] sm:$0xf]
      %v2196 = vld [vmem:[%s2182 + $0x34] sm:$0xf]
      %v2197 = vld [vmem:[%s2182 + $0x38] sm:$0xf]
      %v2198 = vld [vmem:[%s2182 + $0x3c] sm:$0xf]
      %v2199 = vld [vmem:[%s2182 + $0x40] sm:$0xf]
      %v2200 = vld [vmem:[%s2182 + $0x44] sm:$0xf]
      %v2201 = vld [vmem:[%s2182 + $0x48] sm:$0xf]
      %v2202 = vld [vmem:[%s2182 + $0x4c] sm:$0xf]
      %v2203 = vld [vmem:[%s2182 + $0x50] sm:$0xf]
      %v2204 = vld [vmem:[%s2182 + $0x54] sm:$0xf]
      %v2205 = vld [vmem:[%s2182 + $0x58] sm:$0xf]
      %v2206 = vld [vmem:[%s2182 + $0x5c] sm:$0xf]
      %v2207 = vld [vmem:[%s2182 + $0x60] sm:$0xf]
      %v2208 = vld [vmem:[%s2182 + $0x64] sm:$0xf]
      %v2209 = vld [vmem:[%s2182 + $0x68] sm:$0xf]
      %v2210 = vld [vmem:[%s2182 + $0x6c] sm:$0xf]
      %v2211 = vld [vmem:[%s2182 + $0x70] sm:$0xf]
      %v2212 = vld [vmem:[%s2182 + $0x74] sm:$0xf]
      %v2213 = vld [vmem:[%s2182 + $0x78] sm:$0xf]
      %v2214 = vld [vmem:[%s2182 + $0x7c] sm:$0xf]
      %v2247 = vunpack.c.l.b16 %v2183
      %v2248 = vunpack.c.l.b16 %v2184
      %v2249 = vunpack.c.l.b16 %v2185
      %v2250 = vunpack.c.l.b16 %v2186
      %v2251 = vunpack.c.l.b16 %v2187
      %v2252 = vunpack.c.l.b16 %v2188
      %v2253 = vunpack.c.l.b16 %v2189
      %v2254 = vunpack.c.l.b16 %v2190
      %v2255 = vunpack.c.l.b16 %v2191
      %v2256 = vunpack.c.l.b16 %v2192
      %v2257 = vunpack.c.l.b16 %v2193
      %v2258 = vunpack.c.l.b16 %v2194
      %v2259 = vunpack.c.l.b16 %v2195
      %v2260 = vunpack.c.l.b16 %v2196
      %v2261 = vunpack.c.l.b16 %v2197
      %v2262 = vunpack.c.l.b16 %v2198
      %v2263 = vunpack.c.l.b16 %v2199
      %v2264 = vunpack.c.l.b16 %v2200
      %v2265 = vunpack.c.l.b16 %v2201
      %v2266 = vunpack.c.l.b16 %v2202
      %v2267 = vunpack.c.l.b16 %v2203
      %v2268 = vunpack.c.l.b16 %v2204
      %v2269 = vunpack.c.l.b16 %v2205
      %v2270 = vunpack.c.l.b16 %v2206
      %v2271 = vunpack.c.l.b16 %v2207
      %v2272 = vunpack.c.l.b16 %v2208
      %v2273 = vunpack.c.l.b16 %v2209
      %v2274 = vunpack.c.l.b16 %v2210
      %v2275 = vunpack.c.l.b16 %v2211
      %v2276 = vunpack.c.l.b16 %v2212
      %v2277 = vunpack.c.l.b16 %v2213
      %v2278 = vunpack.c.l.b16 %v2214
      %v2279 = vpack.c.b16 %v2248, %v2247
      %v2280 = vpack.c.b16 %v2250, %v2249
      %v2281 = vpack.c.b16 %v2252, %v2251
      %v2282 = vpack.c.b16 %v2254, %v2253
      %v2283 = vpack.c.b16 %v2256, %v2255
      %v2284 = vpack.c.b16 %v2258, %v2257
      %v2285 = vpack.c.b16 %v2260, %v2259
      %v2286 = vpack.c.b16 %v2262, %v2261
      %v2287 = vpack.c.b16 %v2264, %v2263
      %v2288 = vpack.c.b16 %v2266, %v2265
      %v2289 = vpack.c.b16 %v2268, %v2267
      %v2290 = vpack.c.b16 %v2270, %v2269
      %v2291 = vpack.c.b16 %v2272, %v2271
      %v2292 = vpack.c.b16 %v2274, %v2273
      %v2293 = vpack.c.b16 %v2276, %v2275
      %v2294 = vpack.c.b16 %v2278, %v2277
      %2311 = vmatprep.subr.bf16.mxu0 0
      %2312 = vmatpush1.bf16.msra.mxu0 %v2279
      %2313 = vmatprep.subr.bf16.mxu0 0
      %2314 = vmatpush1.bf16.msra.mxu0 %v2280
      %2315 = vmatprep.subr.bf16.mxu0 0
      %2316 = vmatpush1.bf16.msra.mxu0 %v2281
      %2317 = vmatprep.subr.bf16.mxu0 0
      %2318 = vmatpush1.bf16.msra.mxu0 %v2282
      %2319 = vmatprep.subr.bf16.mxu0 0
      %2320 = vmatpush1.bf16.msra.mxu0 %v2283
      %2321 = vmatprep.subr.bf16.mxu0 0
      %2322 = vmatpush1.bf16.msra.mxu0 %v2284
      %2323 = vmatprep.subr.bf16.mxu0 0
      %2324 = vmatpush1.bf16.msra.mxu0 %v2285
      %2325 = vmatprep.subr.bf16.mxu0 0
      %2326 = vmatpush1.bf16.msra.mxu0 %v2286
      %2327 = vmatprep.subr.bf16.mxu0 0
      %2328 = vmatpush1.bf16.msra.mxu0 %v2287
      %2329 = vmatprep.subr.bf16.mxu0 0
      %2330 = vmatpush1.bf16.msra.mxu0 %v2288
      %2331 = vmatprep.subr.bf16.mxu0 0
      %2332 = vmatpush1.bf16.msra.mxu0 %v2289
      %2333 = vmatprep.subr.bf16.mxu0 0
      %2334 = vmatpush1.bf16.msra.mxu0 %v2290
      %2335 = vmatprep.subr.bf16.mxu0 0
      %2336 = vmatpush1.bf16.msra.mxu0 %v2291
      %2337 = vmatprep.subr.bf16.mxu0 0
      %2338 = vmatpush1.bf16.msra.mxu0 %v2292
      %2339 = vmatprep.subr.bf16.mxu0 0
      %2340 = vmatpush1.bf16.msra.mxu0 %v2293
      %2341 = vmatprep.subr.bf16.mxu0 0
      %2342 = vmatpush1.bf16.msra.mxu0 %v2294
      %2343 = vmatprep.mubr.bf16.mxu0 %v447
      %2344 = vmatmul.mubr.bf16.gmra.mrb[0].mxu0 %v446
      %v2345 = vpop.f32.mrb[0].mxu0
      %v2346 = vadd.f32 0.0, %v2345
      %v2347 = vpop.f32.mrb[0].mxu0
      %v2348 = vpop.f32.mrb[0].mxu0
      %v2349 = vpop.f32.mrb[0].mxu0
      %2350 = vdwg.mxu0
      %s2351 = scalar_lea.vmem %s1, 56
      %v2352 = vld [vmem:[%s2351] sm:$0xff]
      %v2354 = vsel %vm788, %v2352, 0
      %v2357 = vsel %vm792, %v2346, 0
      %2359 = vmatprep.subr.mxu0 0.0
      %2360 = vmatpush1.msra.mxu0 %v2357
      %2361 = vmatprep.subr.mxu0 0.0
      %2362 = vmatpush1.msra.mxu0 0.0
      %2363 = vmatprep.subr.mxu0 0.0
      %2364 = vmatpush1.msra.mxu0 0.0
      %2365 = vmatprep.subr.mxu0 0.0
      %2366 = vmatpush1.msra.mxu0 0.0
      %2367 = vmatprep.subr.mxu0 0.0
      %2368 = vmatpush1.msra.mxu0 0.0
      %2369 = vmatprep.subr.mxu0 0.0
      %2370 = vmatpush1.msra.mxu0 0.0
      %2371 = vmatprep.subr.mxu0 0.0
      %2372 = vmatpush1.msra.mxu0 0.0
      %2373 = vmatprep.subr.mxu0 0.0
      %2374 = vmatpush1.msra.mxu0 0.0
      %2375 = vmatprep.subr.mxu0 0.0
      %2376 = vmatpush1.msra.mxu0 0.0
      %2377 = vmatprep.subr.mxu0 0.0
      %2378 = vmatpush1.msra.mxu0 0.0
      %2379 = vmatprep.subr.mxu0 0.0
      %2380 = vmatpush1.msra.mxu0 0.0
      %2381 = vmatprep.subr.mxu0 0.0
      %2382 = vmatpush1.msra.mxu0 0.0
      %2383 = vmatprep.subr.mxu0 0.0
      %2384 = vmatpush1.msra.mxu0 0.0
      %2385 = vmatprep.subr.mxu0 0.0
      %2386 = vmatpush1.msra.mxu0 0.0
      %2387 = vmatprep.subr.mxu0 0.0
      %2388 = vmatpush1.msra.mxu0 0.0
      %2389 = vmatprep.subr.mxu0 0.0
      %2390 = vmatpush1.msra.mxu0 0.0
      %2391 = vmatprep.subr.mxu0 0.0
      %2392 = vmatpush1.msra.mxu0 0.0
      %2393 = vmatprep.subr.mxu0 0.0
      %2394 = vmatpush1.msra.mxu0 0.0
      %2395 = vmatprep.subr.mxu0 0.0
      %2396 = vmatpush1.msra.mxu0 0.0
      %2397 = vmatprep.subr.mxu0 0.0
      %2398 = vmatpush1.msra.mxu0 0.0
      %2399 = vmatprep.subr.mxu0 0.0
      %2400 = vmatpush1.msra.mxu0 0.0
      %2401 = vmatprep.subr.mxu0 0.0
      %2402 = vmatpush1.msra.mxu0 0.0
      %2403 = vmatprep.subr.mxu0 0.0
      %2404 = vmatpush1.msra.mxu0 0.0
      %2405 = vmatprep.subr.mxu0 0.0
      %2406 = vmatpush1.msra.mxu0 0.0
      %2407 = vmatprep.subr.mxu0 0.0
      %2408 = vmatpush1.msra.mxu0 0.0
      %2409 = vmatprep.subr.mxu0 0.0
      %2410 = vmatpush1.msra.mxu0 0.0
      %2411 = vmatprep.subr.mxu0 0.0
      %2412 = vmatpush1.msra.mxu0 0.0
      %2413 = vmatprep.subr.mxu0 0.0
      %2414 = vmatpush1.msra.mxu0 0.0
      %2415 = vmatprep.subr.mxu0 0.0
      %2416 = vmatpush1.msra.mxu0 0.0
      %2417 = vmatprep.subr.mxu0 0.0
      %2418 = vmatpush1.msra.mxu0 0.0
      %2419 = vmatprep.subr.mxu0 0.0
      %2420 = vmatpush1.msra.mxu0 0.0
      %2421 = vmatprep.subr.mxu0 0.0
      %2422 = vmatpush1.msra.mxu0 0.0
      %2423 = vmatprep.mubr.f32.mxu0 0.0
      %2424 = vmatmul.mubr.f32.gmra.mrb[0].mxu0 %v2354
      %v2425 = vpop.f32.mrb[0].mxu0
      %v2426 = vadd.f32 0.0, %v2425
      %v2427 = vpop.f32.mrb[0].mxu0
      %2428 = vdwg.mxu0
      %v2429 = vadd.f32 %v2181, %v2426
      %s2430 = scalar_lea.vmem %s2, 1024
      %v2431 = vld [vmem:[%s2430] sm:$0xf]
      %v2432 = vld [vmem:[%s2430 + $0x4] sm:$0xf]
      %v2433 = vld [vmem:[%s2430 + $0x8] sm:$0xf]
      %v2434 = vld [vmem:[%s2430 + $0xc] sm:$0xf]
      %v2435 = vld [vmem:[%s2430 + $0x10] sm:$0xf]
      %v2436 = vld [vmem:[%s2430 + $0x14] sm:$0xf]
      %v2437 = vld [vmem:[%s2430 + $0x18] sm:$0xf]
      %v2438 = vld [vmem:[%s2430 + $0x1c] sm:$0xf]
      %v2439 = vld [vmem:[%s2430 + $0x20] sm:$0xf]
      %v2440 = vld [vmem:[%s2430 + $0x24] sm:$0xf]
      %v2441 = vld [vmem:[%s2430 + $0x28] sm:$0xf]
      %v2442 = vld [vmem:[%s2430 + $0x2c] sm:$0xf]
      %v2443 = vld [vmem:[%s2430 + $0x30] sm:$0xf]
      %v2444 = vld [vmem:[%s2430 + $0x34] sm:$0xf]
      %v2445 = vld [vmem:[%s2430 + $0x38] sm:$0xf]
      %v2446 = vld [vmem:[%s2430 + $0x3c] sm:$0xf]
      %v2447 = vld [vmem:[%s2430 + $0x40] sm:$0xf]
      %v2448 = vld [vmem:[%s2430 + $0x44] sm:$0xf]
      %v2449 = vld [vmem:[%s2430 + $0x48] sm:$0xf]
      %v2450 = vld [vmem:[%s2430 + $0x4c] sm:$0xf]
      %v2451 = vld [vmem:[%s2430 + $0x50] sm:$0xf]
      %v2452 = vld [vmem:[%s2430 + $0x54] sm:$0xf]
      %v2453 = vld [vmem:[%s2430 + $0x58] sm:$0xf]
      %v2454 = vld [vmem:[%s2430 + $0x5c] sm:$0xf]
      %v2455 = vld [vmem:[%s2430 + $0x60] sm:$0xf]
      %v2456 = vld [vmem:[%s2430 + $0x64] sm:$0xf]
      %v2457 = vld [vmem:[%s2430 + $0x68] sm:$0xf]
      %v2458 = vld [vmem:[%s2430 + $0x6c] sm:$0xf]
      %v2459 = vld [vmem:[%s2430 + $0x70] sm:$0xf]
      %v2460 = vld [vmem:[%s2430 + $0x74] sm:$0xf]
      %v2461 = vld [vmem:[%s2430 + $0x78] sm:$0xf]
      %v2462 = vld [vmem:[%s2430 + $0x7c] sm:$0xf]
      %v2495 = vunpack.c.l.b16 %v2431
      %v2496 = vunpack.c.l.b16 %v2432
      %v2497 = vunpack.c.l.b16 %v2433
      %v2498 = vunpack.c.l.b16 %v2434
      %v2499 = vunpack.c.l.b16 %v2435
      %v2500 = vunpack.c.l.b16 %v2436
      %v2501 = vunpack.c.l.b16 %v2437
      %v2502 = vunpack.c.l.b16 %v2438
      %v2503 = vunpack.c.l.b16 %v2439
      %v2504 = vunpack.c.l.b16 %v2440
      %v2505 = vunpack.c.l.b16 %v2441
      %v2506 = vunpack.c.l.b16 %v2442
      %v2507 = vunpack.c.l.b16 %v2443
      %v2508 = vunpack.c.l.b16 %v2444
      %v2509 = vunpack.c.l.b16 %v2445
      %v2510 = vunpack.c.l.b16 %v2446
      %v2511 = vunpack.c.l.b16 %v2447
      %v2512 = vunpack.c.l.b16 %v2448
      %v2513 = vunpack.c.l.b16 %v2449
      %v2514 = vunpack.c.l.b16 %v2450
      %v2515 = vunpack.c.l.b16 %v2451
      %v2516 = vunpack.c.l.b16 %v2452
      %v2517 = vunpack.c.l.b16 %v2453
      %v2518 = vunpack.c.l.b16 %v2454
      %v2519 = vunpack.c.l.b16 %v2455
      %v2520 = vunpack.c.l.b16 %v2456
      %v2521 = vunpack.c.l.b16 %v2457
      %v2522 = vunpack.c.l.b16 %v2458
      %v2523 = vunpack.c.l.b16 %v2459
      %v2524 = vunpack.c.l.b16 %v2460
      %v2525 = vunpack.c.l.b16 %v2461
      %v2526 = vunpack.c.l.b16 %v2462
      %v2527 = vpack.c.b16 %v2496, %v2495
      %v2528 = vpack.c.b16 %v2498, %v2497
      %v2529 = vpack.c.b16 %v2500, %v2499
      %v2530 = vpack.c.b16 %v2502, %v2501
      %v2531 = vpack.c.b16 %v2504, %v2503
      %v2532 = vpack.c.b16 %v2506, %v2505
      %v2533 = vpack.c.b16 %v2508, %v2507
      %v2534 = vpack.c.b16 %v2510, %v2509
      %v2535 = vpack.c.b16 %v2512, %v2511
      %v2536 = vpack.c.b16 %v2514, %v2513
      %v2537 = vpack.c.b16 %v2516, %v2515
      %v2538 = vpack.c.b16 %v2518, %v2517
      %v2539 = vpack.c.b16 %v2520, %v2519
      %v2540 = vpack.c.b16 %v2522, %v2521
      %v2541 = vpack.c.b16 %v2524, %v2523
      %v2542 = vpack.c.b16 %v2526, %v2525
      %2559 = vmatprep.subr.bf16.mxu0 0
      %2560 = vmatpush1.bf16.msra.mxu0 %v2527
      %2561 = vmatprep.subr.bf16.mxu0 0
      %2562 = vmatpush1.bf16.msra.mxu0 %v2528
      %2563 = vmatprep.subr.bf16.mxu0 0
      %2564 = vmatpush1.bf16.msra.mxu0 %v2529
      %2565 = vmatprep.subr.bf16.mxu0 0
      %2566 = vmatpush1.bf16.msra.mxu0 %v2530
      %2567 = vmatprep.subr.bf16.mxu0 0
      %2568 = vmatpush1.bf16.msra.mxu0 %v2531
      %2569 = vmatprep.subr.bf16.mxu0 0
      %2570 = vmatpush1.bf16.msra.mxu0 %v2532
      %2571 = vmatprep.subr.bf16.mxu0 0
      %2572 = vmatpush1.bf16.msra.mxu0 %v2533
      %2573 = vmatprep.subr.bf16.mxu0 0
      %2574 = vmatpush1.bf16.msra.mxu0 %v2534
      %2575 = vmatprep.subr.bf16.mxu0 0
      %2576 = vmatpush1.bf16.msra.mxu0 %v2535
      %2577 = vmatprep.subr.bf16.mxu0 0
      %2578 = vmatpush1.bf16.msra.mxu0 %v2536
      %2579 = vmatprep.subr.bf16.mxu0 0
      %2580 = vmatpush1.bf16.msra.mxu0 %v2537
      %2581 = vmatprep.subr.bf16.mxu0 0
      %2582 = vmatpush1.bf16.msra.mxu0 %v2538
      %2583 = vmatprep.subr.bf16.mxu0 0
      %2584 = vmatpush1.bf16.msra.mxu0 %v2539
      %2585 = vmatprep.subr.bf16.mxu0 0
      %2586 = vmatpush1.bf16.msra.mxu0 %v2540
      %2587 = vmatprep.subr.bf16.mxu0 0
      %2588 = vmatpush1.bf16.msra.mxu0 %v2541
      %2589 = vmatprep.subr.bf16.mxu0 0
      %2590 = vmatpush1.bf16.msra.mxu0 %v2542
      %2591 = vmatprep.mubr.bf16.mxu0 %v447
      %2592 = vmatmul.mubr.bf16.gmra.mrb[0].mxu0 %v446
      %v2593 = vpop.f32.mrb[0].mxu0
      %v2594 = vadd.f32 0.0, %v2593
      %v2595 = vpop.f32.mrb[0].mxu0
      %v2596 = vpop.f32.mrb[0].mxu0
      %v2597 = vpop.f32.mrb[0].mxu0
      %2598 = vdwg.mxu0
      %s2599 = scalar_lea.vmem %s1, 64
      %v2600 = vld [vmem:[%s2599] sm:$0xff]
      %v2602 = vsel %vm788, %v2600, 0
      %v2605 = vsel %vm792, %v2594, 0
      %2607 = vmatprep.subr.mxu0 0.0
      %2608 = vmatpush1.msra.mxu0 %v2605
      %2609 = vmatprep.subr.mxu0 0.0
      %2610 = vmatpush1.msra.mxu0 0.0
      %2611 = vmatprep.subr.mxu0 0.0
      %2612 = vmatpush1.msra.mxu0 0.0
      %2613 = vmatprep.subr.mxu0 0.0
      %2614 = vmatpush1.msra.mxu0 0.0
      %2615 = vmatprep.subr.mxu0 0.0
      %2616 = vmatpush1.msra.mxu0 0.0
      %2617 = vmatprep.subr.mxu0 0.0
      %2618 = vmatpush1.msra.mxu0 0.0
      %2619 = vmatprep.subr.mxu0 0.0
      %2620 = vmatpush1.msra.mxu0 0.0
      %2621 = vmatprep.subr.mxu0 0.0
      %2622 = vmatpush1.msra.mxu0 0.0
      %2623 = vmatprep.subr.mxu0 0.0
      %2624 = vmatpush1.msra.mxu0 0.0
      %2625 = vmatprep.subr.mxu0 0.0
      %2626 = vmatpush1.msra.mxu0 0.0
      %2627 = vmatprep.subr.mxu0 0.0
      %2628 = vmatpush1.msra.mxu0 0.0
      %2629 = vmatprep.subr.mxu0 0.0
      %2630 = vmatpush1.msra.mxu0 0.0
      %2631 = vmatprep.subr.mxu0 0.0
      %2632 = vmatpush1.msra.mxu0 0.0
      %2633 = vmatprep.subr.mxu0 0.0
      %2634 = vmatpush1.msra.mxu0 0.0
      %2635 = vmatprep.subr.mxu0 0.0
      %2636 = vmatpush1.msra.mxu0 0.0
      %2637 = vmatprep.subr.mxu0 0.0
      %2638 = vmatpush1.msra.mxu0 0.0
      %2639 = vmatprep.subr.mxu0 0.0
      %2640 = vmatpush1.msra.mxu0 0.0
      %2641 = vmatprep.subr.mxu0 0.0
      %2642 = vmatpush1.msra.mxu0 0.0
      %2643 = vmatprep.subr.mxu0 0.0
      %2644 = vmatpush1.msra.mxu0 0.0
      %2645 = vmatprep.subr.mxu0 0.0
      %2646 = vmatpush1.msra.mxu0 0.0
      %2647 = vmatprep.subr.mxu0 0.0
      %2648 = vmatpush1.msra.mxu0 0.0
      %2649 = vmatprep.subr.mxu0 0.0
      %2650 = vmatpush1.msra.mxu0 0.0
      %2651 = vmatprep.subr.mxu0 0.0
      %2652 = vmatpush1.msra.mxu0 0.0
      %2653 = vmatprep.subr.mxu0 0.0
      %2654 = vmatpush1.msra.mxu0 0.0
      %2655 = vmatprep.subr.mxu0 0.0
      %2656 = vmatpush1.msra.mxu0 0.0
      %2657 = vmatprep.subr.mxu0 0.0
      %2658 = vmatpush1.msra.mxu0 0.0
      %2659 = vmatprep.subr.mxu0 0.0
      %2660 = vmatpush1.msra.mxu0 0.0
      %2661 = vmatprep.subr.mxu0 0.0
      %2662 = vmatpush1.msra.mxu0 0.0
      %2663 = vmatprep.subr.mxu0 0.0
      %2664 = vmatpush1.msra.mxu0 0.0
      %2665 = vmatprep.subr.mxu0 0.0
      %2666 = vmatpush1.msra.mxu0 0.0
      %2667 = vmatprep.subr.mxu0 0.0
      %2668 = vmatpush1.msra.mxu0 0.0
      %2669 = vmatprep.subr.mxu0 0.0
      %2670 = vmatpush1.msra.mxu0 0.0
      %2671 = vmatprep.mubr.f32.mxu0 0.0
      %2672 = vmatmul.mubr.f32.gmra.mrb[0].mxu0 %v2602
      %v2673 = vpop.f32.mrb[0].mxu0
      %v2674 = vadd.f32 0.0, %v2673
      %v2675 = vpop.f32.mrb[0].mxu0
      %2676 = vdwg.mxu0
      %v2677 = vadd.f32 %v2429, %v2674
      %v2678 = vld [vmem:[%s3] sm:$0xff]
      %2680 = vset.pattern.permute.xlu0 0
      %2681 = vperm.xlu0 %2680, %v2678
      %v2682 = vpop.permute.xlu0 %2681
      %v2684 = vadd.f32 %v2677, %v2682
      %vm2685 = vcmp.gt.f32.partialorder %v2684, 0.0
      %v2686 = vmul.f32 %v2684, 0.2
      %v2687 = vsel %vm2685, %v2684, %v2686
      %v2688 = vpack.c.bf16 %v2687, %v2687
      %v2689 = vld [vmem:[%s5] sm:$0xf]
      %v2690 = vld [vmem:[%s5 + $0x4] sm:$0xf]
      %v2691 = vld [vmem:[%s5 + $0x8] sm:$0xf]
      %v2692 = vld [vmem:[%s5 + $0xc] sm:$0xf]
      %v2693 = vld [vmem:[%s5 + $0x10] sm:$0xf]
      %v2694 = vld [vmem:[%s5 + $0x14] sm:$0xf]
      %v2695 = vld [vmem:[%s5 + $0x18] sm:$0xf]
      %v2696 = vld [vmem:[%s5 + $0x1c] sm:$0xf]
      %v2705 = vunpack.c.l.b16 %v2689
      %v2706 = vunpack.c.l.b16 %v2690
      %v2707 = vunpack.c.l.b16 %v2691
      %v2708 = vunpack.c.l.b16 %v2692
      %v2709 = vunpack.c.l.b16 %v2693
      %v2710 = vunpack.c.l.b16 %v2694
      %v2711 = vunpack.c.l.b16 %v2695
      %v2712 = vunpack.c.l.b16 %v2696
      %v2713 = vpack.c.b16 %v2706, %v2705
      %v2714 = vpack.c.b16 %v2708, %v2707
      %v2715 = vpack.c.b16 %v2710, %v2709
      %v2716 = vpack.c.b16 %v2712, %v2711
      %vm2721 = vcmask 523264
      %v2723 = vsel %vm2721, %v2688, 0
      %2725 = vmatprep.subr.bf16.mxu0 0
      %2726 = vmatpush1.bf16.msra.mxu0 %v2713
      %2727 = vmatprep.subr.bf16.mxu0 0
      %2728 = vmatpush1.bf16.msra.mxu0 %v2714
      %2729 = vmatprep.subr.bf16.mxu0 0
      %2730 = vmatpush1.bf16.msra.mxu0 %v2715
      %2731 = vmatprep.subr.bf16.mxu0 0
      %2732 = vmatpush1.bf16.msra.mxu0 %v2716
      %2733 = vmatprep.subr.bf16.mxu0 0
      %2734 = vmatpush1.bf16.msra.mxu0 0
      %2735 = vmatprep.subr.bf16.mxu0 0
      %2736 = vmatpush1.bf16.msra.mxu0 0
      %2737 = vmatprep.subr.bf16.mxu0 0
      %2738 = vmatpush1.bf16.msra.mxu0 0
      %2739 = vmatprep.subr.bf16.mxu0 0
      %2740 = vmatpush1.bf16.msra.mxu0 0
      %2741 = vmatprep.subr.bf16.mxu0 0
      %2742 = vmatpush1.bf16.msra.mxu0 0
      %2743 = vmatprep.subr.bf16.mxu0 0
      %2744 = vmatpush1.bf16.msra.mxu0 0
      %2745 = vmatprep.subr.bf16.mxu0 0
      %2746 = vmatpush1.bf16.msra.mxu0 0
      %2747 = vmatprep.subr.bf16.mxu0 0
      %2748 = vmatpush1.bf16.msra.mxu0 0
      %2749 = vmatprep.subr.bf16.mxu0 0
      %2750 = vmatpush1.bf16.msra.mxu0 0
      %2751 = vmatprep.subr.bf16.mxu0 0
      %2752 = vmatpush1.bf16.msra.mxu0 0
      %2753 = vmatprep.subr.bf16.mxu0 0
      %2754 = vmatpush1.bf16.msra.mxu0 0
      %2755 = vmatprep.subr.bf16.mxu0 0
      %2756 = vmatpush1.bf16.msra.mxu0 0
      %2757 = vmatprep.mubr.bf16.mxu0 0
      %2758 = vmatmul.mubr.bf16.gmra.mrb[0].mxu0 %v2723
      %v2759 = vpop.f32.mrb[0].mxu0
      %v2760 = vadd.f32 0.0, %v2759
      %v2761 = vpop.f32.mrb[0].mxu0
      %v2762 = vpop.f32.mrb[0].mxu0
      %v2763 = vpop.f32.mrb[0].mxu0
      %2764 = vdwg.mxu0
      %v2765 = vld [vmem:[%s4] sm:$0xff]
      %v2766 = vld [vmem:[%s4 + $0x8] sm:$0xff]
      %s2767 = scalar_lea.vmem %s5, 32
      %v2768 = vld [vmem:[%s2767] sm:$0xf]
      %v2769 = vld [vmem:[%s2767 + $0x4] sm:$0xf]
      %v2770 = vld [vmem:[%s2767 + $0x8] sm:$0xf]
      %v2771 = vld [vmem:[%s2767 + $0xc] sm:$0xf]
      %v2772 = vld [vmem:[%s2767 + $0x10] sm:$0xf]
      %v2773 = vld [vmem:[%s2767 + $0x14] sm:$0xf]
      %v2774 = vld [vmem:[%s2767 + $0x18] sm:$0xf]
      %v2775 = vld [vmem:[%s2767 + $0x1c] sm:$0xf]
      %v2784 = vunpack.c.l.b16 %v2768
      %v2785 = vunpack.c.l.b16 %v2769
      %v2786 = vunpack.c.l.b16 %v2770
      %v2787 = vunpack.c.l.b16 %v2771
      %v2788 = vunpack.c.l.b16 %v2772
      %v2789 = vunpack.c.l.b16 %v2773
      %v2790 = vunpack.c.l.b16 %v2774
      %v2791 = vunpack.c.l.b16 %v2775
      %v2792 = vpack.c.b16 %v2785, %v2784
      %v2793 = vpack.c.b16 %v2787, %v2786
      %v2794 = vpack.c.b16 %v2789, %v2788
      %v2795 = vpack.c.b16 %v2791, %v2790
      %2800 = vmatprep.subr.bf16.mxu0 0
      %2801 = vmatpush1.bf16.msra.mxu0 %v2792
      %2802 = vmatprep.subr.bf16.mxu0 0
      %2803 = vmatpush1.bf16.msra.mxu0 %v2793
      %2804 = vmatprep.subr.bf16.mxu0 0
      %2805 = vmatpush1.bf16.msra.mxu0 %v2794
      %2806 = vmatprep.subr.bf16.mxu0 0
      %2807 = vmatpush1.bf16.msra.mxu0 %v2795
      %2808 = vmatprep.subr.bf16.mxu0 0
      %2809 = vmatpush1.bf16.msra.mxu0 0
      %2810 = vmatprep.subr.bf16.mxu0 0
      %2811 = vmatpush1.bf16.msra.mxu0 0
      %2812 = vmatprep.subr.bf16.mxu0 0
      %2813 = vmatpush1.bf16.msra.mxu0 0
      %2814 = vmatprep.subr.bf16.mxu0 0
      %2815 = vmatpush1.bf16.msra.mxu0 0
      %2816 = vmatprep.subr.bf16.mxu0 0
      %2817 = vmatpush1.bf16.msra.mxu0 0
      %2818 = vmatprep.subr.bf16.mxu0 0
      %2819 = vmatpush1.bf16.msra.mxu0 0
      %2820 = vmatprep.subr.bf16.mxu0 0
      %2821 = vmatpush1.bf16.msra.mxu0 0
      %2822 = vmatprep.subr.bf16.mxu0 0
      %2823 = vmatpush1.bf16.msra.mxu0 0
      %2824 = vmatprep.subr.bf16.mxu0 0
      %2825 = vmatpush1.bf16.msra.mxu0 0
      %2826 = vmatprep.subr.bf16.mxu0 0
      %2827 = vmatpush1.bf16.msra.mxu0 0
      %2828 = vmatprep.subr.bf16.mxu0 0
      %2829 = vmatpush1.bf16.msra.mxu0 0
      %2830 = vmatprep.subr.bf16.mxu0 0
      %2831 = vmatpush1.bf16.msra.mxu0 0
      %2832 = vmatprep.mubr.bf16.mxu0 0
      %2833 = vmatmul.mubr.bf16.gmra.mrb[0].mxu0 %v2723
      %v2834 = vpop.f32.mrb[0].mxu0
      %v2835 = vadd.f32 0.0, %v2834
      %v2836 = vpop.f32.mrb[0].mxu0
      %v2837 = vpop.f32.mrb[0].mxu0
      %v2838 = vpop.f32.mrb[0].mxu0
      %2839 = vdwg.mxu0
      %s2840 = scalar_lea.vmem %s4, 16
      %v2841 = vld [vmem:[%s2840] sm:$0xff]
      %v2842 = vld [vmem:[%s2840 + $0x8] sm:$0xff]
      %vm2843 = vcmask 64512
      %v2845 = vsel %vm2843, %v2841, 0
      %v2848 = vsel %vm2843, %v2842, 0
      %2850 = vmatprep.subr.mxu0 0.0
      %2851 = vmatpush1.msra.mxu0 %v2835
      %2852 = vmatprep.subr.mxu0 0.0
      %2853 = vmatpush1.msra.mxu0 0.0
      %2854 = vmatprep.subr.mxu0 0.0
      %2855 = vmatpush1.msra.mxu0 0.0
      %2856 = vmatprep.subr.mxu0 0.0
      %2857 = vmatpush1.msra.mxu0 0.0
      %2858 = vmatprep.subr.mxu0 0.0
      %2859 = vmatpush1.msra.mxu0 0.0
      %2860 = vmatprep.subr.mxu0 0.0
      %2861 = vmatpush1.msra.mxu0 0.0
      %2862 = vmatprep.subr.mxu0 0.0
      %2863 = vmatpush1.msra.mxu0 0.0
      %2864 = vmatprep.subr.mxu0 0.0
      %2865 = vmatpush1.msra.mxu0 0.0
      %2866 = vmatprep.subr.mxu0 0.0
      %2867 = vmatpush1.msra.mxu0 0.0
      %2868 = vmatprep.subr.mxu0 0.0
      %2869 = vmatpush1.msra.mxu0 0.0
      %2870 = vmatprep.subr.mxu0 0.0
      %2871 = vmatpush1.msra.mxu0 0.0
      %2872 = vmatprep.subr.mxu0 0.0
      %2873 = vmatpush1.msra.mxu0 0.0
      %2874 = vmatprep.subr.mxu0 0.0
      %2875 = vmatpush1.msra.mxu0 0.0
      %2876 = vmatprep.subr.mxu0 0.0
      %2877 = vmatpush1.msra.mxu0 0.0
      %2878 = vmatprep.subr.mxu0 0.0
      %2879 = vmatpush1.msra.mxu0 0.0
      %2880 = vmatprep.subr.mxu0 0.0
      %2881 = vmatpush1.msra.mxu0 0.0
      %2882 = vmatprep.subr.mxu0 0.0
      %2883 = vmatpush1.msra.mxu0 0.0
      %2884 = vmatprep.subr.mxu0 0.0
      %2885 = vmatpush1.msra.mxu0 0.0
      %2886 = vmatprep.subr.mxu0 0.0
      %2887 = vmatpush1.msra.mxu0 0.0
      %2888 = vmatprep.subr.mxu0 0.0
      %2889 = vmatpush1.msra.mxu0 0.0
      %2890 = vmatprep.subr.mxu0 0.0
      %2891 = vmatpush1.msra.mxu0 0.0
      %2892 = vmatprep.subr.mxu0 0.0
      %2893 = vmatpush1.msra.mxu0 0.0
      %2894 = vmatprep.subr.mxu0 0.0
      %2895 = vmatpush1.msra.mxu0 0.0
      %2896 = vmatprep.subr.mxu0 0.0
      %2897 = vmatpush1.msra.mxu0 0.0
      %2898 = vmatprep.subr.mxu0 0.0
      %2899 = vmatpush1.msra.mxu0 0.0
      %2900 = vmatprep.subr.mxu0 0.0
      %2901 = vmatpush1.msra.mxu0 0.0
      %2902 = vmatprep.subr.mxu0 0.0
      %2903 = vmatpush1.msra.mxu0 0.0
      %2904 = vmatprep.subr.mxu0 0.0
      %2905 = vmatpush1.msra.mxu0 0.0
      %2906 = vmatprep.subr.mxu0 0.0
      %2907 = vmatpush1.msra.mxu0 0.0
      %2908 = vmatprep.subr.mxu0 0.0
      %2909 = vmatpush1.msra.mxu0 0.0
      %2910 = vmatprep.subr.mxu0 0.0
      %2911 = vmatpush1.msra.mxu0 0.0
      %2912 = vmatprep.subr.mxu0 0.0
      %2913 = vmatpush1.msra.mxu0 0.0
      %2914 = vmatprep.mubr.f32.mxu0 0.0
      %2915 = vmatmul.mubr.f32.gmra.mrb[0].mxu0 %v2845
      %v2916 = vpop.f32.mrb[0].mxu0
      %v2917 = vadd.f32 0.0, %v2916
      %v2918 = vpop.f32.mrb[0].mxu0
      %2919 = vmatprep.mubr.f32.mxu0 0.0
      %2920 = vmatmul.mubr.f32.gmra.mrb[0].mxu0 %v2848
      %v2921 = vpop.f32.mrb[0].mxu0
      %v2922 = vadd.f32 0.0, %v2921
      %v2923 = vpop.f32.mrb[0].mxu0
      %2924 = vdwg.mxu0
      %v2926 = vsel %vm2843, %v2765, 0
      %v2929 = vsel %vm2843, %v2766, 0
      %2931 = vmatprep.subr.mxu0 0.0
      %2932 = vmatpush1.msra.mxu0 %v2760
      %2933 = vmatprep.subr.mxu0 0.0
      %2934 = vmatpush1.msra.mxu0 0.0
      %2935 = vmatprep.subr.mxu0 0.0
      %2936 = vmatpush1.msra.mxu0 0.0
      %2937 = vmatprep.subr.mxu0 0.0
      %2938 = vmatpush1.msra.mxu0 0.0
      %2939 = vmatprep.subr.mxu0 0.0
      %2940 = vmatpush1.msra.mxu0 0.0
      %2941 = vmatprep.subr.mxu0 0.0
      %2942 = vmatpush1.msra.mxu0 0.0
      %2943 = vmatprep.subr.mxu0 0.0
      %2944 = vmatpush1.msra.mxu0 0.0
      %2945 = vmatprep.subr.mxu0 0.0
      %2946 = vmatpush1.msra.mxu0 0.0
      %2947 = vmatprep.subr.mxu0 0.0
      %2948 = vmatpush1.msra.mxu0 0.0
      %2949 = vmatprep.subr.mxu0 0.0
      %2950 = vmatpush1.msra.mxu0 0.0
      %2951 = vmatprep.subr.mxu0 0.0
      %2952 = vmatpush1.msra.mxu0 0.0
      %2953 = vmatprep.subr.mxu0 0.0
      %2954 = vmatpush1.msra.mxu0 0.0
      %2955 = vmatprep.subr.mxu0 0.0
      %2956 = vmatpush1.msra.mxu0 0.0
      %2957 = vmatprep.subr.mxu0 0.0
      %2958 = vmatpush1.msra.mxu0 0.0
      %2959 = vmatprep.subr.mxu0 0.0
      %2960 = vmatpush1.msra.mxu0 0.0
      %2961 = vmatprep.subr.mxu0 0.0
      %2962 = vmatpush1.msra.mxu0 0.0
      %2963 = vmatprep.subr.mxu0 0.0
      %2964 = vmatpush1.msra.mxu0 0.0
      %2965 = vmatprep.subr.mxu0 0.0
      %2966 = vmatpush1.msra.mxu0 0.0
      %2967 = vmatprep.subr.mxu0 0.0
      %2968 = vmatpush1.msra.mxu0 0.0
      %2969 = vmatprep.subr.mxu0 0.0
      %2970 = vmatpush1.msra.mxu0 0.0
      %2971 = vmatprep.subr.mxu0 0.0
      %2972 = vmatpush1.msra.mxu0 0.0
      %2973 = vmatprep.subr.mxu0 0.0
      %2974 = vmatpush1.msra.mxu0 0.0
      %2975 = vmatprep.subr.mxu0 0.0
      %2976 = vmatpush1.msra.mxu0 0.0
      %2977 = vmatprep.subr.mxu0 0.0
      %2978 = vmatpush1.msra.mxu0 0.0
      %2979 = vmatprep.subr.mxu0 0.0
      %2980 = vmatpush1.msra.mxu0 0.0
      %2981 = vmatprep.subr.mxu0 0.0
      %2982 = vmatpush1.msra.mxu0 0.0
      %2983 = vmatprep.subr.mxu0 0.0
      %2984 = vmatpush1.msra.mxu0 0.0
      %2985 = vmatprep.subr.mxu0 0.0
      %2986 = vmatpush1.msra.mxu0 0.0
      %2987 = vmatprep.subr.mxu0 0.0
      %2988 = vmatpush1.msra.mxu0 0.0
      %2989 = vmatprep.subr.mxu0 0.0
      %2990 = vmatpush1.msra.mxu0 0.0
      %2991 = vmatprep.subr.mxu0 0.0
      %2992 = vmatpush1.msra.mxu0 0.0
      %2993 = vmatprep.subr.mxu0 0.0
      %2994 = vmatpush1.msra.mxu0 0.0
      %2995 = vmatprep.mubr.f32.mxu0 0.0
      %2996 = vmatmul.mubr.f32.gmra.mrb[0].mxu0 %v2926
      %v2997 = vpop.f32.mrb[0].mxu0
      %v2998 = vadd.f32 %v2917, %v2997
      %v2999 = vpop.f32.mrb[0].mxu0
      %3000 = vmatprep.mubr.f32.mxu0 0.0
      %3001 = vmatmul.mubr.f32.gmra.mrb[0].mxu0 %v2929
      %v3002 = vpop.f32.mrb[0].mxu0
      %v3003 = vadd.f32 %v2922, %v3002
      %v3004 = vpop.f32.mrb[0].mxu0
      %3005 = vdwg.mxu0
      %s3006 = scalar_lea.vmem %s5, 64
      %v3007 = vld [vmem:[%s3006] sm:$0xf]
      %v3008 = vld [vmem:[%s3006 + $0x4] sm:$0xf]
      %v3009 = vld [vmem:[%s3006 + $0x8] sm:$0xf]
      %v3010 = vld [vmem:[%s3006 + $0xc] sm:$0xf]
      %v3011 = vld [vmem:[%s3006 + $0x10] sm:$0xf]
      %v3012 = vld [vmem:[%s3006 + $0x14] sm:$0xf]
      %v3013 = vld [vmem:[%s3006 + $0x18] sm:$0xf]
      %v3014 = vld [vmem:[%s3006 + $0x1c] sm:$0xf]
      %v3023 = vunpack.c.l.b16 %v3007
      %v3024 = vunpack.c.l.b16 %v3008
      %v3025 = vunpack.c.l.b16 %v3009
      %v3026 = vunpack.c.l.b16 %v3010
      %v3027 = vunpack.c.l.b16 %v3011
      %v3028 = vunpack.c.l.b16 %v3012
      %v3029 = vunpack.c.l.b16 %v3013
      %v3030 = vunpack.c.l.b16 %v3014
      %v3031 = vpack.c.b16 %v3024, %v3023
      %v3032 = vpack.c.b16 %v3026, %v3025
      %v3033 = vpack.c.b16 %v3028, %v3027
      %v3034 = vpack.c.b16 %v3030, %v3029
      %3039 = vmatprep.subr.bf16.mxu0 0
      %3040 = vmatpush1.bf16.msra.mxu0 %v3031
      %3041 = vmatprep.subr.bf16.mxu0 0
      %3042 = vmatpush1.bf16.msra.mxu0 %v3032
      %3043 = vmatprep.subr.bf16.mxu0 0
      %3044 = vmatpush1.bf16.msra.mxu0 %v3033
      %3045 = vmatprep.subr.bf16.mxu0 0
      %3046 = vmatpush1.bf16.msra.mxu0 %v3034
      %3047 = vmatprep.subr.bf16.mxu0 0
      %3048 = vmatpush1.bf16.msra.mxu0 0
      %3049 = vmatprep.subr.bf16.mxu0 0
      %3050 = vmatpush1.bf16.msra.mxu0 0
      %3051 = vmatprep.subr.bf16.mxu0 0
      %3052 = vmatpush1.bf16.msra.mxu0 0
      %3053 = vmatprep.subr.bf16.mxu0 0
      %3054 = vmatpush1.bf16.msra.mxu0 0
      %3055 = vmatprep.subr.bf16.mxu0 0
      %3056 = vmatpush1.bf16.msra.mxu0 0
      %3057 = vmatprep.subr.bf16.mxu0 0
      %3058 = vmatpush1.bf16.msra.mxu0 0
      %3059 = vmatprep.subr.bf16.mxu0 0
      %3060 = vmatpush1.bf16.msra.mxu0 0
      %3061 = vmatprep.subr.bf16.mxu0 0
      %3062 = vmatpush1.bf16.msra.mxu0 0
      %3063 = vmatprep.subr.bf16.mxu0 0
      %3064 = vmatpush1.bf16.msra.mxu0 0
      %3065 = vmatprep.subr.bf16.mxu0 0
      %3066 = vmatpush1.bf16.msra.mxu0 0
      %3067 = vmatprep.subr.bf16.mxu0 0
      %3068 = vmatpush1.bf16.msra.mxu0 0
      %3069 = vmatprep.subr.bf16.mxu0 0
      %3070 = vmatpush1.bf16.msra.mxu0 0
      %3071 = vmatprep.mubr.bf16.mxu0 0
      %3072 = vmatmul.mubr.bf16.gmra.mrb[0].mxu0 %v2723
      %v3073 = vpop.f32.mrb[0].mxu0
      %v3074 = vadd.f32 0.0, %v3073
      %v3075 = vpop.f32.mrb[0].mxu0
      %v3076 = vpop.f32.mrb[0].mxu0
      %v3077 = vpop.f32.mrb[0].mxu0
      %3078 = vdwg.mxu0
      %s3079 = scalar_lea.vmem %s4, 32
      %v3080 = vld [vmem:[%s3079] sm:$0xff]
      %v3081 = vld [vmem:[%s3079 + $0x8] sm:$0xff]
      %v3083 = vsel %vm2843, %v3080, 0
      %v3086 = vsel %vm2843, %v3081, 0
      %3088 = vmatprep.subr.mxu0 0.0
      %3089 = vmatpush1.msra.mxu0 %v3074
      %3090 = vmatprep.subr.mxu0 0.0
      %3091 = vmatpush1.msra.mxu0 0.0
      %3092 = vmatprep.subr.mxu0 0.0
      %3093 = vmatpush1.msra.mxu0 0.0
      %3094 = vmatprep.subr.mxu0 0.0
      %3095 = vmatpush1.msra.mxu0 0.0
      %3096 = vmatprep.subr.mxu0 0.0
      %3097 = vmatpush1.msra.mxu0 0.0
      %3098 = vmatprep.subr.mxu0 0.0
      %3099 = vmatpush1.msra.mxu0 0.0
      %3100 = vmatprep.subr.mxu0 0.0
      %3101 = vmatpush1.msra.mxu0 0.0
      %3102 = vmatprep.subr.mxu0 0.0
      %3103 = vmatpush1.msra.mxu0 0.0
      %3104 = vmatprep.subr.mxu0 0.0
      %3105 = vmatpush1.msra.mxu0 0.0
      %3106 = vmatprep.subr.mxu0 0.0
      %3107 = vmatpush1.msra.mxu0 0.0
      %3108 = vmatprep.subr.mxu0 0.0
      %3109 = vmatpush1.msra.mxu0 0.0
      %3110 = vmatprep.subr.mxu0 0.0
      %3111 = vmatpush1.msra.mxu0 0.0
      %3112 = vmatprep.subr.mxu0 0.0
      %3113 = vmatpush1.msra.mxu0 0.0
      %3114 = vmatprep.subr.mxu0 0.0
      %3115 = vmatpush1.msra.mxu0 0.0
      %3116 = vmatprep.subr.mxu0 0.0
      %3117 = vmatpush1.msra.mxu0 0.0
      %3118 = vmatprep.subr.mxu0 0.0
      %3119 = vmatpush1.msra.mxu0 0.0
      %3120 = vmatprep.subr.mxu0 0.0
      %3121 = vmatpush1.msra.mxu0 0.0
      %3122 = vmatprep.subr.mxu0 0.0
      %3123 = vmatpush1.msra.mxu0 0.0
      %3124 = vmatprep.subr.mxu0 0.0
      %3125 = vmatpush1.msra.mxu0 0.0
      %3126 = vmatprep.subr.mxu0 0.0
      %3127 = vmatpush1.msra.mxu0 0.0
      %3128 = vmatprep.subr.mxu0 0.0
      %3129 = vmatpush1.msra.mxu0 0.0
      %3130 = vmatprep.subr.mxu0 0.0
      %3131 = vmatpush1.msra.mxu0 0.0
      %3132 = vmatprep.subr.mxu0 0.0
      %3133 = vmatpush1.msra.mxu0 0.0
      %3134 = vmatprep.subr.mxu0 0.0
      %3135 = vmatpush1.msra.mxu0 0.0
      %3136 = vmatprep.subr.mxu0 0.0
      %3137 = vmatpush1.msra.mxu0 0.0
      %3138 = vmatprep.subr.mxu0 0.0
      %3139 = vmatpush1.msra.mxu0 0.0
      %3140 = vmatprep.subr.mxu0 0.0
      %3141 = vmatpush1.msra.mxu0 0.0
      %3142 = vmatprep.subr.mxu0 0.0
      %3143 = vmatpush1.msra.mxu0 0.0
      %3144 = vmatprep.subr.mxu0 0.0
      %3145 = vmatpush1.msra.mxu0 0.0
      %3146 = vmatprep.subr.mxu0 0.0
      %3147 = vmatpush1.msra.mxu0 0.0
      %3148 = vmatprep.subr.mxu0 0.0
      %3149 = vmatpush1.msra.mxu0 0.0
      %3150 = vmatprep.subr.mxu0 0.0
      %3151 = vmatpush1.msra.mxu0 0.0
      %3152 = vmatprep.mubr.f32.mxu0 0.0
      %3153 = vmatmul.mubr.f32.gmra.mrb[0].mxu0 %v3083
      %v3154 = vpop.f32.mrb[0].mxu0
      %v3155 = vadd.f32 0.0, %v3154
      %v3156 = vpop.f32.mrb[0].mxu0
      %3157 = vmatprep.mubr.f32.mxu0 0.0
      %3158 = vmatmul.mubr.f32.gmra.mrb[0].mxu0 %v3086
      %v3159 = vpop.f32.mrb[0].mxu0
      %v3160 = vadd.f32 0.0, %v3159
      %v3161 = vpop.f32.mrb[0].mxu0
      %3162 = vdwg.mxu0
      %v3163 = vadd.f32 %v2998, %v3155
      %v3164 = vadd.f32 %v3003, %v3160
      %s3165 = scalar_lea.vmem %s5, 96
      %v3166 = vld [vmem:[%s3165] sm:$0xf]
      %v3167 = vld [vmem:[%s3165 + $0x4] sm:$0xf]
      %v3168 = vld [vmem:[%s3165 + $0x8] sm:$0xf]
      %v3169 = vld [vmem:[%s3165 + $0xc] sm:$0xf]
      %v3170 = vld [vmem:[%s3165 + $0x10] sm:$0xf]
      %v3171 = vld [vmem:[%s3165 + $0x14] sm:$0xf]
      %v3172 = vld [vmem:[%s3165 + $0x18] sm:$0xf]
      %v3173 = vld [vmem:[%s3165 + $0x1c] sm:$0xf]
      %v3182 = vunpack.c.l.b16 %v3166
      %v3183 = vunpack.c.l.b16 %v3167
      %v3184 = vunpack.c.l.b16 %v3168
      %v3185 = vunpack.c.l.b16 %v3169
      %v3186 = vunpack.c.l.b16 %v3170
      %v3187 = vunpack.c.l.b16 %v3171
      %v3188 = vunpack.c.l.b16 %v3172
      %v3189 = vunpack.c.l.b16 %v3173
      %v3190 = vpack.c.b16 %v3183, %v3182
      %v3191 = vpack.c.b16 %v3185, %v3184
      %v3192 = vpack.c.b16 %v3187, %v3186
      %v3193 = vpack.c.b16 %v3189, %v3188
      %3198 = vmatprep.subr.bf16.mxu0 0
      %3199 = vmatpush1.bf16.msra.mxu0 %v3190
      %3200 = vmatprep.subr.bf16.mxu0 0
      %3201 = vmatpush1.bf16.msra.mxu0 %v3191
      %3202 = vmatprep.subr.bf16.mxu0 0
      %3203 = vmatpush1.bf16.msra.mxu0 %v3192
      %3204 = vmatprep.subr.bf16.mxu0 0
      %3205 = vmatpush1.bf16.msra.mxu0 %v3193
      %3206 = vmatprep.subr.bf16.mxu0 0
      %3207 = vmatpush1.bf16.msra.mxu0 0
      %3208 = vmatprep.subr.bf16.mxu0 0
      %3209 = vmatpush1.bf16.msra.mxu0 0
      %3210 = vmatprep.subr.bf16.mxu0 0
      %3211 = vmatpush1.bf16.msra.mxu0 0
      %3212 = vmatprep.subr.bf16.mxu0 0
      %3213 = vmatpush1.bf16.msra.mxu0 0
      %3214 = vmatprep.subr.bf16.mxu0 0
      %3215 = vmatpush1.bf16.msra.mxu0 0
      %3216 = vmatprep.subr.bf16.mxu0 0
      %3217 = vmatpush1.bf16.msra.mxu0 0
      %3218 = vmatprep.subr.bf16.mxu0 0
      %3219 = vmatpush1.bf16.msra.mxu0 0
      %3220 = vmatprep.subr.bf16.mxu0 0
      %3221 = vmatpush1.bf16.msra.mxu0 0
      %3222 = vmatprep.subr.bf16.mxu0 0
      %3223 = vmatpush1.bf16.msra.mxu0 0
      %3224 = vmatprep.subr.bf16.mxu0 0
      %3225 = vmatpush1.bf16.msra.mxu0 0
      %3226 = vmatprep.subr.bf16.mxu0 0
      %3227 = vmatpush1.bf16.msra.mxu0 0
      %3228 = vmatprep.subr.bf16.mxu0 0
      %3229 = vmatpush1.bf16.msra.mxu0 0
      %3230 = vmatprep.mubr.bf16.mxu0 0
      %3231 = vmatmul.mubr.bf16.gmra.mrb[0].mxu0 %v2723
      %v3232 = vpop.f32.mrb[0].mxu0
      %v3233 = vadd.f32 0.0, %v3232
      %v3234 = vpop.f32.mrb[0].mxu0
      %v3235 = vpop.f32.mrb[0].mxu0
      %v3236 = vpop.f32.mrb[0].mxu0
      %3237 = vdwg.mxu0
      %s3238 = scalar_lea.vmem %s4, 48
      %v3239 = vld [vmem:[%s3238] sm:$0xff]
      %v3240 = vld [vmem:[%s3238 + $0x8] sm:$0xff]
      %v3242 = vsel %vm2843, %v3239, 0
      %v3245 = vsel %vm2843, %v3240, 0
      %3247 = vmatprep.subr.mxu0 0.0
      %3248 = vmatpush1.msra.mxu0 %v3233
      %3249 = vmatprep.subr.mxu0 0.0
      %3250 = vmatpush1.msra.mxu0 0.0
      %3251 = vmatprep.subr.mxu0 0.0
      %3252 = vmatpush1.msra.mxu0 0.0
      %3253 = vmatprep.subr.mxu0 0.0
      %3254 = vmatpush1.msra.mxu0 0.0
      %3255 = vmatprep.subr.mxu0 0.0
      %3256 = vmatpush1.msra.mxu0 0.0
      %3257 = vmatprep.subr.mxu0 0.0
      %3258 = vmatpush1.msra.mxu0 0.0
      %3259 = vmatprep.subr.mxu0 0.0
      %3260 = vmatpush1.msra.mxu0 0.0
      %3261 = vmatprep.subr.mxu0 0.0
      %3262 = vmatpush1.msra.mxu0 0.0
      %3263 = vmatprep.subr.mxu0 0.0
      %3264 = vmatpush1.msra.mxu0 0.0
      %3265 = vmatprep.subr.mxu0 0.0
      %3266 = vmatpush1.msra.mxu0 0.0
      %3267 = vmatprep.subr.mxu0 0.0
      %3268 = vmatpush1.msra.mxu0 0.0
      %3269 = vmatprep.subr.mxu0 0.0
      %3270 = vmatpush1.msra.mxu0 0.0
      %3271 = vmatprep.subr.mxu0 0.0
      %3272 = vmatpush1.msra.mxu0 0.0
      %3273 = vmatprep.subr.mxu0 0.0
      %3274 = vmatpush1.msra.mxu0 0.0
      %3275 = vmatprep.subr.mxu0 0.0
      %3276 = vmatpush1.msra.mxu0 0.0
      %3277 = vmatprep.subr.mxu0 0.0
      %3278 = vmatpush1.msra.mxu0 0.0
      %3279 = vmatprep.subr.mxu0 0.0
      %3280 = vmatpush1.msra.mxu0 0.0
      %3281 = vmatprep.subr.mxu0 0.0
      %3282 = vmatpush1.msra.mxu0 0.0
      %3283 = vmatprep.subr.mxu0 0.0
      %3284 = vmatpush1.msra.mxu0 0.0
      %3285 = vmatprep.subr.mxu0 0.0
      %3286 = vmatpush1.msra.mxu0 0.0
      %3287 = vmatprep.subr.mxu0 0.0
      %3288 = vmatpush1.msra.mxu0 0.0
      %3289 = vmatprep.subr.mxu0 0.0
      %3290 = vmatpush1.msra.mxu0 0.0
      %3291 = vmatprep.subr.mxu0 0.0
      %3292 = vmatpush1.msra.mxu0 0.0
      %3293 = vmatprep.subr.mxu0 0.0
      %3294 = vmatpush1.msra.mxu0 0.0
      %3295 = vmatprep.subr.mxu0 0.0
      %3296 = vmatpush1.msra.mxu0 0.0
      %3297 = vmatprep.subr.mxu0 0.0
      %3298 = vmatpush1.msra.mxu0 0.0
      %3299 = vmatprep.subr.mxu0 0.0
      %3300 = vmatpush1.msra.mxu0 0.0
      %3301 = vmatprep.subr.mxu0 0.0
      %3302 = vmatpush1.msra.mxu0 0.0
      %3303 = vmatprep.subr.mxu0 0.0
      %3304 = vmatpush1.msra.mxu0 0.0
      %3305 = vmatprep.subr.mxu0 0.0
      %3306 = vmatpush1.msra.mxu0 0.0
      %3307 = vmatprep.subr.mxu0 0.0
      %3308 = vmatpush1.msra.mxu0 0.0
      %3309 = vmatprep.subr.mxu0 0.0
      %3310 = vmatpush1.msra.mxu0 0.0
      %3311 = vmatprep.mubr.f32.mxu0 0.0
      %3312 = vmatmul.mubr.f32.gmra.mrb[0].mxu0 %v3242
      %v3313 = vpop.f32.mrb[0].mxu0
      %v3314 = vadd.f32 0.0, %v3313
      %v3315 = vpop.f32.mrb[0].mxu0
      %3316 = vmatprep.mubr.f32.mxu0 0.0
      %3317 = vmatmul.mubr.f32.gmra.mrb[0].mxu0 %v3245
      %v3318 = vpop.f32.mrb[0].mxu0
      %v3319 = vadd.f32 0.0, %v3318
      %v3320 = vpop.f32.mrb[0].mxu0
      %3321 = vdwg.mxu0
      %v3322 = vadd.f32 %v3163, %v3314
      %v3323 = vadd.f32 %v3164, %v3319
      %s3324 = scalar_lea.vmem %s5, 128
      %v3325 = vld [vmem:[%s3324] sm:$0xf]
      %v3326 = vld [vmem:[%s3324 + $0x4] sm:$0xf]
      %v3327 = vld [vmem:[%s3324 + $0x8] sm:$0xf]
      %v3328 = vld [vmem:[%s3324 + $0xc] sm:$0xf]
      %v3329 = vld [vmem:[%s3324 + $0x10] sm:$0xf]
      %v3330 = vld [vmem:[%s3324 + $0x14] sm:$0xf]
      %v3331 = vld [vmem:[%s3324 + $0x18] sm:$0xf]
      %v3332 = vld [vmem:[%s3324 + $0x1c] sm:$0xf]
      %v3341 = vunpack.c.l.b16 %v3325
      %v3342 = vunpack.c.l.b16 %v3326
      %v3343 = vunpack.c.l.b16 %v3327
      %v3344 = vunpack.c.l.b16 %v3328
      %v3345 = vunpack.c.l.b16 %v3329
      %v3346 = vunpack.c.l.b16 %v3330
      %v3347 = vunpack.c.l.b16 %v3331
      %v3348 = vunpack.c.l.b16 %v3332
      %v3349 = vpack.c.b16 %v3342, %v3341
      %v3350 = vpack.c.b16 %v3344, %v3343
      %v3351 = vpack.c.b16 %v3346, %v3345
      %v3352 = vpack.c.b16 %v3348, %v3347
      %3357 = vmatprep.subr.bf16.mxu0 0
      %3358 = vmatpush1.bf16.msra.mxu0 %v3349
      %3359 = vmatprep.subr.bf16.mxu0 0
      %3360 = vmatpush1.bf16.msra.mxu0 %v3350
      %3361 = vmatprep.subr.bf16.mxu0 0
      %3362 = vmatpush1.bf16.msra.mxu0 %v3351
      %3363 = vmatprep.subr.bf16.mxu0 0
      %3364 = vmatpush1.bf16.msra.mxu0 %v3352
      %3365 = vmatprep.subr.bf16.mxu0 0
      %3366 = vmatpush1.bf16.msra.mxu0 0
      %3367 = vmatprep.subr.bf16.mxu0 0
      %3368 = vmatpush1.bf16.msra.mxu0 0
      %3369 = vmatprep.subr.bf16.mxu0 0
      %3370 = vmatpush1.bf16.msra.mxu0 0
      %3371 = vmatprep.subr.bf16.mxu0 0
      %3372 = vmatpush1.bf16.msra.mxu0 0
      %3373 = vmatprep.subr.bf16.mxu0 0
      %3374 = vmatpush1.bf16.msra.mxu0 0
      %3375 = vmatprep.subr.bf16.mxu0 0
      %3376 = vmatpush1.bf16.msra.mxu0 0
      %3377 = vmatprep.subr.bf16.mxu0 0
      %3378 = vmatpush1.bf16.msra.mxu0 0
      %3379 = vmatprep.subr.bf16.mxu0 0
      %3380 = vmatpush1.bf16.msra.mxu0 0
      %3381 = vmatprep.subr.bf16.mxu0 0
      %3382 = vmatpush1.bf16.msra.mxu0 0
      %3383 = vmatprep.subr.bf16.mxu0 0
      %3384 = vmatpush1.bf16.msra.mxu0 0
      %3385 = vmatprep.subr.bf16.mxu0 0
      %3386 = vmatpush1.bf16.msra.mxu0 0
      %3387 = vmatprep.subr.bf16.mxu0 0
      %3388 = vmatpush1.bf16.msra.mxu0 0
      %3389 = vmatprep.mubr.bf16.mxu0 0
      %3390 = vmatmul.mubr.bf16.gmra.mrb[0].mxu0 %v2723
      %v3391 = vpop.f32.mrb[0].mxu0
      %v3392 = vadd.f32 0.0, %v3391
      %v3393 = vpop.f32.mrb[0].mxu0
      %v3394 = vpop.f32.mrb[0].mxu0
      %v3395 = vpop.f32.mrb[0].mxu0
      %3396 = vdwg.mxu0
      %s3397 = scalar_lea.vmem %s4, 64
      %v3398 = vld [vmem:[%s3397] sm:$0xff]
      %v3399 = vld [vmem:[%s3397 + $0x8] sm:$0xff]
      %v3401 = vsel %vm2843, %v3398, 0
      %v3404 = vsel %vm2843, %v3399, 0
      %3406 = vmatprep.subr.mxu0 0.0
      %3407 = vmatpush1.msra.mxu0 %v3392
      %3408 = vmatprep.subr.mxu0 0.0
      %3409 = vmatpush1.msra.mxu0 0.0
      %3410 = vmatprep.subr.mxu0 0.0
      %3411 = vmatpush1.msra.mxu0 0.0
      %3412 = vmatprep.subr.mxu0 0.0
      %3413 = vmatpush1.msra.mxu0 0.0
      %3414 = vmatprep.subr.mxu0 0.0
      %3415 = vmatpush1.msra.mxu0 0.0
      %3416 = vmatprep.subr.mxu0 0.0
      %3417 = vmatpush1.msra.mxu0 0.0
      %3418 = vmatprep.subr.mxu0 0.0
      %3419 = vmatpush1.msra.mxu0 0.0
      %3420 = vmatprep.subr.mxu0 0.0
      %3421 = vmatpush1.msra.mxu0 0.0
      %3422 = vmatprep.subr.mxu0 0.0
      %3423 = vmatpush1.msra.mxu0 0.0
      %3424 = vmatprep.subr.mxu0 0.0
      %3425 = vmatpush1.msra.mxu0 0.0
      %3426 = vmatprep.subr.mxu0 0.0
      %3427 = vmatpush1.msra.mxu0 0.0
      %3428 = vmatprep.subr.mxu0 0.0
      %3429 = vmatpush1.msra.mxu0 0.0
      %3430 = vmatprep.subr.mxu0 0.0
      %3431 = vmatpush1.msra.mxu0 0.0
      %3432 = vmatprep.subr.mxu0 0.0
      %3433 = vmatpush1.msra.mxu0 0.0
      %3434 = vmatprep.subr.mxu0 0.0
      %3435 = vmatpush1.msra.mxu0 0.0
      %3436 = vmatprep.subr.mxu0 0.0
      %3437 = vmatpush1.msra.mxu0 0.0
      %3438 = vmatprep.subr.mxu0 0.0
      %3439 = vmatpush1.msra.mxu0 0.0
      %3440 = vmatprep.subr.mxu0 0.0
      %3441 = vmatpush1.msra.mxu0 0.0
      %3442 = vmatprep.subr.mxu0 0.0
      %3443 = vmatpush1.msra.mxu0 0.0
      %3444 = vmatprep.subr.mxu0 0.0
      %3445 = vmatpush1.msra.mxu0 0.0
      %3446 = vmatprep.subr.mxu0 0.0
      %3447 = vmatpush1.msra.mxu0 0.0
      %3448 = vmatprep.subr.mxu0 0.0
      %3449 = vmatpush1.msra.mxu0 0.0
      %3450 = vmatprep.subr.mxu0 0.0
      %3451 = vmatpush1.msra.mxu0 0.0
      %3452 = vmatprep.subr.mxu0 0.0
      %3453 = vmatpush1.msra.mxu0 0.0
      %3454 = vmatprep.subr.mxu0 0.0
      %3455 = vmatpush1.msra.mxu0 0.0
      %3456 = vmatprep.subr.mxu0 0.0
      %3457 = vmatpush1.msra.mxu0 0.0
      %3458 = vmatprep.subr.mxu0 0.0
      %3459 = vmatpush1.msra.mxu0 0.0
      %3460 = vmatprep.subr.mxu0 0.0
      %3461 = vmatpush1.msra.mxu0 0.0
      %3462 = vmatprep.subr.mxu0 0.0
      %3463 = vmatpush1.msra.mxu0 0.0
      %3464 = vmatprep.subr.mxu0 0.0
      %3465 = vmatpush1.msra.mxu0 0.0
      %3466 = vmatprep.subr.mxu0 0.0
      %3467 = vmatpush1.msra.mxu0 0.0
      %3468 = vmatprep.subr.mxu0 0.0
      %3469 = vmatpush1.msra.mxu0 0.0
      %3470 = vmatprep.mubr.f32.mxu0 0.0
      %3471 = vmatmul.mubr.f32.gmra.mrb[0].mxu0 %v3401
      %v3472 = vpop.f32.mrb[0].mxu0
      %v3473 = vadd.f32 0.0, %v3472
      %v3474 = vpop.f32.mrb[0].mxu0
      %3475 = vmatprep.mubr.f32.mxu0 0.0
      %3476 = vmatmul.mubr.f32.gmra.mrb[0].mxu0 %v3404
      %v3477 = vpop.f32.mrb[0].mxu0
      %v3478 = vadd.f32 0.0, %v3477
      %v3479 = vpop.f32.mrb[0].mxu0
      %3480 = vdwg.mxu0
      %v3481 = vadd.f32 %v3322, %v3473
      %v3482 = vadd.f32 %v3323, %v3478
      %s3483 = scalar_lea.vmem %s5, 160
      %v3484 = vld [vmem:[%s3483] sm:$0xf]
      %v3485 = vld [vmem:[%s3483 + $0x4] sm:$0xf]
      %v3486 = vld [vmem:[%s3483 + $0x8] sm:$0xf]
      %v3487 = vld [vmem:[%s3483 + $0xc] sm:$0xf]
      %v3488 = vld [vmem:[%s3483 + $0x10] sm:$0xf]
      %v3489 = vld [vmem:[%s3483 + $0x14] sm:$0xf]
      %v3490 = vld [vmem:[%s3483 + $0x18] sm:$0xf]
      %v3491 = vld [vmem:[%s3483 + $0x1c] sm:$0xf]
      %v3500 = vunpack.c.l.b16 %v3484
      %v3501 = vunpack.c.l.b16 %v3485
      %v3502 = vunpack.c.l.b16 %v3486
      %v3503 = vunpack.c.l.b16 %v3487
      %v3504 = vunpack.c.l.b16 %v3488
      %v3505 = vunpack.c.l.b16 %v3489
      %v3506 = vunpack.c.l.b16 %v3490
      %v3507 = vunpack.c.l.b16 %v3491
      %v3508 = vpack.c.b16 %v3501, %v3500
      %v3509 = vpack.c.b16 %v3503, %v3502
      %v3510 = vpack.c.b16 %v3505, %v3504
      %v3511 = vpack.c.b16 %v3507, %v3506
      %3516 = vmatprep.subr.bf16.mxu0 0
      %3517 = vmatpush1.bf16.msra.mxu0 %v3508
      %3518 = vmatprep.subr.bf16.mxu0 0
      %3519 = vmatpush1.bf16.msra.mxu0 %v3509
      %3520 = vmatprep.subr.bf16.mxu0 0
      %3521 = vmatpush1.bf16.msra.mxu0 %v3510
      %3522 = vmatprep.subr.bf16.mxu0 0
      %3523 = vmatpush1.bf16.msra.mxu0 %v3511
      %3524 = vmatprep.subr.bf16.mxu0 0
      %3525 = vmatpush1.bf16.msra.mxu0 0
      %3526 = vmatprep.subr.bf16.mxu0 0
      %3527 = vmatpush1.bf16.msra.mxu0 0
      %3528 = vmatprep.subr.bf16.mxu0 0
      %3529 = vmatpush1.bf16.msra.mxu0 0
      %3530 = vmatprep.subr.bf16.mxu0 0
      %3531 = vmatpush1.bf16.msra.mxu0 0
      %3532 = vmatprep.subr.bf16.mxu0 0
      %3533 = vmatpush1.bf16.msra.mxu0 0
      %3534 = vmatprep.subr.bf16.mxu0 0
      %3535 = vmatpush1.bf16.msra.mxu0 0
      %3536 = vmatprep.subr.bf16.mxu0 0
      %3537 = vmatpush1.bf16.msra.mxu0 0
      %3538 = vmatprep.subr.bf16.mxu0 0
      %3539 = vmatpush1.bf16.msra.mxu0 0
      %3540 = vmatprep.subr.bf16.mxu0 0
      %3541 = vmatpush1.bf16.msra.mxu0 0
      %3542 = vmatprep.subr.bf16.mxu0 0
      %3543 = vmatpush1.bf16.msra.mxu0 0
      %3544 = vmatprep.subr.bf16.mxu0 0
      %3545 = vmatpush1.bf16.msra.mxu0 0
      %3546 = vmatprep.subr.bf16.mxu0 0
      %3547 = vmatpush1.bf16.msra.mxu0 0
      %3548 = vmatprep.mubr.bf16.mxu0 0
      %3549 = vmatmul.mubr.bf16.gmra.mrb[0].mxu0 %v2723
      %v3550 = vpop.f32.mrb[0].mxu0
      %v3551 = vadd.f32 0.0, %v3550
      %v3552 = vpop.f32.mrb[0].mxu0
      %v3553 = vpop.f32.mrb[0].mxu0
      %v3554 = vpop.f32.mrb[0].mxu0
      %3555 = vdwg.mxu0
      %s3556 = scalar_lea.vmem %s4, 80
      %v3557 = vld [vmem:[%s3556] sm:$0xff]
      %v3558 = vld [vmem:[%s3556 + $0x8] sm:$0xff]
      %v3560 = vsel %vm2843, %v3557, 0
      %v3563 = vsel %vm2843, %v3558, 0
      %3565 = vmatprep.subr.mxu0 0.0
      %3566 = vmatpush1.msra.mxu0 %v3551
      %3567 = vmatprep.subr.mxu0 0.0
      %3568 = vmatpush1.msra.mxu0 0.0
      %3569 = vmatprep.subr.mxu0 0.0
      %3570 = vmatpush1.msra.mxu0 0.0
      %3571 = vmatprep.subr.mxu0 0.0
      %3572 = vmatpush1.msra.mxu0 0.0
      %3573 = vmatprep.subr.mxu0 0.0
      %3574 = vmatpush1.msra.mxu0 0.0
      %3575 = vmatprep.subr.mxu0 0.0
      %3576 = vmatpush1.msra.mxu0 0.0
      %3577 = vmatprep.subr.mxu0 0.0
      %3578 = vmatpush1.msra.mxu0 0.0
      %3579 = vmatprep.subr.mxu0 0.0
      %3580 = vmatpush1.msra.mxu0 0.0
      %3581 = vmatprep.subr.mxu0 0.0
      %3582 = vmatpush1.msra.mxu0 0.0
      %3583 = vmatprep.subr.mxu0 0.0
      %3584 = vmatpush1.msra.mxu0 0.0
      %3585 = vmatprep.subr.mxu0 0.0
      %3586 = vmatpush1.msra.mxu0 0.0
      %3587 = vmatprep.subr.mxu0 0.0
      %3588 = vmatpush1.msra.mxu0 0.0
      %3589 = vmatprep.subr.mxu0 0.0
      %3590 = vmatpush1.msra.mxu0 0.0
      %3591 = vmatprep.subr.mxu0 0.0
      %3592 = vmatpush1.msra.mxu0 0.0
      %3593 = vmatprep.subr.mxu0 0.0
      %3594 = vmatpush1.msra.mxu0 0.0
      %3595 = vmatprep.subr.mxu0 0.0
      %3596 = vmatpush1.msra.mxu0 0.0
      %3597 = vmatprep.subr.mxu0 0.0
      %3598 = vmatpush1.msra.mxu0 0.0
      %3599 = vmatprep.subr.mxu0 0.0
      %3600 = vmatpush1.msra.mxu0 0.0
      %3601 = vmatprep.subr.mxu0 0.0
      %3602 = vmatpush1.msra.mxu0 0.0
      %3603 = vmatprep.subr.mxu0 0.0
      %3604 = vmatpush1.msra.mxu0 0.0
      %3605 = vmatprep.subr.mxu0 0.0
      %3606 = vmatpush1.msra.mxu0 0.0
      %3607 = vmatprep.subr.mxu0 0.0
      %3608 = vmatpush1.msra.mxu0 0.0
      %3609 = vmatprep.subr.mxu0 0.0
      %3610 = vmatpush1.msra.mxu0 0.0
      %3611 = vmatprep.subr.mxu0 0.0
      %3612 = vmatpush1.msra.mxu0 0.0
      %3613 = vmatprep.subr.mxu0 0.0
      %3614 = vmatpush1.msra.mxu0 0.0
      %3615 = vmatprep.subr.mxu0 0.0
      %3616 = vmatpush1.msra.mxu0 0.0
      %3617 = vmatprep.subr.mxu0 0.0
      %3618 = vmatpush1.msra.mxu0 0.0
      %3619 = vmatprep.subr.mxu0 0.0
      %3620 = vmatpush1.msra.mxu0 0.0
      %3621 = vmatprep.subr.mxu0 0.0
      %3622 = vmatpush1.msra.mxu0 0.0
      %3623 = vmatprep.subr.mxu0 0.0
      %3624 = vmatpush1.msra.mxu0 0.0
      %3625 = vmatprep.subr.mxu0 0.0
      %3626 = vmatpush1.msra.mxu0 0.0
      %3627 = vmatprep.subr.mxu0 0.0
      %3628 = vmatpush1.msra.mxu0 0.0
      %3629 = vmatprep.mubr.f32.mxu0 0.0
      %3630 = vmatmul.mubr.f32.gmra.mrb[0].mxu0 %v3560
      %v3631 = vpop.f32.mrb[0].mxu0
      %v3632 = vadd.f32 0.0, %v3631
      %v3633 = vpop.f32.mrb[0].mxu0
      %3634 = vmatprep.mubr.f32.mxu0 0.0
      %3635 = vmatmul.mubr.f32.gmra.mrb[0].mxu0 %v3563
      %v3636 = vpop.f32.mrb[0].mxu0
      %v3637 = vadd.f32 0.0, %v3636
      %v3638 = vpop.f32.mrb[0].mxu0
      %3639 = vdwg.mxu0
      %v3640 = vadd.f32 %v3481, %v3632
      %v3641 = vadd.f32 %v3482, %v3637
      %s3642 = scalar_lea.vmem %s5, 192
      %v3643 = vld [vmem:[%s3642] sm:$0xf]
      %v3644 = vld [vmem:[%s3642 + $0x4] sm:$0xf]
      %v3645 = vld [vmem:[%s3642 + $0x8] sm:$0xf]
      %v3646 = vld [vmem:[%s3642 + $0xc] sm:$0xf]
      %v3647 = vld [vmem:[%s3642 + $0x10] sm:$0xf]
      %v3648 = vld [vmem:[%s3642 + $0x14] sm:$0xf]
      %v3649 = vld [vmem:[%s3642 + $0x18] sm:$0xf]
      %v3650 = vld [vmem:[%s3642 + $0x1c] sm:$0xf]
      %v3659 = vunpack.c.l.b16 %v3643
      %v3660 = vunpack.c.l.b16 %v3644
      %v3661 = vunpack.c.l.b16 %v3645
      %v3662 = vunpack.c.l.b16 %v3646
      %v3663 = vunpack.c.l.b16 %v3647
      %v3664 = vunpack.c.l.b16 %v3648
      %v3665 = vunpack.c.l.b16 %v3649
      %v3666 = vunpack.c.l.b16 %v3650
      %v3667 = vpack.c.b16 %v3660, %v3659
      %v3668 = vpack.c.b16 %v3662, %v3661
      %v3669 = vpack.c.b16 %v3664, %v3663
      %v3670 = vpack.c.b16 %v3666, %v3665
      %3675 = vmatprep.subr.bf16.mxu0 0
      %3676 = vmatpush1.bf16.msra.mxu0 %v3667
      %3677 = vmatprep.subr.bf16.mxu0 0
      %3678 = vmatpush1.bf16.msra.mxu0 %v3668
      %3679 = vmatprep.subr.bf16.mxu0 0
      %3680 = vmatpush1.bf16.msra.mxu0 %v3669
      %3681 = vmatprep.subr.bf16.mxu0 0
      %3682 = vmatpush1.bf16.msra.mxu0 %v3670
      %3683 = vmatprep.subr.bf16.mxu0 0
      %3684 = vmatpush1.bf16.msra.mxu0 0
      %3685 = vmatprep.subr.bf16.mxu0 0
      %3686 = vmatpush1.bf16.msra.mxu0 0
      %3687 = vmatprep.subr.bf16.mxu0 0
      %3688 = vmatpush1.bf16.msra.mxu0 0
      %3689 = vmatprep.subr.bf16.mxu0 0
      %3690 = vmatpush1.bf16.msra.mxu0 0
      %3691 = vmatprep.subr.bf16.mxu0 0
      %3692 = vmatpush1.bf16.msra.mxu0 0
      %3693 = vmatprep.subr.bf16.mxu0 0
      %3694 = vmatpush1.bf16.msra.mxu0 0
      %3695 = vmatprep.subr.bf16.mxu0 0
      %3696 = vmatpush1.bf16.msra.mxu0 0
      %3697 = vmatprep.subr.bf16.mxu0 0
      %3698 = vmatpush1.bf16.msra.mxu0 0
      %3699 = vmatprep.subr.bf16.mxu0 0
      %3700 = vmatpush1.bf16.msra.mxu0 0
      %3701 = vmatprep.subr.bf16.mxu0 0
      %3702 = vmatpush1.bf16.msra.mxu0 0
      %3703 = vmatprep.subr.bf16.mxu0 0
      %3704 = vmatpush1.bf16.msra.mxu0 0
      %3705 = vmatprep.subr.bf16.mxu0 0
      %3706 = vmatpush1.bf16.msra.mxu0 0
      %3707 = vmatprep.mubr.bf16.mxu0 0
      %3708 = vmatmul.mubr.bf16.gmra.mrb[0].mxu0 %v2723
      %v3709 = vpop.f32.mrb[0].mxu0
      %v3710 = vadd.f32 0.0, %v3709
      %v3711 = vpop.f32.mrb[0].mxu0
      %v3712 = vpop.f32.mrb[0].mxu0
      %v3713 = vpop.f32.mrb[0].mxu0
      %3714 = vdwg.mxu0
      %s3715 = scalar_lea.vmem %s4, 96
      %v3716 = vld [vmem:[%s3715] sm:$0xff]
      %v3717 = vld [vmem:[%s3715 + $0x8] sm:$0xff]
      %v3719 = vsel %vm2843, %v3716, 0
      %v3722 = vsel %vm2843, %v3717, 0
      %3724 = vmatprep.subr.mxu0 0.0
      %3725 = vmatpush1.msra.mxu0 %v3710
      %3726 = vmatprep.subr.mxu0 0.0
      %3727 = vmatpush1.msra.mxu0 0.0
      %3728 = vmatprep.subr.mxu0 0.0
      %3729 = vmatpush1.msra.mxu0 0.0
      %3730 = vmatprep.subr.mxu0 0.0
      %3731 = vmatpush1.msra.mxu0 0.0
      %3732 = vmatprep.subr.mxu0 0.0
      %3733 = vmatpush1.msra.mxu0 0.0
      %3734 = vmatprep.subr.mxu0 0.0
      %3735 = vmatpush1.msra.mxu0 0.0
      %3736 = vmatprep.subr.mxu0 0.0
      %3737 = vmatpush1.msra.mxu0 0.0
      %3738 = vmatprep.subr.mxu0 0.0
      %3739 = vmatpush1.msra.mxu0 0.0
      %3740 = vmatprep.subr.mxu0 0.0
      %3741 = vmatpush1.msra.mxu0 0.0
      %3742 = vmatprep.subr.mxu0 0.0
      %3743 = vmatpush1.msra.mxu0 0.0
      %3744 = vmatprep.subr.mxu0 0.0
      %3745 = vmatpush1.msra.mxu0 0.0
      %3746 = vmatprep.subr.mxu0 0.0
      %3747 = vmatpush1.msra.mxu0 0.0
      %3748 = vmatprep.subr.mxu0 0.0
      %3749 = vmatpush1.msra.mxu0 0.0
      %3750 = vmatprep.subr.mxu0 0.0
      %3751 = vmatpush1.msra.mxu0 0.0
      %3752 = vmatprep.subr.mxu0 0.0
      %3753 = vmatpush1.msra.mxu0 0.0
      %3754 = vmatprep.subr.mxu0 0.0
      %3755 = vmatpush1.msra.mxu0 0.0
      %3756 = vmatprep.subr.mxu0 0.0
      %3757 = vmatpush1.msra.mxu0 0.0
      %3758 = vmatprep.subr.mxu0 0.0
      %3759 = vmatpush1.msra.mxu0 0.0
      %3760 = vmatprep.subr.mxu0 0.0
      %3761 = vmatpush1.msra.mxu0 0.0
      %3762 = vmatprep.subr.mxu0 0.0
      %3763 = vmatpush1.msra.mxu0 0.0
      %3764 = vmatprep.subr.mxu0 0.0
      %3765 = vmatpush1.msra.mxu0 0.0
      %3766 = vmatprep.subr.mxu0 0.0
      %3767 = vmatpush1.msra.mxu0 0.0
      %3768 = vmatprep.subr.mxu0 0.0
      %3769 = vmatpush1.msra.mxu0 0.0
      %3770 = vmatprep.subr.mxu0 0.0
      %3771 = vmatpush1.msra.mxu0 0.0
      %3772 = vmatprep.subr.mxu0 0.0
      %3773 = vmatpush1.msra.mxu0 0.0
      %3774 = vmatprep.subr.mxu0 0.0
      %3775 = vmatpush1.msra.mxu0 0.0
      %3776 = vmatprep.subr.mxu0 0.0
      %3777 = vmatpush1.msra.mxu0 0.0
      %3778 = vmatprep.subr.mxu0 0.0
      %3779 = vmatpush1.msra.mxu0 0.0
      %3780 = vmatprep.subr.mxu0 0.0
      %3781 = vmatpush1.msra.mxu0 0.0
      %3782 = vmatprep.subr.mxu0 0.0
      %3783 = vmatpush1.msra.mxu0 0.0
      %3784 = vmatprep.subr.mxu0 0.0
      %3785 = vmatpush1.msra.mxu0 0.0
      %3786 = vmatprep.subr.mxu0 0.0
      %3787 = vmatpush1.msra.mxu0 0.0
      %3788 = vmatprep.mubr.f32.mxu0 0.0
      %3789 = vmatmul.mubr.f32.gmra.mrb[0].mxu0 %v3719
      %v3790 = vpop.f32.mrb[0].mxu0
      %v3791 = vadd.f32 0.0, %v3790
      %v3792 = vpop.f32.mrb[0].mxu0
      %3793 = vmatprep.mubr.f32.mxu0 0.0
      %3794 = vmatmul.mubr.f32.gmra.mrb[0].mxu0 %v3722
      %v3795 = vpop.f32.mrb[0].mxu0
      %v3796 = vadd.f32 0.0, %v3795
      %v3797 = vpop.f32.mrb[0].mxu0
      %3798 = vdwg.mxu0
      %v3799 = vadd.f32 %v3640, %v3791
      %v3800 = vadd.f32 %v3641, %v3796
      %s3801 = scalar_lea.vmem %s5, 224
      %v3802 = vld [vmem:[%s3801] sm:$0xf]
      %v3803 = vld [vmem:[%s3801 + $0x4] sm:$0xf]
      %v3804 = vld [vmem:[%s3801 + $0x8] sm:$0xf]
      %v3805 = vld [vmem:[%s3801 + $0xc] sm:$0xf]
      %v3806 = vld [vmem:[%s3801 + $0x10] sm:$0xf]
      %v3807 = vld [vmem:[%s3801 + $0x14] sm:$0xf]
      %v3808 = vld [vmem:[%s3801 + $0x18] sm:$0xf]
      %v3809 = vld [vmem:[%s3801 + $0x1c] sm:$0xf]
      %v3818 = vunpack.c.l.b16 %v3802
      %v3819 = vunpack.c.l.b16 %v3803
      %v3820 = vunpack.c.l.b16 %v3804
      %v3821 = vunpack.c.l.b16 %v3805
      %v3822 = vunpack.c.l.b16 %v3806
      %v3823 = vunpack.c.l.b16 %v3807
      %v3824 = vunpack.c.l.b16 %v3808
      %v3825 = vunpack.c.l.b16 %v3809
      %v3826 = vpack.c.b16 %v3819, %v3818
      %v3827 = vpack.c.b16 %v3821, %v3820
      %v3828 = vpack.c.b16 %v3823, %v3822
      %v3829 = vpack.c.b16 %v3825, %v3824
      %3834 = vmatprep.subr.bf16.mxu0 0
      %3835 = vmatpush1.bf16.msra.mxu0 %v3826
      %3836 = vmatprep.subr.bf16.mxu0 0
      %3837 = vmatpush1.bf16.msra.mxu0 %v3827
      %3838 = vmatprep.subr.bf16.mxu0 0
      %3839 = vmatpush1.bf16.msra.mxu0 %v3828
      %3840 = vmatprep.subr.bf16.mxu0 0
      %3841 = vmatpush1.bf16.msra.mxu0 %v3829
      %3842 = vmatprep.subr.bf16.mxu0 0
      %3843 = vmatpush1.bf16.msra.mxu0 0
      %3844 = vmatprep.subr.bf16.mxu0 0
      %3845 = vmatpush1.bf16.msra.mxu0 0
      %3846 = vmatprep.subr.bf16.mxu0 0
      %3847 = vmatpush1.bf16.msra.mxu0 0
      %3848 = vmatprep.subr.bf16.mxu0 0
      %3849 = vmatpush1.bf16.msra.mxu0 0
      %3850 = vmatprep.subr.bf16.mxu0 0
      %3851 = vmatpush1.bf16.msra.mxu0 0
      %3852 = vmatprep.subr.bf16.mxu0 0
      %3853 = vmatpush1.bf16.msra.mxu0 0
      %3854 = vmatprep.subr.bf16.mxu0 0
      %3855 = vmatpush1.bf16.msra.mxu0 0
      %3856 = vmatprep.subr.bf16.mxu0 0
      %3857 = vmatpush1.bf16.msra.mxu0 0
      %3858 = vmatprep.subr.bf16.mxu0 0
      %3859 = vmatpush1.bf16.msra.mxu0 0
      %3860 = vmatprep.subr.bf16.mxu0 0
      %3861 = vmatpush1.bf16.msra.mxu0 0
      %3862 = vmatprep.subr.bf16.mxu0 0
      %3863 = vmatpush1.bf16.msra.mxu0 0
      %3864 = vmatprep.subr.bf16.mxu0 0
      %3865 = vmatpush1.bf16.msra.mxu0 0
      %3866 = vmatprep.mubr.bf16.mxu0 0
      %3867 = vmatmul.mubr.bf16.gmra.mrb[0].mxu0 %v2723
      %v3868 = vpop.f32.mrb[0].mxu0
      %v3869 = vadd.f32 0.0, %v3868
      %v3870 = vpop.f32.mrb[0].mxu0
      %v3871 = vpop.f32.mrb[0].mxu0
      %v3872 = vpop.f32.mrb[0].mxu0
      %3873 = vdwg.mxu0
      %s3874 = scalar_lea.vmem %s4, 112
      %v3875 = vld [vmem:[%s3874] sm:$0xff]
      %v3876 = vld [vmem:[%s3874 + $0x8] sm:$0xff]
      %v3878 = vsel %vm2843, %v3875, 0
      %v3881 = vsel %vm2843, %v3876, 0
      %3883 = vmatprep.subr.mxu0 0.0
      %3884 = vmatpush1.msra.mxu0 %v3869
      %3885 = vmatprep.subr.mxu0 0.0
      %3886 = vmatpush1.msra.mxu0 0.0
      %3887 = vmatprep.subr.mxu0 0.0
      %3888 = vmatpush1.msra.mxu0 0.0
      %3889 = vmatprep.subr.mxu0 0.0
      %3890 = vmatpush1.msra.mxu0 0.0
      %3891 = vmatprep.subr.mxu0 0.0
      %3892 = vmatpush1.msra.mxu0 0.0
      %3893 = vmatprep.subr.mxu0 0.0
      %3894 = vmatpush1.msra.mxu0 0.0
      %3895 = vmatprep.subr.mxu0 0.0
      %3896 = vmatpush1.msra.mxu0 0.0
      %3897 = vmatprep.subr.mxu0 0.0
      %3898 = vmatpush1.msra.mxu0 0.0
      %3899 = vmatprep.subr.mxu0 0.0
      %3900 = vmatpush1.msra.mxu0 0.0
      %3901 = vmatprep.subr.mxu0 0.0
      %3902 = vmatpush1.msra.mxu0 0.0
      %3903 = vmatprep.subr.mxu0 0.0
      %3904 = vmatpush1.msra.mxu0 0.0
      %3905 = vmatprep.subr.mxu0 0.0
      %3906 = vmatpush1.msra.mxu0 0.0
      %3907 = vmatprep.subr.mxu0 0.0
      %3908 = vmatpush1.msra.mxu0 0.0
      %3909 = vmatprep.subr.mxu0 0.0
      %3910 = vmatpush1.msra.mxu0 0.0
      %3911 = vmatprep.subr.mxu0 0.0
      %3912 = vmatpush1.msra.mxu0 0.0
      %3913 = vmatprep.subr.mxu0 0.0
      %3914 = vmatpush1.msra.mxu0 0.0
      %3915 = vmatprep.subr.mxu0 0.0
      %3916 = vmatpush1.msra.mxu0 0.0
      %3917 = vmatprep.subr.mxu0 0.0
      %3918 = vmatpush1.msra.mxu0 0.0
      %3919 = vmatprep.subr.mxu0 0.0
      %3920 = vmatpush1.msra.mxu0 0.0
      %3921 = vmatprep.subr.mxu0 0.0
      %3922 = vmatpush1.msra.mxu0 0.0
      %3923 = vmatprep.subr.mxu0 0.0
      %3924 = vmatpush1.msra.mxu0 0.0
      %3925 = vmatprep.subr.mxu0 0.0
      %3926 = vmatpush1.msra.mxu0 0.0
      %3927 = vmatprep.subr.mxu0 0.0
      %3928 = vmatpush1.msra.mxu0 0.0
      %3929 = vmatprep.subr.mxu0 0.0
      %3930 = vmatpush1.msra.mxu0 0.0
      %3931 = vmatprep.subr.mxu0 0.0
      %3932 = vmatpush1.msra.mxu0 0.0
      %3933 = vmatprep.subr.mxu0 0.0
      %3934 = vmatpush1.msra.mxu0 0.0
      %3935 = vmatprep.subr.mxu0 0.0
      %3936 = vmatpush1.msra.mxu0 0.0
      %3937 = vmatprep.subr.mxu0 0.0
      %3938 = vmatpush1.msra.mxu0 0.0
      %3939 = vmatprep.subr.mxu0 0.0
      %3940 = vmatpush1.msra.mxu0 0.0
      %3941 = vmatprep.subr.mxu0 0.0
      %3942 = vmatpush1.msra.mxu0 0.0
      %3943 = vmatprep.subr.mxu0 0.0
      %3944 = vmatpush1.msra.mxu0 0.0
      %3945 = vmatprep.subr.mxu0 0.0
      %3946 = vmatpush1.msra.mxu0 0.0
      %3947 = vmatprep.mubr.f32.mxu0 0.0
      %3948 = vmatmul.mubr.f32.gmra.mrb[0].mxu0 %v3878
      %v3949 = vpop.f32.mrb[0].mxu0
      %v3950 = vadd.f32 0.0, %v3949
      %v3951 = vpop.f32.mrb[0].mxu0
      %3952 = vmatprep.mubr.f32.mxu0 0.0
      %3953 = vmatmul.mubr.f32.gmra.mrb[0].mxu0 %v3881
      %v3954 = vpop.f32.mrb[0].mxu0
      %v3955 = vadd.f32 0.0, %v3954
      %v3956 = vpop.f32.mrb[0].mxu0
      %3957 = vdwg.mxu0
      %v3958 = vadd.f32 %v3799, %v3950
      %v3959 = vadd.f32 %v3800, %v3955
      %s3960 = scalar_lea.vmem %s5, 256
      %v3961 = vld [vmem:[%s3960] sm:$0xf]
      %v3962 = vld [vmem:[%s3960 + $0x4] sm:$0xf]
      %v3963 = vld [vmem:[%s3960 + $0x8] sm:$0xf]
      %v3964 = vld [vmem:[%s3960 + $0xc] sm:$0xf]
      %v3965 = vld [vmem:[%s3960 + $0x10] sm:$0xf]
      %v3966 = vld [vmem:[%s3960 + $0x14] sm:$0xf]
      %v3967 = vld [vmem:[%s3960 + $0x18] sm:$0xf]
      %v3968 = vld [vmem:[%s3960 + $0x1c] sm:$0xf]
      %v3977 = vunpack.c.l.b16 %v3961
      %v3978 = vunpack.c.l.b16 %v3962
      %v3979 = vunpack.c.l.b16 %v3963
      %v3980 = vunpack.c.l.b16 %v3964
      %v3981 = vunpack.c.l.b16 %v3965
      %v3982 = vunpack.c.l.b16 %v3966
      %v3983 = vunpack.c.l.b16 %v3967
      %v3984 = vunpack.c.l.b16 %v3968
      %v3985 = vpack.c.b16 %v3978, %v3977
      %v3986 = vpack.c.b16 %v3980, %v3979
      %v3987 = vpack.c.b16 %v3982, %v3981
      %v3988 = vpack.c.b16 %v3984, %v3983
      %3993 = vmatprep.subr.bf16.mxu0 0
      %3994 = vmatpush1.bf16.msra.mxu0 %v3985
      %3995 = vmatprep.subr.bf16.mxu0 0
      %3996 = vmatpush1.bf16.msra.mxu0 %v3986
      %3997 = vmatprep.subr.bf16.mxu0 0
      %3998 = vmatpush1.bf16.msra.mxu0 %v3987
      %3999 = vmatprep.subr.bf16.mxu0 0
      %4000 = vmatpush1.bf16.msra.mxu0 %v3988
      %4001 = vmatprep.subr.bf16.mxu0 0
      %4002 = vmatpush1.bf16.msra.mxu0 0
      %4003 = vmatprep.subr.bf16.mxu0 0
      %4004 = vmatpush1.bf16.msra.mxu0 0
      %4005 = vmatprep.subr.bf16.mxu0 0
      %4006 = vmatpush1.bf16.msra.mxu0 0
      %4007 = vmatprep.subr.bf16.mxu0 0
      %4008 = vmatpush1.bf16.msra.mxu0 0
      %4009 = vmatprep.subr.bf16.mxu0 0
      %4010 = vmatpush1.bf16.msra.mxu0 0
      %4011 = vmatprep.subr.bf16.mxu0 0
      %4012 = vmatpush1.bf16.msra.mxu0 0
      %4013 = vmatprep.subr.bf16.mxu0 0
      %4014 = vmatpush1.bf16.msra.mxu0 0
      %4015 = vmatprep.subr.bf16.mxu0 0
      %4016 = vmatpush1.bf16.msra.mxu0 0
      %4017 = vmatprep.subr.bf16.mxu0 0
      %4018 = vmatpush1.bf16.msra.mxu0 0
      %4019 = vmatprep.subr.bf16.mxu0 0
      %4020 = vmatpush1.bf16.msra.mxu0 0
      %4021 = vmatprep.subr.bf16.mxu0 0
      %4022 = vmatpush1.bf16.msra.mxu0 0
      %4023 = vmatprep.subr.bf16.mxu0 0
      %4024 = vmatpush1.bf16.msra.mxu0 0
      %4025 = vmatprep.mubr.bf16.mxu0 0
      %4026 = vmatmul.mubr.bf16.gmra.mrb[0].mxu0 %v2723
      %v4027 = vpop.f32.mrb[0].mxu0
      %v4028 = vadd.f32 0.0, %v4027
      %v4029 = vpop.f32.mrb[0].mxu0
      %v4030 = vpop.f32.mrb[0].mxu0
      %v4031 = vpop.f32.mrb[0].mxu0
      %4032 = vdwg.mxu0
      %s4033 = scalar_lea.vmem %s4, 128
      %v4034 = vld [vmem:[%s4033] sm:$0xff]
      %v4035 = vld [vmem:[%s4033 + $0x8] sm:$0xff]
      %v4037 = vsel %vm2843, %v4034, 0
      %v4040 = vsel %vm2843, %v4035, 0
      %4042 = vmatprep.subr.mxu0 0.0
      %4043 = vmatpush1.msra.mxu0 %v4028
      %4044 = vmatprep.subr.mxu0 0.0
      %4045 = vmatpush1.msra.mxu0 0.0
      %4046 = vmatprep.subr.mxu0 0.0
      %4047 = vmatpush1.msra.mxu0 0.0
      %4048 = vmatprep.subr.mxu0 0.0
      %4049 = vmatpush1.msra.mxu0 0.0
      %4050 = vmatprep.subr.mxu0 0.0
      %4051 = vmatpush1.msra.mxu0 0.0
      %4052 = vmatprep.subr.mxu0 0.0
      %4053 = vmatpush1.msra.mxu0 0.0
      %4054 = vmatprep.subr.mxu0 0.0
      %4055 = vmatpush1.msra.mxu0 0.0
      %4056 = vmatprep.subr.mxu0 0.0
      %4057 = vmatpush1.msra.mxu0 0.0
      %4058 = vmatprep.subr.mxu0 0.0
      %4059 = vmatpush1.msra.mxu0 0.0
      %4060 = vmatprep.subr.mxu0 0.0
      %4061 = vmatpush1.msra.mxu0 0.0
      %4062 = vmatprep.subr.mxu0 0.0
      %4063 = vmatpush1.msra.mxu0 0.0
      %4064 = vmatprep.subr.mxu0 0.0
      %4065 = vmatpush1.msra.mxu0 0.0
      %4066 = vmatprep.subr.mxu0 0.0
      %4067 = vmatpush1.msra.mxu0 0.0
      %4068 = vmatprep.subr.mxu0 0.0
      %4069 = vmatpush1.msra.mxu0 0.0
      %4070 = vmatprep.subr.mxu0 0.0
      %4071 = vmatpush1.msra.mxu0 0.0
      %4072 = vmatprep.subr.mxu0 0.0
      %4073 = vmatpush1.msra.mxu0 0.0
      %4074 = vmatprep.subr.mxu0 0.0
      %4075 = vmatpush1.msra.mxu0 0.0
      %4076 = vmatprep.subr.mxu0 0.0
      %4077 = vmatpush1.msra.mxu0 0.0
      %4078 = vmatprep.subr.mxu0 0.0
      %4079 = vmatpush1.msra.mxu0 0.0
      %4080 = vmatprep.subr.mxu0 0.0
      %4081 = vmatpush1.msra.mxu0 0.0
      %4082 = vmatprep.subr.mxu0 0.0
      %4083 = vmatpush1.msra.mxu0 0.0
      %4084 = vmatprep.subr.mxu0 0.0
      %4085 = vmatpush1.msra.mxu0 0.0
      %4086 = vmatprep.subr.mxu0 0.0
      %4087 = vmatpush1.msra.mxu0 0.0
      %4088 = vmatprep.subr.mxu0 0.0
      %4089 = vmatpush1.msra.mxu0 0.0
      %4090 = vmatprep.subr.mxu0 0.0
      %4091 = vmatpush1.msra.mxu0 0.0
      %4092 = vmatprep.subr.mxu0 0.0
      %4093 = vmatpush1.msra.mxu0 0.0
      %4094 = vmatprep.subr.mxu0 0.0
      %4095 = vmatpush1.msra.mxu0 0.0
      %4096 = vmatprep.subr.mxu0 0.0
      %4097 = vmatpush1.msra.mxu0 0.0
      %4098 = vmatprep.subr.mxu0 0.0
      %4099 = vmatpush1.msra.mxu0 0.0
      %4100 = vmatprep.subr.mxu0 0.0
      %4101 = vmatpush1.msra.mxu0 0.0
      %4102 = vmatprep.subr.mxu0 0.0
      %4103 = vmatpush1.msra.mxu0 0.0
      %4104 = vmatprep.subr.mxu0 0.0
      %4105 = vmatpush1.msra.mxu0 0.0
      %4106 = vmatprep.mubr.f32.mxu0 0.0
      %4107 = vmatmul.mubr.f32.gmra.mrb[0].mxu0 %v4037
      %v4108 = vpop.f32.mrb[0].mxu0
      %v4109 = vadd.f32 0.0, %v4108
      %v4110 = vpop.f32.mrb[0].mxu0
      %4111 = vmatprep.mubr.f32.mxu0 0.0
      %4112 = vmatmul.mubr.f32.gmra.mrb[0].mxu0 %v4040
      %v4113 = vpop.f32.mrb[0].mxu0
      %v4114 = vadd.f32 0.0, %v4113
      %v4115 = vpop.f32.mrb[0].mxu0
      %4116 = vdwg.mxu0
      %v4117 = vadd.f32 %v3958, %v4109
      %v4118 = vadd.f32 %v3959, %v4114
      %v4119 = vld [vmem:[%s6] sm:$0xff]
      %v4120 = vld [vmem:[%s6 + $0x8] sm:$0xff]
      %4122 = vset.pattern.permute.xlu0 0
      %4123 = vperm.xlu0 %4122, %v4119
      %v4124 = vpop.permute.xlu0 %4123
      %4127 = vset.pattern.permute.xlu0 0
      %4128 = vperm.xlu0 %4127, %v4120
      %v4129 = vpop.permute.xlu0 %4128
      %v4131 = vadd.f32 %v4117, %v4124
      %v4132 = vadd.f32 %v4118, %v4129
      %vm4133 = vcmp.gt.f32.partialorder %v4131, 0.0
      %vm4134 = vcmp.gt.f32.partialorder %v4132, 0.0
      %v4135 = vmul.f32 %v4131, 0.2
      %v4136 = vmul.f32 %v4132, 0.2
      %v4137 = vsel %vm4133, %v4131, %v4135
      %v4138 = vsel %vm4134, %v4132, %v4136
      %v4139 = vpack.c.bf16 %v4138, %v4137
      %v4140 = vld [vmem:[%s8] sm:$0xf]
      %v4141 = vld [vmem:[%s8 + $0x4] sm:$0xf]
      %v4144 = vunpack.c.l.b16 %v4140
      %v4145 = vunpack.c.l.b16 %v4141
      %v4146 = vpack.c.b16 %v4145, %v4144
      %vm4148 = vcmask 130048
      %v4150 = vsel %vm4148, %v4139, 0
      %4152 = vmatprep.subr.bf16.mxu0 0
      %4153 = vmatpush1.bf16.msra.mxu0 %v4146
      %4154 = vmatprep.subr.bf16.mxu0 0
      %4155 = vmatpush1.bf16.msra.mxu0 0
      %4156 = vmatprep.subr.bf16.mxu0 0
      %4157 = vmatpush1.bf16.msra.mxu0 0
      %4158 = vmatprep.subr.bf16.mxu0 0
      %4159 = vmatpush1.bf16.msra.mxu0 0
      %4160 = vmatprep.subr.bf16.mxu0 0
      %4161 = vmatpush1.bf16.msra.mxu0 0
      %4162 = vmatprep.subr.bf16.mxu0 0
      %4163 = vmatpush1.bf16.msra.mxu0 0
      %4164 = vmatprep.subr.bf16.mxu0 0
      %4165 = vmatpush1.bf16.msra.mxu0 0
      %4166 = vmatprep.subr.bf16.mxu0 0
      %4167 = vmatpush1.bf16.msra.mxu0 0
      %4168 = vmatprep.subr.bf16.mxu0 0
      %4169 = vmatpush1.bf16.msra.mxu0 0
      %4170 = vmatprep.subr.bf16.mxu0 0
      %4171 = vmatpush1.bf16.msra.mxu0 0
      %4172 = vmatprep.subr.bf16.mxu0 0
      %4173 = vmatpush1.bf16.msra.mxu0 0
      %4174 = vmatprep.subr.bf16.mxu0 0
      %4175 = vmatpush1.bf16.msra.mxu0 0
      %4176 = vmatprep.subr.bf16.mxu0 0
      %4177 = vmatpush1.bf16.msra.mxu0 0
      %4178 = vmatprep.subr.bf16.mxu0 0
      %4179 = vmatpush1.bf16.msra.mxu0 0
      %4180 = vmatprep.subr.bf16.mxu0 0
      %4181 = vmatpush1.bf16.msra.mxu0 0
      %4182 = vmatprep.subr.bf16.mxu0 0
      %4183 = vmatpush1.bf16.msra.mxu0 0
      %4184 = vmatprep.mubr.bf16.mxu0 0
      %4185 = vmatmul.mubr.bf16.gmra.mrb[0].mxu0 %v4150
      %v4186 = vpop.f32.mrb[0].mxu0
      %v4187 = vadd.f32 0.0, %v4186
      %v4188 = vpop.f32.mrb[0].mxu0
      %v4189 = vpop.f32.mrb[0].mxu0
      %v4190 = vadd.f32 0.0, %v4189
      %v4191 = vpop.f32.mrb[0].mxu0
      %4192 = vdwg.mxu0
      %v4193 = vld [vmem:[%s7] sm:$0xff]
      %s4194 = scalar_lea.vmem %s8, 8
      %v4195 = vld [vmem:[%s4194] sm:$0xf]
      %v4196 = vld [vmem:[%s4194 + $0x4] sm:$0xf]
      %v4199 = vunpack.c.l.b16 %v4195
      %v4200 = vunpack.c.l.b16 %v4196
      %v4201 = vpack.c.b16 %v4200, %v4199
      %4203 = vmatprep.subr.bf16.mxu0 0
      %4204 = vmatpush1.bf16.msra.mxu0 %v4201
      %4205 = vmatprep.subr.bf16.mxu0 0
      %4206 = vmatpush1.bf16.msra.mxu0 0
      %4207 = vmatprep.subr.bf16.mxu0 0
      %4208 = vmatpush1.bf16.msra.mxu0 0
      %4209 = vmatprep.subr.bf16.mxu0 0
      %4210 = vmatpush1.bf16.msra.mxu0 0
      %4211 = vmatprep.subr.bf16.mxu0 0
      %4212 = vmatpush1.bf16.msra.mxu0 0
      %4213 = vmatprep.subr.bf16.mxu0 0
      %4214 = vmatpush1.bf16.msra.mxu0 0
      %4215 = vmatprep.subr.bf16.mxu0 0
      %4216 = vmatpush1.bf16.msra.mxu0 0
      %4217 = vmatprep.subr.bf16.mxu0 0
      %4218 = vmatpush1.bf16.msra.mxu0 0
      %4219 = vmatprep.subr.bf16.mxu0 0
      %4220 = vmatpush1.bf16.msra.mxu0 0
      %4221 = vmatprep.subr.bf16.mxu0 0
      %4222 = vmatpush1.bf16.msra.mxu0 0
      %4223 = vmatprep.subr.bf16.mxu0 0
      %4224 = vmatpush1.bf16.msra.mxu0 0
      %4225 = vmatprep.subr.bf16.mxu0 0
      %4226 = vmatpush1.bf16.msra.mxu0 0
      %4227 = vmatprep.subr.bf16.mxu0 0
      %4228 = vmatpush1.bf16.msra.mxu0 0
      %4229 = vmatprep.subr.bf16.mxu0 0
      %4230 = vmatpush1.bf16.msra.mxu0 0
      %4231 = vmatprep.subr.bf16.mxu0 0
      %4232 = vmatpush1.bf16.msra.mxu0 0
      %4233 = vmatprep.subr.bf16.mxu0 0
      %4234 = vmatpush1.bf16.msra.mxu0 0
      %4235 = vmatprep.mubr.bf16.mxu0 0
      %4236 = vmatmul.mubr.bf16.gmra.mrb[0].mxu0 %v4150
      %v4237 = vpop.f32.mrb[0].mxu0
      %v4238 = vadd.f32 0.0, %v4237
      %v4239 = vpop.f32.mrb[0].mxu0
      %v4240 = vpop.f32.mrb[0].mxu0
      %v4241 = vadd.f32 0.0, %v4240
      %v4242 = vpop.f32.mrb[0].mxu0
      %4243 = vdwg.mxu0
      %s4244 = scalar_lea.vmem %s7, 8
      %v4245 = vld [vmem:[%s4244] sm:$0xff]
      %v4247 = vsel %vm4148, %v4245, 0
      %4249 = vmatprep.subr.mxu0 0.0
      %4250 = vmatpush1.msra.mxu0 %v4238
      %4251 = vmatprep.subr.mxu0 0.0
      %4252 = vmatpush1.msra.mxu0 %v4241
      %4253 = vmatprep.subr.mxu0 0.0
      %4254 = vmatpush1.msra.mxu0 0.0
      %4255 = vmatprep.subr.mxu0 0.0
      %4256 = vmatpush1.msra.mxu0 0.0
      %4257 = vmatprep.subr.mxu0 0.0
      %4258 = vmatpush1.msra.mxu0 0.0
      %4259 = vmatprep.subr.mxu0 0.0
      %4260 = vmatpush1.msra.mxu0 0.0
      %4261 = vmatprep.subr.mxu0 0.0
      %4262 = vmatpush1.msra.mxu0 0.0
      %4263 = vmatprep.subr.mxu0 0.0
      %4264 = vmatpush1.msra.mxu0 0.0
      %4265 = vmatprep.subr.mxu0 0.0
      %4266 = vmatpush1.msra.mxu0 0.0
      %4267 = vmatprep.subr.mxu0 0.0
      %4268 = vmatpush1.msra.mxu0 0.0
      %4269 = vmatprep.subr.mxu0 0.0
      %4270 = vmatpush1.msra.mxu0 0.0
      %4271 = vmatprep.subr.mxu0 0.0
      %4272 = vmatpush1.msra.mxu0 0.0
      %4273 = vmatprep.subr.mxu0 0.0
      %4274 = vmatpush1.msra.mxu0 0.0
      %4275 = vmatprep.subr.mxu0 0.0
      %4276 = vmatpush1.msra.mxu0 0.0
      %4277 = vmatprep.subr.mxu0 0.0
      %4278 = vmatpush1.msra.mxu0 0.0
      %4279 = vmatprep.subr.mxu0 0.0
      %4280 = vmatpush1.msra.mxu0 0.0
      %4281 = vmatprep.subr.mxu0 0.0
      %4282 = vmatpush1.msra.mxu0 0.0
      %4283 = vmatprep.subr.mxu0 0.0
      %4284 = vmatpush1.msra.mxu0 0.0
      %4285 = vmatprep.subr.mxu0 0.0
      %4286 = vmatpush1.msra.mxu0 0.0
      %4287 = vmatprep.subr.mxu0 0.0
      %4288 = vmatpush1.msra.mxu0 0.0
      %4289 = vmatprep.subr.mxu0 0.0
      %4290 = vmatpush1.msra.mxu0 0.0
      %4291 = vmatprep.subr.mxu0 0.0
      %4292 = vmatpush1.msra.mxu0 0.0
      %4293 = vmatprep.subr.mxu0 0.0
      %4294 = vmatpush1.msra.mxu0 0.0
      %4295 = vmatprep.subr.mxu0 0.0
      %4296 = vmatpush1.msra.mxu0 0.0
      %4297 = vmatprep.subr.mxu0 0.0
      %4298 = vmatpush1.msra.mxu0 0.0
      %4299 = vmatprep.subr.mxu0 0.0
      %4300 = vmatpush1.msra.mxu0 0.0
      %4301 = vmatprep.subr.mxu0 0.0
      %4302 = vmatpush1.msra.mxu0 0.0
      %4303 = vmatprep.subr.mxu0 0.0
      %4304 = vmatpush1.msra.mxu0 0.0
      %4305 = vmatprep.subr.mxu0 0.0
      %4306 = vmatpush1.msra.mxu0 0.0
      %4307 = vmatprep.subr.mxu0 0.0
      %4308 = vmatpush1.msra.mxu0 0.0
      %4309 = vmatprep.subr.mxu0 0.0
      %4310 = vmatpush1.msra.mxu0 0.0
      %4311 = vmatprep.subr.mxu0 0.0
      %4312 = vmatpush1.msra.mxu0 0.0
      %4313 = vmatprep.mubr.f32.mxu0 0.0
      %4314 = vmatmul.mubr.f32.gmra.mrb[0].mxu0 %v4247
      %v4315 = vpop.f32.mrb[0].mxu0
      %v4316 = vadd.f32 0.0, %v4315
      %v4317 = vpop.f32.mrb[0].mxu0
      %4318 = vdwg.mxu0
      %v4320 = vsel %vm4148, %v4193, 0
      %4322 = vmatprep.subr.mxu0 0.0
      %4323 = vmatpush1.msra.mxu0 %v4187
      %4324 = vmatprep.subr.mxu0 0.0
      %4325 = vmatpush1.msra.mxu0 %v4190
      %4326 = vmatprep.subr.mxu0 0.0
      %4327 = vmatpush1.msra.mxu0 0.0
      %4328 = vmatprep.subr.mxu0 0.0
      %4329 = vmatpush1.msra.mxu0 0.0
      %4330 = vmatprep.subr.mxu0 0.0
      %4331 = vmatpush1.msra.mxu0 0.0
      %4332 = vmatprep.subr.mxu0 0.0
      %4333 = vmatpush1.msra.mxu0 0.0
      %4334 = vmatprep.subr.mxu0 0.0
      %4335 = vmatpush1.msra.mxu0 0.0
      %4336 = vmatprep.subr.mxu0 0.0
      %4337 = vmatpush1.msra.mxu0 0.0
      %4338 = vmatprep.subr.mxu0 0.0
      %4339 = vmatpush1.msra.mxu0 0.0
      %4340 = vmatprep.subr.mxu0 0.0
      %4341 = vmatpush1.msra.mxu0 0.0
      %4342 = vmatprep.subr.mxu0 0.0
      %4343 = vmatpush1.msra.mxu0 0.0
      %4344 = vmatprep.subr.mxu0 0.0
      %4345 = vmatpush1.msra.mxu0 0.0
      %4346 = vmatprep.subr.mxu0 0.0
      %4347 = vmatpush1.msra.mxu0 0.0
      %4348 = vmatprep.subr.mxu0 0.0
      %4349 = vmatpush1.msra.mxu0 0.0
      %4350 = vmatprep.subr.mxu0 0.0
      %4351 = vmatpush1.msra.mxu0 0.0
      %4352 = vmatprep.subr.mxu0 0.0
      %4353 = vmatpush1.msra.mxu0 0.0
      %4354 = vmatprep.subr.mxu0 0.0
      %4355 = vmatpush1.msra.mxu0 0.0
      %4356 = vmatprep.subr.mxu0 0.0
      %4357 = vmatpush1.msra.mxu0 0.0
      %4358 = vmatprep.subr.mxu0 0.0
      %4359 = vmatpush1.msra.mxu0 0.0
      %4360 = vmatprep.subr.mxu0 0.0
      %4361 = vmatpush1.msra.mxu0 0.0
      %4362 = vmatprep.subr.mxu0 0.0
      %4363 = vmatpush1.msra.mxu0 0.0
      %4364 = vmatprep.subr.mxu0 0.0
      %4365 = vmatpush1.msra.mxu0 0.0
      %4366 = vmatprep.subr.mxu0 0.0
      %4367 = vmatpush1.msra.mxu0 0.0
      %4368 = vmatprep.subr.mxu0 0.0
      %4369 = vmatpush1.msra.mxu0 0.0
      %4370 = vmatprep.subr.mxu0 0.0
      %4371 = vmatpush1.msra.mxu0 0.0
      %4372 = vmatprep.subr.mxu0 0.0
      %4373 = vmatpush1.msra.mxu0 0.0
      %4374 = vmatprep.subr.mxu0 0.0
      %4375 = vmatpush1.msra.mxu0 0.0
      %4376 = vmatprep.subr.mxu0 0.0
      %4377 = vmatpush1.msra.mxu0 0.0
      %4378 = vmatprep.subr.mxu0 0.0
      %4379 = vmatpush1.msra.mxu0 0.0
      %4380 = vmatprep.subr.mxu0 0.0
      %4381 = vmatpush1.msra.mxu0 0.0
      %4382 = vmatprep.subr.mxu0 0.0
      %4383 = vmatpush1.msra.mxu0 0.0
      %4384 = vmatprep.subr.mxu0 0.0
      %4385 = vmatpush1.msra.mxu0 0.0
      %4386 = vmatprep.mubr.f32.mxu0 0.0
      %4387 = vmatmul.mubr.f32.gmra.mrb[0].mxu0 %v4320
      %v4388 = vpop.f32.mrb[0].mxu0
      %v4389 = vadd.f32 %v4316, %v4388
      %v4390 = vpop.f32.mrb[0].mxu0
      %4391 = vdwg.mxu0
      %s4392 = scalar_lea.vmem %s8, 16
      %v4393 = vld [vmem:[%s4392] sm:$0xf]
      %v4394 = vld [vmem:[%s4392 + $0x4] sm:$0xf]
      %v4397 = vunpack.c.l.b16 %v4393
      %v4398 = vunpack.c.l.b16 %v4394
      %v4399 = vpack.c.b16 %v4398, %v4397
      %4401 = vmatprep.subr.bf16.mxu0 0
      %4402 = vmatpush1.bf16.msra.mxu0 %v4399
      %4403 = vmatprep.subr.bf16.mxu0 0
      %4404 = vmatpush1.bf16.msra.mxu0 0
      %4405 = vmatprep.subr.bf16.mxu0 0
      %4406 = vmatpush1.bf16.msra.mxu0 0
      %4407 = vmatprep.subr.bf16.mxu0 0
      %4408 = vmatpush1.bf16.msra.mxu0 0
      %4409 = vmatprep.subr.bf16.mxu0 0
      %4410 = vmatpush1.bf16.msra.mxu0 0
      %4411 = vmatprep.subr.bf16.mxu0 0
      %4412 = vmatpush1.bf16.msra.mxu0 0
      %4413 = vmatprep.subr.bf16.mxu0 0
      %4414 = vmatpush1.bf16.msra.mxu0 0
      %4415 = vmatprep.subr.bf16.mxu0 0
      %4416 = vmatpush1.bf16.msra.mxu0 0
      %4417 = vmatprep.subr.bf16.mxu0 0
      %4418 = vmatpush1.bf16.msra.mxu0 0
      %4419 = vmatprep.subr.bf16.mxu0 0
      %4420 = vmatpush1.bf16.msra.mxu0 0
      %4421 = vmatprep.subr.bf16.mxu0 0
      %4422 = vmatpush1.bf16.msra.mxu0 0
      %4423 = vmatprep.subr.bf16.mxu0 0
      %4424 = vmatpush1.bf16.msra.mxu0 0
      %4425 = vmatprep.subr.bf16.mxu0 0
      %4426 = vmatpush1.bf16.msra.mxu0 0
      %4427 = vmatprep.subr.bf16.mxu0 0
      %4428 = vmatpush1.bf16.msra.mxu0 0
      %4429 = vmatprep.subr.bf16.mxu0 0
      %4430 = vmatpush1.bf16.msra.mxu0 0
      %4431 = vmatprep.subr.bf16.mxu0 0
      %4432 = vmatpush1.bf16.msra.mxu0 0
      %4433 = vmatprep.mubr.bf16.mxu0 0
      %4434 = vmatmul.mubr.bf16.gmra.mrb[0].mxu0 %v4150
      %v4435 = vpop.f32.mrb[0].mxu0
      %v4436 = vadd.f32 0.0, %v4435
      %v4437 = vpop.f32.mrb[0].mxu0
      %v4438 = vpop.f32.mrb[0].mxu0
      %v4439 = vadd.f32 0.0, %v4438
      %v4440 = vpop.f32.mrb[0].mxu0
      %4441 = vdwg.mxu0
      %s4442 = scalar_lea.vmem %s7, 16
      %v4443 = vld [vmem:[%s4442] sm:$0xff]
      %v4445 = vsel %vm4148, %v4443, 0
      %4447 = vmatprep.subr.mxu0 0.0
      %4448 = vmatpush1.msra.mxu0 %v4436
      %4449 = vmatprep.subr.mxu0 0.0
      %4450 = vmatpush1.msra.mxu0 %v4439
      %4451 = vmatprep.subr.mxu0 0.0
      %4452 = vmatpush1.msra.mxu0 0.0
      %4453 = vmatprep.subr.mxu0 0.0
      %4454 = vmatpush1.msra.mxu0 0.0
      %4455 = vmatprep.subr.mxu0 0.0
      %4456 = vmatpush1.msra.mxu0 0.0
      %4457 = vmatprep.subr.mxu0 0.0
      %4458 = vmatpush1.msra.mxu0 0.0
      %4459 = vmatprep.subr.mxu0 0.0
      %4460 = vmatpush1.msra.mxu0 0.0
      %4461 = vmatprep.subr.mxu0 0.0
      %4462 = vmatpush1.msra.mxu0 0.0
      %4463 = vmatprep.subr.mxu0 0.0
      %4464 = vmatpush1.msra.mxu0 0.0
      %4465 = vmatprep.subr.mxu0 0.0
      %4466 = vmatpush1.msra.mxu0 0.0
      %4467 = vmatprep.subr.mxu0 0.0
      %4468 = vmatpush1.msra.mxu0 0.0
      %4469 = vmatprep.subr.mxu0 0.0
      %4470 = vmatpush1.msra.mxu0 0.0
      %4471 = vmatprep.subr.mxu0 0.0
      %4472 = vmatpush1.msra.mxu0 0.0
      %4473 = vmatprep.subr.mxu0 0.0
      %4474 = vmatpush1.msra.mxu0 0.0
      %4475 = vmatprep.subr.mxu0 0.0
      %4476 = vmatpush1.msra.mxu0 0.0
      %4477 = vmatprep.subr.mxu0 0.0
      %4478 = vmatpush1.msra.mxu0 0.0
      %4479 = vmatprep.subr.mxu0 0.0
      %4480 = vmatpush1.msra.mxu0 0.0
      %4481 = vmatprep.subr.mxu0 0.0
      %4482 = vmatpush1.msra.mxu0 0.0
      %4483 = vmatprep.subr.mxu0 0.0
      %4484 = vmatpush1.msra.mxu0 0.0
      %4485 = vmatprep.subr.mxu0 0.0
      %4486 = vmatpush1.msra.mxu0 0.0
      %4487 = vmatprep.subr.mxu0 0.0
      %4488 = vmatpush1.msra.mxu0 0.0
      %4489 = vmatprep.subr.mxu0 0.0
      %4490 = vmatpush1.msra.mxu0 0.0
      %4491 = vmatprep.subr.mxu0 0.0
      %4492 = vmatpush1.msra.mxu0 0.0
      %4493 = vmatprep.subr.mxu0 0.0
      %4494 = vmatpush1.msra.mxu0 0.0
      %4495 = vmatprep.subr.mxu0 0.0
      %4496 = vmatpush1.msra.mxu0 0.0
      %4497 = vmatprep.subr.mxu0 0.0
      %4498 = vmatpush1.msra.mxu0 0.0
      %4499 = vmatprep.subr.mxu0 0.0
      %4500 = vmatpush1.msra.mxu0 0.0
      %4501 = vmatprep.subr.mxu0 0.0
      %4502 = vmatpush1.msra.mxu0 0.0
      %4503 = vmatprep.subr.mxu0 0.0
      %4504 = vmatpush1.msra.mxu0 0.0
      %4505 = vmatprep.subr.mxu0 0.0
      %4506 = vmatpush1.msra.mxu0 0.0
      %4507 = vmatprep.subr.mxu0 0.0
      %4508 = vmatpush1.msra.mxu0 0.0
      %4509 = vmatprep.subr.mxu0 0.0
      %4510 = vmatpush1.msra.mxu0 0.0
      %4511 = vmatprep.mubr.f32.mxu0 0.0
      %4512 = vmatmul.mubr.f32.gmra.mrb[0].mxu0 %v4445
      %v4513 = vpop.f32.mrb[0].mxu0
      %v4514 = vadd.f32 0.0, %v4513
      %v4515 = vpop.f32.mrb[0].mxu0
      %4516 = vdwg.mxu0
      %v4517 = vadd.f32 %v4389, %v4514
      %s4518 = scalar_lea.vmem %s8, 24
      %v4519 = vld [vmem:[%s4518] sm:$0xf]
      %v4520 = vld [vmem:[%s4518 + $0x4] sm:$0xf]
      %v4523 = vunpack.c.l.b16 %v4519
      %v4524 = vunpack.c.l.b16 %v4520
      %v4525 = vpack.c.b16 %v4524, %v4523
      %4527 = vmatprep.subr.bf16.mxu0 0
      %4528 = vmatpush1.bf16.msra.mxu0 %v4525
      %4529 = vmatprep.subr.bf16.mxu0 0
      %4530 = vmatpush1.bf16.msra.mxu0 0
      %4531 = vmatprep.subr.bf16.mxu0 0
      %4532 = vmatpush1.bf16.msra.mxu0 0
      %4533 = vmatprep.subr.bf16.mxu0 0
      %4534 = vmatpush1.bf16.msra.mxu0 0
      %4535 = vmatprep.subr.bf16.mxu0 0
      %4536 = vmatpush1.bf16.msra.mxu0 0
      %4537 = vmatprep.subr.bf16.mxu0 0
      %4538 = vmatpush1.bf16.msra.mxu0 0
      %4539 = vmatprep.subr.bf16.mxu0 0
      %4540 = vmatpush1.bf16.msra.mxu0 0
      %4541 = vmatprep.subr.bf16.mxu0 0
      %4542 = vmatpush1.bf16.msra.mxu0 0
      %4543 = vmatprep.subr.bf16.mxu0 0
      %4544 = vmatpush1.bf16.msra.mxu0 0
      %4545 = vmatprep.subr.bf16.mxu0 0
      %4546 = vmatpush1.bf16.msra.mxu0 0
      %4547 = vmatprep.subr.bf16.mxu0 0
      %4548 = vmatpush1.bf16.msra.mxu0 0
      %4549 = vmatprep.subr.bf16.mxu0 0
      %4550 = vmatpush1.bf16.msra.mxu0 0
      %4551 = vmatprep.subr.bf16.mxu0 0
      %4552 = vmatpush1.bf16.msra.mxu0 0
      %4553 = vmatprep.subr.bf16.mxu0 0
      %4554 = vmatpush1.bf16.msra.mxu0 0
      %4555 = vmatprep.subr.bf16.mxu0 0
      %4556 = vmatpush1.bf16.msra.mxu0 0
      %4557 = vmatprep.subr.bf16.mxu0 0
      %4558 = vmatpush1.bf16.msra.mxu0 0
      %4559 = vmatprep.mubr.bf16.mxu0 0
      %4560 = vmatmul.mubr.bf16.gmra.mrb[0].mxu0 %v4150
      %v4561 = vpop.f32.mrb[0].mxu0
      %v4562 = vadd.f32 0.0, %v4561
      %v4563 = vpop.f32.mrb[0].mxu0
      %v4564 = vpop.f32.mrb[0].mxu0
      %v4565 = vadd.f32 0.0, %v4564
      %v4566 = vpop.f32.mrb[0].mxu0
      %4567 = vdwg.mxu0
      %s4568 = scalar_lea.vmem %s7, 24
      %v4569 = vld [vmem:[%s4568] sm:$0xff]
      %v4571 = vsel %vm4148, %v4569, 0
      %4573 = vmatprep.subr.mxu0 0.0
      %4574 = vmatpush1.msra.mxu0 %v4562
      %4575 = vmatprep.subr.mxu0 0.0
      %4576 = vmatpush1.msra.mxu0 %v4565
      %4577 = vmatprep.subr.mxu0 0.0
      %4578 = vmatpush1.msra.mxu0 0.0
      %4579 = vmatprep.subr.mxu0 0.0
      %4580 = vmatpush1.msra.mxu0 0.0
      %4581 = vmatprep.subr.mxu0 0.0
      %4582 = vmatpush1.msra.mxu0 0.0
      %4583 = vmatprep.subr.mxu0 0.0
      %4584 = vmatpush1.msra.mxu0 0.0
      %4585 = vmatprep.subr.mxu0 0.0
      %4586 = vmatpush1.msra.mxu0 0.0
      %4587 = vmatprep.subr.mxu0 0.0
      %4588 = vmatpush1.msra.mxu0 0.0
      %4589 = vmatprep.subr.mxu0 0.0
      %4590 = vmatpush1.msra.mxu0 0.0
      %4591 = vmatprep.subr.mxu0 0.0
      %4592 = vmatpush1.msra.mxu0 0.0
      %4593 = vmatprep.subr.mxu0 0.0
      %4594 = vmatpush1.msra.mxu0 0.0
      %4595 = vmatprep.subr.mxu0 0.0
      %4596 = vmatpush1.msra.mxu0 0.0
      %4597 = vmatprep.subr.mxu0 0.0
      %4598 = vmatpush1.msra.mxu0 0.0
      %4599 = vmatprep.subr.mxu0 0.0
      %4600 = vmatpush1.msra.mxu0 0.0
      %4601 = vmatprep.subr.mxu0 0.0
      %4602 = vmatpush1.msra.mxu0 0.0
      %4603 = vmatprep.subr.mxu0 0.0
      %4604 = vmatpush1.msra.mxu0 0.0
      %4605 = vmatprep.subr.mxu0 0.0
      %4606 = vmatpush1.msra.mxu0 0.0
      %4607 = vmatprep.subr.mxu0 0.0
      %4608 = vmatpush1.msra.mxu0 0.0
      %4609 = vmatprep.subr.mxu0 0.0
      %4610 = vmatpush1.msra.mxu0 0.0
      %4611 = vmatprep.subr.mxu0 0.0
      %4612 = vmatpush1.msra.mxu0 0.0
      %4613 = vmatprep.subr.mxu0 0.0
      %4614 = vmatpush1.msra.mxu0 0.0
      %4615 = vmatprep.subr.mxu0 0.0
      %4616 = vmatpush1.msra.mxu0 0.0
      %4617 = vmatprep.subr.mxu0 0.0
      %4618 = vmatpush1.msra.mxu0 0.0
      %4619 = vmatprep.subr.mxu0 0.0
      %4620 = vmatpush1.msra.mxu0 0.0
      %4621 = vmatprep.subr.mxu0 0.0
      %4622 = vmatpush1.msra.mxu0 0.0
      %4623 = vmatprep.subr.mxu0 0.0
      %4624 = vmatpush1.msra.mxu0 0.0
      %4625 = vmatprep.subr.mxu0 0.0
      %4626 = vmatpush1.msra.mxu0 0.0
      %4627 = vmatprep.subr.mxu0 0.0
      %4628 = vmatpush1.msra.mxu0 0.0
      %4629 = vmatprep.subr.mxu0 0.0
      %4630 = vmatpush1.msra.mxu0 0.0
      %4631 = vmatprep.subr.mxu0 0.0
      %4632 = vmatpush1.msra.mxu0 0.0
      %4633 = vmatprep.subr.mxu0 0.0
      %4634 = vmatpush1.msra.mxu0 0.0
      %4635 = vmatprep.subr.mxu0 0.0
      %4636 = vmatpush1.msra.mxu0 0.0
      %4637 = vmatprep.mubr.f32.mxu0 0.0
      %4638 = vmatmul.mubr.f32.gmra.mrb[0].mxu0 %v4571
      %v4639 = vpop.f32.mrb[0].mxu0
      %v4640 = vadd.f32 0.0, %v4639
      %v4641 = vpop.f32.mrb[0].mxu0
      %4642 = vdwg.mxu0
      %v4643 = vadd.f32 %v4517, %v4640
      %s4644 = scalar_lea.vmem %s8, 32
      %v4645 = vld [vmem:[%s4644] sm:$0xf]
      %v4646 = vld [vmem:[%s4644 + $0x4] sm:$0xf]
      %v4649 = vunpack.c.l.b16 %v4645
      %v4650 = vunpack.c.l.b16 %v4646
      %v4651 = vpack.c.b16 %v4650, %v4649
      %4653 = vmatprep.subr.bf16.mxu0 0
      %4654 = vmatpush1.bf16.msra.mxu0 %v4651
      %4655 = vmatprep.subr.bf16.mxu0 0
      %4656 = vmatpush1.bf16.msra.mxu0 0
      %4657 = vmatprep.subr.bf16.mxu0 0
      %4658 = vmatpush1.bf16.msra.mxu0 0
      %4659 = vmatprep.subr.bf16.mxu0 0
      %4660 = vmatpush1.bf16.msra.mxu0 0
      %4661 = vmatprep.subr.bf16.mxu0 0
      %4662 = vmatpush1.bf16.msra.mxu0 0
      %4663 = vmatprep.subr.bf16.mxu0 0
      %4664 = vmatpush1.bf16.msra.mxu0 0
      %4665 = vmatprep.subr.bf16.mxu0 0
      %4666 = vmatpush1.bf16.msra.mxu0 0
      %4667 = vmatprep.subr.bf16.mxu0 0
      %4668 = vmatpush1.bf16.msra.mxu0 0
      %4669 = vmatprep.subr.bf16.mxu0 0
      %4670 = vmatpush1.bf16.msra.mxu0 0
      %4671 = vmatprep.subr.bf16.mxu0 0
      %4672 = vmatpush1.bf16.msra.mxu0 0
      %4673 = vmatprep.subr.bf16.mxu0 0
      %4674 = vmatpush1.bf16.msra.mxu0 0
      %4675 = vmatprep.subr.bf16.mxu0 0
      %4676 = vmatpush1.bf16.msra.mxu0 0
      %4677 = vmatprep.subr.bf16.mxu0 0
      %4678 = vmatpush1.bf16.msra.mxu0 0
      %4679 = vmatprep.subr.bf16.mxu0 0
      %4680 = vmatpush1.bf16.msra.mxu0 0
      %4681 = vmatprep.subr.bf16.mxu0 0
      %4682 = vmatpush1.bf16.msra.mxu0 0
      %4683 = vmatprep.subr.bf16.mxu0 0
      %4684 = vmatpush1.bf16.msra.mxu0 0
      %4685 = vmatprep.mubr.bf16.mxu0 0
      %4686 = vmatmul.mubr.bf16.gmra.mrb[0].mxu0 %v4150
      %v4687 = vpop.f32.mrb[0].mxu0
      %v4688 = vadd.f32 0.0, %v4687
      %v4689 = vpop.f32.mrb[0].mxu0
      %v4690 = vpop.f32.mrb[0].mxu0
      %v4691 = vadd.f32 0.0, %v4690
      %v4692 = vpop.f32.mrb[0].mxu0
      %4693 = vdwg.mxu0
      %s4694 = scalar_lea.vmem %s7, 32
      %v4695 = vld [vmem:[%s4694] sm:$0xff]
      %v4697 = vsel %vm4148, %v4695, 0
      %4699 = vmatprep.subr.mxu0 0.0
      %4700 = vmatpush1.msra.mxu0 %v4688
      %4701 = vmatprep.subr.mxu0 0.0
      %4702 = vmatpush1.msra.mxu0 %v4691
      %4703 = vmatprep.subr.mxu0 0.0
      %4704 = vmatpush1.msra.mxu0 0.0
      %4705 = vmatprep.subr.mxu0 0.0
      %4706 = vmatpush1.msra.mxu0 0.0
      %4707 = vmatprep.subr.mxu0 0.0
      %4708 = vmatpush1.msra.mxu0 0.0
      %4709 = vmatprep.subr.mxu0 0.0
      %4710 = vmatpush1.msra.mxu0 0.0
      %4711 = vmatprep.subr.mxu0 0.0
      %4712 = vmatpush1.msra.mxu0 0.0
      %4713 = vmatprep.subr.mxu0 0.0
      %4714 = vmatpush1.msra.mxu0 0.0
      %4715 = vmatprep.subr.mxu0 0.0
      %4716 = vmatpush1.msra.mxu0 0.0
      %4717 = vmatprep.subr.mxu0 0.0
      %4718 = vmatpush1.msra.mxu0 0.0
      %4719 = vmatprep.subr.mxu0 0.0
      %4720 = vmatpush1.msra.mxu0 0.0
      %4721 = vmatprep.subr.mxu0 0.0
      %4722 = vmatpush1.msra.mxu0 0.0
      %4723 = vmatprep.subr.mxu0 0.0
      %4724 = vmatpush1.msra.mxu0 0.0
      %4725 = vmatprep.subr.mxu0 0.0
      %4726 = vmatpush1.msra.mxu0 0.0
      %4727 = vmatprep.subr.mxu0 0.0
      %4728 = vmatpush1.msra.mxu0 0.0
      %4729 = vmatprep.subr.mxu0 0.0
      %4730 = vmatpush1.msra.mxu0 0.0
      %4731 = vmatprep.subr.mxu0 0.0
      %4732 = vmatpush1.msra.mxu0 0.0
      %4733 = vmatprep.subr.mxu0 0.0
      %4734 = vmatpush1.msra.mxu0 0.0
      %4735 = vmatprep.subr.mxu0 0.0
      %4736 = vmatpush1.msra.mxu0 0.0
      %4737 = vmatprep.subr.mxu0 0.0
      %4738 = vmatpush1.msra.mxu0 0.0
      %4739 = vmatprep.subr.mxu0 0.0
      %4740 = vmatpush1.msra.mxu0 0.0
      %4741 = vmatprep.subr.mxu0 0.0
      %4742 = vmatpush1.msra.mxu0 0.0
      %4743 = vmatprep.subr.mxu0 0.0
      %4744 = vmatpush1.msra.mxu0 0.0
      %4745 = vmatprep.subr.mxu0 0.0
      %4746 = vmatpush1.msra.mxu0 0.0
      %4747 = vmatprep.subr.mxu0 0.0
      %4748 = vmatpush1.msra.mxu0 0.0
      %4749 = vmatprep.subr.mxu0 0.0
      %4750 = vmatpush1.msra.mxu0 0.0
      %4751 = vmatprep.subr.mxu0 0.0
      %4752 = vmatpush1.msra.mxu0 0.0
      %4753 = vmatprep.subr.mxu0 0.0
      %4754 = vmatpush1.msra.mxu0 0.0
      %4755 = vmatprep.subr.mxu0 0.0
      %4756 = vmatpush1.msra.mxu0 0.0
      %4757 = vmatprep.subr.mxu0 0.0
      %4758 = vmatpush1.msra.mxu0 0.0
      %4759 = vmatprep.subr.mxu0 0.0
      %4760 = vmatpush1.msra.mxu0 0.0
      %4761 = vmatprep.subr.mxu0 0.0
      %4762 = vmatpush1.msra.mxu0 0.0
      %4763 = vmatprep.mubr.f32.mxu0 0.0
      %4764 = vmatmul.mubr.f32.gmra.mrb[0].mxu0 %v4697
      %v4765 = vpop.f32.mrb[0].mxu0
      %v4766 = vadd.f32 0.0, %v4765
      %v4767 = vpop.f32.mrb[0].mxu0
      %4768 = vdwg.mxu0
      %v4769 = vadd.f32 %v4643, %v4766
      %s4770 = scalar_lea.vmem %s8, 40
      %v4771 = vld [vmem:[%s4770] sm:$0xf]
      %v4772 = vld [vmem:[%s4770 + $0x4] sm:$0xf]
      %v4775 = vunpack.c.l.b16 %v4771
      %v4776 = vunpack.c.l.b16 %v4772
      %v4777 = vpack.c.b16 %v4776, %v4775
      %4779 = vmatprep.subr.bf16.mxu0 0
      %4780 = vmatpush1.bf16.msra.mxu0 %v4777
      %4781 = vmatprep.subr.bf16.mxu0 0
      %4782 = vmatpush1.bf16.msra.mxu0 0
      %4783 = vmatprep.subr.bf16.mxu0 0
      %4784 = vmatpush1.bf16.msra.mxu0 0
      %4785 = vmatprep.subr.bf16.mxu0 0
      %4786 = vmatpush1.bf16.msra.mxu0 0
      %4787 = vmatprep.subr.bf16.mxu0 0
      %4788 = vmatpush1.bf16.msra.mxu0 0
      %4789 = vmatprep.subr.bf16.mxu0 0
      %4790 = vmatpush1.bf16.msra.mxu0 0
      %4791 = vmatprep.subr.bf16.mxu0 0
      %4792 = vmatpush1.bf16.msra.mxu0 0
      %4793 = vmatprep.subr.bf16.mxu0 0
      %4794 = vmatpush1.bf16.msra.mxu0 0
      %4795 = vmatprep.subr.bf16.mxu0 0
      %4796 = vmatpush1.bf16.msra.mxu0 0
      %4797 = vmatprep.subr.bf16.mxu0 0
      %4798 = vmatpush1.bf16.msra.mxu0 0
      %4799 = vmatprep.subr.bf16.mxu0 0
      %4800 = vmatpush1.bf16.msra.mxu0 0
      %4801 = vmatprep.subr.bf16.mxu0 0
      %4802 = vmatpush1.bf16.msra.mxu0 0
      %4803 = vmatprep.subr.bf16.mxu0 0
      %4804 = vmatpush1.bf16.msra.mxu0 0
      %4805 = vmatprep.subr.bf16.mxu0 0
      %4806 = vmatpush1.bf16.msra.mxu0 0
      %4807 = vmatprep.subr.bf16.mxu0 0
      %4808 = vmatpush1.bf16.msra.mxu0 0
      %4809 = vmatprep.subr.bf16.mxu0 0
      %4810 = vmatpush1.bf16.msra.mxu0 0
      %4811 = vmatprep.mubr.bf16.mxu0 0
      %4812 = vmatmul.mubr.bf16.gmra.mrb[0].mxu0 %v4150
      %v4813 = vpop.f32.mrb[0].mxu0
      %v4814 = vadd.f32 0.0, %v4813
      %v4815 = vpop.f32.mrb[0].mxu0
      %v4816 = vpop.f32.mrb[0].mxu0
      %v4817 = vadd.f32 0.0, %v4816
      %v4818 = vpop.f32.mrb[0].mxu0
      %4819 = vdwg.mxu0
      %s4820 = scalar_lea.vmem %s7, 40
      %v4821 = vld [vmem:[%s4820] sm:$0xff]
      %v4823 = vsel %vm4148, %v4821, 0
      %4825 = vmatprep.subr.mxu0 0.0
      %4826 = vmatpush1.msra.mxu0 %v4814
      %4827 = vmatprep.subr.mxu0 0.0
      %4828 = vmatpush1.msra.mxu0 %v4817
      %4829 = vmatprep.subr.mxu0 0.0
      %4830 = vmatpush1.msra.mxu0 0.0
      %4831 = vmatprep.subr.mxu0 0.0
      %4832 = vmatpush1.msra.mxu0 0.0
      %4833 = vmatprep.subr.mxu0 0.0
      %4834 = vmatpush1.msra.mxu0 0.0
      %4835 = vmatprep.subr.mxu0 0.0
      %4836 = vmatpush1.msra.mxu0 0.0
      %4837 = vmatprep.subr.mxu0 0.0
      %4838 = vmatpush1.msra.mxu0 0.0
      %4839 = vmatprep.subr.mxu0 0.0
      %4840 = vmatpush1.msra.mxu0 0.0
      %4841 = vmatprep.subr.mxu0 0.0
      %4842 = vmatpush1.msra.mxu0 0.0
      %4843 = vmatprep.subr.mxu0 0.0
      %4844 = vmatpush1.msra.mxu0 0.0
      %4845 = vmatprep.subr.mxu0 0.0
      %4846 = vmatpush1.msra.mxu0 0.0
      %4847 = vmatprep.subr.mxu0 0.0
      %4848 = vmatpush1.msra.mxu0 0.0
      %4849 = vmatprep.subr.mxu0 0.0
      %4850 = vmatpush1.msra.mxu0 0.0
      %4851 = vmatprep.subr.mxu0 0.0
      %4852 = vmatpush1.msra.mxu0 0.0
      %4853 = vmatprep.subr.mxu0 0.0
      %4854 = vmatpush1.msra.mxu0 0.0
      %4855 = vmatprep.subr.mxu0 0.0
      %4856 = vmatpush1.msra.mxu0 0.0
      %4857 = vmatprep.subr.mxu0 0.0
      %4858 = vmatpush1.msra.mxu0 0.0
      %4859 = vmatprep.subr.mxu0 0.0
      %4860 = vmatpush1.msra.mxu0 0.0
      %4861 = vmatprep.subr.mxu0 0.0
      %4862 = vmatpush1.msra.mxu0 0.0
      %4863 = vmatprep.subr.mxu0 0.0
      %4864 = vmatpush1.msra.mxu0 0.0
      %4865 = vmatprep.subr.mxu0 0.0
      %4866 = vmatpush1.msra.mxu0 0.0
      %4867 = vmatprep.subr.mxu0 0.0
      %4868 = vmatpush1.msra.mxu0 0.0
      %4869 = vmatprep.subr.mxu0 0.0
      %4870 = vmatpush1.msra.mxu0 0.0
      %4871 = vmatprep.subr.mxu0 0.0
      %4872 = vmatpush1.msra.mxu0 0.0
      %4873 = vmatprep.subr.mxu0 0.0
      %4874 = vmatpush1.msra.mxu0 0.0
      %4875 = vmatprep.subr.mxu0 0.0
      %4876 = vmatpush1.msra.mxu0 0.0
      %4877 = vmatprep.subr.mxu0 0.0
      %4878 = vmatpush1.msra.mxu0 0.0
      %4879 = vmatprep.subr.mxu0 0.0
      %4880 = vmatpush1.msra.mxu0 0.0
      %4881 = vmatprep.subr.mxu0 0.0
      %4882 = vmatpush1.msra.mxu0 0.0
      %4883 = vmatprep.subr.mxu0 0.0
      %4884 = vmatpush1.msra.mxu0 0.0
      %4885 = vmatprep.subr.mxu0 0.0
      %4886 = vmatpush1.msra.mxu0 0.0
      %4887 = vmatprep.subr.mxu0 0.0
      %4888 = vmatpush1.msra.mxu0 0.0
      %4889 = vmatprep.mubr.f32.mxu0 0.0
      %4890 = vmatmul.mubr.f32.gmra.mrb[0].mxu0 %v4823
      %v4891 = vpop.f32.mrb[0].mxu0
      %v4892 = vadd.f32 0.0, %v4891
      %v4893 = vpop.f32.mrb[0].mxu0
      %4894 = vdwg.mxu0
      %v4895 = vadd.f32 %v4769, %v4892
      %s4896 = scalar_lea.vmem %s8, 48
      %v4897 = vld [vmem:[%s4896] sm:$0xf]
      %v4898 = vld [vmem:[%s4896 + $0x4] sm:$0xf]
      %v4901 = vunpack.c.l.b16 %v4897
      %v4902 = vunpack.c.l.b16 %v4898
      %v4903 = vpack.c.b16 %v4902, %v4901
      %4905 = vmatprep.subr.bf16.mxu0 0
      %4906 = vmatpush1.bf16.msra.mxu0 %v4903
      %4907 = vmatprep.subr.bf16.mxu0 0
      %4908 = vmatpush1.bf16.msra.mxu0 0
      %4909 = vmatprep.subr.bf16.mxu0 0
      %4910 = vmatpush1.bf16.msra.mxu0 0
      %4911 = vmatprep.subr.bf16.mxu0 0
      %4912 = vmatpush1.bf16.msra.mxu0 0
      %4913 = vmatprep.subr.bf16.mxu0 0
      %4914 = vmatpush1.bf16.msra.mxu0 0
      %4915 = vmatprep.subr.bf16.mxu0 0
      %4916 = vmatpush1.bf16.msra.mxu0 0
      %4917 = vmatprep.subr.bf16.mxu0 0
      %4918 = vmatpush1.bf16.msra.mxu0 0
      %4919 = vmatprep.subr.bf16.mxu0 0
      %4920 = vmatpush1.bf16.msra.mxu0 0
      %4921 = vmatprep.subr.bf16.mxu0 0
      %4922 = vmatpush1.bf16.msra.mxu0 0
      %4923 = vmatprep.subr.bf16.mxu0 0
      %4924 = vmatpush1.bf16.msra.mxu0 0
      %4925 = vmatprep.subr.bf16.mxu0 0
      %4926 = vmatpush1.bf16.msra.mxu0 0
      %4927 = vmatprep.subr.bf16.mxu0 0
      %4928 = vmatpush1.bf16.msra.mxu0 0
      %4929 = vmatprep.subr.bf16.mxu0 0
      %4930 = vmatpush1.bf16.msra.mxu0 0
      %4931 = vmatprep.subr.bf16.mxu0 0
      %4932 = vmatpush1.bf16.msra.mxu0 0
      %4933 = vmatprep.subr.bf16.mxu0 0
      %4934 = vmatpush1.bf16.msra.mxu0 0
      %4935 = vmatprep.subr.bf16.mxu0 0
      %4936 = vmatpush1.bf16.msra.mxu0 0
      %4937 = vmatprep.mubr.bf16.mxu0 0
      %4938 = vmatmul.mubr.bf16.gmra.mrb[0].mxu0 %v4150
      %v4939 = vpop.f32.mrb[0].mxu0
      %v4940 = vadd.f32 0.0, %v4939
      %v4941 = vpop.f32.mrb[0].mxu0
      %v4942 = vpop.f32.mrb[0].mxu0
      %v4943 = vadd.f32 0.0, %v4942
      %v4944 = vpop.f32.mrb[0].mxu0
      %4945 = vdwg.mxu0
      %s4946 = scalar_lea.vmem %s7, 48
      %v4947 = vld [vmem:[%s4946] sm:$0xff]
      %v4949 = vsel %vm4148, %v4947, 0
      %4951 = vmatprep.subr.mxu0 0.0
      %4952 = vmatpush1.msra.mxu0 %v4940
      %4953 = vmatprep.subr.mxu0 0.0
      %4954 = vmatpush1.msra.mxu0 %v4943
      %4955 = vmatprep.subr.mxu0 0.0
      %4956 = vmatpush1.msra.mxu0 0.0
      %4957 = vmatprep.subr.mxu0 0.0
      %4958 = vmatpush1.msra.mxu0 0.0
      %4959 = vmatprep.subr.mxu0 0.0
      %4960 = vmatpush1.msra.mxu0 0.0
      %4961 = vmatprep.subr.mxu0 0.0
      %4962 = vmatpush1.msra.mxu0 0.0
      %4963 = vmatprep.subr.mxu0 0.0
      %4964 = vmatpush1.msra.mxu0 0.0
      %4965 = vmatprep.subr.mxu0 0.0
      %4966 = vmatpush1.msra.mxu0 0.0
      %4967 = vmatprep.subr.mxu0 0.0
      %4968 = vmatpush1.msra.mxu0 0.0
      %4969 = vmatprep.subr.mxu0 0.0
      %4970 = vmatpush1.msra.mxu0 0.0
      %4971 = vmatprep.subr.mxu0 0.0
      %4972 = vmatpush1.msra.mxu0 0.0
      %4973 = vmatprep.subr.mxu0 0.0
      %4974 = vmatpush1.msra.mxu0 0.0
      %4975 = vmatprep.subr.mxu0 0.0
      %4976 = vmatpush1.msra.mxu0 0.0
      %4977 = vmatprep.subr.mxu0 0.0
      %4978 = vmatpush1.msra.mxu0 0.0
      %4979 = vmatprep.subr.mxu0 0.0
      %4980 = vmatpush1.msra.mxu0 0.0
      %4981 = vmatprep.subr.mxu0 0.0
      %4982 = vmatpush1.msra.mxu0 0.0
      %4983 = vmatprep.subr.mxu0 0.0
      %4984 = vmatpush1.msra.mxu0 0.0
      %4985 = vmatprep.subr.mxu0 0.0
      %4986 = vmatpush1.msra.mxu0 0.0
      %4987 = vmatprep.subr.mxu0 0.0
      %4988 = vmatpush1.msra.mxu0 0.0
      %4989 = vmatprep.subr.mxu0 0.0
      %4990 = vmatpush1.msra.mxu0 0.0
      %4991 = vmatprep.subr.mxu0 0.0
      %4992 = vmatpush1.msra.mxu0 0.0
      %4993 = vmatprep.subr.mxu0 0.0
      %4994 = vmatpush1.msra.mxu0 0.0
      %4995 = vmatprep.subr.mxu0 0.0
      %4996 = vmatpush1.msra.mxu0 0.0
      %4997 = vmatprep.subr.mxu0 0.0
      %4998 = vmatpush1.msra.mxu0 0.0
      %4999 = vmatprep.subr.mxu0 0.0
      %5000 = vmatpush1.msra.mxu0 0.0
      %5001 = vmatprep.subr.mxu0 0.0
      %5002 = vmatpush1.msra.mxu0 0.0
      %5003 = vmatprep.subr.mxu0 0.0
      %5004 = vmatpush1.msra.mxu0 0.0
      %5005 = vmatprep.subr.mxu0 0.0
      %5006 = vmatpush1.msra.mxu0 0.0
      %5007 = vmatprep.subr.mxu0 0.0
      %5008 = vmatpush1.msra.mxu0 0.0
      %5009 = vmatprep.subr.mxu0 0.0
      %5010 = vmatpush1.msra.mxu0 0.0
      %5011 = vmatprep.subr.mxu0 0.0
      %5012 = vmatpush1.msra.mxu0 0.0
      %5013 = vmatprep.subr.mxu0 0.0
      %5014 = vmatpush1.msra.mxu0 0.0
      %5015 = vmatprep.mubr.f32.mxu0 0.0
      %5016 = vmatmul.mubr.f32.gmra.mrb[0].mxu0 %v4949
      %v5017 = vpop.f32.mrb[0].mxu0
      %v5018 = vadd.f32 0.0, %v5017
      %v5019 = vpop.f32.mrb[0].mxu0
      %5020 = vdwg.mxu0
      %v5021 = vadd.f32 %v4895, %v5018
      %s5022 = scalar_lea.vmem %s8, 56
      %v5023 = vld [vmem:[%s5022] sm:$0xf]
      %v5024 = vld [vmem:[%s5022 + $0x4] sm:$0xf]
      %v5027 = vunpack.c.l.b16 %v5023
      %v5028 = vunpack.c.l.b16 %v5024
      %v5029 = vpack.c.b16 %v5028, %v5027
      %5031 = vmatprep.subr.bf16.mxu0 0
      %5032 = vmatpush1.bf16.msra.mxu0 %v5029
      %5033 = vmatprep.subr.bf16.mxu0 0
      %5034 = vmatpush1.bf16.msra.mxu0 0
      %5035 = vmatprep.subr.bf16.mxu0 0
      %5036 = vmatpush1.bf16.msra.mxu0 0
      %5037 = vmatprep.subr.bf16.mxu0 0
      %5038 = vmatpush1.bf16.msra.mxu0 0
      %5039 = vmatprep.subr.bf16.mxu0 0
      %5040 = vmatpush1.bf16.msra.mxu0 0
      %5041 = vmatprep.subr.bf16.mxu0 0
      %5042 = vmatpush1.bf16.msra.mxu0 0
      %5043 = vmatprep.subr.bf16.mxu0 0
      %5044 = vmatpush1.bf16.msra.mxu0 0
      %5045 = vmatprep.subr.bf16.mxu0 0
      %5046 = vmatpush1.bf16.msra.mxu0 0
      %5047 = vmatprep.subr.bf16.mxu0 0
      %5048 = vmatpush1.bf16.msra.mxu0 0
      %5049 = vmatprep.subr.bf16.mxu0 0
      %5050 = vmatpush1.bf16.msra.mxu0 0
      %5051 = vmatprep.subr.bf16.mxu0 0
      %5052 = vmatpush1.bf16.msra.mxu0 0
      %5053 = vmatprep.subr.bf16.mxu0 0
      %5054 = vmatpush1.bf16.msra.mxu0 0
      %5055 = vmatprep.subr.bf16.mxu0 0
      %5056 = vmatpush1.bf16.msra.mxu0 0
      %5057 = vmatprep.subr.bf16.mxu0 0
      %5058 = vmatpush1.bf16.msra.mxu0 0
      %5059 = vmatprep.subr.bf16.mxu0 0
      %5060 = vmatpush1.bf16.msra.mxu0 0
      %5061 = vmatprep.subr.bf16.mxu0 0
      %5062 = vmatpush1.bf16.msra.mxu0 0
      %5063 = vmatprep.mubr.bf16.mxu0 0
      %5064 = vmatmul.mubr.bf16.gmra.mrb[0].mxu0 %v4150
      %v5065 = vpop.f32.mrb[0].mxu0
      %v5066 = vadd.f32 0.0, %v5065
      %v5067 = vpop.f32.mrb[0].mxu0
      %v5068 = vpop.f32.mrb[0].mxu0
      %v5069 = vadd.f32 0.0, %v5068
      %v5070 = vpop.f32.mrb[0].mxu0
      %5071 = vdwg.mxu0
      %s5072 = scalar_lea.vmem %s7, 56
      %v5073 = vld [vmem:[%s5072] sm:$0xff]
      %v5075 = vsel %vm4148, %v5073, 0
      %5077 = vmatprep.subr.mxu0 0.0
      %5078 = vmatpush1.msra.mxu0 %v5066
      %5079 = vmatprep.subr.mxu0 0.0
      %5080 = vmatpush1.msra.mxu0 %v5069
      %5081 = vmatprep.subr.mxu0 0.0
      %5082 = vmatpush1.msra.mxu0 0.0
      %5083 = vmatprep.subr.mxu0 0.0
      %5084 = vmatpush1.msra.mxu0 0.0
      %5085 = vmatprep.subr.mxu0 0.0
      %5086 = vmatpush1.msra.mxu0 0.0
      %5087 = vmatprep.subr.mxu0 0.0
      %5088 = vmatpush1.msra.mxu0 0.0
      %5089 = vmatprep.subr.mxu0 0.0
      %5090 = vmatpush1.msra.mxu0 0.0
      %5091 = vmatprep.subr.mxu0 0.0
      %5092 = vmatpush1.msra.mxu0 0.0
      %5093 = vmatprep.subr.mxu0 0.0
      %5094 = vmatpush1.msra.mxu0 0.0
      %5095 = vmatprep.subr.mxu0 0.0
      %5096 = vmatpush1.msra.mxu0 0.0
      %5097 = vmatprep.subr.mxu0 0.0
      %5098 = vmatpush1.msra.mxu0 0.0
      %5099 = vmatprep.subr.mxu0 0.0
      %5100 = vmatpush1.msra.mxu0 0.0
      %5101 = vmatprep.subr.mxu0 0.0
      %5102 = vmatpush1.msra.mxu0 0.0
      %5103 = vmatprep.subr.mxu0 0.0
      %5104 = vmatpush1.msra.mxu0 0.0
      %5105 = vmatprep.subr.mxu0 0.0
      %5106 = vmatpush1.msra.mxu0 0.0
      %5107 = vmatprep.subr.mxu0 0.0
      %5108 = vmatpush1.msra.mxu0 0.0
      %5109 = vmatprep.subr.mxu0 0.0
      %5110 = vmatpush1.msra.mxu0 0.0
      %5111 = vmatprep.subr.mxu0 0.0
      %5112 = vmatpush1.msra.mxu0 0.0
      %5113 = vmatprep.subr.mxu0 0.0
      %5114 = vmatpush1.msra.mxu0 0.0
      %5115 = vmatprep.subr.mxu0 0.0
      %5116 = vmatpush1.msra.mxu0 0.0
      %5117 = vmatprep.subr.mxu0 0.0
      %5118 = vmatpush1.msra.mxu0 0.0
      %5119 = vmatprep.subr.mxu0 0.0
      %5120 = vmatpush1.msra.mxu0 0.0
      %5121 = vmatprep.subr.mxu0 0.0
      %5122 = vmatpush1.msra.mxu0 0.0
      %5123 = vmatprep.subr.mxu0 0.0
      %5124 = vmatpush1.msra.mxu0 0.0
      %5125 = vmatprep.subr.mxu0 0.0
      %5126 = vmatpush1.msra.mxu0 0.0
      %5127 = vmatprep.subr.mxu0 0.0
      %5128 = vmatpush1.msra.mxu0 0.0
      %5129 = vmatprep.subr.mxu0 0.0
      %5130 = vmatpush1.msra.mxu0 0.0
      %5131 = vmatprep.subr.mxu0 0.0
      %5132 = vmatpush1.msra.mxu0 0.0
      %5133 = vmatprep.subr.mxu0 0.0
      %5134 = vmatpush1.msra.mxu0 0.0
      %5135 = vmatprep.subr.mxu0 0.0
      %5136 = vmatpush1.msra.mxu0 0.0
      %5137 = vmatprep.subr.mxu0 0.0
      %5138 = vmatpush1.msra.mxu0 0.0
      %5139 = vmatprep.subr.mxu0 0.0
      %5140 = vmatpush1.msra.mxu0 0.0
      %5141 = vmatprep.mubr.f32.mxu0 0.0
      %5142 = vmatmul.mubr.f32.gmra.mrb[0].mxu0 %v5075
      %v5143 = vpop.f32.mrb[0].mxu0
      %v5144 = vadd.f32 0.0, %v5143
      %v5145 = vpop.f32.mrb[0].mxu0
      %5146 = vdwg.mxu0
      %v5147 = vadd.f32 %v5021, %v5144
      %s5148 = scalar_lea.vmem %s8, 64
      %v5149 = vld [vmem:[%s5148] sm:$0xf]
      %v5150 = vld [vmem:[%s5148 + $0x4] sm:$0xf]
      %v5153 = vunpack.c.l.b16 %v5149
      %v5154 = vunpack.c.l.b16 %v5150
      %v5155 = vpack.c.b16 %v5154, %v5153
      %5157 = vmatprep.subr.bf16.mxu0 0
      %5158 = vmatpush1.bf16.msra.mxu0 %v5155
      %5159 = vmatprep.subr.bf16.mxu0 0
      %5160 = vmatpush1.bf16.msra.mxu0 0
      %5161 = vmatprep.subr.bf16.mxu0 0
      %5162 = vmatpush1.bf16.msra.mxu0 0
      %5163 = vmatprep.subr.bf16.mxu0 0
      %5164 = vmatpush1.bf16.msra.mxu0 0
      %5165 = vmatprep.subr.bf16.mxu0 0
      %5166 = vmatpush1.bf16.msra.mxu0 0
      %5167 = vmatprep.subr.bf16.mxu0 0
      %5168 = vmatpush1.bf16.msra.mxu0 0
      %5169 = vmatprep.subr.bf16.mxu0 0
      %5170 = vmatpush1.bf16.msra.mxu0 0
      %5171 = vmatprep.subr.bf16.mxu0 0
      %5172 = vmatpush1.bf16.msra.mxu0 0
      %5173 = vmatprep.subr.bf16.mxu0 0
      %5174 = vmatpush1.bf16.msra.mxu0 0
      %5175 = vmatprep.subr.bf16.mxu0 0
      %5176 = vmatpush1.bf16.msra.mxu0 0
      %5177 = vmatprep.subr.bf16.mxu0 0
      %5178 = vmatpush1.bf16.msra.mxu0 0
      %5179 = vmatprep.subr.bf16.mxu0 0
      %5180 = vmatpush1.bf16.msra.mxu0 0
      %5181 = vmatprep.subr.bf16.mxu0 0
      %5182 = vmatpush1.bf16.msra.mxu0 0
      %5183 = vmatprep.subr.bf16.mxu0 0
      %5184 = vmatpush1.bf16.msra.mxu0 0
      %5185 = vmatprep.subr.bf16.mxu0 0
      %5186 = vmatpush1.bf16.msra.mxu0 0
      %5187 = vmatprep.subr.bf16.mxu0 0
      %5188 = vmatpush1.bf16.msra.mxu0 0
      %5189 = vmatprep.mubr.bf16.mxu0 0
      %5190 = vmatmul.mubr.bf16.gmra.mrb[0].mxu0 %v4150
      %v5191 = vpop.f32.mrb[0].mxu0
      %v5192 = vadd.f32 0.0, %v5191
      %v5193 = vpop.f32.mrb[0].mxu0
      %v5194 = vpop.f32.mrb[0].mxu0
      %v5195 = vadd.f32 0.0, %v5194
      %v5196 = vpop.f32.mrb[0].mxu0
      %5197 = vdwg.mxu0
      %s5198 = scalar_lea.vmem %s7, 64
      %v5199 = vld [vmem:[%s5198] sm:$0xff]
      %v5201 = vsel %vm4148, %v5199, 0
      %5203 = vmatprep.subr.mxu0 0.0
      %5204 = vmatpush1.msra.mxu0 %v5192
      %5205 = vmatprep.subr.mxu0 0.0
      %5206 = vmatpush1.msra.mxu0 %v5195
      %5207 = vmatprep.subr.mxu0 0.0
      %5208 = vmatpush1.msra.mxu0 0.0
      %5209 = vmatprep.subr.mxu0 0.0
      %5210 = vmatpush1.msra.mxu0 0.0
      %5211 = vmatprep.subr.mxu0 0.0
      %5212 = vmatpush1.msra.mxu0 0.0
      %5213 = vmatprep.subr.mxu0 0.0
      %5214 = vmatpush1.msra.mxu0 0.0
      %5215 = vmatprep.subr.mxu0 0.0
      %5216 = vmatpush1.msra.mxu0 0.0
      %5217 = vmatprep.subr.mxu0 0.0
      %5218 = vmatpush1.msra.mxu0 0.0
      %5219 = vmatprep.subr.mxu0 0.0
      %5220 = vmatpush1.msra.mxu0 0.0
      %5221 = vmatprep.subr.mxu0 0.0
      %5222 = vmatpush1.msra.mxu0 0.0
      %5223 = vmatprep.subr.mxu0 0.0
      %5224 = vmatpush1.msra.mxu0 0.0
      %5225 = vmatprep.subr.mxu0 0.0
      %5226 = vmatpush1.msra.mxu0 0.0
      %5227 = vmatprep.subr.mxu0 0.0
      %5228 = vmatpush1.msra.mxu0 0.0
      %5229 = vmatprep.subr.mxu0 0.0
      %5230 = vmatpush1.msra.mxu0 0.0
      %5231 = vmatprep.subr.mxu0 0.0
      %5232 = vmatpush1.msra.mxu0 0.0
      %5233 = vmatprep.subr.mxu0 0.0
      %5234 = vmatpush1.msra.mxu0 0.0
      %5235 = vmatprep.subr.mxu0 0.0
      %5236 = vmatpush1.msra.mxu0 0.0
      %5237 = vmatprep.subr.mxu0 0.0
      %5238 = vmatpush1.msra.mxu0 0.0
      %5239 = vmatprep.subr.mxu0 0.0
      %5240 = vmatpush1.msra.mxu0 0.0
      %5241 = vmatprep.subr.mxu0 0.0
      %5242 = vmatpush1.msra.mxu0 0.0
      %5243 = vmatprep.subr.mxu0 0.0
      %5244 = vmatpush1.msra.mxu0 0.0
      %5245 = vmatprep.subr.mxu0 0.0
      %5246 = vmatpush1.msra.mxu0 0.0
      %5247 = vmatprep.subr.mxu0 0.0
      %5248 = vmatpush1.msra.mxu0 0.0
      %5249 = vmatprep.subr.mxu0 0.0
      %5250 = vmatpush1.msra.mxu0 0.0
      %5251 = vmatprep.subr.mxu0 0.0
      %5252 = vmatpush1.msra.mxu0 0.0
      %5253 = vmatprep.subr.mxu0 0.0
      %5254 = vmatpush1.msra.mxu0 0.0
      %5255 = vmatprep.subr.mxu0 0.0
      %5256 = vmatpush1.msra.mxu0 0.0
      %5257 = vmatprep.subr.mxu0 0.0
      %5258 = vmatpush1.msra.mxu0 0.0
      %5259 = vmatprep.subr.mxu0 0.0
      %5260 = vmatpush1.msra.mxu0 0.0
      %5261 = vmatprep.subr.mxu0 0.0
      %5262 = vmatpush1.msra.mxu0 0.0
      %5263 = vmatprep.subr.mxu0 0.0
      %5264 = vmatpush1.msra.mxu0 0.0
      %5265 = vmatprep.subr.mxu0 0.0
      %5266 = vmatpush1.msra.mxu0 0.0
      %5267 = vmatprep.mubr.f32.mxu0 0.0
      %5268 = vmatmul.mubr.f32.gmra.mrb[0].mxu0 %v5201
      %v5269 = vpop.f32.mrb[0].mxu0
      %v5270 = vadd.f32 0.0, %v5269
      %v5271 = vpop.f32.mrb[0].mxu0
      %5272 = vdwg.mxu0
      %v5273 = vadd.f32 %v5147, %v5270
      %s5274 = scalar_lea.vmem %s8, 72
      %v5275 = vld [vmem:[%s5274] sm:$0xf]
      %v5276 = vld [vmem:[%s5274 + $0x4] sm:$0xf]
      %v5279 = vunpack.c.l.b16 %v5275
      %v5280 = vunpack.c.l.b16 %v5276
      %v5281 = vpack.c.b16 %v5280, %v5279
      %5283 = vmatprep.subr.bf16.mxu0 0
      %5284 = vmatpush1.bf16.msra.mxu0 %v5281
      %5285 = vmatprep.subr.bf16.mxu0 0
      %5286 = vmatpush1.bf16.msra.mxu0 0
      %5287 = vmatprep.subr.bf16.mxu0 0
      %5288 = vmatpush1.bf16.msra.mxu0 0
      %5289 = vmatprep.subr.bf16.mxu0 0
      %5290 = vmatpush1.bf16.msra.mxu0 0
      %5291 = vmatprep.subr.bf16.mxu0 0
      %5292 = vmatpush1.bf16.msra.mxu0 0
      %5293 = vmatprep.subr.bf16.mxu0 0
      %5294 = vmatpush1.bf16.msra.mxu0 0
      %5295 = vmatprep.subr.bf16.mxu0 0
      %5296 = vmatpush1.bf16.msra.mxu0 0
      %5297 = vmatprep.subr.bf16.mxu0 0
      %5298 = vmatpush1.bf16.msra.mxu0 0
      %5299 = vmatprep.subr.bf16.mxu0 0
      %5300 = vmatpush1.bf16.msra.mxu0 0
      %5301 = vmatprep.subr.bf16.mxu0 0
      %5302 = vmatpush1.bf16.msra.mxu0 0
      %5303 = vmatprep.subr.bf16.mxu0 0
      %5304 = vmatpush1.bf16.msra.mxu0 0
      %5305 = vmatprep.subr.bf16.mxu0 0
      %5306 = vmatpush1.bf16.msra.mxu0 0
      %5307 = vmatprep.subr.bf16.mxu0 0
      %5308 = vmatpush1.bf16.msra.mxu0 0
      %5309 = vmatprep.subr.bf16.mxu0 0
      %5310 = vmatpush1.bf16.msra.mxu0 0
      %5311 = vmatprep.subr.bf16.mxu0 0
      %5312 = vmatpush1.bf16.msra.mxu0 0
      %5313 = vmatprep.subr.bf16.mxu0 0
      %5314 = vmatpush1.bf16.msra.mxu0 0
      %5315 = vmatprep.mubr.bf16.mxu0 0
      %5316 = vmatmul.mubr.bf16.gmra.mrb[0].mxu0 %v4150
      %v5317 = vpop.f32.mrb[0].mxu0
      %v5318 = vadd.f32 0.0, %v5317
      %v5319 = vpop.f32.mrb[0].mxu0
      %v5320 = vpop.f32.mrb[0].mxu0
      %v5321 = vadd.f32 0.0, %v5320
      %v5322 = vpop.f32.mrb[0].mxu0
      %5323 = vdwg.mxu0
      %s5324 = scalar_lea.vmem %s7, 72
      %v5325 = vld [vmem:[%s5324] sm:$0xff]
      %v5327 = vsel %vm4148, %v5325, 0
      %5329 = vmatprep.subr.mxu0 0.0
      %5330 = vmatpush1.msra.mxu0 %v5318
      %5331 = vmatprep.subr.mxu0 0.0
      %5332 = vmatpush1.msra.mxu0 %v5321
      %5333 = vmatprep.subr.mxu0 0.0
      %5334 = vmatpush1.msra.mxu0 0.0
      %5335 = vmatprep.subr.mxu0 0.0
      %5336 = vmatpush1.msra.mxu0 0.0
      %5337 = vmatprep.subr.mxu0 0.0
      %5338 = vmatpush1.msra.mxu0 0.0
      %5339 = vmatprep.subr.mxu0 0.0
      %5340 = vmatpush1.msra.mxu0 0.0
      %5341 = vmatprep.subr.mxu0 0.0
      %5342 = vmatpush1.msra.mxu0 0.0
      %5343 = vmatprep.subr.mxu0 0.0
      %5344 = vmatpush1.msra.mxu0 0.0
      %5345 = vmatprep.subr.mxu0 0.0
      %5346 = vmatpush1.msra.mxu0 0.0
      %5347 = vmatprep.subr.mxu0 0.0
      %5348 = vmatpush1.msra.mxu0 0.0
      %5349 = vmatprep.subr.mxu0 0.0
      %5350 = vmatpush1.msra.mxu0 0.0
      %5351 = vmatprep.subr.mxu0 0.0
      %5352 = vmatpush1.msra.mxu0 0.0
      %5353 = vmatprep.subr.mxu0 0.0
      %5354 = vmatpush1.msra.mxu0 0.0
      %5355 = vmatprep.subr.mxu0 0.0
      %5356 = vmatpush1.msra.mxu0 0.0
      %5357 = vmatprep.subr.mxu0 0.0
      %5358 = vmatpush1.msra.mxu0 0.0
      %5359 = vmatprep.subr.mxu0 0.0
      %5360 = vmatpush1.msra.mxu0 0.0
      %5361 = vmatprep.subr.mxu0 0.0
      %5362 = vmatpush1.msra.mxu0 0.0
      %5363 = vmatprep.subr.mxu0 0.0
      %5364 = vmatpush1.msra.mxu0 0.0
      %5365 = vmatprep.subr.mxu0 0.0
      %5366 = vmatpush1.msra.mxu0 0.0
      %5367 = vmatprep.subr.mxu0 0.0
      %5368 = vmatpush1.msra.mxu0 0.0
      %5369 = vmatprep.subr.mxu0 0.0
      %5370 = vmatpush1.msra.mxu0 0.0
      %5371 = vmatprep.subr.mxu0 0.0
      %5372 = vmatpush1.msra.mxu0 0.0
      %5373 = vmatprep.subr.mxu0 0.0
      %5374 = vmatpush1.msra.mxu0 0.0
      %5375 = vmatprep.subr.mxu0 0.0
      %5376 = vmatpush1.msra.mxu0 0.0
      %5377 = vmatprep.subr.mxu0 0.0
      %5378 = vmatpush1.msra.mxu0 0.0
      %5379 = vmatprep.subr.mxu0 0.0
      %5380 = vmatpush1.msra.mxu0 0.0
      %5381 = vmatprep.subr.mxu0 0.0
      %5382 = vmatpush1.msra.mxu0 0.0
      %5383 = vmatprep.subr.mxu0 0.0
      %5384 = vmatpush1.msra.mxu0 0.0
      %5385 = vmatprep.subr.mxu0 0.0
      %5386 = vmatpush1.msra.mxu0 0.0
      %5387 = vmatprep.subr.mxu0 0.0
      %5388 = vmatpush1.msra.mxu0 0.0
      %5389 = vmatprep.subr.mxu0 0.0
      %5390 = vmatpush1.msra.mxu0 0.0
      %5391 = vmatprep.subr.mxu0 0.0
      %5392 = vmatpush1.msra.mxu0 0.0
      %5393 = vmatprep.mubr.f32.mxu0 0.0
      %5394 = vmatmul.mubr.f32.gmra.mrb[0].mxu0 %v5327
      %v5395 = vpop.f32.mrb[0].mxu0
      %v5396 = vadd.f32 0.0, %v5395
      %v5397 = vpop.f32.mrb[0].mxu0
      %5398 = vdwg.mxu0
      %v5399 = vadd.f32 %v5273, %v5396
      %s5400 = scalar_lea.vmem %s8, 80
      %v5401 = vld [vmem:[%s5400] sm:$0xf]
      %v5402 = vld [vmem:[%s5400 + $0x4] sm:$0xf]
      %v5405 = vunpack.c.l.b16 %v5401
      %v5406 = vunpack.c.l.b16 %v5402
      %v5407 = vpack.c.b16 %v5406, %v5405
      %5409 = vmatprep.subr.bf16.mxu0 0
      %5410 = vmatpush1.bf16.msra.mxu0 %v5407
      %5411 = vmatprep.subr.bf16.mxu0 0
      %5412 = vmatpush1.bf16.msra.mxu0 0
      %5413 = vmatprep.subr.bf16.mxu0 0
      %5414 = vmatpush1.bf16.msra.mxu0 0
      %5415 = vmatprep.subr.bf16.mxu0 0
      %5416 = vmatpush1.bf16.msra.mxu0 0
      %5417 = vmatprep.subr.bf16.mxu0 0
      %5418 = vmatpush1.bf16.msra.mxu0 0
      %5419 = vmatprep.subr.bf16.mxu0 0
      %5420 = vmatpush1.bf16.msra.mxu0 0
      %5421 = vmatprep.subr.bf16.mxu0 0
      %5422 = vmatpush1.bf16.msra.mxu0 0
      %5423 = vmatprep.subr.bf16.mxu0 0
      %5424 = vmatpush1.bf16.msra.mxu0 0
      %5425 = vmatprep.subr.bf16.mxu0 0
      %5426 = vmatpush1.bf16.msra.mxu0 0
      %5427 = vmatprep.subr.bf16.mxu0 0
      %5428 = vmatpush1.bf16.msra.mxu0 0
      %5429 = vmatprep.subr.bf16.mxu0 0
      %5430 = vmatpush1.bf16.msra.mxu0 0
      %5431 = vmatprep.subr.bf16.mxu0 0
      %5432 = vmatpush1.bf16.msra.mxu0 0
      %5433 = vmatprep.subr.bf16.mxu0 0
      %5434 = vmatpush1.bf16.msra.mxu0 0
      %5435 = vmatprep.subr.bf16.mxu0 0
      %5436 = vmatpush1.bf16.msra.mxu0 0
      %5437 = vmatprep.subr.bf16.mxu0 0
      %5438 = vmatpush1.bf16.msra.mxu0 0
      %5439 = vmatprep.subr.bf16.mxu0 0
      %5440 = vmatpush1.bf16.msra.mxu0 0
      %5441 = vmatprep.mubr.bf16.mxu0 0
      %5442 = vmatmul.mubr.bf16.gmra.mrb[0].mxu0 %v4150
      %v5443 = vpop.f32.mrb[0].mxu0
      %v5444 = vadd.f32 0.0, %v5443
      %v5445 = vpop.f32.mrb[0].mxu0
      %v5446 = vpop.f32.mrb[0].mxu0
      %v5447 = vadd.f32 0.0, %v5446
      %v5448 = vpop.f32.mrb[0].mxu0
      %5449 = vdwg.mxu0
      %s5450 = scalar_lea.vmem %s7, 80
      %v5451 = vld [vmem:[%s5450] sm:$0xff]
      %v5453 = vsel %vm4148, %v5451, 0
      %5455 = vmatprep.subr.mxu0 0.0
      %5456 = vmatpush1.msra.mxu0 %v5444
      %5457 = vmatprep.subr.mxu0 0.0
      %5458 = vmatpush1.msra.mxu0 %v5447
      %5459 = vmatprep.subr.mxu0 0.0
      %5460 = vmatpush1.msra.mxu0 0.0
      %5461 = vmatprep.subr.mxu0 0.0
      %5462 = vmatpush1.msra.mxu0 0.0
      %5463 = vmatprep.subr.mxu0 0.0
      %5464 = vmatpush1.msra.mxu0 0.0
      %5465 = vmatprep.subr.mxu0 0.0
      %5466 = vmatpush1.msra.mxu0 0.0
      %5467 = vmatprep.subr.mxu0 0.0
      %5468 = vmatpush1.msra.mxu0 0.0
      %5469 = vmatprep.subr.mxu0 0.0
      %5470 = vmatpush1.msra.mxu0 0.0
      %5471 = vmatprep.subr.mxu0 0.0
      %5472 = vmatpush1.msra.mxu0 0.0
      %5473 = vmatprep.subr.mxu0 0.0
      %5474 = vmatpush1.msra.mxu0 0.0
      %5475 = vmatprep.subr.mxu0 0.0
      %5476 = vmatpush1.msra.mxu0 0.0
      %5477 = vmatprep.subr.mxu0 0.0
      %5478 = vmatpush1.msra.mxu0 0.0
      %5479 = vmatprep.subr.mxu0 0.0
      %5480 = vmatpush1.msra.mxu0 0.0
      %5481 = vmatprep.subr.mxu0 0.0
      %5482 = vmatpush1.msra.mxu0 0.0
      %5483 = vmatprep.subr.mxu0 0.0
      %5484 = vmatpush1.msra.mxu0 0.0
      %5485 = vmatprep.subr.mxu0 0.0
      %5486 = vmatpush1.msra.mxu0 0.0
      %5487 = vmatprep.subr.mxu0 0.0
      %5488 = vmatpush1.msra.mxu0 0.0
      %5489 = vmatprep.subr.mxu0 0.0
      %5490 = vmatpush1.msra.mxu0 0.0
      %5491 = vmatprep.subr.mxu0 0.0
      %5492 = vmatpush1.msra.mxu0 0.0
      %5493 = vmatprep.subr.mxu0 0.0
      %5494 = vmatpush1.msra.mxu0 0.0
      %5495 = vmatprep.subr.mxu0 0.0
      %5496 = vmatpush1.msra.mxu0 0.0
      %5497 = vmatprep.subr.mxu0 0.0
      %5498 = vmatpush1.msra.mxu0 0.0
      %5499 = vmatprep.subr.mxu0 0.0
      %5500 = vmatpush1.msra.mxu0 0.0
      %5501 = vmatprep.subr.mxu0 0.0
      %5502 = vmatpush1.msra.mxu0 0.0
      %5503 = vmatprep.subr.mxu0 0.0
      %5504 = vmatpush1.msra.mxu0 0.0
      %5505 = vmatprep.subr.mxu0 0.0
      %5506 = vmatpush1.msra.mxu0 0.0
      %5507 = vmatprep.subr.mxu0 0.0
      %5508 = vmatpush1.msra.mxu0 0.0
      %5509 = vmatprep.subr.mxu0 0.0
      %5510 = vmatpush1.msra.mxu0 0.0
      %5511 = vmatprep.subr.mxu0 0.0
      %5512 = vmatpush1.msra.mxu0 0.0
      %5513 = vmatprep.subr.mxu0 0.0
      %5514 = vmatpush1.msra.mxu0 0.0
      %5515 = vmatprep.subr.mxu0 0.0
      %5516 = vmatpush1.msra.mxu0 0.0
      %5517 = vmatprep.subr.mxu0 0.0
      %5518 = vmatpush1.msra.mxu0 0.0
      %5519 = vmatprep.mubr.f32.mxu0 0.0
      %5520 = vmatmul.mubr.f32.gmra.mrb[0].mxu0 %v5453
      %v5521 = vpop.f32.mrb[0].mxu0
      %v5522 = vadd.f32 0.0, %v5521
      %v5523 = vpop.f32.mrb[0].mxu0
      %5524 = vdwg.mxu0
      %v5525 = vadd.f32 %v5399, %v5522
      %s5526 = scalar_lea.vmem %s8, 88
      %v5527 = vld [vmem:[%s5526] sm:$0xf]
      %v5528 = vld [vmem:[%s5526 + $0x4] sm:$0xf]
      %v5531 = vunpack.c.l.b16 %v5527
      %v5532 = vunpack.c.l.b16 %v5528
      %v5533 = vpack.c.b16 %v5532, %v5531
      %5535 = vmatprep.subr.bf16.mxu0 0
      %5536 = vmatpush1.bf16.msra.mxu0 %v5533
      %5537 = vmatprep.subr.bf16.mxu0 0
      %5538 = vmatpush1.bf16.msra.mxu0 0
      %5539 = vmatprep.subr.bf16.mxu0 0
      %5540 = vmatpush1.bf16.msra.mxu0 0
      %5541 = vmatprep.subr.bf16.mxu0 0
      %5542 = vmatpush1.bf16.msra.mxu0 0
      %5543 = vmatprep.subr.bf16.mxu0 0
      %5544 = vmatpush1.bf16.msra.mxu0 0
      %5545 = vmatprep.subr.bf16.mxu0 0
      %5546 = vmatpush1.bf16.msra.mxu0 0
      %5547 = vmatprep.subr.bf16.mxu0 0
      %5548 = vmatpush1.bf16.msra.mxu0 0
      %5549 = vmatprep.subr.bf16.mxu0 0
      %5550 = vmatpush1.bf16.msra.mxu0 0
      %5551 = vmatprep.subr.bf16.mxu0 0
      %5552 = vmatpush1.bf16.msra.mxu0 0
      %5553 = vmatprep.subr.bf16.mxu0 0
      %5554 = vmatpush1.bf16.msra.mxu0 0
      %5555 = vmatprep.subr.bf16.mxu0 0
      %5556 = vmatpush1.bf16.msra.mxu0 0
      %5557 = vmatprep.subr.bf16.mxu0 0
      %5558 = vmatpush1.bf16.msra.mxu0 0
      %5559 = vmatprep.subr.bf16.mxu0 0
      %5560 = vmatpush1.bf16.msra.mxu0 0
      %5561 = vmatprep.subr.bf16.mxu0 0
      %5562 = vmatpush1.bf16.msra.mxu0 0
      %5563 = vmatprep.subr.bf16.mxu0 0
      %5564 = vmatpush1.bf16.msra.mxu0 0
      %5565 = vmatprep.subr.bf16.mxu0 0
      %5566 = vmatpush1.bf16.msra.mxu0 0
      %5567 = vmatprep.mubr.bf16.mxu0 0
      %5568 = vmatmul.mubr.bf16.gmra.mrb[0].mxu0 %v4150
      %v5569 = vpop.f32.mrb[0].mxu0
      %v5570 = vadd.f32 0.0, %v5569
      %v5571 = vpop.f32.mrb[0].mxu0
      %v5572 = vpop.f32.mrb[0].mxu0
      %v5573 = vadd.f32 0.0, %v5572
      %v5574 = vpop.f32.mrb[0].mxu0
      %5575 = vdwg.mxu0
      %s5576 = scalar_lea.vmem %s7, 88
      %v5577 = vld [vmem:[%s5576] sm:$0xff]
      %v5579 = vsel %vm4148, %v5577, 0
      %5581 = vmatprep.subr.mxu0 0.0
      %5582 = vmatpush1.msra.mxu0 %v5570
      %5583 = vmatprep.subr.mxu0 0.0
      %5584 = vmatpush1.msra.mxu0 %v5573
      %5585 = vmatprep.subr.mxu0 0.0
      %5586 = vmatpush1.msra.mxu0 0.0
      %5587 = vmatprep.subr.mxu0 0.0
      %5588 = vmatpush1.msra.mxu0 0.0
      %5589 = vmatprep.subr.mxu0 0.0
      %5590 = vmatpush1.msra.mxu0 0.0
      %5591 = vmatprep.subr.mxu0 0.0
      %5592 = vmatpush1.msra.mxu0 0.0
      %5593 = vmatprep.subr.mxu0 0.0
      %5594 = vmatpush1.msra.mxu0 0.0
      %5595 = vmatprep.subr.mxu0 0.0
      %5596 = vmatpush1.msra.mxu0 0.0
      %5597 = vmatprep.subr.mxu0 0.0
      %5598 = vmatpush1.msra.mxu0 0.0
      %5599 = vmatprep.subr.mxu0 0.0
      %5600 = vmatpush1.msra.mxu0 0.0
      %5601 = vmatprep.subr.mxu0 0.0
      %5602 = vmatpush1.msra.mxu0 0.0
      %5603 = vmatprep.subr.mxu0 0.0
      %5604 = vmatpush1.msra.mxu0 0.0
      %5605 = vmatprep.subr.mxu0 0.0
      %5606 = vmatpush1.msra.mxu0 0.0
      %5607 = vmatprep.subr.mxu0 0.0
      %5608 = vmatpush1.msra.mxu0 0.0
      %5609 = vmatprep.subr.mxu0 0.0
      %5610 = vmatpush1.msra.mxu0 0.0
      %5611 = vmatprep.subr.mxu0 0.0
      %5612 = vmatpush1.msra.mxu0 0.0
      %5613 = vmatprep.subr.mxu0 0.0
      %5614 = vmatpush1.msra.mxu0 0.0
      %5615 = vmatprep.subr.mxu0 0.0
      %5616 = vmatpush1.msra.mxu0 0.0
      %5617 = vmatprep.subr.mxu0 0.0
      %5618 = vmatpush1.msra.mxu0 0.0
      %5619 = vmatprep.subr.mxu0 0.0
      %5620 = vmatpush1.msra.mxu0 0.0
      %5621 = vmatprep.subr.mxu0 0.0
      %5622 = vmatpush1.msra.mxu0 0.0
      %5623 = vmatprep.subr.mxu0 0.0
      %5624 = vmatpush1.msra.mxu0 0.0
      %5625 = vmatprep.subr.mxu0 0.0
      %5626 = vmatpush1.msra.mxu0 0.0
      %5627 = vmatprep.subr.mxu0 0.0
      %5628 = vmatpush1.msra.mxu0 0.0
      %5629 = vmatprep.subr.mxu0 0.0
      %5630 = vmatpush1.msra.mxu0 0.0
      %5631 = vmatprep.subr.mxu0 0.0
      %5632 = vmatpush1.msra.mxu0 0.0
      %5633 = vmatprep.subr.mxu0 0.0
      %5634 = vmatpush1.msra.mxu0 0.0
      %5635 = vmatprep.subr.mxu0 0.0
      %5636 = vmatpush1.msra.mxu0 0.0
      %5637 = vmatprep.subr.mxu0 0.0
      %5638 = vmatpush1.msra.mxu0 0.0
      %5639 = vmatprep.subr.mxu0 0.0
      %5640 = vmatpush1.msra.mxu0 0.0
      %5641 = vmatprep.subr.mxu0 0.0
      %5642 = vmatpush1.msra.mxu0 0.0
      %5643 = vmatprep.subr.mxu0 0.0
      %5644 = vmatpush1.msra.mxu0 0.0
      %5645 = vmatprep.mubr.f32.mxu0 0.0
      %5646 = vmatmul.mubr.f32.gmra.mrb[0].mxu0 %v5579
      %v5647 = vpop.f32.mrb[0].mxu0
      %v5648 = vadd.f32 0.0, %v5647
      %v5649 = vpop.f32.mrb[0].mxu0
      %5650 = vdwg.mxu0
      %v5651 = vadd.f32 %v5525, %v5648
      %s5652 = scalar_lea.vmem %s8, 96
      %v5653 = vld [vmem:[%s5652] sm:$0xf]
      %v5654 = vld [vmem:[%s5652 + $0x4] sm:$0xf]
      %v5657 = vunpack.c.l.b16 %v5653
      %v5658 = vunpack.c.l.b16 %v5654
      %v5659 = vpack.c.b16 %v5658, %v5657
      %5661 = vmatprep.subr.bf16.mxu0 0
      %5662 = vmatpush1.bf16.msra.mxu0 %v5659
      %5663 = vmatprep.subr.bf16.mxu0 0
      %5664 = vmatpush1.bf16.msra.mxu0 0
      %5665 = vmatprep.subr.bf16.mxu0 0
      %5666 = vmatpush1.bf16.msra.mxu0 0
      %5667 = vmatprep.subr.bf16.mxu0 0
      %5668 = vmatpush1.bf16.msra.mxu0 0
      %5669 = vmatprep.subr.bf16.mxu0 0
      %5670 = vmatpush1.bf16.msra.mxu0 0
      %5671 = vmatprep.subr.bf16.mxu0 0
      %5672 = vmatpush1.bf16.msra.mxu0 0
      %5673 = vmatprep.subr.bf16.mxu0 0
      %5674 = vmatpush1.bf16.msra.mxu0 0
      %5675 = vmatprep.subr.bf16.mxu0 0
      %5676 = vmatpush1.bf16.msra.mxu0 0
      %5677 = vmatprep.subr.bf16.mxu0 0
      %5678 = vmatpush1.bf16.msra.mxu0 0
      %5679 = vmatprep.subr.bf16.mxu0 0
      %5680 = vmatpush1.bf16.msra.mxu0 0
      %5681 = vmatprep.subr.bf16.mxu0 0
      %5682 = vmatpush1.bf16.msra.mxu0 0
      %5683 = vmatprep.subr.bf16.mxu0 0
      %5684 = vmatpush1.bf16.msra.mxu0 0
      %5685 = vmatprep.subr.bf16.mxu0 0
      %5686 = vmatpush1.bf16.msra.mxu0 0
      %5687 = vmatprep.subr.bf16.mxu0 0
      %5688 = vmatpush1.bf16.msra.mxu0 0
      %5689 = vmatprep.subr.bf16.mxu0 0
      %5690 = vmatpush1.bf16.msra.mxu0 0
      %5691 = vmatprep.subr.bf16.mxu0 0
      %5692 = vmatpush1.bf16.msra.mxu0 0
      %5693 = vmatprep.mubr.bf16.mxu0 0
      %5694 = vmatmul.mubr.bf16.gmra.mrb[0].mxu0 %v4150
      %v5695 = vpop.f32.mrb[0].mxu0
      %v5696 = vadd.f32 0.0, %v5695
      %v5697 = vpop.f32.mrb[0].mxu0
      %v5698 = vpop.f32.mrb[0].mxu0
      %v5699 = vadd.f32 0.0, %v5698
      %v5700 = vpop.f32.mrb[0].mxu0
      %5701 = vdwg.mxu0
      %s5702 = scalar_lea.vmem %s7, 96
      %v5703 = vld [vmem:[%s5702] sm:$0xff]
      %v5705 = vsel %vm4148, %v5703, 0
      %5707 = vmatprep.subr.mxu0 0.0
      %5708 = vmatpush1.msra.mxu0 %v5696
      %5709 = vmatprep.subr.mxu0 0.0
      %5710 = vmatpush1.msra.mxu0 %v5699
      %5711 = vmatprep.subr.mxu0 0.0
      %5712 = vmatpush1.msra.mxu0 0.0
      %5713 = vmatprep.subr.mxu0 0.0
      %5714 = vmatpush1.msra.mxu0 0.0
      %5715 = vmatprep.subr.mxu0 0.0
      %5716 = vmatpush1.msra.mxu0 0.0
      %5717 = vmatprep.subr.mxu0 0.0
      %5718 = vmatpush1.msra.mxu0 0.0
      %5719 = vmatprep.subr.mxu0 0.0
      %5720 = vmatpush1.msra.mxu0 0.0
      %5721 = vmatprep.subr.mxu0 0.0
      %5722 = vmatpush1.msra.mxu0 0.0
      %5723 = vmatprep.subr.mxu0 0.0
      %5724 = vmatpush1.msra.mxu0 0.0
      %5725 = vmatprep.subr.mxu0 0.0
      %5726 = vmatpush1.msra.mxu0 0.0
      %5727 = vmatprep.subr.mxu0 0.0
      %5728 = vmatpush1.msra.mxu0 0.0
      %5729 = vmatprep.subr.mxu0 0.0
      %5730 = vmatpush1.msra.mxu0 0.0
      %5731 = vmatprep.subr.mxu0 0.0
      %5732 = vmatpush1.msra.mxu0 0.0
      %5733 = vmatprep.subr.mxu0 0.0
      %5734 = vmatpush1.msra.mxu0 0.0
      %5735 = vmatprep.subr.mxu0 0.0
      %5736 = vmatpush1.msra.mxu0 0.0
      %5737 = vmatprep.subr.mxu0 0.0
      %5738 = vmatpush1.msra.mxu0 0.0
      %5739 = vmatprep.subr.mxu0 0.0
      %5740 = vmatpush1.msra.mxu0 0.0
      %5741 = vmatprep.subr.mxu0 0.0
      %5742 = vmatpush1.msra.mxu0 0.0
      %5743 = vmatprep.subr.mxu0 0.0
      %5744 = vmatpush1.msra.mxu0 0.0
      %5745 = vmatprep.subr.mxu0 0.0
      %5746 = vmatpush1.msra.mxu0 0.0
      %5747 = vmatprep.subr.mxu0 0.0
      %5748 = vmatpush1.msra.mxu0 0.0
      %5749 = vmatprep.subr.mxu0 0.0
      %5750 = vmatpush1.msra.mxu0 0.0
      %5751 = vmatprep.subr.mxu0 0.0
      %5752 = vmatpush1.msra.mxu0 0.0
      %5753 = vmatprep.subr.mxu0 0.0
      %5754 = vmatpush1.msra.mxu0 0.0
      %5755 = vmatprep.subr.mxu0 0.0
      %5756 = vmatpush1.msra.mxu0 0.0
      %5757 = vmatprep.subr.mxu0 0.0
      %5758 = vmatpush1.msra.mxu0 0.0
      %5759 = vmatprep.subr.mxu0 0.0
      %5760 = vmatpush1.msra.mxu0 0.0
      %5761 = vmatprep.subr.mxu0 0.0
      %5762 = vmatpush1.msra.mxu0 0.0
      %5763 = vmatprep.subr.mxu0 0.0
      %5764 = vmatpush1.msra.mxu0 0.0
      %5765 = vmatprep.subr.mxu0 0.0
      %5766 = vmatpush1.msra.mxu0 0.0
      %5767 = vmatprep.subr.mxu0 0.0
      %5768 = vmatpush1.msra.mxu0 0.0
      %5769 = vmatprep.subr.mxu0 0.0
      %5770 = vmatpush1.msra.mxu0 0.0
      %5771 = vmatprep.mubr.f32.mxu0 0.0
      %5772 = vmatmul.mubr.f32.gmra.mrb[0].mxu0 %v5705
      %v5773 = vpop.f32.mrb[0].mxu0
      %v5774 = vadd.f32 0.0, %v5773
      %v5775 = vpop.f32.mrb[0].mxu0
      %5776 = vdwg.mxu0
      %v5777 = vadd.f32 %v5651, %v5774
      %s5778 = scalar_lea.vmem %s8, 104
      %v5779 = vld [vmem:[%s5778] sm:$0xf]
      %v5780 = vld [vmem:[%s5778 + $0x4] sm:$0xf]
      %v5783 = vunpack.c.l.b16 %v5779
      %v5784 = vunpack.c.l.b16 %v5780
      %v5785 = vpack.c.b16 %v5784, %v5783
      %5787 = vmatprep.subr.bf16.mxu0 0
      %5788 = vmatpush1.bf16.msra.mxu0 %v5785
      %5789 = vmatprep.subr.bf16.mxu0 0
      %5790 = vmatpush1.bf16.msra.mxu0 0
      %5791 = vmatprep.subr.bf16.mxu0 0
      %5792 = vmatpush1.bf16.msra.mxu0 0
      %5793 = vmatprep.subr.bf16.mxu0 0
      %5794 = vmatpush1.bf16.msra.mxu0 0
      %5795 = vmatprep.subr.bf16.mxu0 0
      %5796 = vmatpush1.bf16.msra.mxu0 0
      %5797 = vmatprep.subr.bf16.mxu0 0
      %5798 = vmatpush1.bf16.msra.mxu0 0
      %5799 = vmatprep.subr.bf16.mxu0 0
      %5800 = vmatpush1.bf16.msra.mxu0 0
      %5801 = vmatprep.subr.bf16.mxu0 0
      %5802 = vmatpush1.bf16.msra.mxu0 0
      %5803 = vmatprep.subr.bf16.mxu0 0
      %5804 = vmatpush1.bf16.msra.mxu0 0
      %5805 = vmatprep.subr.bf16.mxu0 0
      %5806 = vmatpush1.bf16.msra.mxu0 0
      %5807 = vmatprep.subr.bf16.mxu0 0
      %5808 = vmatpush1.bf16.msra.mxu0 0
      %5809 = vmatprep.subr.bf16.mxu0 0
      %5810 = vmatpush1.bf16.msra.mxu0 0
      %5811 = vmatprep.subr.bf16.mxu0 0
      %5812 = vmatpush1.bf16.msra.mxu0 0
      %5813 = vmatprep.subr.bf16.mxu0 0
      %5814 = vmatpush1.bf16.msra.mxu0 0
      %5815 = vmatprep.subr.bf16.mxu0 0
      %5816 = vmatpush1.bf16.msra.mxu0 0
      %5817 = vmatprep.subr.bf16.mxu0 0
      %5818 = vmatpush1.bf16.msra.mxu0 0
      %5819 = vmatprep.mubr.bf16.mxu0 0
      %5820 = vmatmul.mubr.bf16.gmra.mrb[0].mxu0 %v4150
      %v5821 = vpop.f32.mrb[0].mxu0
      %v5822 = vadd.f32 0.0, %v5821
      %v5823 = vpop.f32.mrb[0].mxu0
      %v5824 = vpop.f32.mrb[0].mxu0
      %v5825 = vadd.f32 0.0, %v5824
      %v5826 = vpop.f32.mrb[0].mxu0
      %5827 = vdwg.mxu0
      %s5828 = scalar_lea.vmem %s7, 104
      %v5829 = vld [vmem:[%s5828] sm:$0xff]
      %v5831 = vsel %vm4148, %v5829, 0
      %5833 = vmatprep.subr.mxu0 0.0
      %5834 = vmatpush1.msra.mxu0 %v5822
      %5835 = vmatprep.subr.mxu0 0.0
      %5836 = vmatpush1.msra.mxu0 %v5825
      %5837 = vmatprep.subr.mxu0 0.0
      %5838 = vmatpush1.msra.mxu0 0.0
      %5839 = vmatprep.subr.mxu0 0.0
      %5840 = vmatpush1.msra.mxu0 0.0
      %5841 = vmatprep.subr.mxu0 0.0
      %5842 = vmatpush1.msra.mxu0 0.0
      %5843 = vmatprep.subr.mxu0 0.0
      %5844 = vmatpush1.msra.mxu0 0.0
      %5845 = vmatprep.subr.mxu0 0.0
      %5846 = vmatpush1.msra.mxu0 0.0
      %5847 = vmatprep.subr.mxu0 0.0
      %5848 = vmatpush1.msra.mxu0 0.0
      %5849 = vmatprep.subr.mxu0 0.0
      %5850 = vmatpush1.msra.mxu0 0.0
      %5851 = vmatprep.subr.mxu0 0.0
      %5852 = vmatpush1.msra.mxu0 0.0
      %5853 = vmatprep.subr.mxu0 0.0
      %5854 = vmatpush1.msra.mxu0 0.0
      %5855 = vmatprep.subr.mxu0 0.0
      %5856 = vmatpush1.msra.mxu0 0.0
      %5857 = vmatprep.subr.mxu0 0.0
      %5858 = vmatpush1.msra.mxu0 0.0
      %5859 = vmatprep.subr.mxu0 0.0
      %5860 = vmatpush1.msra.mxu0 0.0
      %5861 = vmatprep.subr.mxu0 0.0
      %5862 = vmatpush1.msra.mxu0 0.0
      %5863 = vmatprep.subr.mxu0 0.0
      %5864 = vmatpush1.msra.mxu0 0.0
      %5865 = vmatprep.subr.mxu0 0.0
      %5866 = vmatpush1.msra.mxu0 0.0
      %5867 = vmatprep.subr.mxu0 0.0
      %5868 = vmatpush1.msra.mxu0 0.0
      %5869 = vmatprep.subr.mxu0 0.0
      %5870 = vmatpush1.msra.mxu0 0.0
      %5871 = vmatprep.subr.mxu0 0.0
      %5872 = vmatpush1.msra.mxu0 0.0
      %5873 = vmatprep.subr.mxu0 0.0
      %5874 = vmatpush1.msra.mxu0 0.0
      %5875 = vmatprep.subr.mxu0 0.0
      %5876 = vmatpush1.msra.mxu0 0.0
      %5877 = vmatprep.subr.mxu0 0.0
      %5878 = vmatpush1.msra.mxu0 0.0
      %5879 = vmatprep.subr.mxu0 0.0
      %5880 = vmatpush1.msra.mxu0 0.0
      %5881 = vmatprep.subr.mxu0 0.0
      %5882 = vmatpush1.msra.mxu0 0.0
      %5883 = vmatprep.subr.mxu0 0.0
      %5884 = vmatpush1.msra.mxu0 0.0
      %5885 = vmatprep.subr.mxu0 0.0
      %5886 = vmatpush1.msra.mxu0 0.0
      %5887 = vmatprep.subr.mxu0 0.0
      %5888 = vmatpush1.msra.mxu0 0.0
      %5889 = vmatprep.subr.mxu0 0.0
      %5890 = vmatpush1.msra.mxu0 0.0
      %5891 = vmatprep.subr.mxu0 0.0
      %5892 = vmatpush1.msra.mxu0 0.0
      %5893 = vmatprep.subr.mxu0 0.0
      %5894 = vmatpush1.msra.mxu0 0.0
      %5895 = vmatprep.subr.mxu0 0.0
      %5896 = vmatpush1.msra.mxu0 0.0
      %5897 = vmatprep.mubr.f32.mxu0 0.0
      %5898 = vmatmul.mubr.f32.gmra.mrb[0].mxu0 %v5831
      %v5899 = vpop.f32.mrb[0].mxu0
      %v5900 = vadd.f32 0.0, %v5899
      %v5901 = vpop.f32.mrb[0].mxu0
      %5902 = vdwg.mxu0
      %v5903 = vadd.f32 %v5777, %v5900
      %s5904 = scalar_lea.vmem %s8, 112
      %v5905 = vld [vmem:[%s5904] sm:$0xf]
      %v5906 = vld [vmem:[%s5904 + $0x4] sm:$0xf]
      %v5909 = vunpack.c.l.b16 %v5905
      %v5910 = vunpack.c.l.b16 %v5906
      %v5911 = vpack.c.b16 %v5910, %v5909
      %5913 = vmatprep.subr.bf16.mxu0 0
      %5914 = vmatpush1.bf16.msra.mxu0 %v5911
      %5915 = vmatprep.subr.bf16.mxu0 0
      %5916 = vmatpush1.bf16.msra.mxu0 0
      %5917 = vmatprep.subr.bf16.mxu0 0
      %5918 = vmatpush1.bf16.msra.mxu0 0
      %5919 = vmatprep.subr.bf16.mxu0 0
      %5920 = vmatpush1.bf16.msra.mxu0 0
      %5921 = vmatprep.subr.bf16.mxu0 0
      %5922 = vmatpush1.bf16.msra.mxu0 0
      %5923 = vmatprep.subr.bf16.mxu0 0
      %5924 = vmatpush1.bf16.msra.mxu0 0
      %5925 = vmatprep.subr.bf16.mxu0 0
      %5926 = vmatpush1.bf16.msra.mxu0 0
      %5927 = vmatprep.subr.bf16.mxu0 0
      %5928 = vmatpush1.bf16.msra.mxu0 0
      %5929 = vmatprep.subr.bf16.mxu0 0
      %5930 = vmatpush1.bf16.msra.mxu0 0
      %5931 = vmatprep.subr.bf16.mxu0 0
      %5932 = vmatpush1.bf16.msra.mxu0 0
      %5933 = vmatprep.subr.bf16.mxu0 0
      %5934 = vmatpush1.bf16.msra.mxu0 0
      %5935 = vmatprep.subr.bf16.mxu0 0
      %5936 = vmatpush1.bf16.msra.mxu0 0
      %5937 = vmatprep.subr.bf16.mxu0 0
      %5938 = vmatpush1.bf16.msra.mxu0 0
      %5939 = vmatprep.subr.bf16.mxu0 0
      %5940 = vmatpush1.bf16.msra.mxu0 0
      %5941 = vmatprep.subr.bf16.mxu0 0
      %5942 = vmatpush1.bf16.msra.mxu0 0
      %5943 = vmatprep.subr.bf16.mxu0 0
      %5944 = vmatpush1.bf16.msra.mxu0 0
      %5945 = vmatprep.mubr.bf16.mxu0 0
      %5946 = vmatmul.mubr.bf16.gmra.mrb[0].mxu0 %v4150
      %v5947 = vpop.f32.mrb[0].mxu0
      %v5948 = vadd.f32 0.0, %v5947
      %v5949 = vpop.f32.mrb[0].mxu0
      %v5950 = vpop.f32.mrb[0].mxu0
      %v5951 = vadd.f32 0.0, %v5950
      %v5952 = vpop.f32.mrb[0].mxu0
      %5953 = vdwg.mxu0
      %s5954 = scalar_lea.vmem %s7, 112
      %v5955 = vld [vmem:[%s5954] sm:$0xff]
      %v5957 = vsel %vm4148, %v5955, 0
      %5959 = vmatprep.subr.mxu0 0.0
      %5960 = vmatpush1.msra.mxu0 %v5948
      %5961 = vmatprep.subr.mxu0 0.0
      %5962 = vmatpush1.msra.mxu0 %v5951
      %5963 = vmatprep.subr.mxu0 0.0
      %5964 = vmatpush1.msra.mxu0 0.0
      %5965 = vmatprep.subr.mxu0 0.0
      %5966 = vmatpush1.msra.mxu0 0.0
      %5967 = vmatprep.subr.mxu0 0.0
      %5968 = vmatpush1.msra.mxu0 0.0
      %5969 = vmatprep.subr.mxu0 0.0
      %5970 = vmatpush1.msra.mxu0 0.0
      %5971 = vmatprep.subr.mxu0 0.0
      %5972 = vmatpush1.msra.mxu0 0.0
      %5973 = vmatprep.subr.mxu0 0.0
      %5974 = vmatpush1.msra.mxu0 0.0
      %5975 = vmatprep.subr.mxu0 0.0
      %5976 = vmatpush1.msra.mxu0 0.0
      %5977 = vmatprep.subr.mxu0 0.0
      %5978 = vmatpush1.msra.mxu0 0.0
      %5979 = vmatprep.subr.mxu0 0.0
      %5980 = vmatpush1.msra.mxu0 0.0
      %5981 = vmatprep.subr.mxu0 0.0
      %5982 = vmatpush1.msra.mxu0 0.0
      %5983 = vmatprep.subr.mxu0 0.0
      %5984 = vmatpush1.msra.mxu0 0.0
      %5985 = vmatprep.subr.mxu0 0.0
      %5986 = vmatpush1.msra.mxu0 0.0
      %5987 = vmatprep.subr.mxu0 0.0
      %5988 = vmatpush1.msra.mxu0 0.0
      %5989 = vmatprep.subr.mxu0 0.0
      %5990 = vmatpush1.msra.mxu0 0.0
      %5991 = vmatprep.subr.mxu0 0.0
      %5992 = vmatpush1.msra.mxu0 0.0
      %5993 = vmatprep.subr.mxu0 0.0
      %5994 = vmatpush1.msra.mxu0 0.0
      %5995 = vmatprep.subr.mxu0 0.0
      %5996 = vmatpush1.msra.mxu0 0.0
      %5997 = vmatprep.subr.mxu0 0.0
      %5998 = vmatpush1.msra.mxu0 0.0
      %5999 = vmatprep.subr.mxu0 0.0
      %6000 = vmatpush1.msra.mxu0 0.0
      %6001 = vmatprep.subr.mxu0 0.0
      %6002 = vmatpush1.msra.mxu0 0.0
      %6003 = vmatprep.subr.mxu0 0.0
      %6004 = vmatpush1.msra.mxu0 0.0
      %6005 = vmatprep.subr.mxu0 0.0
      %6006 = vmatpush1.msra.mxu0 0.0
      %6007 = vmatprep.subr.mxu0 0.0
      %6008 = vmatpush1.msra.mxu0 0.0
      %6009 = vmatprep.subr.mxu0 0.0
      %6010 = vmatpush1.msra.mxu0 0.0
      %6011 = vmatprep.subr.mxu0 0.0
      %6012 = vmatpush1.msra.mxu0 0.0
      %6013 = vmatprep.subr.mxu0 0.0
      %6014 = vmatpush1.msra.mxu0 0.0
      %6015 = vmatprep.subr.mxu0 0.0
      %6016 = vmatpush1.msra.mxu0 0.0
      %6017 = vmatprep.subr.mxu0 0.0
      %6018 = vmatpush1.msra.mxu0 0.0
      %6019 = vmatprep.subr.mxu0 0.0
      %6020 = vmatpush1.msra.mxu0 0.0
      %6021 = vmatprep.subr.mxu0 0.0
      %6022 = vmatpush1.msra.mxu0 0.0
      %6023 = vmatprep.mubr.f32.mxu0 0.0
      %6024 = vmatmul.mubr.f32.gmra.mrb[0].mxu0 %v5957
      %v6025 = vpop.f32.mrb[0].mxu0
      %v6026 = vadd.f32 0.0, %v6025
      %v6027 = vpop.f32.mrb[0].mxu0
      %6028 = vdwg.mxu0
      %v6029 = vadd.f32 %v5903, %v6026
      %s6030 = scalar_lea.vmem %s8, 120
      %v6031 = vld [vmem:[%s6030] sm:$0xf]
      %v6032 = vld [vmem:[%s6030 + $0x4] sm:$0xf]
      %v6035 = vunpack.c.l.b16 %v6031
      %v6036 = vunpack.c.l.b16 %v6032
      %v6037 = vpack.c.b16 %v6036, %v6035
      %6039 = vmatprep.subr.bf16.mxu0 0
      %6040 = vmatpush1.bf16.msra.mxu0 %v6037
      %6041 = vmatprep.subr.bf16.mxu0 0
      %6042 = vmatpush1.bf16.msra.mxu0 0
      %6043 = vmatprep.subr.bf16.mxu0 0
      %6044 = vmatpush1.bf16.msra.mxu0 0
      %6045 = vmatprep.subr.bf16.mxu0 0
      %6046 = vmatpush1.bf16.msra.mxu0 0
      %6047 = vmatprep.subr.bf16.mxu0 0
      %6048 = vmatpush1.bf16.msra.mxu0 0
      %6049 = vmatprep.subr.bf16.mxu0 0
      %6050 = vmatpush1.bf16.msra.mxu0 0
      %6051 = vmatprep.subr.bf16.mxu0 0
      %6052 = vmatpush1.bf16.msra.mxu0 0
      %6053 = vmatprep.subr.bf16.mxu0 0
      %6054 = vmatpush1.bf16.msra.mxu0 0
      %6055 = vmatprep.subr.bf16.mxu0 0
      %6056 = vmatpush1.bf16.msra.mxu0 0
      %6057 = vmatprep.subr.bf16.mxu0 0
      %6058 = vmatpush1.bf16.msra.mxu0 0
      %6059 = vmatprep.subr.bf16.mxu0 0
      %6060 = vmatpush1.bf16.msra.mxu0 0
      %6061 = vmatprep.subr.bf16.mxu0 0
      %6062 = vmatpush1.bf16.msra.mxu0 0
      %6063 = vmatprep.subr.bf16.mxu0 0
      %6064 = vmatpush1.bf16.msra.mxu0 0
      %6065 = vmatprep.subr.bf16.mxu0 0
      %6066 = vmatpush1.bf16.msra.mxu0 0
      %6067 = vmatprep.subr.bf16.mxu0 0
      %6068 = vmatpush1.bf16.msra.mxu0 0
      %6069 = vmatprep.subr.bf16.mxu0 0
      %6070 = vmatpush1.bf16.msra.mxu0 0
      %6071 = vmatprep.mubr.bf16.mxu0 0
      %6072 = vmatmul.mubr.bf16.gmra.mrb[0].mxu0 %v4150
      %v6073 = vpop.f32.mrb[0].mxu0
      %v6074 = vadd.f32 0.0, %v6073
      %v6075 = vpop.f32.mrb[0].mxu0
      %v6076 = vpop.f32.mrb[0].mxu0
      %v6077 = vadd.f32 0.0, %v6076
      %v6078 = vpop.f32.mrb[0].mxu0
      %6079 = vdwg.mxu0
      %s6080 = scalar_lea.vmem %s7, 120
      %v6081 = vld [vmem:[%s6080] sm:$0xff]
      %v6083 = vsel %vm4148, %v6081, 0
      %6085 = vmatprep.subr.mxu0 0.0
      %6086 = vmatpush1.msra.mxu0 %v6074
      %6087 = vmatprep.subr.mxu0 0.0
      %6088 = vmatpush1.msra.mxu0 %v6077
      %6089 = vmatprep.subr.mxu0 0.0
      %6090 = vmatpush1.msra.mxu0 0.0
      %6091 = vmatprep.subr.mxu0 0.0
      %6092 = vmatpush1.msra.mxu0 0.0
      %6093 = vmatprep.subr.mxu0 0.0
      %6094 = vmatpush1.msra.mxu0 0.0
      %6095 = vmatprep.subr.mxu0 0.0
      %6096 = vmatpush1.msra.mxu0 0.0
      %6097 = vmatprep.subr.mxu0 0.0
      %6098 = vmatpush1.msra.mxu0 0.0
      %6099 = vmatprep.subr.mxu0 0.0
      %6100 = vmatpush1.msra.mxu0 0.0
      %6101 = vmatprep.subr.mxu0 0.0
      %6102 = vmatpush1.msra.mxu0 0.0
      %6103 = vmatprep.subr.mxu0 0.0
      %6104 = vmatpush1.msra.mxu0 0.0
      %6105 = vmatprep.subr.mxu0 0.0
      %6106 = vmatpush1.msra.mxu0 0.0
      %6107 = vmatprep.subr.mxu0 0.0
      %6108 = vmatpush1.msra.mxu0 0.0
      %6109 = vmatprep.subr.mxu0 0.0
      %6110 = vmatpush1.msra.mxu0 0.0
      %6111 = vmatprep.subr.mxu0 0.0
      %6112 = vmatpush1.msra.mxu0 0.0
      %6113 = vmatprep.subr.mxu0 0.0
      %6114 = vmatpush1.msra.mxu0 0.0
      %6115 = vmatprep.subr.mxu0 0.0
      %6116 = vmatpush1.msra.mxu0 0.0
      %6117 = vmatprep.subr.mxu0 0.0
      %6118 = vmatpush1.msra.mxu0 0.0
      %6119 = vmatprep.subr.mxu0 0.0
      %6120 = vmatpush1.msra.mxu0 0.0
      %6121 = vmatprep.subr.mxu0 0.0
      %6122 = vmatpush1.msra.mxu0 0.0
      %6123 = vmatprep.subr.mxu0 0.0
      %6124 = vmatpush1.msra.mxu0 0.0
      %6125 = vmatprep.subr.mxu0 0.0
      %6126 = vmatpush1.msra.mxu0 0.0
      %6127 = vmatprep.subr.mxu0 0.0
      %6128 = vmatpush1.msra.mxu0 0.0
      %6129 = vmatprep.subr.mxu0 0.0
      %6130 = vmatpush1.msra.mxu0 0.0
      %6131 = vmatprep.subr.mxu0 0.0
      %6132 = vmatpush1.msra.mxu0 0.0
      %6133 = vmatprep.subr.mxu0 0.0
      %6134 = vmatpush1.msra.mxu0 0.0
      %6135 = vmatprep.subr.mxu0 0.0
      %6136 = vmatpush1.msra.mxu0 0.0
      %6137 = vmatprep.subr.mxu0 0.0
      %6138 = vmatpush1.msra.mxu0 0.0
      %6139 = vmatprep.subr.mxu0 0.0
      %6140 = vmatpush1.msra.mxu0 0.0
      %6141 = vmatprep.subr.mxu0 0.0
      %6142 = vmatpush1.msra.mxu0 0.0
      %6143 = vmatprep.subr.mxu0 0.0
      %6144 = vmatpush1.msra.mxu0 0.0
      %6145 = vmatprep.subr.mxu0 0.0
      %6146 = vmatpush1.msra.mxu0 0.0
      %6147 = vmatprep.subr.mxu0 0.0
      %6148 = vmatpush1.msra.mxu0 0.0
      %6149 = vmatprep.mubr.f32.mxu0 0.0
      %6150 = vmatmul.mubr.f32.gmra.mrb[0].mxu0 %v6083
      %v6151 = vpop.f32.mrb[0].mxu0
      %v6152 = vadd.f32 0.0, %v6151
      %v6153 = vpop.f32.mrb[0].mxu0
      %6154 = vdwg.mxu0
      %v6155 = vadd.f32 %v6029, %v6152
      %v6156 = vld [vmem:[%s9] sm:$0xff]
      %6158 = vset.pattern.permute.xlu0 0
      %6159 = vperm.xlu0 %6158, %v6156
      %v6160 = vpop.permute.xlu0 %6159
      %v6162 = vadd.f32 %v6155, %v6160
      %v6163 = vmax.f32 %v6162, 0.0
      %v6164 = vpack.c.bf16 %v6163, %v6163
      %v6165 = vld [vmem:[%s11] sm:$0xff]
      %v6166 = vld [vmem:[%s11 + $0x8] sm:$0xff]
      %v6167 = vld [vmem:[%s11 + $0x10] sm:$0xff]
      %v6168 = vld [vmem:[%s11 + $0x18] sm:$0xff]
      %v6169 = vld [vmem:[%s11 + $0x20] sm:$0xff]
      %v6170 = vld [vmem:[%s11 + $0x28] sm:$0xff]
      %v6171 = vld [vmem:[%s11 + $0x30] sm:$0xff]
      %v6172 = vld [vmem:[%s11 + $0x38] sm:$0xff]
      %v6181 = vunpack.c.l.b16 %v6165
      %v6182 = vunpack.c.h.b16 %v6165
      %v6183 = vunpack.c.l.b16 %v6166
      %v6184 = vunpack.c.h.b16 %v6166
      %v6185 = vunpack.c.l.b16 %v6167
      %v6186 = vunpack.c.h.b16 %v6167
      %v6187 = vunpack.c.l.b16 %v6168
      %v6188 = vunpack.c.h.b16 %v6168
      %v6189 = vunpack.c.l.b16 %v6169
      %v6190 = vunpack.c.h.b16 %v6169
      %v6191 = vunpack.c.l.b16 %v6170
      %v6192 = vunpack.c.h.b16 %v6170
      %v6193 = vunpack.c.l.b16 %v6171
      %v6194 = vunpack.c.h.b16 %v6171
      %v6195 = vunpack.c.l.b16 %v6172
      %v6196 = vunpack.c.h.b16 %v6172
      %v6197 = vpack.c.b16 %v6183, %v6181
      %v6198 = vpack.c.b16 %v6184, %v6182
      %v6199 = vpack.c.b16 %v6187, %v6185
      %v6200 = vpack.c.b16 %v6188, %v6186
      %v6201 = vpack.c.b16 %v6191, %v6189
      %v6202 = vpack.c.b16 %v6192, %v6190
      %v6203 = vpack.c.b16 %v6195, %v6193
      %v6204 = vpack.c.b16 %v6196, %v6194
      %v6214 = vsel %vm2721, %v6164, 0
      %6216 = vmatprep.subr.bf16.mxu0 %v6198
      %6217 = vmatpush1.bf16.msra.mxu0 %v6197
      %6218 = vmatprep.subr.bf16.mxu0 %v6200
      %6219 = vmatpush1.bf16.msra.mxu0 %v6199
      %6220 = vmatprep.subr.bf16.mxu0 %v6202
      %6221 = vmatpush1.bf16.msra.mxu0 %v6201
      %6222 = vmatprep.subr.bf16.mxu0 %v6204
      %6223 = vmatpush1.bf16.msra.mxu0 %v6203
      %6224 = vmatprep.subr.bf16.mxu0 0
      %6225 = vmatpush1.bf16.msra.mxu0 0
      %6226 = vmatprep.subr.bf16.mxu0 0
      %6227 = vmatpush1.bf16.msra.mxu0 0
      %6228 = vmatprep.subr.bf16.mxu0 0
      %6229 = vmatpush1.bf16.msra.mxu0 0
      %6230 = vmatprep.subr.bf16.mxu0 0
      %6231 = vmatpush1.bf16.msra.mxu0 0
      %6232 = vmatprep.subr.bf16.mxu0 0
      %6233 = vmatpush1.bf16.msra.mxu0 0
      %6234 = vmatprep.subr.bf16.mxu0 0
      %6235 = vmatpush1.bf16.msra.mxu0 0
      %6236 = vmatprep.subr.bf16.mxu0 0
      %6237 = vmatpush1.bf16.msra.mxu0 0
      %6238 = vmatprep.subr.bf16.mxu0 0
      %6239 = vmatpush1.bf16.msra.mxu0 0
      %6240 = vmatprep.subr.bf16.mxu0 0
      %6241 = vmatpush1.bf16.msra.mxu0 0
      %6242 = vmatprep.subr.bf16.mxu0 0
      %6243 = vmatpush1.bf16.msra.mxu0 0
      %6244 = vmatprep.subr.bf16.mxu0 0
      %6245 = vmatpush1.bf16.msra.mxu0 0
      %6246 = vmatprep.subr.bf16.mxu0 0
      %6247 = vmatpush1.bf16.msra.mxu0 0
      %6248 = vmatprep.mubr.bf16.mxu0 0
      %6249 = vmatmul.mubr.bf16.gmra.mrb[0].mxu0 %v6214
      %v6250 = vpop.f32.mrb[0].mxu0
      %v6251 = vadd.f32 0.0, %v6250
      %v6252 = vpop.f32.mrb[0].mxu0
      %v6253 = vadd.f32 0.0, %v6252
      %v6254 = vpop.f32.mrb[0].mxu0
      %v6255 = vpop.f32.mrb[0].mxu0
      %6256 = vdwg.mxu0
      %v6257 = vld [vmem:[%s10] sm:$0x7]
      %s6258 = scalar_lea.vmem %s11, 64
      %v6259 = vld [vmem:[%s6258] sm:$0xff]
      %v6260 = vld [vmem:[%s6258 + $0x8] sm:$0xff]
      %v6261 = vld [vmem:[%s6258 + $0x10] sm:$0xff]
      %v6262 = vld [vmem:[%s6258 + $0x18] sm:$0xff]
      %v6263 = vld [vmem:[%s6258 + $0x20] sm:$0xff]
      %v6264 = vld [vmem:[%s6258 + $0x28] sm:$0xff]
      %v6265 = vld [vmem:[%s6258 + $0x30] sm:$0xff]
      %v6266 = vld [vmem:[%s6258 + $0x38] sm:$0xff]
      %v6275 = vunpack.c.l.b16 %v6259
      %v6276 = vunpack.c.h.b16 %v6259
      %v6277 = vunpack.c.l.b16 %v6260
      %v6278 = vunpack.c.h.b16 %v6260
      %v6279 = vunpack.c.l.b16 %v6261
      %v6280 = vunpack.c.h.b16 %v6261
      %v6281 = vunpack.c.l.b16 %v6262
      %v6282 = vunpack.c.h.b16 %v6262
      %v6283 = vunpack.c.l.b16 %v6263
      %v6284 = vunpack.c.h.b16 %v6263
      %v6285 = vunpack.c.l.b16 %v6264
      %v6286 = vunpack.c.h.b16 %v6264
      %v6287 = vunpack.c.l.b16 %v6265
      %v6288 = vunpack.c.h.b16 %v6265
      %v6289 = vunpack.c.l.b16 %v6266
      %v6290 = vunpack.c.h.b16 %v6266
      %v6291 = vpack.c.b16 %v6277, %v6275
      %v6292 = vpack.c.b16 %v6278, %v6276
      %v6293 = vpack.c.b16 %v6281, %v6279
      %v6294 = vpack.c.b16 %v6282, %v6280
      %v6295 = vpack.c.b16 %v6285, %v6283
      %v6296 = vpack.c.b16 %v6286, %v6284
      %v6297 = vpack.c.b16 %v6289, %v6287
      %v6298 = vpack.c.b16 %v6290, %v6288
      %6307 = vmatprep.subr.bf16.mxu0 %v6292
      %6308 = vmatpush1.bf16.msra.mxu0 %v6291
      %6309 = vmatprep.subr.bf16.mxu0 %v6294
      %6310 = vmatpush1.bf16.msra.mxu0 %v6293
      %6311 = vmatprep.subr.bf16.mxu0 %v6296
      %6312 = vmatpush1.bf16.msra.mxu0 %v6295
      %6313 = vmatprep.subr.bf16.mxu0 %v6298
      %6314 = vmatpush1.bf16.msra.mxu0 %v6297
      %6315 = vmatprep.subr.bf16.mxu0 0
      %6316 = vmatpush1.bf16.msra.mxu0 0
      %6317 = vmatprep.subr.bf16.mxu0 0
      %6318 = vmatpush1.bf16.msra.mxu0 0
      %6319 = vmatprep.subr.bf16.mxu0 0
      %6320 = vmatpush1.bf16.msra.mxu0 0
      %6321 = vmatprep.subr.bf16.mxu0 0
      %6322 = vmatpush1.bf16.msra.mxu0 0
      %6323 = vmatprep.subr.bf16.mxu0 0
      %6324 = vmatpush1.bf16.msra.mxu0 0
      %6325 = vmatprep.subr.bf16.mxu0 0
      %6326 = vmatpush1.bf16.msra.mxu0 0
      %6327 = vmatprep.subr.bf16.mxu0 0
      %6328 = vmatpush1.bf16.msra.mxu0 0
      %6329 = vmatprep.subr.bf16.mxu0 0
      %6330 = vmatpush1.bf16.msra.mxu0 0
      %6331 = vmatprep.subr.bf16.mxu0 0
      %6332 = vmatpush1.bf16.msra.mxu0 0
      %6333 = vmatprep.subr.bf16.mxu0 0
      %6334 = vmatpush1.bf16.msra.mxu0 0
      %6335 = vmatprep.subr.bf16.mxu0 0
      %6336 = vmatpush1.bf16.msra.mxu0 0
      %6337 = vmatprep.subr.bf16.mxu0 0
      %6338 = vmatpush1.bf16.msra.mxu0 0
      %6339 = vmatprep.mubr.bf16.mxu0 0
      %6340 = vmatmul.mubr.bf16.gmra.mrb[0].mxu0 %v6214
      %v6341 = vpop.f32.mrb[0].mxu0
      %v6342 = vadd.f32 0.0, %v6341
      %v6343 = vpop.f32.mrb[0].mxu0
      %v6344 = vadd.f32 0.0, %v6343
      %v6345 = vpop.f32.mrb[0].mxu0
      %v6346 = vpop.f32.mrb[0].mxu0
      %6347 = vdwg.mxu0
      %s6348 = scalar_lea.vmem %s10, 4
      %v6349 = vld [vmem:[%s6348] sm:$0x7]
      %v6351 = vsel %vm2843, %v6349, 0
      %6353 = vmatprep.subr.mxu0 %v6344
      %6354 = vmatpush1.msra.mxu0 %v6342
      %6355 = vmatprep.subr.mxu0 0.0
      %6356 = vmatpush1.msra.mxu0 0.0
      %6357 = vmatprep.subr.mxu0 0.0
      %6358 = vmatpush1.msra.mxu0 0.0
      %6359 = vmatprep.subr.mxu0 0.0
      %6360 = vmatpush1.msra.mxu0 0.0
      %6361 = vmatprep.subr.mxu0 0.0
      %6362 = vmatpush1.msra.mxu0 0.0
      %6363 = vmatprep.subr.mxu0 0.0
      %6364 = vmatpush1.msra.mxu0 0.0
      %6365 = vmatprep.subr.mxu0 0.0
      %6366 = vmatpush1.msra.mxu0 0.0
      %6367 = vmatprep.subr.mxu0 0.0
      %6368 = vmatpush1.msra.mxu0 0.0
      %6369 = vmatprep.subr.mxu0 0.0
      %6370 = vmatpush1.msra.mxu0 0.0
      %6371 = vmatprep.subr.mxu0 0.0
      %6372 = vmatpush1.msra.mxu0 0.0
      %6373 = vmatprep.subr.mxu0 0.0
      %6374 = vmatpush1.msra.mxu0 0.0
      %6375 = vmatprep.subr.mxu0 0.0
      %6376 = vmatpush1.msra.mxu0 0.0
      %6377 = vmatprep.subr.mxu0 0.0
      %6378 = vmatpush1.msra.mxu0 0.0
      %6379 = vmatprep.subr.mxu0 0.0
      %6380 = vmatpush1.msra.mxu0 0.0
      %6381 = vmatprep.subr.mxu0 0.0
      %6382 = vmatpush1.msra.mxu0 0.0
      %6383 = vmatprep.subr.mxu0 0.0
      %6384 = vmatpush1.msra.mxu0 0.0
      %6385 = vmatprep.subr.mxu0 0.0
      %6386 = vmatpush1.msra.mxu0 0.0
      %6387 = vmatprep.subr.mxu0 0.0
      %6388 = vmatpush1.msra.mxu0 0.0
      %6389 = vmatprep.subr.mxu0 0.0
      %6390 = vmatpush1.msra.mxu0 0.0
      %6391 = vmatprep.subr.mxu0 0.0
      %6392 = vmatpush1.msra.mxu0 0.0
      %6393 = vmatprep.subr.mxu0 0.0
      %6394 = vmatpush1.msra.mxu0 0.0
      %6395 = vmatprep.subr.mxu0 0.0
      %6396 = vmatpush1.msra.mxu0 0.0
      %6397 = vmatprep.subr.mxu0 0.0
      %6398 = vmatpush1.msra.mxu0 0.0
      %6399 = vmatprep.subr.mxu0 0.0
      %6400 = vmatpush1.msra.mxu0 0.0
      %6401 = vmatprep.subr.mxu0 0.0
      %6402 = vmatpush1.msra.mxu0 0.0
      %6403 = vmatprep.subr.mxu0 0.0
      %6404 = vmatpush1.msra.mxu0 0.0
      %6405 = vmatprep.subr.mxu0 0.0
      %6406 = vmatpush1.msra.mxu0 0.0
      %6407 = vmatprep.subr.mxu0 0.0
      %6408 = vmatpush1.msra.mxu0 0.0
      %6409 = vmatprep.subr.mxu0 0.0
      %6410 = vmatpush1.msra.mxu0 0.0
      %6411 = vmatprep.subr.mxu0 0.0
      %6412 = vmatpush1.msra.mxu0 0.0
      %6413 = vmatprep.subr.mxu0 0.0
      %6414 = vmatpush1.msra.mxu0 0.0
      %6415 = vmatprep.subr.mxu0 0.0
      %6416 = vmatpush1.msra.mxu0 0.0
      %6417 = vmatprep.mubr.f32.mxu0 0.0
      %6418 = vmatmul.mubr.f32.gmra.mrb[0].mxu0 %v6351
      %v6419 = vpop.f32.mrb[0].mxu0
      %v6420 = vadd.f32 0.0, %v6419
      %v6421 = vpop.f32.mrb[0].mxu0
      %v6422 = vadd.f32 0.0, %v6421
      %6423 = vdwg.mxu0
      %v6425 = vsel %vm2843, %v6257, 0
      %6427 = vmatprep.subr.mxu0 %v6253
      %6428 = vmatpush1.msra.mxu0 %v6251
      %6429 = vmatprep.subr.mxu0 0.0
      %6430 = vmatpush1.msra.mxu0 0.0
      %6431 = vmatprep.subr.mxu0 0.0
      %6432 = vmatpush1.msra.mxu0 0.0
      %6433 = vmatprep.subr.mxu0 0.0
      %6434 = vmatpush1.msra.mxu0 0.0
      %6435 = vmatprep.subr.mxu0 0.0
      %6436 = vmatpush1.msra.mxu0 0.0
      %6437 = vmatprep.subr.mxu0 0.0
      %6438 = vmatpush1.msra.mxu0 0.0
      %6439 = vmatprep.subr.mxu0 0.0
      %6440 = vmatpush1.msra.mxu0 0.0
      %6441 = vmatprep.subr.mxu0 0.0
      %6442 = vmatpush1.msra.mxu0 0.0
      %6443 = vmatprep.subr.mxu0 0.0
      %6444 = vmatpush1.msra.mxu0 0.0
      %6445 = vmatprep.subr.mxu0 0.0
      %6446 = vmatpush1.msra.mxu0 0.0
      %6447 = vmatprep.subr.mxu0 0.0
      %6448 = vmatpush1.msra.mxu0 0.0
      %6449 = vmatprep.subr.mxu0 0.0
      %6450 = vmatpush1.msra.mxu0 0.0
      %6451 = vmatprep.subr.mxu0 0.0
      %6452 = vmatpush1.msra.mxu0 0.0
      %6453 = vmatprep.subr.mxu0 0.0
      %6454 = vmatpush1.msra.mxu0 0.0
      %6455 = vmatprep.subr.mxu0 0.0
      %6456 = vmatpush1.msra.mxu0 0.0
      %6457 = vmatprep.subr.mxu0 0.0
      %6458 = vmatpush1.msra.mxu0 0.0
      %6459 = vmatprep.subr.mxu0 0.0
      %6460 = vmatpush1.msra.mxu0 0.0
      %6461 = vmatprep.subr.mxu0 0.0
      %6462 = vmatpush1.msra.mxu0 0.0
      %6463 = vmatprep.subr.mxu0 0.0
      %6464 = vmatpush1.msra.mxu0 0.0
      %6465 = vmatprep.subr.mxu0 0.0
      %6466 = vmatpush1.msra.mxu0 0.0
      %6467 = vmatprep.subr.mxu0 0.0
      %6468 = vmatpush1.msra.mxu0 0.0
      %6469 = vmatprep.subr.mxu0 0.0
      %6470 = vmatpush1.msra.mxu0 0.0
      %6471 = vmatprep.subr.mxu0 0.0
      %6472 = vmatpush1.msra.mxu0 0.0
      %6473 = vmatprep.subr.mxu0 0.0
      %6474 = vmatpush1.msra.mxu0 0.0
      %6475 = vmatprep.subr.mxu0 0.0
      %6476 = vmatpush1.msra.mxu0 0.0
      %6477 = vmatprep.subr.mxu0 0.0
      %6478 = vmatpush1.msra.mxu0 0.0
      %6479 = vmatprep.subr.mxu0 0.0
      %6480 = vmatpush1.msra.mxu0 0.0
      %6481 = vmatprep.subr.mxu0 0.0
      %6482 = vmatpush1.msra.mxu0 0.0
      %6483 = vmatprep.subr.mxu0 0.0
      %6484 = vmatpush1.msra.mxu0 0.0
      %6485 = vmatprep.subr.mxu0 0.0
      %6486 = vmatpush1.msra.mxu0 0.0
      %6487 = vmatprep.subr.mxu0 0.0
      %6488 = vmatpush1.msra.mxu0 0.0
      %6489 = vmatprep.subr.mxu0 0.0
      %6490 = vmatpush1.msra.mxu0 0.0
      %6491 = vmatprep.mubr.f32.mxu0 0.0
      %6492 = vmatmul.mubr.f32.gmra.mrb[0].mxu0 %v6425
      %v6493 = vpop.f32.mrb[0].mxu0
      %v6494 = vadd.f32 %v6420, %v6493
      %v6495 = vpop.f32.mrb[0].mxu0
      %v6496 = vadd.f32 %v6422, %v6495
      %6497 = vdwg.mxu0
      %s6498 = scalar_lea.vmem %s11, 128
      %v6499 = vld [vmem:[%s6498] sm:$0xff]
      %v6500 = vld [vmem:[%s6498 + $0x8] sm:$0xff]
      %v6501 = vld [vmem:[%s6498 + $0x10] sm:$0xff]
      %v6502 = vld [vmem:[%s6498 + $0x18] sm:$0xff]
      %v6503 = vld [vmem:[%s6498 + $0x20] sm:$0xff]
      %v6504 = vld [vmem:[%s6498 + $0x28] sm:$0xff]
      %v6505 = vld [vmem:[%s6498 + $0x30] sm:$0xff]
      %v6506 = vld [vmem:[%s6498 + $0x38] sm:$0xff]
      %v6515 = vunpack.c.l.b16 %v6499
      %v6516 = vunpack.c.h.b16 %v6499
      %v6517 = vunpack.c.l.b16 %v6500
      %v6518 = vunpack.c.h.b16 %v6500
      %v6519 = vunpack.c.l.b16 %v6501
      %v6520 = vunpack.c.h.b16 %v6501
      %v6521 = vunpack.c.l.b16 %v6502
      %v6522 = vunpack.c.h.b16 %v6502
      %v6523 = vunpack.c.l.b16 %v6503
      %v6524 = vunpack.c.h.b16 %v6503
      %v6525 = vunpack.c.l.b16 %v6504
      %v6526 = vunpack.c.h.b16 %v6504
      %v6527 = vunpack.c.l.b16 %v6505
      %v6528 = vunpack.c.h.b16 %v6505
      %v6529 = vunpack.c.l.b16 %v6506
      %v6530 = vunpack.c.h.b16 %v6506
      %v6531 = vpack.c.b16 %v6517, %v6515
      %v6532 = vpack.c.b16 %v6518, %v6516
      %v6533 = vpack.c.b16 %v6521, %v6519
      %v6534 = vpack.c.b16 %v6522, %v6520
      %v6535 = vpack.c.b16 %v6525, %v6523
      %v6536 = vpack.c.b16 %v6526, %v6524
      %v6537 = vpack.c.b16 %v6529, %v6527
      %v6538 = vpack.c.b16 %v6530, %v6528
      %6547 = vmatprep.subr.bf16.mxu0 %v6532
      %6548 = vmatpush1.bf16.msra.mxu0 %v6531
      %6549 = vmatprep.subr.bf16.mxu0 %v6534
      %6550 = vmatpush1.bf16.msra.mxu0 %v6533
      %6551 = vmatprep.subr.bf16.mxu0 %v6536
      %6552 = vmatpush1.bf16.msra.mxu0 %v6535
      %6553 = vmatprep.subr.bf16.mxu0 %v6538
      %6554 = vmatpush1.bf16.msra.mxu0 %v6537
      %6555 = vmatprep.subr.bf16.mxu0 0
      %6556 = vmatpush1.bf16.msra.mxu0 0
      %6557 = vmatprep.subr.bf16.mxu0 0
      %6558 = vmatpush1.bf16.msra.mxu0 0
      %6559 = vmatprep.subr.bf16.mxu0 0
      %6560 = vmatpush1.bf16.msra.mxu0 0
      %6561 = vmatprep.subr.bf16.mxu0 0
      %6562 = vmatpush1.bf16.msra.mxu0 0
      %6563 = vmatprep.subr.bf16.mxu0 0
      %6564 = vmatpush1.bf16.msra.mxu0 0
      %6565 = vmatprep.subr.bf16.mxu0 0
      %6566 = vmatpush1.bf16.msra.mxu0 0
      %6567 = vmatprep.subr.bf16.mxu0 0
      %6568 = vmatpush1.bf16.msra.mxu0 0
      %6569 = vmatprep.subr.bf16.mxu0 0
      %6570 = vmatpush1.bf16.msra.mxu0 0
      %6571 = vmatprep.subr.bf16.mxu0 0
      %6572 = vmatpush1.bf16.msra.mxu0 0
      %6573 = vmatprep.subr.bf16.mxu0 0
      %6574 = vmatpush1.bf16.msra.mxu0 0
      %6575 = vmatprep.subr.bf16.mxu0 0
      %6576 = vmatpush1.bf16.msra.mxu0 0
      %6577 = vmatprep.subr.bf16.mxu0 0
      %6578 = vmatpush1.bf16.msra.mxu0 0
      %6579 = vmatprep.mubr.bf16.mxu0 0
      %6580 = vmatmul.mubr.bf16.gmra.mrb[0].mxu0 %v6214
      %v6581 = vpop.f32.mrb[0].mxu0
      %v6582 = vadd.f32 0.0, %v6581
      %v6583 = vpop.f32.mrb[0].mxu0
      %v6584 = vadd.f32 0.0, %v6583
      %v6585 = vpop.f32.mrb[0].mxu0
      %v6586 = vpop.f32.mrb[0].mxu0
      %6587 = vdwg.mxu0
      %s6588 = scalar_lea.vmem %s10, 8
      %v6589 = vld [vmem:[%s6588] sm:$0x7]
      %v6591 = vsel %vm2843, %v6589, 0
      %6593 = vmatprep.subr.mxu0 %v6584
      %6594 = vmatpush1.msra.mxu0 %v6582
      %6595 = vmatprep.subr.mxu0 0.0
      %6596 = vmatpush1.msra.mxu0 0.0
      %6597 = vmatprep.subr.mxu0 0.0
      %6598 = vmatpush1.msra.mxu0 0.0
      %6599 = vmatprep.subr.mxu0 0.0
      %6600 = vmatpush1.msra.mxu0 0.0
      %6601 = vmatprep.subr.mxu0 0.0
      %6602 = vmatpush1.msra.mxu0 0.0
      %6603 = vmatprep.subr.mxu0 0.0
      %6604 = vmatpush1.msra.mxu0 0.0
      %6605 = vmatprep.subr.mxu0 0.0
      %6606 = vmatpush1.msra.mxu0 0.0
      %6607 = vmatprep.subr.mxu0 0.0
      %6608 = vmatpush1.msra.mxu0 0.0
      %6609 = vmatprep.subr.mxu0 0.0
      %6610 = vmatpush1.msra.mxu0 0.0
      %6611 = vmatprep.subr.mxu0 0.0
      %6612 = vmatpush1.msra.mxu0 0.0
      %6613 = vmatprep.subr.mxu0 0.0
      %6614 = vmatpush1.msra.mxu0 0.0
      %6615 = vmatprep.subr.mxu0 0.0
      %6616 = vmatpush1.msra.mxu0 0.0
      %6617 = vmatprep.subr.mxu0 0.0
      %6618 = vmatpush1.msra.mxu0 0.0
      %6619 = vmatprep.subr.mxu0 0.0
      %6620 = vmatpush1.msra.mxu0 0.0
      %6621 = vmatprep.subr.mxu0 0.0
      %6622 = vmatpush1.msra.mxu0 0.0
      %6623 = vmatprep.subr.mxu0 0.0
      %6624 = vmatpush1.msra.mxu0 0.0
      %6625 = vmatprep.subr.mxu0 0.0
      %6626 = vmatpush1.msra.mxu0 0.0
      %6627 = vmatprep.subr.mxu0 0.0
      %6628 = vmatpush1.msra.mxu0 0.0
      %6629 = vmatprep.subr.mxu0 0.0
      %6630 = vmatpush1.msra.mxu0 0.0
      %6631 = vmatprep.subr.mxu0 0.0
      %6632 = vmatpush1.msra.mxu0 0.0
      %6633 = vmatprep.subr.mxu0 0.0
      %6634 = vmatpush1.msra.mxu0 0.0
      %6635 = vmatprep.subr.mxu0 0.0
      %6636 = vmatpush1.msra.mxu0 0.0
      %6637 = vmatprep.subr.mxu0 0.0
      %6638 = vmatpush1.msra.mxu0 0.0
      %6639 = vmatprep.subr.mxu0 0.0
      %6640 = vmatpush1.msra.mxu0 0.0
      %6641 = vmatprep.subr.mxu0 0.0
      %6642 = vmatpush1.msra.mxu0 0.0
      %6643 = vmatprep.subr.mxu0 0.0
      %6644 = vmatpush1.msra.mxu0 0.0
      %6645 = vmatprep.subr.mxu0 0.0
      %6646 = vmatpush1.msra.mxu0 0.0
      %6647 = vmatprep.subr.mxu0 0.0
      %6648 = vmatpush1.msra.mxu0 0.0
      %6649 = vmatprep.subr.mxu0 0.0
      %6650 = vmatpush1.msra.mxu0 0.0
      %6651 = vmatprep.subr.mxu0 0.0
      %6652 = vmatpush1.msra.mxu0 0.0
      %6653 = vmatprep.subr.mxu0 0.0
      %6654 = vmatpush1.msra.mxu0 0.0
      %6655 = vmatprep.subr.mxu0 0.0
      %6656 = vmatpush1.msra.mxu0 0.0
      %6657 = vmatprep.mubr.f32.mxu0 0.0
      %6658 = vmatmul.mubr.f32.gmra.mrb[0].mxu0 %v6591
      %v6659 = vpop.f32.mrb[0].mxu0
      %v6660 = vadd.f32 0.0, %v6659
      %v6661 = vpop.f32.mrb[0].mxu0
      %v6662 = vadd.f32 0.0, %v6661
      %6663 = vdwg.mxu0
      %v6664 = vadd.f32 %v6494, %v6660
      %v6665 = vadd.f32 %v6496, %v6662
      %s6666 = scalar_lea.vmem %s11, 192
      %v6667 = vld [vmem:[%s6666] sm:$0xff]
      %v6668 = vld [vmem:[%s6666 + $0x8] sm:$0xff]
      %v6669 = vld [vmem:[%s6666 + $0x10] sm:$0xff]
      %v6670 = vld [vmem:[%s6666 + $0x18] sm:$0xff]
      %v6671 = vld [vmem:[%s6666 + $0x20] sm:$0xff]
      %v6672 = vld [vmem:[%s6666 + $0x28] sm:$0xff]
      %v6673 = vld [vmem:[%s6666 + $0x30] sm:$0xff]
      %v6674 = vld [vmem:[%s6666 + $0x38] sm:$0xff]
      %v6683 = vunpack.c.l.b16 %v6667
      %v6684 = vunpack.c.h.b16 %v6667
      %v6685 = vunpack.c.l.b16 %v6668
      %v6686 = vunpack.c.h.b16 %v6668
      %v6687 = vunpack.c.l.b16 %v6669
      %v6688 = vunpack.c.h.b16 %v6669
      %v6689 = vunpack.c.l.b16 %v6670
      %v6690 = vunpack.c.h.b16 %v6670
      %v6691 = vunpack.c.l.b16 %v6671
      %v6692 = vunpack.c.h.b16 %v6671
      %v6693 = vunpack.c.l.b16 %v6672
      %v6694 = vunpack.c.h.b16 %v6672
      %v6695 = vunpack.c.l.b16 %v6673
      %v6696 = vunpack.c.h.b16 %v6673
      %v6697 = vunpack.c.l.b16 %v6674
      %v6698 = vunpack.c.h.b16 %v6674
      %v6699 = vpack.c.b16 %v6685, %v6683
      %v6700 = vpack.c.b16 %v6686, %v6684
      %v6701 = vpack.c.b16 %v6689, %v6687
      %v6702 = vpack.c.b16 %v6690, %v6688
      %v6703 = vpack.c.b16 %v6693, %v6691
      %v6704 = vpack.c.b16 %v6694, %v6692
      %v6705 = vpack.c.b16 %v6697, %v6695
      %v6706 = vpack.c.b16 %v6698, %v6696
      %6715 = vmatprep.subr.bf16.mxu0 %v6700
      %6716 = vmatpush1.bf16.msra.mxu0 %v6699
      %6717 = vmatprep.subr.bf16.mxu0 %v6702
      %6718 = vmatpush1.bf16.msra.mxu0 %v6701
      %6719 = vmatprep.subr.bf16.mxu0 %v6704
      %6720 = vmatpush1.bf16.msra.mxu0 %v6703
      %6721 = vmatprep.subr.bf16.mxu0 %v6706
      %6722 = vmatpush1.bf16.msra.mxu0 %v6705
      %6723 = vmatprep.subr.bf16.mxu0 0
      %6724 = vmatpush1.bf16.msra.mxu0 0
      %6725 = vmatprep.subr.bf16.mxu0 0
      %6726 = vmatpush1.bf16.msra.mxu0 0
      %6727 = vmatprep.subr.bf16.mxu0 0
      %6728 = vmatpush1.bf16.msra.mxu0 0
      %6729 = vmatprep.subr.bf16.mxu0 0
      %6730 = vmatpush1.bf16.msra.mxu0 0
      %6731 = vmatprep.subr.bf16.mxu0 0
      %6732 = vmatpush1.bf16.msra.mxu0 0
      %6733 = vmatprep.subr.bf16.mxu0 0
      %6734 = vmatpush1.bf16.msra.mxu0 0
      %6735 = vmatprep.subr.bf16.mxu0 0
      %6736 = vmatpush1.bf16.msra.mxu0 0
      %6737 = vmatprep.subr.bf16.mxu0 0
      %6738 = vmatpush1.bf16.msra.mxu0 0
      %6739 = vmatprep.subr.bf16.mxu0 0
      %6740 = vmatpush1.bf16.msra.mxu0 0
      %6741 = vmatprep.subr.bf16.mxu0 0
      %6742 = vmatpush1.bf16.msra.mxu0 0
      %6743 = vmatprep.subr.bf16.mxu0 0
      %6744 = vmatpush1.bf16.msra.mxu0 0
      %6745 = vmatprep.subr.bf16.mxu0 0
      %6746 = vmatpush1.bf16.msra.mxu0 0
      %6747 = vmatprep.mubr.bf16.mxu0 0
      %6748 = vmatmul.mubr.bf16.gmra.mrb[0].mxu0 %v6214
      %v6749 = vpop.f32.mrb[0].mxu0
      %v6750 = vadd.f32 0.0, %v6749
      %v6751 = vpop.f32.mrb[0].mxu0
      %v6752 = vadd.f32 0.0, %v6751
      %v6753 = vpop.f32.mrb[0].mxu0
      %v6754 = vpop.f32.mrb[0].mxu0
      %6755 = vdwg.mxu0
      %s6756 = scalar_lea.vmem %s10, 12
      %v6757 = vld [vmem:[%s6756] sm:$0x7]
      %v6759 = vsel %vm2843, %v6757, 0
      %6761 = vmatprep.subr.mxu0 %v6752
      %6762 = vmatpush1.msra.mxu0 %v6750
      %6763 = vmatprep.subr.mxu0 0.0
      %6764 = vmatpush1.msra.mxu0 0.0
      %6765 = vmatprep.subr.mxu0 0.0
      %6766 = vmatpush1.msra.mxu0 0.0
      %6767 = vmatprep.subr.mxu0 0.0
      %6768 = vmatpush1.msra.mxu0 0.0
      %6769 = vmatprep.subr.mxu0 0.0
      %6770 = vmatpush1.msra.mxu0 0.0
      %6771 = vmatprep.subr.mxu0 0.0
      %6772 = vmatpush1.msra.mxu0 0.0
      %6773 = vmatprep.subr.mxu0 0.0
      %6774 = vmatpush1.msra.mxu0 0.0
      %6775 = vmatprep.subr.mxu0 0.0
      %6776 = vmatpush1.msra.mxu0 0.0
      %6777 = vmatprep.subr.mxu0 0.0
      %6778 = vmatpush1.msra.mxu0 0.0
      %6779 = vmatprep.subr.mxu0 0.0
      %6780 = vmatpush1.msra.mxu0 0.0
      %6781 = vmatprep.subr.mxu0 0.0
      %6782 = vmatpush1.msra.mxu0 0.0
      %6783 = vmatprep.subr.mxu0 0.0
      %6784 = vmatpush1.msra.mxu0 0.0
      %6785 = vmatprep.subr.mxu0 0.0
      %6786 = vmatpush1.msra.mxu0 0.0
      %6787 = vmatprep.subr.mxu0 0.0
      %6788 = vmatpush1.msra.mxu0 0.0
      %6789 = vmatprep.subr.mxu0 0.0
      %6790 = vmatpush1.msra.mxu0 0.0
      %6791 = vmatprep.subr.mxu0 0.0
      %6792 = vmatpush1.msra.mxu0 0.0
      %6793 = vmatprep.subr.mxu0 0.0
      %6794 = vmatpush1.msra.mxu0 0.0
      %6795 = vmatprep.subr.mxu0 0.0
      %6796 = vmatpush1.msra.mxu0 0.0
      %6797 = vmatprep.subr.mxu0 0.0
      %6798 = vmatpush1.msra.mxu0 0.0
      %6799 = vmatprep.subr.mxu0 0.0
      %6800 = vmatpush1.msra.mxu0 0.0
      %6801 = vmatprep.subr.mxu0 0.0
      %6802 = vmatpush1.msra.mxu0 0.0
      %6803 = vmatprep.subr.mxu0 0.0
      %6804 = vmatpush1.msra.mxu0 0.0
      %6805 = vmatprep.subr.mxu0 0.0
      %6806 = vmatpush1.msra.mxu0 0.0
      %6807 = vmatprep.subr.mxu0 0.0
      %6808 = vmatpush1.msra.mxu0 0.0
      %6809 = vmatprep.subr.mxu0 0.0
      %6810 = vmatpush1.msra.mxu0 0.0
      %6811 = vmatprep.subr.mxu0 0.0
      %6812 = vmatpush1.msra.mxu0 0.0
      %6813 = vmatprep.subr.mxu0 0.0
      %6814 = vmatpush1.msra.mxu0 0.0
      %6815 = vmatprep.subr.mxu0 0.0
      %6816 = vmatpush1.msra.mxu0 0.0
      %6817 = vmatprep.subr.mxu0 0.0
      %6818 = vmatpush1.msra.mxu0 0.0
      %6819 = vmatprep.subr.mxu0 0.0
      %6820 = vmatpush1.msra.mxu0 0.0
      %6821 = vmatprep.subr.mxu0 0.0
      %6822 = vmatpush1.msra.mxu0 0.0
      %6823 = vmatprep.subr.mxu0 0.0
      %6824 = vmatpush1.msra.mxu0 0.0
      %6825 = vmatprep.mubr.f32.mxu0 0.0
      %6826 = vmatmul.mubr.f32.gmra.mrb[0].mxu0 %v6759
      %v6827 = vpop.f32.mrb[0].mxu0
      %v6828 = vadd.f32 0.0, %v6827
      %v6829 = vpop.f32.mrb[0].mxu0
      %v6830 = vadd.f32 0.0, %v6829
      %6831 = vdwg.mxu0
      %v6832 = vadd.f32 %v6664, %v6828
      %v6833 = vadd.f32 %v6665, %v6830
      %s6834 = scalar_lea.vmem %s11, 256
      %v6835 = vld [vmem:[%s6834] sm:$0xff]
      %v6836 = vld [vmem:[%s6834 + $0x8] sm:$0xff]
      %v6837 = vld [vmem:[%s6834 + $0x10] sm:$0xff]
      %v6838 = vld [vmem:[%s6834 + $0x18] sm:$0xff]
      %v6839 = vld [vmem:[%s6834 + $0x20] sm:$0xff]
      %v6840 = vld [vmem:[%s6834 + $0x28] sm:$0xff]
      %v6841 = vld [vmem:[%s6834 + $0x30] sm:$0xff]
      %v6842 = vld [vmem:[%s6834 + $0x38] sm:$0xff]
      %v6851 = vunpack.c.l.b16 %v6835
      %v6852 = vunpack.c.h.b16 %v6835
      %v6853 = vunpack.c.l.b16 %v6836
      %v6854 = vunpack.c.h.b16 %v6836
      %v6855 = vunpack.c.l.b16 %v6837
      %v6856 = vunpack.c.h.b16 %v6837
      %v6857 = vunpack.c.l.b16 %v6838
      %v6858 = vunpack.c.h.b16 %v6838
      %v6859 = vunpack.c.l.b16 %v6839
      %v6860 = vunpack.c.h.b16 %v6839
      %v6861 = vunpack.c.l.b16 %v6840
      %v6862 = vunpack.c.h.b16 %v6840
      %v6863 = vunpack.c.l.b16 %v6841
      %v6864 = vunpack.c.h.b16 %v6841
      %v6865 = vunpack.c.l.b16 %v6842
      %v6866 = vunpack.c.h.b16 %v6842
      %v6867 = vpack.c.b16 %v6853, %v6851
      %v6868 = vpack.c.b16 %v6854, %v6852
      %v6869 = vpack.c.b16 %v6857, %v6855
      %v6870 = vpack.c.b16 %v6858, %v6856
      %v6871 = vpack.c.b16 %v6861, %v6859
      %v6872 = vpack.c.b16 %v6862, %v6860
      %v6873 = vpack.c.b16 %v6865, %v6863
      %v6874 = vpack.c.b16 %v6866, %v6864
      %6883 = vmatprep.subr.bf16.mxu0 %v6868
      %6884 = vmatpush1.bf16.msra.mxu0 %v6867
      %6885 = vmatprep.subr.bf16.mxu0 %v6870
      %6886 = vmatpush1.bf16.msra.mxu0 %v6869
      %6887 = vmatprep.subr.bf16.mxu0 %v6872
      %6888 = vmatpush1.bf16.msra.mxu0 %v6871
      %6889 = vmatprep.subr.bf16.mxu0 %v6874
      %6890 = vmatpush1.bf16.msra.mxu0 %v6873
      %6891 = vmatprep.subr.bf16.mxu0 0
      %6892 = vmatpush1.bf16.msra.mxu0 0
      %6893 = vmatprep.subr.bf16.mxu0 0
      %6894 = vmatpush1.bf16.msra.mxu0 0
      %6895 = vmatprep.subr.bf16.mxu0 0
      %6896 = vmatpush1.bf16.msra.mxu0 0
      %6897 = vmatprep.subr.bf16.mxu0 0
      %6898 = vmatpush1.bf16.msra.mxu0 0
      %6899 = vmatprep.subr.bf16.mxu0 0
      %6900 = vmatpush1.bf16.msra.mxu0 0
      %6901 = vmatprep.subr.bf16.mxu0 0
      %6902 = vmatpush1.bf16.msra.mxu0 0
      %6903 = vmatprep.subr.bf16.mxu0 0
      %6904 = vmatpush1.bf16.msra.mxu0 0
      %6905 = vmatprep.subr.bf16.mxu0 0
      %6906 = vmatpush1.bf16.msra.mxu0 0
      %6907 = vmatprep.subr.bf16.mxu0 0
      %6908 = vmatpush1.bf16.msra.mxu0 0
      %6909 = vmatprep.subr.bf16.mxu0 0
      %6910 = vmatpush1.bf16.msra.mxu0 0
      %6911 = vmatprep.subr.bf16.mxu0 0
      %6912 = vmatpush1.bf16.msra.mxu0 0
      %6913 = vmatprep.subr.bf16.mxu0 0
      %6914 = vmatpush1.bf16.msra.mxu0 0
      %6915 = vmatprep.mubr.bf16.mxu0 0
      %6916 = vmatmul.mubr.bf16.gmra.mrb[0].mxu0 %v6214
      %v6917 = vpop.f32.mrb[0].mxu0
      %v6918 = vadd.f32 0.0, %v6917
      %v6919 = vpop.f32.mrb[0].mxu0
      %v6920 = vadd.f32 0.0, %v6919
      %v6921 = vpop.f32.mrb[0].mxu0
      %v6922 = vpop.f32.mrb[0].mxu0
      %6923 = vdwg.mxu0
      %s6924 = scalar_lea.vmem %s10, 16
      %v6925 = vld [vmem:[%s6924] sm:$0x7]
      %v6927 = vsel %vm2843, %v6925, 0
      %6929 = vmatprep.subr.mxu0 %v6920
      %6930 = vmatpush1.msra.mxu0 %v6918
      %6931 = vmatprep.subr.mxu0 0.0
      %6932 = vmatpush1.msra.mxu0 0.0
      %6933 = vmatprep.subr.mxu0 0.0
      %6934 = vmatpush1.msra.mxu0 0.0
      %6935 = vmatprep.subr.mxu0 0.0
      %6936 = vmatpush1.msra.mxu0 0.0
      %6937 = vmatprep.subr.mxu0 0.0
      %6938 = vmatpush1.msra.mxu0 0.0
      %6939 = vmatprep.subr.mxu0 0.0
      %6940 = vmatpush1.msra.mxu0 0.0
      %6941 = vmatprep.subr.mxu0 0.0
      %6942 = vmatpush1.msra.mxu0 0.0
      %6943 = vmatprep.subr.mxu0 0.0
      %6944 = vmatpush1.msra.mxu0 0.0
      %6945 = vmatprep.subr.mxu0 0.0
      %6946 = vmatpush1.msra.mxu0 0.0
      %6947 = vmatprep.subr.mxu0 0.0
      %6948 = vmatpush1.msra.mxu0 0.0
      %6949 = vmatprep.subr.mxu0 0.0
      %6950 = vmatpush1.msra.mxu0 0.0
      %6951 = vmatprep.subr.mxu0 0.0
      %6952 = vmatpush1.msra.mxu0 0.0
      %6953 = vmatprep.subr.mxu0 0.0
      %6954 = vmatpush1.msra.mxu0 0.0
      %6955 = vmatprep.subr.mxu0 0.0
      %6956 = vmatpush1.msra.mxu0 0.0
      %6957 = vmatprep.subr.mxu0 0.0
      %6958 = vmatpush1.msra.mxu0 0.0
      %6959 = vmatprep.subr.mxu0 0.0
      %6960 = vmatpush1.msra.mxu0 0.0
      %6961 = vmatprep.subr.mxu0 0.0
      %6962 = vmatpush1.msra.mxu0 0.0
      %6963 = vmatprep.subr.mxu0 0.0
      %6964 = vmatpush1.msra.mxu0 0.0
      %6965 = vmatprep.subr.mxu0 0.0
      %6966 = vmatpush1.msra.mxu0 0.0
      %6967 = vmatprep.subr.mxu0 0.0
      %6968 = vmatpush1.msra.mxu0 0.0
      %6969 = vmatprep.subr.mxu0 0.0
      %6970 = vmatpush1.msra.mxu0 0.0
      %6971 = vmatprep.subr.mxu0 0.0
      %6972 = vmatpush1.msra.mxu0 0.0
      %6973 = vmatprep.subr.mxu0 0.0
      %6974 = vmatpush1.msra.mxu0 0.0
      %6975 = vmatprep.subr.mxu0 0.0
      %6976 = vmatpush1.msra.mxu0 0.0
      %6977 = vmatprep.subr.mxu0 0.0
      %6978 = vmatpush1.msra.mxu0 0.0
      %6979 = vmatprep.subr.mxu0 0.0
      %6980 = vmatpush1.msra.mxu0 0.0
      %6981 = vmatprep.subr.mxu0 0.0
      %6982 = vmatpush1.msra.mxu0 0.0
      %6983 = vmatprep.subr.mxu0 0.0
      %6984 = vmatpush1.msra.mxu0 0.0
      %6985 = vmatprep.subr.mxu0 0.0
      %6986 = vmatpush1.msra.mxu0 0.0
      %6987 = vmatprep.subr.mxu0 0.0
      %6988 = vmatpush1.msra.mxu0 0.0
      %6989 = vmatprep.subr.mxu0 0.0
      %6990 = vmatpush1.msra.mxu0 0.0
      %6991 = vmatprep.subr.mxu0 0.0
      %6992 = vmatpush1.msra.mxu0 0.0
      %6993 = vmatprep.mubr.f32.mxu0 0.0
      %6994 = vmatmul.mubr.f32.gmra.mrb[0].mxu0 %v6927
      %v6995 = vpop.f32.mrb[0].mxu0
      %v6996 = vadd.f32 0.0, %v6995
      %v6997 = vpop.f32.mrb[0].mxu0
      %v6998 = vadd.f32 0.0, %v6997
      %6999 = vdwg.mxu0
      %v7000 = vadd.f32 %v6832, %v6996
      %v7001 = vadd.f32 %v6833, %v6998
      %s7002 = scalar_lea.vmem %s11, 320
      %v7003 = vld [vmem:[%s7002] sm:$0xff]
      %v7004 = vld [vmem:[%s7002 + $0x8] sm:$0xff]
      %v7005 = vld [vmem:[%s7002 + $0x10] sm:$0xff]
      %v7006 = vld [vmem:[%s7002 + $0x18] sm:$0xff]
      %v7007 = vld [vmem:[%s7002 + $0x20] sm:$0xff]
      %v7008 = vld [vmem:[%s7002 + $0x28] sm:$0xff]
      %v7009 = vld [vmem:[%s7002 + $0x30] sm:$0xff]
      %v7010 = vld [vmem:[%s7002 + $0x38] sm:$0xff]
      %v7019 = vunpack.c.l.b16 %v7003
      %v7020 = vunpack.c.h.b16 %v7003
      %v7021 = vunpack.c.l.b16 %v7004
      %v7022 = vunpack.c.h.b16 %v7004
      %v7023 = vunpack.c.l.b16 %v7005
      %v7024 = vunpack.c.h.b16 %v7005
      %v7025 = vunpack.c.l.b16 %v7006
      %v7026 = vunpack.c.h.b16 %v7006
      %v7027 = vunpack.c.l.b16 %v7007
      %v7028 = vunpack.c.h.b16 %v7007
      %v7029 = vunpack.c.l.b16 %v7008
      %v7030 = vunpack.c.h.b16 %v7008
      %v7031 = vunpack.c.l.b16 %v7009
      %v7032 = vunpack.c.h.b16 %v7009
      %v7033 = vunpack.c.l.b16 %v7010
      %v7034 = vunpack.c.h.b16 %v7010
      %v7035 = vpack.c.b16 %v7021, %v7019
      %v7036 = vpack.c.b16 %v7022, %v7020
      %v7037 = vpack.c.b16 %v7025, %v7023
      %v7038 = vpack.c.b16 %v7026, %v7024
      %v7039 = vpack.c.b16 %v7029, %v7027
      %v7040 = vpack.c.b16 %v7030, %v7028
      %v7041 = vpack.c.b16 %v7033, %v7031
      %v7042 = vpack.c.b16 %v7034, %v7032
      %7051 = vmatprep.subr.bf16.mxu0 %v7036
      %7052 = vmatpush1.bf16.msra.mxu0 %v7035
      %7053 = vmatprep.subr.bf16.mxu0 %v7038
      %7054 = vmatpush1.bf16.msra.mxu0 %v7037
      %7055 = vmatprep.subr.bf16.mxu0 %v7040
      %7056 = vmatpush1.bf16.msra.mxu0 %v7039
      %7057 = vmatprep.subr.bf16.mxu0 %v7042
      %7058 = vmatpush1.bf16.msra.mxu0 %v7041
      %7059 = vmatprep.subr.bf16.mxu0 0
      %7060 = vmatpush1.bf16.msra.mxu0 0
      %7061 = vmatprep.subr.bf16.mxu0 0
      %7062 = vmatpush1.bf16.msra.mxu0 0
      %7063 = vmatprep.subr.bf16.mxu0 0
      %7064 = vmatpush1.bf16.msra.mxu0 0
      %7065 = vmatprep.subr.bf16.mxu0 0
      %7066 = vmatpush1.bf16.msra.mxu0 0
      %7067 = vmatprep.subr.bf16.mxu0 0
      %7068 = vmatpush1.bf16.msra.mxu0 0
      %7069 = vmatprep.subr.bf16.mxu0 0
      %7070 = vmatpush1.bf16.msra.mxu0 0
      %7071 = vmatprep.subr.bf16.mxu0 0
      %7072 = vmatpush1.bf16.msra.mxu0 0
      %7073 = vmatprep.subr.bf16.mxu0 0
      %7074 = vmatpush1.bf16.msra.mxu0 0
      %7075 = vmatprep.subr.bf16.mxu0 0
      %7076 = vmatpush1.bf16.msra.mxu0 0
      %7077 = vmatprep.subr.bf16.mxu0 0
      %7078 = vmatpush1.bf16.msra.mxu0 0
      %7079 = vmatprep.subr.bf16.mxu0 0
      %7080 = vmatpush1.bf16.msra.mxu0 0
      %7081 = vmatprep.subr.bf16.mxu0 0
      %7082 = vmatpush1.bf16.msra.mxu0 0
      %7083 = vmatprep.mubr.bf16.mxu0 0
      %7084 = vmatmul.mubr.bf16.gmra.mrb[0].mxu0 %v6214
      %v7085 = vpop.f32.mrb[0].mxu0
      %v7086 = vadd.f32 0.0, %v7085
      %v7087 = vpop.f32.mrb[0].mxu0
      %v7088 = vadd.f32 0.0, %v7087
      %v7089 = vpop.f32.mrb[0].mxu0
      %v7090 = vpop.f32.mrb[0].mxu0
      %7091 = vdwg.mxu0
      %s7092 = scalar_lea.vmem %s10, 20
      %v7093 = vld [vmem:[%s7092] sm:$0x7]
      %v7095 = vsel %vm2843, %v7093, 0
      %7097 = vmatprep.subr.mxu0 %v7088
      %7098 = vmatpush1.msra.mxu0 %v7086
      %7099 = vmatprep.subr.mxu0 0.0
      %7100 = vmatpush1.msra.mxu0 0.0
      %7101 = vmatprep.subr.mxu0 0.0
      %7102 = vmatpush1.msra.mxu0 0.0
      %7103 = vmatprep.subr.mxu0 0.0
      %7104 = vmatpush1.msra.mxu0 0.0
      %7105 = vmatprep.subr.mxu0 0.0
      %7106 = vmatpush1.msra.mxu0 0.0
      %7107 = vmatprep.subr.mxu0 0.0
      %7108 = vmatpush1.msra.mxu0 0.0
      %7109 = vmatprep.subr.mxu0 0.0
      %7110 = vmatpush1.msra.mxu0 0.0
      %7111 = vmatprep.subr.mxu0 0.0
      %7112 = vmatpush1.msra.mxu0 0.0
      %7113 = vmatprep.subr.mxu0 0.0
      %7114 = vmatpush1.msra.mxu0 0.0
      %7115 = vmatprep.subr.mxu0 0.0
      %7116 = vmatpush1.msra.mxu0 0.0
      %7117 = vmatprep.subr.mxu0 0.0
      %7118 = vmatpush1.msra.mxu0 0.0
      %7119 = vmatprep.subr.mxu0 0.0
      %7120 = vmatpush1.msra.mxu0 0.0
      %7121 = vmatprep.subr.mxu0 0.0
      %7122 = vmatpush1.msra.mxu0 0.0
      %7123 = vmatprep.subr.mxu0 0.0
      %7124 = vmatpush1.msra.mxu0 0.0
      %7125 = vmatprep.subr.mxu0 0.0
      %7126 = vmatpush1.msra.mxu0 0.0
      %7127 = vmatprep.subr.mxu0 0.0
      %7128 = vmatpush1.msra.mxu0 0.0
      %7129 = vmatprep.subr.mxu0 0.0
      %7130 = vmatpush1.msra.mxu0 0.0
      %7131 = vmatprep.subr.mxu0 0.0
      %7132 = vmatpush1.msra.mxu0 0.0
      %7133 = vmatprep.subr.mxu0 0.0
      %7134 = vmatpush1.msra.mxu0 0.0
      %7135 = vmatprep.subr.mxu0 0.0
      %7136 = vmatpush1.msra.mxu0 0.0
      %7137 = vmatprep.subr.mxu0 0.0
      %7138 = vmatpush1.msra.mxu0 0.0
      %7139 = vmatprep.subr.mxu0 0.0
      %7140 = vmatpush1.msra.mxu0 0.0
      %7141 = vmatprep.subr.mxu0 0.0
      %7142 = vmatpush1.msra.mxu0 0.0
      %7143 = vmatprep.subr.mxu0 0.0
      %7144 = vmatpush1.msra.mxu0 0.0
      %7145 = vmatprep.subr.mxu0 0.0
      %7146 = vmatpush1.msra.mxu0 0.0
      %7147 = vmatprep.subr.mxu0 0.0
      %7148 = vmatpush1.msra.mxu0 0.0
      %7149 = vmatprep.subr.mxu0 0.0
      %7150 = vmatpush1.msra.mxu0 0.0
      %7151 = vmatprep.subr.mxu0 0.0
      %7152 = vmatpush1.msra.mxu0 0.0
      %7153 = vmatprep.subr.mxu0 0.0
      %7154 = vmatpush1.msra.mxu0 0.0
      %7155 = vmatprep.subr.mxu0 0.0
      %7156 = vmatpush1.msra.mxu0 0.0
      %7157 = vmatprep.subr.mxu0 0.0
      %7158 = vmatpush1.msra.mxu0 0.0
      %7159 = vmatprep.subr.mxu0 0.0
      %7160 = vmatpush1.msra.mxu0 0.0
      %7161 = vmatprep.mubr.f32.mxu0 0.0
      %7162 = vmatmul.mubr.f32.gmra.mrb[0].mxu0 %v7095
      %v7163 = vpop.f32.mrb[0].mxu0
      %v7164 = vadd.f32 0.0, %v7163
      %v7165 = vpop.f32.mrb[0].mxu0
      %v7166 = vadd.f32 0.0, %v7165
      %7167 = vdwg.mxu0
      %v7168 = vadd.f32 %v7000, %v7164
      %v7169 = vadd.f32 %v7001, %v7166
      %s7170 = scalar_lea.vmem %s11, 384
      %v7171 = vld [vmem:[%s7170] sm:$0xff]
      %v7172 = vld [vmem:[%s7170 + $0x8] sm:$0xff]
      %v7173 = vld [vmem:[%s7170 + $0x10] sm:$0xff]
      %v7174 = vld [vmem:[%s7170 + $0x18] sm:$0xff]
      %v7175 = vld [vmem:[%s7170 + $0x20] sm:$0xff]
      %v7176 = vld [vmem:[%s7170 + $0x28] sm:$0xff]
      %v7177 = vld [vmem:[%s7170 + $0x30] sm:$0xff]
      %v7178 = vld [vmem:[%s7170 + $0x38] sm:$0xff]
      %v7187 = vunpack.c.l.b16 %v7171
      %v7188 = vunpack.c.h.b16 %v7171
      %v7189 = vunpack.c.l.b16 %v7172
      %v7190 = vunpack.c.h.b16 %v7172
      %v7191 = vunpack.c.l.b16 %v7173
      %v7192 = vunpack.c.h.b16 %v7173
      %v7193 = vunpack.c.l.b16 %v7174
      %v7194 = vunpack.c.h.b16 %v7174
      %v7195 = vunpack.c.l.b16 %v7175
      %v7196 = vunpack.c.h.b16 %v7175
      %v7197 = vunpack.c.l.b16 %v7176
      %v7198 = vunpack.c.h.b16 %v7176
      %v7199 = vunpack.c.l.b16 %v7177
      %v7200 = vunpack.c.h.b16 %v7177
      %v7201 = vunpack.c.l.b16 %v7178
      %v7202 = vunpack.c.h.b16 %v7178
      %v7203 = vpack.c.b16 %v7189, %v7187
      %v7204 = vpack.c.b16 %v7190, %v7188
      %v7205 = vpack.c.b16 %v7193, %v7191
      %v7206 = vpack.c.b16 %v7194, %v7192
      %v7207 = vpack.c.b16 %v7197, %v7195
      %v7208 = vpack.c.b16 %v7198, %v7196
      %v7209 = vpack.c.b16 %v7201, %v7199
      %v7210 = vpack.c.b16 %v7202, %v7200
      %7219 = vmatprep.subr.bf16.mxu0 %v7204
      %7220 = vmatpush1.bf16.msra.mxu0 %v7203
      %7221 = vmatprep.subr.bf16.mxu0 %v7206
      %7222 = vmatpush1.bf16.msra.mxu0 %v7205
      %7223 = vmatprep.subr.bf16.mxu0 %v7208
      %7224 = vmatpush1.bf16.msra.mxu0 %v7207
      %7225 = vmatprep.subr.bf16.mxu0 %v7210
      %7226 = vmatpush1.bf16.msra.mxu0 %v7209
      %7227 = vmatprep.subr.bf16.mxu0 0
      %7228 = vmatpush1.bf16.msra.mxu0 0
      %7229 = vmatprep.subr.bf16.mxu0 0
      %7230 = vmatpush1.bf16.msra.mxu0 0
      %7231 = vmatprep.subr.bf16.mxu0 0
      %7232 = vmatpush1.bf16.msra.mxu0 0
      %7233 = vmatprep.subr.bf16.mxu0 0
      %7234 = vmatpush1.bf16.msra.mxu0 0
      %7235 = vmatprep.subr.bf16.mxu0 0
      %7236 = vmatpush1.bf16.msra.mxu0 0
      %7237 = vmatprep.subr.bf16.mxu0 0
      %7238 = vmatpush1.bf16.msra.mxu0 0
      %7239 = vmatprep.subr.bf16.mxu0 0
      %7240 = vmatpush1.bf16.msra.mxu0 0
      %7241 = vmatprep.subr.bf16.mxu0 0
      %7242 = vmatpush1.bf16.msra.mxu0 0
      %7243 = vmatprep.subr.bf16.mxu0 0
      %7244 = vmatpush1.bf16.msra.mxu0 0
      %7245 = vmatprep.subr.bf16.mxu0 0
      %7246 = vmatpush1.bf16.msra.mxu0 0
      %7247 = vmatprep.subr.bf16.mxu0 0
      %7248 = vmatpush1.bf16.msra.mxu0 0
      %7249 = vmatprep.subr.bf16.mxu0 0
      %7250 = vmatpush1.bf16.msra.mxu0 0
      %7251 = vmatprep.mubr.bf16.mxu0 0
      %7252 = vmatmul.mubr.bf16.gmra.mrb[0].mxu0 %v6214
      %v7253 = vpop.f32.mrb[0].mxu0
      %v7254 = vadd.f32 0.0, %v7253
      %v7255 = vpop.f32.mrb[0].mxu0
      %v7256 = vadd.f32 0.0, %v7255
      %v7257 = vpop.f32.mrb[0].mxu0
      %v7258 = vpop.f32.mrb[0].mxu0
      %7259 = vdwg.mxu0
      %s7260 = scalar_lea.vmem %s10, 24
      %v7261 = vld [vmem:[%s7260] sm:$0x7]
      %v7263 = vsel %vm2843, %v7261, 0
      %7265 = vmatprep.subr.mxu0 %v7256
      %7266 = vmatpush1.msra.mxu0 %v7254
      %7267 = vmatprep.subr.mxu0 0.0
      %7268 = vmatpush1.msra.mxu0 0.0
      %7269 = vmatprep.subr.mxu0 0.0
      %7270 = vmatpush1.msra.mxu0 0.0
      %7271 = vmatprep.subr.mxu0 0.0
      %7272 = vmatpush1.msra.mxu0 0.0
      %7273 = vmatprep.subr.mxu0 0.0
      %7274 = vmatpush1.msra.mxu0 0.0
      %7275 = vmatprep.subr.mxu0 0.0
      %7276 = vmatpush1.msra.mxu0 0.0
      %7277 = vmatprep.subr.mxu0 0.0
      %7278 = vmatpush1.msra.mxu0 0.0
      %7279 = vmatprep.subr.mxu0 0.0
      %7280 = vmatpush1.msra.mxu0 0.0
      %7281 = vmatprep.subr.mxu0 0.0
      %7282 = vmatpush1.msra.mxu0 0.0
      %7283 = vmatprep.subr.mxu0 0.0
      %7284 = vmatpush1.msra.mxu0 0.0
      %7285 = vmatprep.subr.mxu0 0.0
      %7286 = vmatpush1.msra.mxu0 0.0
      %7287 = vmatprep.subr.mxu0 0.0
      %7288 = vmatpush1.msra.mxu0 0.0
      %7289 = vmatprep.subr.mxu0 0.0
      %7290 = vmatpush1.msra.mxu0 0.0
      %7291 = vmatprep.subr.mxu0 0.0
      %7292 = vmatpush1.msra.mxu0 0.0
      %7293 = vmatprep.subr.mxu0 0.0
      %7294 = vmatpush1.msra.mxu0 0.0
      %7295 = vmatprep.subr.mxu0 0.0
      %7296 = vmatpush1.msra.mxu0 0.0
      %7297 = vmatprep.subr.mxu0 0.0
      %7298 = vmatpush1.msra.mxu0 0.0
      %7299 = vmatprep.subr.mxu0 0.0
      %7300 = vmatpush1.msra.mxu0 0.0
      %7301 = vmatprep.subr.mxu0 0.0
      %7302 = vmatpush1.msra.mxu0 0.0
      %7303 = vmatprep.subr.mxu0 0.0
      %7304 = vmatpush1.msra.mxu0 0.0
      %7305 = vmatprep.subr.mxu0 0.0
      %7306 = vmatpush1.msra.mxu0 0.0
      %7307 = vmatprep.subr.mxu0 0.0
      %7308 = vmatpush1.msra.mxu0 0.0
      %7309 = vmatprep.subr.mxu0 0.0
      %7310 = vmatpush1.msra.mxu0 0.0
      %7311 = vmatprep.subr.mxu0 0.0
      %7312 = vmatpush1.msra.mxu0 0.0
      %7313 = vmatprep.subr.mxu0 0.0
      %7314 = vmatpush1.msra.mxu0 0.0
      %7315 = vmatprep.subr.mxu0 0.0
      %7316 = vmatpush1.msra.mxu0 0.0
      %7317 = vmatprep.subr.mxu0 0.0
      %7318 = vmatpush1.msra.mxu0 0.0
      %7319 = vmatprep.subr.mxu0 0.0
      %7320 = vmatpush1.msra.mxu0 0.0
      %7321 = vmatprep.subr.mxu0 0.0
      %7322 = vmatpush1.msra.mxu0 0.0
      %7323 = vmatprep.subr.mxu0 0.0
      %7324 = vmatpush1.msra.mxu0 0.0
      %7325 = vmatprep.subr.mxu0 0.0
      %7326 = vmatpush1.msra.mxu0 0.0
      %7327 = vmatprep.subr.mxu0 0.0
      %7328 = vmatpush1.msra.mxu0 0.0
      %7329 = vmatprep.mubr.f32.mxu0 0.0
      %7330 = vmatmul.mubr.f32.gmra.mrb[0].mxu0 %v7263
      %v7331 = vpop.f32.mrb[0].mxu0
      %v7332 = vadd.f32 0.0, %v7331
      %v7333 = vpop.f32.mrb[0].mxu0
      %v7334 = vadd.f32 0.0, %v7333
      %7335 = vdwg.mxu0
      %v7336 = vadd.f32 %v7168, %v7332
      %v7337 = vadd.f32 %v7169, %v7334
      %s7338 = scalar_lea.vmem %s11, 448
      %v7339 = vld [vmem:[%s7338] sm:$0xff]
      %v7340 = vld [vmem:[%s7338 + $0x8] sm:$0xff]
      %v7341 = vld [vmem:[%s7338 + $0x10] sm:$0xff]
      %v7342 = vld [vmem:[%s7338 + $0x18] sm:$0xff]
      %v7343 = vld [vmem:[%s7338 + $0x20] sm:$0xff]
      %v7344 = vld [vmem:[%s7338 + $0x28] sm:$0xff]
      %v7345 = vld [vmem:[%s7338 + $0x30] sm:$0xff]
      %v7346 = vld [vmem:[%s7338 + $0x38] sm:$0xff]
      %v7355 = vunpack.c.l.b16 %v7339
      %v7356 = vunpack.c.h.b16 %v7339
      %v7357 = vunpack.c.l.b16 %v7340
      %v7358 = vunpack.c.h.b16 %v7340
      %v7359 = vunpack.c.l.b16 %v7341
      %v7360 = vunpack.c.h.b16 %v7341
      %v7361 = vunpack.c.l.b16 %v7342
      %v7362 = vunpack.c.h.b16 %v7342
      %v7363 = vunpack.c.l.b16 %v7343
      %v7364 = vunpack.c.h.b16 %v7343
      %v7365 = vunpack.c.l.b16 %v7344
      %v7366 = vunpack.c.h.b16 %v7344
      %v7367 = vunpack.c.l.b16 %v7345
      %v7368 = vunpack.c.h.b16 %v7345
      %v7369 = vunpack.c.l.b16 %v7346
      %v7370 = vunpack.c.h.b16 %v7346
      %v7371 = vpack.c.b16 %v7357, %v7355
      %v7372 = vpack.c.b16 %v7358, %v7356
      %v7373 = vpack.c.b16 %v7361, %v7359
      %v7374 = vpack.c.b16 %v7362, %v7360
      %v7375 = vpack.c.b16 %v7365, %v7363
      %v7376 = vpack.c.b16 %v7366, %v7364
      %v7377 = vpack.c.b16 %v7369, %v7367
      %v7378 = vpack.c.b16 %v7370, %v7368
      %7387 = vmatprep.subr.bf16.mxu0 %v7372
      %7388 = vmatpush1.bf16.msra.mxu0 %v7371
      %7389 = vmatprep.subr.bf16.mxu0 %v7374
      %7390 = vmatpush1.bf16.msra.mxu0 %v7373
      %7391 = vmatprep.subr.bf16.mxu0 %v7376
      %7392 = vmatpush1.bf16.msra.mxu0 %v7375
      %7393 = vmatprep.subr.bf16.mxu0 %v7378
      %7394 = vmatpush1.bf16.msra.mxu0 %v7377
      %7395 = vmatprep.subr.bf16.mxu0 0
      %7396 = vmatpush1.bf16.msra.mxu0 0
      %7397 = vmatprep.subr.bf16.mxu0 0
      %7398 = vmatpush1.bf16.msra.mxu0 0
      %7399 = vmatprep.subr.bf16.mxu0 0
      %7400 = vmatpush1.bf16.msra.mxu0 0
      %7401 = vmatprep.subr.bf16.mxu0 0
      %7402 = vmatpush1.bf16.msra.mxu0 0
      %7403 = vmatprep.subr.bf16.mxu0 0
      %7404 = vmatpush1.bf16.msra.mxu0 0
      %7405 = vmatprep.subr.bf16.mxu0 0
      %7406 = vmatpush1.bf16.msra.mxu0 0
      %7407 = vmatprep.subr.bf16.mxu0 0
      %7408 = vmatpush1.bf16.msra.mxu0 0
      %7409 = vmatprep.subr.bf16.mxu0 0
      %7410 = vmatpush1.bf16.msra.mxu0 0
      %7411 = vmatprep.subr.bf16.mxu0 0
      %7412 = vmatpush1.bf16.msra.mxu0 0
      %7413 = vmatprep.subr.bf16.mxu0 0
      %7414 = vmatpush1.bf16.msra.mxu0 0
      %7415 = vmatprep.subr.bf16.mxu0 0
      %7416 = vmatpush1.bf16.msra.mxu0 0
      %7417 = vmatprep.subr.bf16.mxu0 0
      %7418 = vmatpush1.bf16.msra.mxu0 0
      %7419 = vmatprep.mubr.bf16.mxu0 0
      %7420 = vmatmul.mubr.bf16.gmra.mrb[0].mxu0 %v6214
      %v7421 = vpop.f32.mrb[0].mxu0
      %v7422 = vadd.f32 0.0, %v7421
      %v7423 = vpop.f32.mrb[0].mxu0
      %v7424 = vadd.f32 0.0, %v7423
      %v7425 = vpop.f32.mrb[0].mxu0
      %v7426 = vpop.f32.mrb[0].mxu0
      %7427 = vdwg.mxu0
      %s7428 = scalar_lea.vmem %s10, 28
      %v7429 = vld [vmem:[%s7428] sm:$0x7]
      %v7431 = vsel %vm2843, %v7429, 0
      %7433 = vmatprep.subr.mxu0 %v7424
      %7434 = vmatpush1.msra.mxu0 %v7422
      %7435 = vmatprep.subr.mxu0 0.0
      %7436 = vmatpush1.msra.mxu0 0.0
      %7437 = vmatprep.subr.mxu0 0.0
      %7438 = vmatpush1.msra.mxu0 0.0
      %7439 = vmatprep.subr.mxu0 0.0
      %7440 = vmatpush1.msra.mxu0 0.0
      %7441 = vmatprep.subr.mxu0 0.0
      %7442 = vmatpush1.msra.mxu0 0.0
      %7443 = vmatprep.subr.mxu0 0.0
      %7444 = vmatpush1.msra.mxu0 0.0
      %7445 = vmatprep.subr.mxu0 0.0
      %7446 = vmatpush1.msra.mxu0 0.0
      %7447 = vmatprep.subr.mxu0 0.0
      %7448 = vmatpush1.msra.mxu0 0.0
      %7449 = vmatprep.subr.mxu0 0.0
      %7450 = vmatpush1.msra.mxu0 0.0
      %7451 = vmatprep.subr.mxu0 0.0
      %7452 = vmatpush1.msra.mxu0 0.0
      %7453 = vmatprep.subr.mxu0 0.0
      %7454 = vmatpush1.msra.mxu0 0.0
      %7455 = vmatprep.subr.mxu0 0.0
      %7456 = vmatpush1.msra.mxu0 0.0
      %7457 = vmatprep.subr.mxu0 0.0
      %7458 = vmatpush1.msra.mxu0 0.0
      %7459 = vmatprep.subr.mxu0 0.0
      %7460 = vmatpush1.msra.mxu0 0.0
      %7461 = vmatprep.subr.mxu0 0.0
      %7462 = vmatpush1.msra.mxu0 0.0
      %7463 = vmatprep.subr.mxu0 0.0
      %7464 = vmatpush1.msra.mxu0 0.0
      %7465 = vmatprep.subr.mxu0 0.0
      %7466 = vmatpush1.msra.mxu0 0.0
      %7467 = vmatprep.subr.mxu0 0.0
      %7468 = vmatpush1.msra.mxu0 0.0
      %7469 = vmatprep.subr.mxu0 0.0
      %7470 = vmatpush1.msra.mxu0 0.0
      %7471 = vmatprep.subr.mxu0 0.0
      %7472 = vmatpush1.msra.mxu0 0.0
      %7473 = vmatprep.subr.mxu0 0.0
      %7474 = vmatpush1.msra.mxu0 0.0
      %7475 = vmatprep.subr.mxu0 0.0
      %7476 = vmatpush1.msra.mxu0 0.0
      %7477 = vmatprep.subr.mxu0 0.0
      %7478 = vmatpush1.msra.mxu0 0.0
      %7479 = vmatprep.subr.mxu0 0.0
      %7480 = vmatpush1.msra.mxu0 0.0
      %7481 = vmatprep.subr.mxu0 0.0
      %7482 = vmatpush1.msra.mxu0 0.0
      %7483 = vmatprep.subr.mxu0 0.0
      %7484 = vmatpush1.msra.mxu0 0.0
      %7485 = vmatprep.subr.mxu0 0.0
      %7486 = vmatpush1.msra.mxu0 0.0
      %7487 = vmatprep.subr.mxu0 0.0
      %7488 = vmatpush1.msra.mxu0 0.0
      %7489 = vmatprep.subr.mxu0 0.0
      %7490 = vmatpush1.msra.mxu0 0.0
      %7491 = vmatprep.subr.mxu0 0.0
      %7492 = vmatpush1.msra.mxu0 0.0
      %7493 = vmatprep.subr.mxu0 0.0
      %7494 = vmatpush1.msra.mxu0 0.0
      %7495 = vmatprep.subr.mxu0 0.0
      %7496 = vmatpush1.msra.mxu0 0.0
      %7497 = vmatprep.mubr.f32.mxu0 0.0
      %7498 = vmatmul.mubr.f32.gmra.mrb[0].mxu0 %v7431
      %v7499 = vpop.f32.mrb[0].mxu0
      %v7500 = vadd.f32 0.0, %v7499
      %v7501 = vpop.f32.mrb[0].mxu0
      %v7502 = vadd.f32 0.0, %v7501
      %7503 = vdwg.mxu0
      %v7504 = vadd.f32 %v7336, %v7500
      %v7505 = vadd.f32 %v7337, %v7502
      %s7506 = scalar_lea.vmem %s11, 512
      %v7507 = vld [vmem:[%s7506] sm:$0xff]
      %v7508 = vld [vmem:[%s7506 + $0x8] sm:$0xff]
      %v7509 = vld [vmem:[%s7506 + $0x10] sm:$0xff]
      %v7510 = vld [vmem:[%s7506 + $0x18] sm:$0xff]
      %v7511 = vld [vmem:[%s7506 + $0x20] sm:$0xff]
      %v7512 = vld [vmem:[%s7506 + $0x28] sm:$0xff]
      %v7513 = vld [vmem:[%s7506 + $0x30] sm:$0xff]
      %v7514 = vld [vmem:[%s7506 + $0x38] sm:$0xff]
      %v7523 = vunpack.c.l.b16 %v7507
      %v7524 = vunpack.c.h.b16 %v7507
      %v7525 = vunpack.c.l.b16 %v7508
      %v7526 = vunpack.c.h.b16 %v7508
      %v7527 = vunpack.c.l.b16 %v7509
      %v7528 = vunpack.c.h.b16 %v7509
      %v7529 = vunpack.c.l.b16 %v7510
      %v7530 = vunpack.c.h.b16 %v7510
      %v7531 = vunpack.c.l.b16 %v7511
      %v7532 = vunpack.c.h.b16 %v7511
      %v7533 = vunpack.c.l.b16 %v7512
      %v7534 = vunpack.c.h.b16 %v7512
      %v7535 = vunpack.c.l.b16 %v7513
      %v7536 = vunpack.c.h.b16 %v7513
      %v7537 = vunpack.c.l.b16 %v7514
      %v7538 = vunpack.c.h.b16 %v7514
      %v7539 = vpack.c.b16 %v7525, %v7523
      %v7540 = vpack.c.b16 %v7526, %v7524
      %v7541 = vpack.c.b16 %v7529, %v7527
      %v7542 = vpack.c.b16 %v7530, %v7528
      %v7543 = vpack.c.b16 %v7533, %v7531
      %v7544 = vpack.c.b16 %v7534, %v7532
      %v7545 = vpack.c.b16 %v7537, %v7535
      %v7546 = vpack.c.b16 %v7538, %v7536
      %7555 = vmatprep.subr.bf16.mxu0 %v7540
      %7556 = vmatpush1.bf16.msra.mxu0 %v7539
      %7557 = vmatprep.subr.bf16.mxu0 %v7542
      %7558 = vmatpush1.bf16.msra.mxu0 %v7541
      %7559 = vmatprep.subr.bf16.mxu0 %v7544
      %7560 = vmatpush1.bf16.msra.mxu0 %v7543
      %7561 = vmatprep.subr.bf16.mxu0 %v7546
      %7562 = vmatpush1.bf16.msra.mxu0 %v7545
      %7563 = vmatprep.subr.bf16.mxu0 0
      %7564 = vmatpush1.bf16.msra.mxu0 0
      %7565 = vmatprep.subr.bf16.mxu0 0
      %7566 = vmatpush1.bf16.msra.mxu0 0
      %7567 = vmatprep.subr.bf16.mxu0 0
      %7568 = vmatpush1.bf16.msra.mxu0 0
      %7569 = vmatprep.subr.bf16.mxu0 0
      %7570 = vmatpush1.bf16.msra.mxu0 0
      %7571 = vmatprep.subr.bf16.mxu0 0
      %7572 = vmatpush1.bf16.msra.mxu0 0
      %7573 = vmatprep.subr.bf16.mxu0 0
      %7574 = vmatpush1.bf16.msra.mxu0 0
      %7575 = vmatprep.subr.bf16.mxu0 0
      %7576 = vmatpush1.bf16.msra.mxu0 0
      %7577 = vmatprep.subr.bf16.mxu0 0
      %7578 = vmatpush1.bf16.msra.mxu0 0
      %7579 = vmatprep.subr.bf16.mxu0 0
      %7580 = vmatpush1.bf16.msra.mxu0 0
      %7581 = vmatprep.subr.bf16.mxu0 0
      %7582 = vmatpush1.bf16.msra.mxu0 0
      %7583 = vmatprep.subr.bf16.mxu0 0
      %7584 = vmatpush1.bf16.msra.mxu0 0
      %7585 = vmatprep.subr.bf16.mxu0 0
      %7586 = vmatpush1.bf16.msra.mxu0 0
      %7587 = vmatprep.mubr.bf16.mxu0 0
      %7588 = vmatmul.mubr.bf16.gmra.mrb[0].mxu0 %v6214
      %v7589 = vpop.f32.mrb[0].mxu0
      %v7590 = vadd.f32 0.0, %v7589
      %v7591 = vpop.f32.mrb[0].mxu0
      %v7592 = vadd.f32 0.0, %v7591
      %v7593 = vpop.f32.mrb[0].mxu0
      %v7594 = vpop.f32.mrb[0].mxu0
      %7595 = vdwg.mxu0
      %s7596 = scalar_lea.vmem %s10, 32
      %v7597 = vld [vmem:[%s7596] sm:$0x7]
      %v7599 = vsel %vm2843, %v7597, 0
      %7601 = vmatprep.subr.mxu0 %v7592
      %7602 = vmatpush1.msra.mxu0 %v7590
      %7603 = vmatprep.subr.mxu0 0.0
      %7604 = vmatpush1.msra.mxu0 0.0
      %7605 = vmatprep.subr.mxu0 0.0
      %7606 = vmatpush1.msra.mxu0 0.0
      %7607 = vmatprep.subr.mxu0 0.0
      %7608 = vmatpush1.msra.mxu0 0.0
      %7609 = vmatprep.subr.mxu0 0.0
      %7610 = vmatpush1.msra.mxu0 0.0
      %7611 = vmatprep.subr.mxu0 0.0
      %7612 = vmatpush1.msra.mxu0 0.0
      %7613 = vmatprep.subr.mxu0 0.0
      %7614 = vmatpush1.msra.mxu0 0.0
      %7615 = vmatprep.subr.mxu0 0.0
      %7616 = vmatpush1.msra.mxu0 0.0
      %7617 = vmatprep.subr.mxu0 0.0
      %7618 = vmatpush1.msra.mxu0 0.0
      %7619 = vmatprep.subr.mxu0 0.0
      %7620 = vmatpush1.msra.mxu0 0.0
      %7621 = vmatprep.subr.mxu0 0.0
      %7622 = vmatpush1.msra.mxu0 0.0
      %7623 = vmatprep.subr.mxu0 0.0
      %7624 = vmatpush1.msra.mxu0 0.0
      %7625 = vmatprep.subr.mxu0 0.0
      %7626 = vmatpush1.msra.mxu0 0.0
      %7627 = vmatprep.subr.mxu0 0.0
      %7628 = vmatpush1.msra.mxu0 0.0
      %7629 = vmatprep.subr.mxu0 0.0
      %7630 = vmatpush1.msra.mxu0 0.0
      %7631 = vmatprep.subr.mxu0 0.0
      %7632 = vmatpush1.msra.mxu0 0.0
      %7633 = vmatprep.subr.mxu0 0.0
      %7634 = vmatpush1.msra.mxu0 0.0
      %7635 = vmatprep.subr.mxu0 0.0
      %7636 = vmatpush1.msra.mxu0 0.0
      %7637 = vmatprep.subr.mxu0 0.0
      %7638 = vmatpush1.msra.mxu0 0.0
      %7639 = vmatprep.subr.mxu0 0.0
      %7640 = vmatpush1.msra.mxu0 0.0
      %7641 = vmatprep.subr.mxu0 0.0
      %7642 = vmatpush1.msra.mxu0 0.0
      %7643 = vmatprep.subr.mxu0 0.0
      %7644 = vmatpush1.msra.mxu0 0.0
      %7645 = vmatprep.subr.mxu0 0.0
      %7646 = vmatpush1.msra.mxu0 0.0
      %7647 = vmatprep.subr.mxu0 0.0
      %7648 = vmatpush1.msra.mxu0 0.0
      %7649 = vmatprep.subr.mxu0 0.0
      %7650 = vmatpush1.msra.mxu0 0.0
      %7651 = vmatprep.subr.mxu0 0.0
      %7652 = vmatpush1.msra.mxu0 0.0
      %7653 = vmatprep.subr.mxu0 0.0
      %7654 = vmatpush1.msra.mxu0 0.0
      %7655 = vmatprep.subr.mxu0 0.0
      %7656 = vmatpush1.msra.mxu0 0.0
      %7657 = vmatprep.subr.mxu0 0.0
      %7658 = vmatpush1.msra.mxu0 0.0
      %7659 = vmatprep.subr.mxu0 0.0
      %7660 = vmatpush1.msra.mxu0 0.0
      %7661 = vmatprep.subr.mxu0 0.0
      %7662 = vmatpush1.msra.mxu0 0.0
      %7663 = vmatprep.subr.mxu0 0.0
      %7664 = vmatpush1.msra.mxu0 0.0
      %7665 = vmatprep.mubr.f32.mxu0 0.0
      %7666 = vmatmul.mubr.f32.gmra.mrb[0].mxu0 %v7599
      %v7667 = vpop.f32.mrb[0].mxu0
      %v7668 = vadd.f32 0.0, %v7667
      %v7669 = vpop.f32.mrb[0].mxu0
      %v7670 = vadd.f32 0.0, %v7669
      %7671 = vdwg.mxu0
      %v7672 = vadd.f32 %v7504, %v7668
      %v7673 = vadd.f32 %v7505, %v7670
      %s7674 = scalar_lea.vmem %s11, 576
      %v7675 = vld [vmem:[%s7674] sm:$0xff]
      %v7676 = vld [vmem:[%s7674 + $0x8] sm:$0xff]
      %v7677 = vld [vmem:[%s7674 + $0x10] sm:$0xff]
      %v7678 = vld [vmem:[%s7674 + $0x18] sm:$0xff]
      %v7679 = vld [vmem:[%s7674 + $0x20] sm:$0xff]
      %v7680 = vld [vmem:[%s7674 + $0x28] sm:$0xff]
      %v7681 = vld [vmem:[%s7674 + $0x30] sm:$0xff]
      %v7682 = vld [vmem:[%s7674 + $0x38] sm:$0xff]
      %v7691 = vunpack.c.l.b16 %v7675
      %v7692 = vunpack.c.h.b16 %v7675
      %v7693 = vunpack.c.l.b16 %v7676
      %v7694 = vunpack.c.h.b16 %v7676
      %v7695 = vunpack.c.l.b16 %v7677
      %v7696 = vunpack.c.h.b16 %v7677
      %v7697 = vunpack.c.l.b16 %v7678
      %v7698 = vunpack.c.h.b16 %v7678
      %v7699 = vunpack.c.l.b16 %v7679
      %v7700 = vunpack.c.h.b16 %v7679
      %v7701 = vunpack.c.l.b16 %v7680
      %v7702 = vunpack.c.h.b16 %v7680
      %v7703 = vunpack.c.l.b16 %v7681
      %v7704 = vunpack.c.h.b16 %v7681
      %v7705 = vunpack.c.l.b16 %v7682
      %v7706 = vunpack.c.h.b16 %v7682
      %v7707 = vpack.c.b16 %v7693, %v7691
      %v7708 = vpack.c.b16 %v7694, %v7692
      %v7709 = vpack.c.b16 %v7697, %v7695
      %v7710 = vpack.c.b16 %v7698, %v7696
      %v7711 = vpack.c.b16 %v7701, %v7699
      %v7712 = vpack.c.b16 %v7702, %v7700
      %v7713 = vpack.c.b16 %v7705, %v7703
      %v7714 = vpack.c.b16 %v7706, %v7704
      %7723 = vmatprep.subr.bf16.mxu0 %v7708
      %7724 = vmatpush1.bf16.msra.mxu0 %v7707
      %7725 = vmatprep.subr.bf16.mxu0 %v7710
      %7726 = vmatpush1.bf16.msra.mxu0 %v7709
      %7727 = vmatprep.subr.bf16.mxu0 %v7712
      %7728 = vmatpush1.bf16.msra.mxu0 %v7711
      %7729 = vmatprep.subr.bf16.mxu0 %v7714
      %7730 = vmatpush1.bf16.msra.mxu0 %v7713
      %7731 = vmatprep.subr.bf16.mxu0 0
      %7732 = vmatpush1.bf16.msra.mxu0 0
      %7733 = vmatprep.subr.bf16.mxu0 0
      %7734 = vmatpush1.bf16.msra.mxu0 0
      %7735 = vmatprep.subr.bf16.mxu0 0
      %7736 = vmatpush1.bf16.msra.mxu0 0
      %7737 = vmatprep.subr.bf16.mxu0 0
      %7738 = vmatpush1.bf16.msra.mxu0 0
      %7739 = vmatprep.subr.bf16.mxu0 0
      %7740 = vmatpush1.bf16.msra.mxu0 0
      %7741 = vmatprep.subr.bf16.mxu0 0
      %7742 = vmatpush1.bf16.msra.mxu0 0
      %7743 = vmatprep.subr.bf16.mxu0 0
      %7744 = vmatpush1.bf16.msra.mxu0 0
      %7745 = vmatprep.subr.bf16.mxu0 0
      %7746 = vmatpush1.bf16.msra.mxu0 0
      %7747 = vmatprep.subr.bf16.mxu0 0
      %7748 = vmatpush1.bf16.msra.mxu0 0
      %7749 = vmatprep.subr.bf16.mxu0 0
      %7750 = vmatpush1.bf16.msra.mxu0 0
      %7751 = vmatprep.subr.bf16.mxu0 0
      %7752 = vmatpush1.bf16.msra.mxu0 0
      %7753 = vmatprep.subr.bf16.mxu0 0
      %7754 = vmatpush1.bf16.msra.mxu0 0
      %7755 = vmatprep.mubr.bf16.mxu0 0
      %7756 = vmatmul.mubr.bf16.gmra.mrb[0].mxu0 %v6214
      %v7757 = vpop.f32.mrb[0].mxu0
      %v7758 = vadd.f32 0.0, %v7757
      %v7759 = vpop.f32.mrb[0].mxu0
      %v7760 = vadd.f32 0.0, %v7759
      %v7761 = vpop.f32.mrb[0].mxu0
      %v7762 = vpop.f32.mrb[0].mxu0
      %7763 = vdwg.mxu0
      %s7764 = scalar_lea.vmem %s10, 36
      %v7765 = vld [vmem:[%s7764] sm:$0x7]
      %v7767 = vsel %vm2843, %v7765, 0
      %7769 = vmatprep.subr.mxu0 %v7760
      %7770 = vmatpush1.msra.mxu0 %v7758
      %7771 = vmatprep.subr.mxu0 0.0
      %7772 = vmatpush1.msra.mxu0 0.0
      %7773 = vmatprep.subr.mxu0 0.0
      %7774 = vmatpush1.msra.mxu0 0.0
      %7775 = vmatprep.subr.mxu0 0.0
      %7776 = vmatpush1.msra.mxu0 0.0
      %7777 = vmatprep.subr.mxu0 0.0
      %7778 = vmatpush1.msra.mxu0 0.0
      %7779 = vmatprep.subr.mxu0 0.0
      %7780 = vmatpush1.msra.mxu0 0.0
      %7781 = vmatprep.subr.mxu0 0.0
      %7782 = vmatpush1.msra.mxu0 0.0
      %7783 = vmatprep.subr.mxu0 0.0
      %7784 = vmatpush1.msra.mxu0 0.0
      %7785 = vmatprep.subr.mxu0 0.0
      %7786 = vmatpush1.msra.mxu0 0.0
      %7787 = vmatprep.subr.mxu0 0.0
      %7788 = vmatpush1.msra.mxu0 0.0
      %7789 = vmatprep.subr.mxu0 0.0
      %7790 = vmatpush1.msra.mxu0 0.0
      %7791 = vmatprep.subr.mxu0 0.0
      %7792 = vmatpush1.msra.mxu0 0.0
      %7793 = vmatprep.subr.mxu0 0.0
      %7794 = vmatpush1.msra.mxu0 0.0
      %7795 = vmatprep.subr.mxu0 0.0
      %7796 = vmatpush1.msra.mxu0 0.0
      %7797 = vmatprep.subr.mxu0 0.0
      %7798 = vmatpush1.msra.mxu0 0.0
      %7799 = vmatprep.subr.mxu0 0.0
      %7800 = vmatpush1.msra.mxu0 0.0
      %7801 = vmatprep.subr.mxu0 0.0
      %7802 = vmatpush1.msra.mxu0 0.0
      %7803 = vmatprep.subr.mxu0 0.0
      %7804 = vmatpush1.msra.mxu0 0.0
      %7805 = vmatprep.subr.mxu0 0.0
      %7806 = vmatpush1.msra.mxu0 0.0
      %7807 = vmatprep.subr.mxu0 0.0
      %7808 = vmatpush1.msra.mxu0 0.0
      %7809 = vmatprep.subr.mxu0 0.0
      %7810 = vmatpush1.msra.mxu0 0.0
      %7811 = vmatprep.subr.mxu0 0.0
      %7812 = vmatpush1.msra.mxu0 0.0
      %7813 = vmatprep.subr.mxu0 0.0
      %7814 = vmatpush1.msra.mxu0 0.0
      %7815 = vmatprep.subr.mxu0 0.0
      %7816 = vmatpush1.msra.mxu0 0.0
      %7817 = vmatprep.subr.mxu0 0.0
      %7818 = vmatpush1.msra.mxu0 0.0
      %7819 = vmatprep.subr.mxu0 0.0
      %7820 = vmatpush1.msra.mxu0 0.0
      %7821 = vmatprep.subr.mxu0 0.0
      %7822 = vmatpush1.msra.mxu0 0.0
      %7823 = vmatprep.subr.mxu0 0.0
      %7824 = vmatpush1.msra.mxu0 0.0
      %7825 = vmatprep.subr.mxu0 0.0
      %7826 = vmatpush1.msra.mxu0 0.0
      %7827 = vmatprep.subr.mxu0 0.0
      %7828 = vmatpush1.msra.mxu0 0.0
      %7829 = vmatprep.subr.mxu0 0.0
      %7830 = vmatpush1.msra.mxu0 0.0
      %7831 = vmatprep.subr.mxu0 0.0
      %7832 = vmatpush1.msra.mxu0 0.0
      %7833 = vmatprep.mubr.f32.mxu0 0.0
      %7834 = vmatmul.mubr.f32.gmra.mrb[0].mxu0 %v7767
      %v7835 = vpop.f32.mrb[0].mxu0
      %v7836 = vadd.f32 0.0, %v7835
      %v7837 = vpop.f32.mrb[0].mxu0
      %v7838 = vadd.f32 0.0, %v7837
      %7839 = vdwg.mxu0
      %v7840 = vadd.f32 %v7672, %v7836
      %v7841 = vadd.f32 %v7673, %v7838
      %s7842 = scalar_lea.vmem %s11, 640
      %v7843 = vld [vmem:[%s7842] sm:$0xff]
      %v7844 = vld [vmem:[%s7842 + $0x8] sm:$0xff]
      %v7845 = vld [vmem:[%s7842 + $0x10] sm:$0xff]
      %v7846 = vld [vmem:[%s7842 + $0x18] sm:$0xff]
      %v7847 = vld [vmem:[%s7842 + $0x20] sm:$0xff]
      %v7848 = vld [vmem:[%s7842 + $0x28] sm:$0xff]
      %v7849 = vld [vmem:[%s7842 + $0x30] sm:$0xff]
      %v7850 = vld [vmem:[%s7842 + $0x38] sm:$0xff]
      %v7859 = vunpack.c.l.b16 %v7843
      %v7860 = vunpack.c.h.b16 %v7843
      %v7861 = vunpack.c.l.b16 %v7844
      %v7862 = vunpack.c.h.b16 %v7844
      %v7863 = vunpack.c.l.b16 %v7845
      %v7864 = vunpack.c.h.b16 %v7845
      %v7865 = vunpack.c.l.b16 %v7846
      %v7866 = vunpack.c.h.b16 %v7846
      %v7867 = vunpack.c.l.b16 %v7847
      %v7868 = vunpack.c.h.b16 %v7847
      %v7869 = vunpack.c.l.b16 %v7848
      %v7870 = vunpack.c.h.b16 %v7848
      %v7871 = vunpack.c.l.b16 %v7849
      %v7872 = vunpack.c.h.b16 %v7849
      %v7873 = vunpack.c.l.b16 %v7850
      %v7874 = vunpack.c.h.b16 %v7850
      %v7875 = vpack.c.b16 %v7861, %v7859
      %v7876 = vpack.c.b16 %v7862, %v7860
      %v7877 = vpack.c.b16 %v7865, %v7863
      %v7878 = vpack.c.b16 %v7866, %v7864
      %v7879 = vpack.c.b16 %v7869, %v7867
      %v7880 = vpack.c.b16 %v7870, %v7868
      %v7881 = vpack.c.b16 %v7873, %v7871
      %v7882 = vpack.c.b16 %v7874, %v7872
      %7891 = vmatprep.subr.bf16.mxu0 %v7876
      %7892 = vmatpush1.bf16.msra.mxu0 %v7875
      %7893 = vmatprep.subr.bf16.mxu0 %v7878
      %7894 = vmatpush1.bf16.msra.mxu0 %v7877
      %7895 = vmatprep.subr.bf16.mxu0 %v7880
      %7896 = vmatpush1.bf16.msra.mxu0 %v7879
      %7897 = vmatprep.subr.bf16.mxu0 %v7882
      %7898 = vmatpush1.bf16.msra.mxu0 %v7881
      %7899 = vmatprep.subr.bf16.mxu0 0
      %7900 = vmatpush1.bf16.msra.mxu0 0
      %7901 = vmatprep.subr.bf16.mxu0 0
      %7902 = vmatpush1.bf16.msra.mxu0 0
      %7903 = vmatprep.subr.bf16.mxu0 0
      %7904 = vmatpush1.bf16.msra.mxu0 0
      %7905 = vmatprep.subr.bf16.mxu0 0
      %7906 = vmatpush1.bf16.msra.mxu0 0
      %7907 = vmatprep.subr.bf16.mxu0 0
      %7908 = vmatpush1.bf16.msra.mxu0 0
      %7909 = vmatprep.subr.bf16.mxu0 0
      %7910 = vmatpush1.bf16.msra.mxu0 0
      %7911 = vmatprep.subr.bf16.mxu0 0
      %7912 = vmatpush1.bf16.msra.mxu0 0
      %7913 = vmatprep.subr.bf16.mxu0 0
      %7914 = vmatpush1.bf16.msra.mxu0 0
      %7915 = vmatprep.subr.bf16.mxu0 0
      %7916 = vmatpush1.bf16.msra.mxu0 0
      %7917 = vmatprep.subr.bf16.mxu0 0
      %7918 = vmatpush1.bf16.msra.mxu0 0
      %7919 = vmatprep.subr.bf16.mxu0 0
      %7920 = vmatpush1.bf16.msra.mxu0 0
      %7921 = vmatprep.subr.bf16.mxu0 0
      %7922 = vmatpush1.bf16.msra.mxu0 0
      %7923 = vmatprep.mubr.bf16.mxu0 0
      %7924 = vmatmul.mubr.bf16.gmra.mrb[0].mxu0 %v6214
      %v7925 = vpop.f32.mrb[0].mxu0
      %v7926 = vadd.f32 0.0, %v7925
      %v7927 = vpop.f32.mrb[0].mxu0
      %v7928 = vadd.f32 0.0, %v7927
      %v7929 = vpop.f32.mrb[0].mxu0
      %v7930 = vpop.f32.mrb[0].mxu0
      %7931 = vdwg.mxu0
      %s7932 = scalar_lea.vmem %s10, 40
      %v7933 = vld [vmem:[%s7932] sm:$0x7]
      %v7935 = vsel %vm2843, %v7933, 0
      %7937 = vmatprep.subr.mxu0 %v7928
      %7938 = vmatpush1.msra.mxu0 %v7926
      %7939 = vmatprep.subr.mxu0 0.0
      %7940 = vmatpush1.msra.mxu0 0.0
      %7941 = vmatprep.subr.mxu0 0.0
      %7942 = vmatpush1.msra.mxu0 0.0
      %7943 = vmatprep.subr.mxu0 0.0
      %7944 = vmatpush1.msra.mxu0 0.0
      %7945 = vmatprep.subr.mxu0 0.0
      %7946 = vmatpush1.msra.mxu0 0.0
      %7947 = vmatprep.subr.mxu0 0.0
      %7948 = vmatpush1.msra.mxu0 0.0
      %7949 = vmatprep.subr.mxu0 0.0
      %7950 = vmatpush1.msra.mxu0 0.0
      %7951 = vmatprep.subr.mxu0 0.0
      %7952 = vmatpush1.msra.mxu0 0.0
      %7953 = vmatprep.subr.mxu0 0.0
      %7954 = vmatpush1.msra.mxu0 0.0
      %7955 = vmatprep.subr.mxu0 0.0
      %7956 = vmatpush1.msra.mxu0 0.0
      %7957 = vmatprep.subr.mxu0 0.0
      %7958 = vmatpush1.msra.mxu0 0.0
      %7959 = vmatprep.subr.mxu0 0.0
      %7960 = vmatpush1.msra.mxu0 0.0
      %7961 = vmatprep.subr.mxu0 0.0
      %7962 = vmatpush1.msra.mxu0 0.0
      %7963 = vmatprep.subr.mxu0 0.0
      %7964 = vmatpush1.msra.mxu0 0.0
      %7965 = vmatprep.subr.mxu0 0.0
      %7966 = vmatpush1.msra.mxu0 0.0
      %7967 = vmatprep.subr.mxu0 0.0
      %7968 = vmatpush1.msra.mxu0 0.0
      %7969 = vmatprep.subr.mxu0 0.0
      %7970 = vmatpush1.msra.mxu0 0.0
      %7971 = vmatprep.subr.mxu0 0.0
      %7972 = vmatpush1.msra.mxu0 0.0
      %7973 = vmatprep.subr.mxu0 0.0
      %7974 = vmatpush1.msra.mxu0 0.0
      %7975 = vmatprep.subr.mxu0 0.0
      %7976 = vmatpush1.msra.mxu0 0.0
      %7977 = vmatprep.subr.mxu0 0.0
      %7978 = vmatpush1.msra.mxu0 0.0
      %7979 = vmatprep.subr.mxu0 0.0
      %7980 = vmatpush1.msra.mxu0 0.0
      %7981 = vmatprep.subr.mxu0 0.0
      %7982 = vmatpush1.msra.mxu0 0.0
      %7983 = vmatprep.subr.mxu0 0.0
      %7984 = vmatpush1.msra.mxu0 0.0
      %7985 = vmatprep.subr.mxu0 0.0
      %7986 = vmatpush1.msra.mxu0 0.0
      %7987 = vmatprep.subr.mxu0 0.0
      %7988 = vmatpush1.msra.mxu0 0.0
      %7989 = vmatprep.subr.mxu0 0.0
      %7990 = vmatpush1.msra.mxu0 0.0
      %7991 = vmatprep.subr.mxu0 0.0
      %7992 = vmatpush1.msra.mxu0 0.0
      %7993 = vmatprep.subr.mxu0 0.0
      %7994 = vmatpush1.msra.mxu0 0.0
      %7995 = vmatprep.subr.mxu0 0.0
      %7996 = vmatpush1.msra.mxu0 0.0
      %7997 = vmatprep.subr.mxu0 0.0
      %7998 = vmatpush1.msra.mxu0 0.0
      %7999 = vmatprep.subr.mxu0 0.0
      %8000 = vmatpush1.msra.mxu0 0.0
      %8001 = vmatprep.mubr.f32.mxu0 0.0
      %8002 = vmatmul.mubr.f32.gmra.mrb[0].mxu0 %v7935
      %v8003 = vpop.f32.mrb[0].mxu0
      %v8004 = vadd.f32 0.0, %v8003
      %v8005 = vpop.f32.mrb[0].mxu0
      %v8006 = vadd.f32 0.0, %v8005
      %8007 = vdwg.mxu0
      %v8008 = vadd.f32 %v7840, %v8004
      %v8009 = vadd.f32 %v7841, %v8006
      %s8010 = scalar_lea.vmem %s11, 704
      %v8011 = vld [vmem:[%s8010] sm:$0xff]
      %v8012 = vld [vmem:[%s8010 + $0x8] sm:$0xff]
      %v8013 = vld [vmem:[%s8010 + $0x10] sm:$0xff]
      %v8014 = vld [vmem:[%s8010 + $0x18] sm:$0xff]
      %v8015 = vld [vmem:[%s8010 + $0x20] sm:$0xff]
      %v8016 = vld [vmem:[%s8010 + $0x28] sm:$0xff]
      %v8017 = vld [vmem:[%s8010 + $0x30] sm:$0xff]
      %v8018 = vld [vmem:[%s8010 + $0x38] sm:$0xff]
      %v8027 = vunpack.c.l.b16 %v8011
      %v8028 = vunpack.c.h.b16 %v8011
      %v8029 = vunpack.c.l.b16 %v8012
      %v8030 = vunpack.c.h.b16 %v8012
      %v8031 = vunpack.c.l.b16 %v8013
      %v8032 = vunpack.c.h.b16 %v8013
      %v8033 = vunpack.c.l.b16 %v8014
      %v8034 = vunpack.c.h.b16 %v8014
      %v8035 = vunpack.c.l.b16 %v8015
      %v8036 = vunpack.c.h.b16 %v8015
      %v8037 = vunpack.c.l.b16 %v8016
      %v8038 = vunpack.c.h.b16 %v8016
      %v8039 = vunpack.c.l.b16 %v8017
      %v8040 = vunpack.c.h.b16 %v8017
      %v8041 = vunpack.c.l.b16 %v8018
      %v8042 = vunpack.c.h.b16 %v8018
      %v8043 = vpack.c.b16 %v8029, %v8027
      %v8044 = vpack.c.b16 %v8030, %v8028
      %v8045 = vpack.c.b16 %v8033, %v8031
      %v8046 = vpack.c.b16 %v8034, %v8032
      %v8047 = vpack.c.b16 %v8037, %v8035
      %v8048 = vpack.c.b16 %v8038, %v8036
      %v8049 = vpack.c.b16 %v8041, %v8039
      %v8050 = vpack.c.b16 %v8042, %v8040
      %8059 = vmatprep.subr.bf16.mxu0 %v8044
      %8060 = vmatpush1.bf16.msra.mxu0 %v8043
      %8061 = vmatprep.subr.bf16.mxu0 %v8046
      %8062 = vmatpush1.bf16.msra.mxu0 %v8045
      %8063 = vmatprep.subr.bf16.mxu0 %v8048
      %8064 = vmatpush1.bf16.msra.mxu0 %v8047
      %8065 = vmatprep.subr.bf16.mxu0 %v8050
      %8066 = vmatpush1.bf16.msra.mxu0 %v8049
      %8067 = vmatprep.subr.bf16.mxu0 0
      %8068 = vmatpush1.bf16.msra.mxu0 0
      %8069 = vmatprep.subr.bf16.mxu0 0
      %8070 = vmatpush1.bf16.msra.mxu0 0
      %8071 = vmatprep.subr.bf16.mxu0 0
      %8072 = vmatpush1.bf16.msra.mxu0 0
      %8073 = vmatprep.subr.bf16.mxu0 0
      %8074 = vmatpush1.bf16.msra.mxu0 0
      %8075 = vmatprep.subr.bf16.mxu0 0
      %8076 = vmatpush1.bf16.msra.mxu0 0
      %8077 = vmatprep.subr.bf16.mxu0 0
      %8078 = vmatpush1.bf16.msra.mxu0 0
      %8079 = vmatprep.subr.bf16.mxu0 0
      %8080 = vmatpush1.bf16.msra.mxu0 0
      %8081 = vmatprep.subr.bf16.mxu0 0
      %8082 = vmatpush1.bf16.msra.mxu0 0
      %8083 = vmatprep.subr.bf16.mxu0 0
      %8084 = vmatpush1.bf16.msra.mxu0 0
      %8085 = vmatprep.subr.bf16.mxu0 0
      %8086 = vmatpush1.bf16.msra.mxu0 0
      %8087 = vmatprep.subr.bf16.mxu0 0
      %8088 = vmatpush1.bf16.msra.mxu0 0
      %8089 = vmatprep.subr.bf16.mxu0 0
      %8090 = vmatpush1.bf16.msra.mxu0 0
      %8091 = vmatprep.mubr.bf16.mxu0 0
      %8092 = vmatmul.mubr.bf16.gmra.mrb[0].mxu0 %v6214
      %v8093 = vpop.f32.mrb[0].mxu0
      %v8094 = vadd.f32 0.0, %v8093
      %v8095 = vpop.f32.mrb[0].mxu0
      %v8096 = vadd.f32 0.0, %v8095
      %v8097 = vpop.f32.mrb[0].mxu0
      %v8098 = vpop.f32.mrb[0].mxu0
      %8099 = vdwg.mxu0
      %s8100 = scalar_lea.vmem %s10, 44
      %v8101 = vld [vmem:[%s8100] sm:$0x7]
      %v8103 = vsel %vm2843, %v8101, 0
      %8105 = vmatprep.subr.mxu0 %v8096
      %8106 = vmatpush1.msra.mxu0 %v8094
      %8107 = vmatprep.subr.mxu0 0.0
      %8108 = vmatpush1.msra.mxu0 0.0
      %8109 = vmatprep.subr.mxu0 0.0
      %8110 = vmatpush1.msra.mxu0 0.0
      %8111 = vmatprep.subr.mxu0 0.0
      %8112 = vmatpush1.msra.mxu0 0.0
      %8113 = vmatprep.subr.mxu0 0.0
      %8114 = vmatpush1.msra.mxu0 0.0
      %8115 = vmatprep.subr.mxu0 0.0
      %8116 = vmatpush1.msra.mxu0 0.0
      %8117 = vmatprep.subr.mxu0 0.0
      %8118 = vmatpush1.msra.mxu0 0.0
      %8119 = vmatprep.subr.mxu0 0.0
      %8120 = vmatpush1.msra.mxu0 0.0
      %8121 = vmatprep.subr.mxu0 0.0
      %8122 = vmatpush1.msra.mxu0 0.0
      %8123 = vmatprep.subr.mxu0 0.0
      %8124 = vmatpush1.msra.mxu0 0.0
      %8125 = vmatprep.subr.mxu0 0.0
      %8126 = vmatpush1.msra.mxu0 0.0
      %8127 = vmatprep.subr.mxu0 0.0
      %8128 = vmatpush1.msra.mxu0 0.0
      %8129 = vmatprep.subr.mxu0 0.0
      %8130 = vmatpush1.msra.mxu0 0.0
      %8131 = vmatprep.subr.mxu0 0.0
      %8132 = vmatpush1.msra.mxu0 0.0
      %8133 = vmatprep.subr.mxu0 0.0
      %8134 = vmatpush1.msra.mxu0 0.0
      %8135 = vmatprep.subr.mxu0 0.0
      %8136 = vmatpush1.msra.mxu0 0.0
      %8137 = vmatprep.subr.mxu0 0.0
      %8138 = vmatpush1.msra.mxu0 0.0
      %8139 = vmatprep.subr.mxu0 0.0
      %8140 = vmatpush1.msra.mxu0 0.0
      %8141 = vmatprep.subr.mxu0 0.0
      %8142 = vmatpush1.msra.mxu0 0.0
      %8143 = vmatprep.subr.mxu0 0.0
      %8144 = vmatpush1.msra.mxu0 0.0
      %8145 = vmatprep.subr.mxu0 0.0
      %8146 = vmatpush1.msra.mxu0 0.0
      %8147 = vmatprep.subr.mxu0 0.0
      %8148 = vmatpush1.msra.mxu0 0.0
      %8149 = vmatprep.subr.mxu0 0.0
      %8150 = vmatpush1.msra.mxu0 0.0
      %8151 = vmatprep.subr.mxu0 0.0
      %8152 = vmatpush1.msra.mxu0 0.0
      %8153 = vmatprep.subr.mxu0 0.0
      %8154 = vmatpush1.msra.mxu0 0.0
      %8155 = vmatprep.subr.mxu0 0.0
      %8156 = vmatpush1.msra.mxu0 0.0
      %8157 = vmatprep.subr.mxu0 0.0
      %8158 = vmatpush1.msra.mxu0 0.0
      %8159 = vmatprep.subr.mxu0 0.0
      %8160 = vmatpush1.msra.mxu0 0.0
      %8161 = vmatprep.subr.mxu0 0.0
      %8162 = vmatpush1.msra.mxu0 0.0
      %8163 = vmatprep.subr.mxu0 0.0
      %8164 = vmatpush1.msra.mxu0 0.0
      %8165 = vmatprep.subr.mxu0 0.0
      %8166 = vmatpush1.msra.mxu0 0.0
      %8167 = vmatprep.subr.mxu0 0.0
      %8168 = vmatpush1.msra.mxu0 0.0
      %8169 = vmatprep.mubr.f32.mxu0 0.0
      %8170 = vmatmul.mubr.f32.gmra.mrb[0].mxu0 %v8103
      %v8171 = vpop.f32.mrb[0].mxu0
      %v8172 = vadd.f32 0.0, %v8171
      %v8173 = vpop.f32.mrb[0].mxu0
      %v8174 = vadd.f32 0.0, %v8173
      %8175 = vdwg.mxu0
      %v8176 = vadd.f32 %v8008, %v8172
      %v8177 = vadd.f32 %v8009, %v8174
      %s8178 = scalar_lea.vmem %s11, 768
      %v8179 = vld [vmem:[%s8178] sm:$0xff]
      %v8180 = vld [vmem:[%s8178 + $0x8] sm:$0xff]
      %v8181 = vld [vmem:[%s8178 + $0x10] sm:$0xff]
      %v8182 = vld [vmem:[%s8178 + $0x18] sm:$0xff]
      %v8183 = vld [vmem:[%s8178 + $0x20] sm:$0xff]
      %v8184 = vld [vmem:[%s8178 + $0x28] sm:$0xff]
      %v8185 = vld [vmem:[%s8178 + $0x30] sm:$0xff]
      %v8186 = vld [vmem:[%s8178 + $0x38] sm:$0xff]
      %v8195 = vunpack.c.l.b16 %v8179
      %v8196 = vunpack.c.h.b16 %v8179
      %v8197 = vunpack.c.l.b16 %v8180
      %v8198 = vunpack.c.h.b16 %v8180
      %v8199 = vunpack.c.l.b16 %v8181
      %v8200 = vunpack.c.h.b16 %v8181
      %v8201 = vunpack.c.l.b16 %v8182
      %v8202 = vunpack.c.h.b16 %v8182
      %v8203 = vunpack.c.l.b16 %v8183
      %v8204 = vunpack.c.h.b16 %v8183
      %v8205 = vunpack.c.l.b16 %v8184
      %v8206 = vunpack.c.h.b16 %v8184
      %v8207 = vunpack.c.l.b16 %v8185
      %v8208 = vunpack.c.h.b16 %v8185
      %v8209 = vunpack.c.l.b16 %v8186
      %v8210 = vunpack.c.h.b16 %v8186
      %v8211 = vpack.c.b16 %v8197, %v8195
      %v8212 = vpack.c.b16 %v8198, %v8196
      %v8213 = vpack.c.b16 %v8201, %v8199
      %v8214 = vpack.c.b16 %v8202, %v8200
      %v8215 = vpack.c.b16 %v8205, %v8203
      %v8216 = vpack.c.b16 %v8206, %v8204
      %v8217 = vpack.c.b16 %v8209, %v8207
      %v8218 = vpack.c.b16 %v8210, %v8208
      %8227 = vmatprep.subr.bf16.mxu0 %v8212
      %8228 = vmatpush1.bf16.msra.mxu0 %v8211
      %8229 = vmatprep.subr.bf16.mxu0 %v8214
      %8230 = vmatpush1.bf16.msra.mxu0 %v8213
      %8231 = vmatprep.subr.bf16.mxu0 %v8216
      %8232 = vmatpush1.bf16.msra.mxu0 %v8215
      %8233 = vmatprep.subr.bf16.mxu0 %v8218
      %8234 = vmatpush1.bf16.msra.mxu0 %v8217
      %8235 = vmatprep.subr.bf16.mxu0 0
      %8236 = vmatpush1.bf16.msra.mxu0 0
      %8237 = vmatprep.subr.bf16.mxu0 0
      %8238 = vmatpush1.bf16.msra.mxu0 0
      %8239 = vmatprep.subr.bf16.mxu0 0
      %8240 = vmatpush1.bf16.msra.mxu0 0
      %8241 = vmatprep.subr.bf16.mxu0 0
      %8242 = vmatpush1.bf16.msra.mxu0 0
      %8243 = vmatprep.subr.bf16.mxu0 0
      %8244 = vmatpush1.bf16.msra.mxu0 0
      %8245 = vmatprep.subr.bf16.mxu0 0
      %8246 = vmatpush1.bf16.msra.mxu0 0
      %8247 = vmatprep.subr.bf16.mxu0 0
      %8248 = vmatpush1.bf16.msra.mxu0 0
      %8249 = vmatprep.subr.bf16.mxu0 0
      %8250 = vmatpush1.bf16.msra.mxu0 0
      %8251 = vmatprep.subr.bf16.mxu0 0
      %8252 = vmatpush1.bf16.msra.mxu0 0
      %8253 = vmatprep.subr.bf16.mxu0 0
      %8254 = vmatpush1.bf16.msra.mxu0 0
      %8255 = vmatprep.subr.bf16.mxu0 0
      %8256 = vmatpush1.bf16.msra.mxu0 0
      %8257 = vmatprep.subr.bf16.mxu0 0
      %8258 = vmatpush1.bf16.msra.mxu0 0
      %8259 = vmatprep.mubr.bf16.mxu0 0
      %8260 = vmatmul.mubr.bf16.gmra.mrb[0].mxu0 %v6214
      %v8261 = vpop.f32.mrb[0].mxu0
      %v8262 = vadd.f32 0.0, %v8261
      %v8263 = vpop.f32.mrb[0].mxu0
      %v8264 = vadd.f32 0.0, %v8263
      %v8265 = vpop.f32.mrb[0].mxu0
      %v8266 = vpop.f32.mrb[0].mxu0
      %8267 = vdwg.mxu0
      %s8268 = scalar_lea.vmem %s10, 48
      %v8269 = vld [vmem:[%s8268] sm:$0x7]
      %v8271 = vsel %vm2843, %v8269, 0
      %8273 = vmatprep.subr.mxu0 %v8264
      %8274 = vmatpush1.msra.mxu0 %v8262
      %8275 = vmatprep.subr.mxu0 0.0
      %8276 = vmatpush1.msra.mxu0 0.0
      %8277 = vmatprep.subr.mxu0 0.0
      %8278 = vmatpush1.msra.mxu0 0.0
      %8279 = vmatprep.subr.mxu0 0.0
      %8280 = vmatpush1.msra.mxu0 0.0
      %8281 = vmatprep.subr.mxu0 0.0
      %8282 = vmatpush1.msra.mxu0 0.0
      %8283 = vmatprep.subr.mxu0 0.0
      %8284 = vmatpush1.msra.mxu0 0.0
      %8285 = vmatprep.subr.mxu0 0.0
      %8286 = vmatpush1.msra.mxu0 0.0
      %8287 = vmatprep.subr.mxu0 0.0
      %8288 = vmatpush1.msra.mxu0 0.0
      %8289 = vmatprep.subr.mxu0 0.0
      %8290 = vmatpush1.msra.mxu0 0.0
      %8291 = vmatprep.subr.mxu0 0.0
      %8292 = vmatpush1.msra.mxu0 0.0
      %8293 = vmatprep.subr.mxu0 0.0
      %8294 = vmatpush1.msra.mxu0 0.0
      %8295 = vmatprep.subr.mxu0 0.0
      %8296 = vmatpush1.msra.mxu0 0.0
      %8297 = vmatprep.subr.mxu0 0.0
      %8298 = vmatpush1.msra.mxu0 0.0
      %8299 = vmatprep.subr.mxu0 0.0
      %8300 = vmatpush1.msra.mxu0 0.0
      %8301 = vmatprep.subr.mxu0 0.0
      %8302 = vmatpush1.msra.mxu0 0.0
      %8303 = vmatprep.subr.mxu0 0.0
      %8304 = vmatpush1.msra.mxu0 0.0
      %8305 = vmatprep.subr.mxu0 0.0
      %8306 = vmatpush1.msra.mxu0 0.0
      %8307 = vmatprep.subr.mxu0 0.0
      %8308 = vmatpush1.msra.mxu0 0.0
      %8309 = vmatprep.subr.mxu0 0.0
      %8310 = vmatpush1.msra.mxu0 0.0
      %8311 = vmatprep.subr.mxu0 0.0
      %8312 = vmatpush1.msra.mxu0 0.0
      %8313 = vmatprep.subr.mxu0 0.0
      %8314 = vmatpush1.msra.mxu0 0.0
      %8315 = vmatprep.subr.mxu0 0.0
      %8316 = vmatpush1.msra.mxu0 0.0
      %8317 = vmatprep.subr.mxu0 0.0
      %8318 = vmatpush1.msra.mxu0 0.0
      %8319 = vmatprep.subr.mxu0 0.0
      %8320 = vmatpush1.msra.mxu0 0.0
      %8321 = vmatprep.subr.mxu0 0.0
      %8322 = vmatpush1.msra.mxu0 0.0
      %8323 = vmatprep.subr.mxu0 0.0
      %8324 = vmatpush1.msra.mxu0 0.0
      %8325 = vmatprep.subr.mxu0 0.0
      %8326 = vmatpush1.msra.mxu0 0.0
      %8327 = vmatprep.subr.mxu0 0.0
      %8328 = vmatpush1.msra.mxu0 0.0
      %8329 = vmatprep.subr.mxu0 0.0
      %8330 = vmatpush1.msra.mxu0 0.0
      %8331 = vmatprep.subr.mxu0 0.0
      %8332 = vmatpush1.msra.mxu0 0.0
      %8333 = vmatprep.subr.mxu0 0.0
      %8334 = vmatpush1.msra.mxu0 0.0
      %8335 = vmatprep.subr.mxu0 0.0
      %8336 = vmatpush1.msra.mxu0 0.0
      %8337 = vmatprep.mubr.f32.mxu0 0.0
      %8338 = vmatmul.mubr.f32.gmra.mrb[0].mxu0 %v8271
      %v8339 = vpop.f32.mrb[0].mxu0
      %v8340 = vadd.f32 0.0, %v8339
      %v8341 = vpop.f32.mrb[0].mxu0
      %v8342 = vadd.f32 0.0, %v8341
      %8343 = vdwg.mxu0
      %v8344 = vadd.f32 %v8176, %v8340
      %v8345 = vadd.f32 %v8177, %v8342
      %s8346 = scalar_lea.vmem %s11, 832
      %v8347 = vld [vmem:[%s8346] sm:$0xff]
      %v8348 = vld [vmem:[%s8346 + $0x8] sm:$0xff]
      %v8349 = vld [vmem:[%s8346 + $0x10] sm:$0xff]
      %v8350 = vld [vmem:[%s8346 + $0x18] sm:$0xff]
      %v8351 = vld [vmem:[%s8346 + $0x20] sm:$0xff]
      %v8352 = vld [vmem:[%s8346 + $0x28] sm:$0xff]
      %v8353 = vld [vmem:[%s8346 + $0x30] sm:$0xff]
      %v8354 = vld [vmem:[%s8346 + $0x38] sm:$0xff]
      %v8363 = vunpack.c.l.b16 %v8347
      %v8364 = vunpack.c.h.b16 %v8347
      %v8365 = vunpack.c.l.b16 %v8348
      %v8366 = vunpack.c.h.b16 %v8348
      %v8367 = vunpack.c.l.b16 %v8349
      %v8368 = vunpack.c.h.b16 %v8349
      %v8369 = vunpack.c.l.b16 %v8350
      %v8370 = vunpack.c.h.b16 %v8350
      %v8371 = vunpack.c.l.b16 %v8351
      %v8372 = vunpack.c.h.b16 %v8351
      %v8373 = vunpack.c.l.b16 %v8352
      %v8374 = vunpack.c.h.b16 %v8352
      %v8375 = vunpack.c.l.b16 %v8353
      %v8376 = vunpack.c.h.b16 %v8353
      %v8377 = vunpack.c.l.b16 %v8354
      %v8378 = vunpack.c.h.b16 %v8354
      %v8379 = vpack.c.b16 %v8365, %v8363
      %v8380 = vpack.c.b16 %v8366, %v8364
      %v8381 = vpack.c.b16 %v8369, %v8367
      %v8382 = vpack.c.b16 %v8370, %v8368
      %v8383 = vpack.c.b16 %v8373, %v8371
      %v8384 = vpack.c.b16 %v8374, %v8372
      %v8385 = vpack.c.b16 %v8377, %v8375
      %v8386 = vpack.c.b16 %v8378, %v8376
      %8395 = vmatprep.subr.bf16.mxu0 %v8380
      %8396 = vmatpush1.bf16.msra.mxu0 %v8379
      %8397 = vmatprep.subr.bf16.mxu0 %v8382
      %8398 = vmatpush1.bf16.msra.mxu0 %v8381
      %8399 = vmatprep.subr.bf16.mxu0 %v8384
      %8400 = vmatpush1.bf16.msra.mxu0 %v8383
      %8401 = vmatprep.subr.bf16.mxu0 %v8386
      %8402 = vmatpush1.bf16.msra.mxu0 %v8385
      %8403 = vmatprep.subr.bf16.mxu0 0
      %8404 = vmatpush1.bf16.msra.mxu0 0
      %8405 = vmatprep.subr.bf16.mxu0 0
      %8406 = vmatpush1.bf16.msra.mxu0 0
      %8407 = vmatprep.subr.bf16.mxu0 0
      %8408 = vmatpush1.bf16.msra.mxu0 0
      %8409 = vmatprep.subr.bf16.mxu0 0
      %8410 = vmatpush1.bf16.msra.mxu0 0
      %8411 = vmatprep.subr.bf16.mxu0 0
      %8412 = vmatpush1.bf16.msra.mxu0 0
      %8413 = vmatprep.subr.bf16.mxu0 0
      %8414 = vmatpush1.bf16.msra.mxu0 0
      %8415 = vmatprep.subr.bf16.mxu0 0
      %8416 = vmatpush1.bf16.msra.mxu0 0
      %8417 = vmatprep.subr.bf16.mxu0 0
      %8418 = vmatpush1.bf16.msra.mxu0 0
      %8419 = vmatprep.subr.bf16.mxu0 0
      %8420 = vmatpush1.bf16.msra.mxu0 0
      %8421 = vmatprep.subr.bf16.mxu0 0
      %8422 = vmatpush1.bf16.msra.mxu0 0
      %8423 = vmatprep.subr.bf16.mxu0 0
      %8424 = vmatpush1.bf16.msra.mxu0 0
      %8425 = vmatprep.subr.bf16.mxu0 0
      %8426 = vmatpush1.bf16.msra.mxu0 0
      %8427 = vmatprep.mubr.bf16.mxu0 0
      %8428 = vmatmul.mubr.bf16.gmra.mrb[0].mxu0 %v6214
      %v8429 = vpop.f32.mrb[0].mxu0
      %v8430 = vadd.f32 0.0, %v8429
      %v8431 = vpop.f32.mrb[0].mxu0
      %v8432 = vadd.f32 0.0, %v8431
      %v8433 = vpop.f32.mrb[0].mxu0
      %v8434 = vpop.f32.mrb[0].mxu0
      %8435 = vdwg.mxu0
      %s8436 = scalar_lea.vmem %s10, 52
      %v8437 = vld [vmem:[%s8436] sm:$0x7]
      %v8439 = vsel %vm2843, %v8437, 0
      %8441 = vmatprep.subr.mxu0 %v8432
      %8442 = vmatpush1.msra.mxu0 %v8430
      %8443 = vmatprep.subr.mxu0 0.0
      %8444 = vmatpush1.msra.mxu0 0.0
      %8445 = vmatprep.subr.mxu0 0.0
      %8446 = vmatpush1.msra.mxu0 0.0
      %8447 = vmatprep.subr.mxu0 0.0
      %8448 = vmatpush1.msra.mxu0 0.0
      %8449 = vmatprep.subr.mxu0 0.0
      %8450 = vmatpush1.msra.mxu0 0.0
      %8451 = vmatprep.subr.mxu0 0.0
      %8452 = vmatpush1.msra.mxu0 0.0
      %8453 = vmatprep.subr.mxu0 0.0
      %8454 = vmatpush1.msra.mxu0 0.0
      %8455 = vmatprep.subr.mxu0 0.0
      %8456 = vmatpush1.msra.mxu0 0.0
      %8457 = vmatprep.subr.mxu0 0.0
      %8458 = vmatpush1.msra.mxu0 0.0
      %8459 = vmatprep.subr.mxu0 0.0
      %8460 = vmatpush1.msra.mxu0 0.0
      %8461 = vmatprep.subr.mxu0 0.0
      %8462 = vmatpush1.msra.mxu0 0.0
      %8463 = vmatprep.subr.mxu0 0.0
      %8464 = vmatpush1.msra.mxu0 0.0
      %8465 = vmatprep.subr.mxu0 0.0
      %8466 = vmatpush1.msra.mxu0 0.0
      %8467 = vmatprep.subr.mxu0 0.0
      %8468 = vmatpush1.msra.mxu0 0.0
      %8469 = vmatprep.subr.mxu0 0.0
      %8470 = vmatpush1.msra.mxu0 0.0
      %8471 = vmatprep.subr.mxu0 0.0
      %8472 = vmatpush1.msra.mxu0 0.0
      %8473 = vmatprep.subr.mxu0 0.0
      %8474 = vmatpush1.msra.mxu0 0.0
      %8475 = vmatprep.subr.mxu0 0.0
      %8476 = vmatpush1.msra.mxu0 0.0
      %8477 = vmatprep.subr.mxu0 0.0
      %8478 = vmatpush1.msra.mxu0 0.0
      %8479 = vmatprep.subr.mxu0 0.0
      %8480 = vmatpush1.msra.mxu0 0.0
      %8481 = vmatprep.subr.mxu0 0.0
      %8482 = vmatpush1.msra.mxu0 0.0
      %8483 = vmatprep.subr.mxu0 0.0
      %8484 = vmatpush1.msra.mxu0 0.0
      %8485 = vmatprep.subr.mxu0 0.0
      %8486 = vmatpush1.msra.mxu0 0.0
      %8487 = vmatprep.subr.mxu0 0.0
      %8488 = vmatpush1.msra.mxu0 0.0
      %8489 = vmatprep.subr.mxu0 0.0
      %8490 = vmatpush1.msra.mxu0 0.0
      %8491 = vmatprep.subr.mxu0 0.0
      %8492 = vmatpush1.msra.mxu0 0.0
      %8493 = vmatprep.subr.mxu0 0.0
      %8494 = vmatpush1.msra.mxu0 0.0
      %8495 = vmatprep.subr.mxu0 0.0
      %8496 = vmatpush1.msra.mxu0 0.0
      %8497 = vmatprep.subr.mxu0 0.0
      %8498 = vmatpush1.msra.mxu0 0.0
      %8499 = vmatprep.subr.mxu0 0.0
      %8500 = vmatpush1.msra.mxu0 0.0
      %8501 = vmatprep.subr.mxu0 0.0
      %8502 = vmatpush1.msra.mxu0 0.0
      %8503 = vmatprep.subr.mxu0 0.0
      %8504 = vmatpush1.msra.mxu0 0.0
      %8505 = vmatprep.mubr.f32.mxu0 0.0
      %8506 = vmatmul.mubr.f32.gmra.mrb[0].mxu0 %v8439
      %v8507 = vpop.f32.mrb[0].mxu0
      %v8508 = vadd.f32 0.0, %v8507
      %v8509 = vpop.f32.mrb[0].mxu0
      %v8510 = vadd.f32 0.0, %v8509
      %8511 = vdwg.mxu0
      %v8512 = vadd.f32 %v8344, %v8508
      %v8513 = vadd.f32 %v8345, %v8510
      %s8514 = scalar_lea.vmem %s11, 896
      %v8515 = vld [vmem:[%s8514] sm:$0xff]
      %v8516 = vld [vmem:[%s8514 + $0x8] sm:$0xff]
      %v8517 = vld [vmem:[%s8514 + $0x10] sm:$0xff]
      %v8518 = vld [vmem:[%s8514 + $0x18] sm:$0xff]
      %v8519 = vld [vmem:[%s8514 + $0x20] sm:$0xff]
      %v8520 = vld [vmem:[%s8514 + $0x28] sm:$0xff]
      %v8521 = vld [vmem:[%s8514 + $0x30] sm:$0xff]
      %v8522 = vld [vmem:[%s8514 + $0x38] sm:$0xff]
      %v8531 = vunpack.c.l.b16 %v8515
      %v8532 = vunpack.c.h.b16 %v8515
      %v8533 = vunpack.c.l.b16 %v8516
      %v8534 = vunpack.c.h.b16 %v8516
      %v8535 = vunpack.c.l.b16 %v8517
      %v8536 = vunpack.c.h.b16 %v8517
      %v8537 = vunpack.c.l.b16 %v8518
      %v8538 = vunpack.c.h.b16 %v8518
      %v8539 = vunpack.c.l.b16 %v8519
      %v8540 = vunpack.c.h.b16 %v8519
      %v8541 = vunpack.c.l.b16 %v8520
      %v8542 = vunpack.c.h.b16 %v8520
      %v8543 = vunpack.c.l.b16 %v8521
      %v8544 = vunpack.c.h.b16 %v8521
      %v8545 = vunpack.c.l.b16 %v8522
      %v8546 = vunpack.c.h.b16 %v8522
      %v8547 = vpack.c.b16 %v8533, %v8531
      %v8548 = vpack.c.b16 %v8534, %v8532
      %v8549 = vpack.c.b16 %v8537, %v8535
      %v8550 = vpack.c.b16 %v8538, %v8536
      %v8551 = vpack.c.b16 %v8541, %v8539
      %v8552 = vpack.c.b16 %v8542, %v8540
      %v8553 = vpack.c.b16 %v8545, %v8543
      %v8554 = vpack.c.b16 %v8546, %v8544
      %8563 = vmatprep.subr.bf16.mxu0 %v8548
      %8564 = vmatpush1.bf16.msra.mxu0 %v8547
      %8565 = vmatprep.subr.bf16.mxu0 %v8550
      %8566 = vmatpush1.bf16.msra.mxu0 %v8549
      %8567 = vmatprep.subr.bf16.mxu0 %v8552
      %8568 = vmatpush1.bf16.msra.mxu0 %v8551
      %8569 = vmatprep.subr.bf16.mxu0 %v8554
      %8570 = vmatpush1.bf16.msra.mxu0 %v8553
      %8571 = vmatprep.subr.bf16.mxu0 0
      %8572 = vmatpush1.bf16.msra.mxu0 0
      %8573 = vmatprep.subr.bf16.mxu0 0
      %8574 = vmatpush1.bf16.msra.mxu0 0
      %8575 = vmatprep.subr.bf16.mxu0 0
      %8576 = vmatpush1.bf16.msra.mxu0 0
      %8577 = vmatprep.subr.bf16.mxu0 0
      %8578 = vmatpush1.bf16.msra.mxu0 0
      %8579 = vmatprep.subr.bf16.mxu0 0
      %8580 = vmatpush1.bf16.msra.mxu0 0
      %8581 = vmatprep.subr.bf16.mxu0 0
      %8582 = vmatpush1.bf16.msra.mxu0 0
      %8583 = vmatprep.subr.bf16.mxu0 0
      %8584 = vmatpush1.bf16.msra.mxu0 0
      %8585 = vmatprep.subr.bf16.mxu0 0
      %8586 = vmatpush1.bf16.msra.mxu0 0
      %8587 = vmatprep.subr.bf16.mxu0 0
      %8588 = vmatpush1.bf16.msra.mxu0 0
      %8589 = vmatprep.subr.bf16.mxu0 0
      %8590 = vmatpush1.bf16.msra.mxu0 0
      %8591 = vmatprep.subr.bf16.mxu0 0
      %8592 = vmatpush1.bf16.msra.mxu0 0
      %8593 = vmatprep.subr.bf16.mxu0 0
      %8594 = vmatpush1.bf16.msra.mxu0 0
      %8595 = vmatprep.mubr.bf16.mxu0 0
      %8596 = vmatmul.mubr.bf16.gmra.mrb[0].mxu0 %v6214
      %v8597 = vpop.f32.mrb[0].mxu0
      %v8598 = vadd.f32 0.0, %v8597
      %v8599 = vpop.f32.mrb[0].mxu0
      %v8600 = vadd.f32 0.0, %v8599
      %v8601 = vpop.f32.mrb[0].mxu0
      %v8602 = vpop.f32.mrb[0].mxu0
      %8603 = vdwg.mxu0
      %s8604 = scalar_lea.vmem %s10, 56
      %v8605 = vld [vmem:[%s8604] sm:$0x7]
      %v8607 = vsel %vm2843, %v8605, 0
      %8609 = vmatprep.subr.mxu0 %v8600
      %8610 = vmatpush1.msra.mxu0 %v8598
      %8611 = vmatprep.subr.mxu0 0.0
      %8612 = vmatpush1.msra.mxu0 0.0
      %8613 = vmatprep.subr.mxu0 0.0
      %8614 = vmatpush1.msra.mxu0 0.0
      %8615 = vmatprep.subr.mxu0 0.0
      %8616 = vmatpush1.msra.mxu0 0.0
      %8617 = vmatprep.subr.mxu0 0.0
      %8618 = vmatpush1.msra.mxu0 0.0
      %8619 = vmatprep.subr.mxu0 0.0
      %8620 = vmatpush1.msra.mxu0 0.0
      %8621 = vmatprep.subr.mxu0 0.0
      %8622 = vmatpush1.msra.mxu0 0.0
      %8623 = vmatprep.subr.mxu0 0.0
      %8624 = vmatpush1.msra.mxu0 0.0
      %8625 = vmatprep.subr.mxu0 0.0
      %8626 = vmatpush1.msra.mxu0 0.0
      %8627 = vmatprep.subr.mxu0 0.0
      %8628 = vmatpush1.msra.mxu0 0.0
      %8629 = vmatprep.subr.mxu0 0.0
      %8630 = vmatpush1.msra.mxu0 0.0
      %8631 = vmatprep.subr.mxu0 0.0
      %8632 = vmatpush1.msra.mxu0 0.0
      %8633 = vmatprep.subr.mxu0 0.0
      %8634 = vmatpush1.msra.mxu0 0.0
      %8635 = vmatprep.subr.mxu0 0.0
      %8636 = vmatpush1.msra.mxu0 0.0
      %8637 = vmatprep.subr.mxu0 0.0
      %8638 = vmatpush1.msra.mxu0 0.0
      %8639 = vmatprep.subr.mxu0 0.0
      %8640 = vmatpush1.msra.mxu0 0.0
      %8641 = vmatprep.subr.mxu0 0.0
      %8642 = vmatpush1.msra.mxu0 0.0
      %8643 = vmatprep.subr.mxu0 0.0
      %8644 = vmatpush1.msra.mxu0 0.0
      %8645 = vmatprep.subr.mxu0 0.0
      %8646 = vmatpush1.msra.mxu0 0.0
      %8647 = vmatprep.subr.mxu0 0.0
      %8648 = vmatpush1.msra.mxu0 0.0
      %8649 = vmatprep.subr.mxu0 0.0
      %8650 = vmatpush1.msra.mxu0 0.0
      %8651 = vmatprep.subr.mxu0 0.0
      %8652 = vmatpush1.msra.mxu0 0.0
      %8653 = vmatprep.subr.mxu0 0.0
      %8654 = vmatpush1.msra.mxu0 0.0
      %8655 = vmatprep.subr.mxu0 0.0
      %8656 = vmatpush1.msra.mxu0 0.0
      %8657 = vmatprep.subr.mxu0 0.0
      %8658 = vmatpush1.msra.mxu0 0.0
      %8659 = vmatprep.subr.mxu0 0.0
      %8660 = vmatpush1.msra.mxu0 0.0
      %8661 = vmatprep.subr.mxu0 0.0
      %8662 = vmatpush1.msra.mxu0 0.0
      %8663 = vmatprep.subr.mxu0 0.0
      %8664 = vmatpush1.msra.mxu0 0.0
      %8665 = vmatprep.subr.mxu0 0.0
      %8666 = vmatpush1.msra.mxu0 0.0
      %8667 = vmatprep.subr.mxu0 0.0
      %8668 = vmatpush1.msra.mxu0 0.0
      %8669 = vmatprep.subr.mxu0 0.0
      %8670 = vmatpush1.msra.mxu0 0.0
      %8671 = vmatprep.subr.mxu0 0.0
      %8672 = vmatpush1.msra.mxu0 0.0
      %8673 = vmatprep.mubr.f32.mxu0 0.0
      %8674 = vmatmul.mubr.f32.gmra.mrb[0].mxu0 %v8607
      %v8675 = vpop.f32.mrb[0].mxu0
      %v8676 = vadd.f32 0.0, %v8675
      %v8677 = vpop.f32.mrb[0].mxu0
      %v8678 = vadd.f32 0.0, %v8677
      %8679 = vdwg.mxu0
      %v8680 = vadd.f32 %v8512, %v8676
      %v8681 = vadd.f32 %v8513, %v8678
      %s8682 = scalar_lea.vmem %s11, 960
      %v8683 = vld [vmem:[%s8682] sm:$0xff]
      %v8684 = vld [vmem:[%s8682 + $0x8] sm:$0xff]
      %v8685 = vld [vmem:[%s8682 + $0x10] sm:$0xff]
      %v8686 = vld [vmem:[%s8682 + $0x18] sm:$0xff]
      %v8687 = vld [vmem:[%s8682 + $0x20] sm:$0xff]
      %v8688 = vld [vmem:[%s8682 + $0x28] sm:$0xff]
      %v8689 = vld [vmem:[%s8682 + $0x30] sm:$0xff]
      %v8690 = vld [vmem:[%s8682 + $0x38] sm:$0xff]
      %v8699 = vunpack.c.l.b16 %v8683
      %v8700 = vunpack.c.h.b16 %v8683
      %v8701 = vunpack.c.l.b16 %v8684
      %v8702 = vunpack.c.h.b16 %v8684
      %v8703 = vunpack.c.l.b16 %v8685
      %v8704 = vunpack.c.h.b16 %v8685
      %v8705 = vunpack.c.l.b16 %v8686
      %v8706 = vunpack.c.h.b16 %v8686
      %v8707 = vunpack.c.l.b16 %v8687
      %v8708 = vunpack.c.h.b16 %v8687
      %v8709 = vunpack.c.l.b16 %v8688
      %v8710 = vunpack.c.h.b16 %v8688
      %v8711 = vunpack.c.l.b16 %v8689
      %v8712 = vunpack.c.h.b16 %v8689
      %v8713 = vunpack.c.l.b16 %v8690
      %v8714 = vunpack.c.h.b16 %v8690
      %v8715 = vpack.c.b16 %v8701, %v8699
      %v8716 = vpack.c.b16 %v8702, %v8700
      %v8717 = vpack.c.b16 %v8705, %v8703
      %v8718 = vpack.c.b16 %v8706, %v8704
      %v8719 = vpack.c.b16 %v8709, %v8707
      %v8720 = vpack.c.b16 %v8710, %v8708
      %v8721 = vpack.c.b16 %v8713, %v8711
      %v8722 = vpack.c.b16 %v8714, %v8712
      %8731 = vmatprep.subr.bf16.mxu0 %v8716
      %8732 = vmatpush1.bf16.msra.mxu0 %v8715
      %8733 = vmatprep.subr.bf16.mxu0 %v8718
      %8734 = vmatpush1.bf16.msra.mxu0 %v8717
      %8735 = vmatprep.subr.bf16.mxu0 %v8720
      %8736 = vmatpush1.bf16.msra.mxu0 %v8719
      %8737 = vmatprep.subr.bf16.mxu0 %v8722
      %8738 = vmatpush1.bf16.msra.mxu0 %v8721
      %8739 = vmatprep.subr.bf16.mxu0 0
      %8740 = vmatpush1.bf16.msra.mxu0 0
      %8741 = vmatprep.subr.bf16.mxu0 0
      %8742 = vmatpush1.bf16.msra.mxu0 0
      %8743 = vmatprep.subr.bf16.mxu0 0
      %8744 = vmatpush1.bf16.msra.mxu0 0
      %8745 = vmatprep.subr.bf16.mxu0 0
      %8746 = vmatpush1.bf16.msra.mxu0 0
      %8747 = vmatprep.subr.bf16.mxu0 0
      %8748 = vmatpush1.bf16.msra.mxu0 0
      %8749 = vmatprep.subr.bf16.mxu0 0
      %8750 = vmatpush1.bf16.msra.mxu0 0
      %8751 = vmatprep.subr.bf16.mxu0 0
      %8752 = vmatpush1.bf16.msra.mxu0 0
      %8753 = vmatprep.subr.bf16.mxu0 0
      %8754 = vmatpush1.bf16.msra.mxu0 0
      %8755 = vmatprep.subr.bf16.mxu0 0
      %8756 = vmatpush1.bf16.msra.mxu0 0
      %8757 = vmatprep.subr.bf16.mxu0 0
      %8758 = vmatpush1.bf16.msra.mxu0 0
      %8759 = vmatprep.subr.bf16.mxu0 0
      %8760 = vmatpush1.bf16.msra.mxu0 0
      %8761 = vmatprep.subr.bf16.mxu0 0
      %8762 = vmatpush1.bf16.msra.mxu0 0
      %8763 = vmatprep.mubr.bf16.mxu0 0
      %8764 = vmatmul.mubr.bf16.gmra.mrb[0].mxu0 %v6214
      %v8765 = vpop.f32.mrb[0].mxu0
      %v8766 = vadd.f32 0.0, %v8765
      %v8767 = vpop.f32.mrb[0].mxu0
      %v8768 = vadd.f32 0.0, %v8767
      %v8769 = vpop.f32.mrb[0].mxu0
      %v8770 = vpop.f32.mrb[0].mxu0
      %8771 = vdwg.mxu0
      %s8772 = scalar_lea.vmem %s10, 60
      %v8773 = vld [vmem:[%s8772] sm:$0x7]
      %v8775 = vsel %vm2843, %v8773, 0
      %8777 = vmatprep.subr.mxu0 %v8768
      %8778 = vmatpush1.msra.mxu0 %v8766
      %8779 = vmatprep.subr.mxu0 0.0
      %8780 = vmatpush1.msra.mxu0 0.0
      %8781 = vmatprep.subr.mxu0 0.0
      %8782 = vmatpush1.msra.mxu0 0.0
      %8783 = vmatprep.subr.mxu0 0.0
      %8784 = vmatpush1.msra.mxu0 0.0
      %8785 = vmatprep.subr.mxu0 0.0
      %8786 = vmatpush1.msra.mxu0 0.0
      %8787 = vmatprep.subr.mxu0 0.0
      %8788 = vmatpush1.msra.mxu0 0.0
      %8789 = vmatprep.subr.mxu0 0.0
      %8790 = vmatpush1.msra.mxu0 0.0
      %8791 = vmatprep.subr.mxu0 0.0
      %8792 = vmatpush1.msra.mxu0 0.0
      %8793 = vmatprep.subr.mxu0 0.0
      %8794 = vmatpush1.msra.mxu0 0.0
      %8795 = vmatprep.subr.mxu0 0.0
      %8796 = vmatpush1.msra.mxu0 0.0
      %8797 = vmatprep.subr.mxu0 0.0
      %8798 = vmatpush1.msra.mxu0 0.0
      %8799 = vmatprep.subr.mxu0 0.0
      %8800 = vmatpush1.msra.mxu0 0.0
      %8801 = vmatprep.subr.mxu0 0.0
      %8802 = vmatpush1.msra.mxu0 0.0
      %8803 = vmatprep.subr.mxu0 0.0
      %8804 = vmatpush1.msra.mxu0 0.0
      %8805 = vmatprep.subr.mxu0 0.0
      %8806 = vmatpush1.msra.mxu0 0.0
      %8807 = vmatprep.subr.mxu0 0.0
      %8808 = vmatpush1.msra.mxu0 0.0
      %8809 = vmatprep.subr.mxu0 0.0
      %8810 = vmatpush1.msra.mxu0 0.0
      %8811 = vmatprep.subr.mxu0 0.0
      %8812 = vmatpush1.msra.mxu0 0.0
      %8813 = vmatprep.subr.mxu0 0.0
      %8814 = vmatpush1.msra.mxu0 0.0
      %8815 = vmatprep.subr.mxu0 0.0
      %8816 = vmatpush1.msra.mxu0 0.0
      %8817 = vmatprep.subr.mxu0 0.0
      %8818 = vmatpush1.msra.mxu0 0.0
      %8819 = vmatprep.subr.mxu0 0.0
      %8820 = vmatpush1.msra.mxu0 0.0
      %8821 = vmatprep.subr.mxu0 0.0
      %8822 = vmatpush1.msra.mxu0 0.0
      %8823 = vmatprep.subr.mxu0 0.0
      %8824 = vmatpush1.msra.mxu0 0.0
      %8825 = vmatprep.subr.mxu0 0.0
      %8826 = vmatpush1.msra.mxu0 0.0
      %8827 = vmatprep.subr.mxu0 0.0
      %8828 = vmatpush1.msra.mxu0 0.0
      %8829 = vmatprep.subr.mxu0 0.0
      %8830 = vmatpush1.msra.mxu0 0.0
      %8831 = vmatprep.subr.mxu0 0.0
      %8832 = vmatpush1.msra.mxu0 0.0
      %8833 = vmatprep.subr.mxu0 0.0
      %8834 = vmatpush1.msra.mxu0 0.0
      %8835 = vmatprep.subr.mxu0 0.0
      %8836 = vmatpush1.msra.mxu0 0.0
      %8837 = vmatprep.subr.mxu0 0.0
      %8838 = vmatpush1.msra.mxu0 0.0
      %8839 = vmatprep.subr.mxu0 0.0
      %8840 = vmatpush1.msra.mxu0 0.0
      %8841 = vmatprep.mubr.f32.mxu0 0.0
      %8842 = vmatmul.mubr.f32.gmra.mrb[0].mxu0 %v8775
      %v8843 = vpop.f32.mrb[0].mxu0
      %v8844 = vadd.f32 0.0, %v8843
      %v8845 = vpop.f32.mrb[0].mxu0
      %v8846 = vadd.f32 0.0, %v8845
      %8847 = vdwg.mxu0
      %v8848 = vadd.f32 %v8680, %v8844
      %v8849 = vadd.f32 %v8681, %v8846
      %v8850 = vld [vmem:[%s12] sm:$0x7]
      %8852 = vset.pattern.permute.xlu0 0
      %8853 = vperm.xlu0 %8852, %v8850
      %v8854 = vpop.permute.xlu0 %8853
      %v8856 = vadd.f32 %v8848, %v8854
      %v8857 = vadd.f32 %v8849, %v8854
      %v8858 = vtanh.pop %v8856
      %v8859 = vtanh.pop %v8857
      %v8862 = vcombine.low %v8858, %v8859
      %8864 = vst [vmem:[%s440] sm:$0x77] %v8862
      %p8865 = scmp.lt.s32.totalorder %s24, 1
      %s8866 = scalar_select %p8865, %s24, 1
      %s8867 = smul.addr %s8866, 2
      %s8868 = smul.addr %s8867, 4
      %s8869 = scalar_lea.vmem %s13, %s8868
      // Predicated region
      $region73: #{gan_forward.1} parent=71 // pred_check
        %p8870 = pneg %p320
      $region74: #{gan_forward.1} parent=71 // pred_check_branch
        %8872 = sbr.rel (%p8870) target = $region76
      $region75: #{gan_forward.1} parent=71 // pred_region
        _
      $region76: #{gan_forward.1} parent=71 // pred_fallthru
        _
    $region72: #{gan_forward.1} parent=5 // pred_fallthru
      _
    %p8873 = scmp.le.s32.totalorder 2, %s19
    // Predicated region
    $region77: #{gan_forward.1} parent=5 // pred_check
      %p8874 = pneg %p8873
    $region78: #{gan_forward.1} parent=5 // pred_check_branch
      %8876 = sbr.rel (%p8874) target = $region80
    $region79: #{gan_forward.1} parent=5 // pred_region
      %s8877 = ssub.s32 %s19, 2
      // Predicated region
      $region81: #{gan_forward.1} parent=79 // pred_check
        %p8878 = pneg %p326
      $region82: #{gan_forward.1} parent=79 // pred_check_branch
        %8880 = sbr.rel (%p8878) target = $region84
      $region83: #{gan_forward.1} parent=79 // pred_region
        %p8881 = scmp.lt.s32.totalorder %s25, 1
        %s8882 = scalar_select %p8881, %s25, 1
        %s8883 = smul.addr %s8882, 2
        %s8884 = smul.addr %s8883, 4
        %s8885 = scalar_lea.vmem %s13, %s8884
      $region84: #{gan_forward.1} parent=79 // pred_fallthru
        _
    $region80: #{gan_forward.1} parent=5 // pred_fallthru
      _
  $region6: #{gan_forward.1} parent=0 // loop_footer
    %s23 = sadd.s32 1, %s19
  $region7: #{gan_forward.1} parent=0 // loop_footer_branch
    %18 = sbr.rel target = $region3
  $region8: #{gan_forward.1} parent=0 // loop_exit
    _

</llo_original>
